<compile_context>
chip_gen: v7x
topology: tpu7x:2x2x1
jax: 0.10.0
libtpu: 0.0.40
codegen_flags: <defaults>
</compile_context>

<pallas_src>
import functools
import numpy as np

import jax
import jax.numpy as jnp
from jax.experimental import pallas as pl
from jax.experimental.pallas import tpu as pltpu

LOG2PI = float(np.log(2.0 * np.pi))
# tap order t = (dh+1)*3 + (dw+1) = kh*3 + kw  (torch cross-correlation)
_TAPS = tuple((dh, dw) for dh in (-1, 0, 1) for dw in (-1, 0, 1))


# --------------------------------------------------------------------------
# Fused whole-model kernel.
#   Activation layout: (C, M) with M = B*H*W, m = b*H*W + h*W + w (lane-dense:
#   the large spatial axis sits on the 128-wide lane axis; channel splits are
#   contiguous sublane slices).
# --------------------------------------------------------------------------
def _glow_kernel(*refs, K, W1, W2):
    (x_ref,
     m1_ref, bsel1_ref, wfa1, wfb1, bw1, w0f1, b0f1, w1f1, b1f1, w2f1, b2f1,
     wp1, bp1, psel2, pchan2,
     m2_ref, bsel2_ref, wfa2, wfb2, bw2, w0f2, b0f2, w1f2, b1f2, w2f2, b2f2,
     z_out, dld_out, prior_out) = refs

    f32 = jnp.float32

    def conv3x3(x, wflat, masks, Wimg):
        # x: (Cin, M) f32; wflat: (Cout, 9*Cin) f32; masks: (9, M) 0/1 f32.
        # Zero-padded "same" 3x3 conv: 9 lane rolls (XLU) + boundary masks
        # (VPU) stacked to (9*Cin, M), then ONE batched weight matmul (MXU).
        Cin, M = x.shape
        pieces = []
        for t, (dh, dw) in enumerate(_TAPS):
            k = dh * Wimg + dw
            if k == 0:
                pieces.append(x)                      # center tap: no shift/mask
            else:
                sh = pltpu.roll(x, (-k) % M, axis=1)  # y[:, m] = x[:, m + k]
                pieces.append(sh * masks[t:t + 1, :])
        xs = jnp.concatenate(pieces, axis=0)                      # (9*Cin, M)
        return jnp.dot(wflat, xs, preferred_element_type=f32)     # (Cout, M)

    def batch_sum(vals, bsel):
        # vals: (rows, M) -> per-batch sums in a lane-dense (1, 128) slab
        # (columns >= B are zero in the selector).
        per = jnp.dot(vals, bsel, preferred_element_type=f32)     # (rows, 128)
        return jnp.sum(per, axis=0, keepdims=True)                # (1, 128)

    def run_level(z1, z2, masks, bsel, wfa, wfb, bw, w0f, b0f, w1f, b1f,
                  w2f, b2f, Wimg, dld):
        Ch = z1.shape[0]
        for k in range(K):
            # 1+2. ActNorm (folded host-side) + invertible 1x1 conv, applied as
            #      two half matmuls (no per-step concatenate of z1/z2).
            zm = (jnp.dot(wfa[k], z1, preferred_element_type=f32)
                  + jnp.dot(wfb[k], z2, preferred_element_type=f32)
                  + bw[k])
            z1 = zm[:Ch, :]
            z2 = zm[Ch:, :]

            # 3. Affine coupling.  f(z1): Conv3x3(+AN folded)+ReLU ->
            #    Conv1x1(+AN folded)+ReLU -> Conv2dZeros (bias*scale folded).
            h = jnp.maximum(conv3x3(z1, w0f[k], masks, Wimg) + b0f[k], 0.0)
            h = jnp.maximum(
                jnp.dot(w1f[k], h, preferred_element_type=f32) + b1f[k], 0.0)
            out = conv3x3(h, w2f[k], masks, Wimg) + b2f[k]

            # "cross" split is a contiguous half split (weights pre-permuted).
            shift = out[:Ch, :]
            a = out[Ch:, :] + 2.0
            denom = 1.0 + jnp.exp(-a)              # 1/denom == sigmoid(a)
            z2 = (z2 + shift) * pl.reciprocal(denom, approx=True)
            dld = dld + batch_sum(-jnp.log(denom), bsel)   # sum log(sigmoid(a))
        return z1, z2, dld

    x = x_ref[...]
    C1 = x.shape[0]
    Ch1 = C1 // 2
    m1 = m1_ref[...]
    b1sel = bsel1_ref[...]
    dld = jnp.zeros((1, 128), f32)

    # ---------------- level 1: K flow steps ----------------
    z1, z2, dld = run_level(x[:Ch1, :], x[Ch1:, :], m1, b1sel,
                            wfa1, wfb1, bw1, w0f1, b0f1, w1f1, b1f1,
                            w2f1, b2f1, W1, dld)

    # ---------------- Split2d: prior conv on z1, Gaussian logp of z2 --------
    hp = conv3x3(z1, wp1[...], m1, W1) + bp1[...]
    mean = hp[:Ch1, :]
    lgs = hp[Ch1:, :]
    diff = z2 - mean
    ll = -0.5 * (2.0 * lgs + diff * diff * jnp.exp(-2.0 * lgs) + LOG2PI)
    dld = dld + batch_sum(ll, b1sel)

    # ---------------- in-kernel squeeze2d of z1 -----------------------------
    # 4 selection matmuls (block channel order) + channel permutation matmul
    # back to torch order c*4 + fh*2 + fw.
    blocks = [jnp.dot(z1, psel2[i], preferred_element_type=f32)
              for i in range(4)]
    zb = jnp.concatenate(blocks, axis=0)                          # block order
    znext = jnp.dot(pchan2[...], zb, preferred_element_type=f32)  # torch order

    C2 = znext.shape[0]
    Ch2 = C2 // 2
    m2 = m2_ref[...]
    b2sel = bsel2_ref[...]

    # ---------------- level 2: K flow steps ----------------
    z1, z2, dld = run_level(znext[:Ch2, :], znext[Ch2:, :], m2, b2sel,
                            wfa2, wfb2, bw2, w0f2, b0f2, w1f2, b1f2,
                            w2f2, b2f2, W2, dld)

    # ---------------- final prior (mean=0, logs=0) ----------------
    prior = (batch_sum(-0.5 * (z1 * z1 + LOG2PI), b2sel)
             + batch_sum(-0.5 * (z2 * z2 + LOG2PI), b2sel))

    z_out[:Ch2, :] = z1
    z_out[Ch2:, :] = z2
    dld_out[...] = dld
    prior_out[...] = prior


def _full_spec(shape):
    rank = len(shape)
    return pl.BlockSpec(shape, lambda i, _r=rank: (0,) * _r)


def glow_flow_call(x_sq, p, *, W1, W2):
    """Single fused pallas_call for the entire FlowNet (both levels)."""
    inputs = [x_sq,
              p['m1'], p['bsel1'], p['wfa1'], p['wfb1'], p['bw1'],
              p['w0f1'], p['b0f1'], p['w1f1'], p['b1f1'], p['w2f1'], p['b2f1'],
              p['wp1'], p['bp1'], p['psel2'], p['pchan2'],
              p['m2'], p['bsel2'], p['wfa2'], p['wfb2'], p['bw2'],
              p['w0f2'], p['b0f2'], p['w1f2'], p['b1f2'], p['w2f2'], p['b2f2']]
    K = p['wfa1'].shape[0]
    C2 = p['pchan2'].shape[0]
    M2 = p['m2'].shape[1]
    out_shape = (jax.ShapeDtypeStruct((C2, M2), jnp.float32),   # final z
                 jax.ShapeDtypeStruct((1, 128), jnp.float32),   # data logdet
                 jax.ShapeDtypeStruct((1, 128), jnp.float32))   # prior logp
    kern = functools.partial(_glow_kernel, K=K, W1=W1, W2=W2)
    # TODO(synk): for production batch sizes, split the grid over batch
    # (dimension_semantics=("parallel",)) to use v7x's second TensorCore; not
    # worth it for B=2 (per-core lane width would drop below 128).
    return pl.pallas_call(
        kern,
        out_shape=out_shape,
        grid=(1,),
        in_specs=[_full_spec(a.shape) for a in inputs],
        out_specs=tuple(_full_spec(s.shape) for s in out_shape),
        compiler_params=pltpu.CompilerParams(
            dimension_semantics=("arbitrary",)),
    )(*inputs)


# --------------------------------------------------------------------------
# Plain-JAX glue (tiny input prep / output reshape only)
# --------------------------------------------------------------------------
def squeeze_canonical(z):
    """z: (C, B, H, W) -> (4C, B, H/2, W/2), channel order c*4 + fh*2 + fw
    (matches torch squeeze2d)."""
    C, B, H, W = z.shape
    z = z.reshape(C, B, H // 2, 2, W // 2, 2)
    z = z.transpose(0, 3, 5, 1, 2, 4)
    return z.reshape(C * 4, B, H // 2, W // 2)


def glow_normal_flow(x, params, noise_key):
    """GlowModel.normal_flow.  x: (B, C, H, W) NCHW float32."""
    B, C0, H0, W0 = x.shape
    pixels0 = H0 * W0

    # TODO(synk): dequant noise is generated host-side (one fused XLA op with
    # the layout prep); could be moved in-kernel with pltpu.prng_seed +
    # pltpu.prng_random_bits if desired.
    z = x + jax.random.normal(noise_key, x.shape, jnp.float32) * (1.0 / 256.0)
    zc = jnp.transpose(z, (1, 0, 2, 3))                  # (C0, B, H0, W0)
    zsq = squeeze_canonical(zc)                          # level-1 squeeze
    C1, H1, W1 = 4 * C0, H0 // 2, W0 // 2
    x_sq = zsq.reshape(C1, B * H1 * W1)

    z_out, dld_out, prior_out = glow_flow_call(
        x_sq, params['p'], W1=W1, W2=W1 // 2)
    dld = dld_out[0, :B]
    prior = prior_out[0, :B]

    # Flow objective = dequant logdet + parameter-only logdets (precomputed
    # host-side) + data-dependent contributions + final prior.
    objective = (dld + params['const_logdet']
                 + float(-np.log(256.0) * pixels0) + prior)
    nll = -objective / float(np.log(2.0) * pixels0)
    y_logits = None  # y_condition=False

    C2 = z_out.shape[0]
    H2, W2 = H0 // 4, W0 // 4
    z_final = jnp.transpose(z_out.reshape(C2, B, H2, W2), (1, 0, 2, 3))
    # NOTE: in torch `logdet = objective; objective += prior` aliases in place,
    # so loss_logdet is the *post*-prior objective mean.
    loss_dict = {'loss_logdet': jnp.mean(objective),
                 'loss_prior': jnp.mean(prior)}
    return z_final, nll, y_logits, loss_dict


# --------------------------------------------------------------------------
# Host-side parameter preparation (init + all per-parameter precompute)
# --------------------------------------------------------------------------
def _taps_flat(w):
    """torch conv weight (Cout, Cin, 3, 3) -> (Cout, 9*Cin), col = t*Cin+cin."""
    Cout, Cin = w.shape[0], w.shape[1]
    return np.transpose(w, (0, 2, 3, 1)).reshape(Cout, 9 * Cin)


def _conv_masks(B, H, W):
    """(9, M) 0/1 boundary masks for the rolled taps."""
    M = B * H * W
    masks = np.zeros((9, M), np.float32)
    for t, (dh, dw) in enumerate(_TAPS):
        for m in range(M):
            h = (m // W) % H
            w = m % W
            if 0 <= h + dh < H and 0 <= w + dw < W:
                masks[t, m] = 1.0
    return masks


def _batch_selector(B, H, W, lanes=128):
    """(M, 128) one-hot selector; per-batch sums land lane-dense in col b."""
    M = B * H * W
    sel = np.zeros((M, lanes), np.float32)
    for b in range(B):
        sel[b * H * W:(b + 1) * H * W, b] = 1.0
    return sel


def _squeeze_selectors(B, H1, W1):
    """(4, M1, M2) 0/1 column-selection matrices for in-kernel squeeze2d."""
    H2, W2 = H1 // 2, W1 // 2
    M1, M2 = B * H1 * W1, B * H2 * W2
    psel = np.zeros((4, M1, M2), np.float32)
    for fh in (0, 1):
        for fw in (0, 1):
            idx = fh * 2 + fw
            for b in range(B):
                for h2 in range(H2):
                    for w2 in range(W2):
                        m2 = (b * H2 + h2) * W2 + w2
                        m1 = (b * H1 + 2 * h2 + fh) * W1 + (2 * w2 + fw)
                        psel[idx, m1, m2] = 1.0
    return psel


def _squeeze_channel_perm(Cin):
    """(4Cin, 4Cin) permutation: block order (idx*Cin+c) -> torch (c*4+idx)."""
    C2 = 4 * Cin
    P = np.zeros((C2, C2), np.float32)
    for c in range(Cin):
        for idx in range(4):
            P[c * 4 + idx, idx * Cin + c] = 1.0
    return P


def _build_level(keys, C, hidden, K, pixels):
    """One Glow level (K flow steps): init + host-side folding of all
    ActNorm-style affines and Conv2dZeros scales into the matmul weights."""
    Ch = C // 2
    perm = np.concatenate([np.arange(0, C, 2), np.arange(1, C, 2)])  # cross
    wfa, wfb, bw = [], [], []
    w0f, b0f, w1f, b1f, w2f, b2f = [], [], [], [], [], []
    const = 0.0
    for _ in range(K):
        # ActNorm (treated as inited): bias=0, logs=0.
        an_b = np.zeros((C,), np.float32)
        an_logs = np.zeros((C,), np.float32)
        an_s = np.exp(an_logs)
        # Invertible 1x1 conv (forward weight W): random orthogonal init.
        g = np.asarray(jax.random.normal(next(keys), (C, C), jnp.float32),
                       np.float64)
        q = np.linalg.qr(g)[0].astype(np.float32)
        # actnorm + invconv logdets are parameter-only -> one constant.
        const += (float(an_logs.sum())
                  + float(np.linalg.slogdet(q.astype(np.float64))[1])) * pixels
        # Fold actnorm into the invconv: W@((z+b)*s) = (W*s)@z + W@(b*s).
        wf = q * an_s[None, :]
        wfa.append(wf[:, :Ch])
        wfb.append(wf[:, Ch:])
        bw.append((q @ (an_b * an_s)).astype(np.float32).reshape(C, 1))

        # f(): Conv2d 3x3 (no bias, ~N(0, 0.05)) + ActNorm + ReLU
        w0 = 0.05 * np.asarray(
            jax.random.normal(next(keys), (hidden, Ch, 3, 3), jnp.float32))
        s0 = np.exp(np.zeros((hidden,), np.float32))
        b0 = np.zeros((hidden,), np.float32)
        w0f.append(_taps_flat(w0 * s0[:, None, None, None]))
        b0f.append((b0 * s0).reshape(hidden, 1))

        #      Conv2d 1x1 (no bias) + ActNorm + ReLU
        w1 = 0.05 * np.asarray(
            jax.random.normal(next(keys), (hidden, hidden), jnp.float32))
        s1 = np.exp(np.zeros((hidden,), np.float32))
        b1 = np.zeros((hidden,), np.float32)
        w1f.append(w1 * s1[:, None])
        b1f.append((b1 * s1).reshape(hidden, 1))

        #      Conv2dZeros 3x3 (zero w/b/logs, out scale exp(3*logs)); output
        #      channels pre-permuted so "cross" split is a contiguous half.
        w2 = np.zeros((C, hidden, 3, 3), np.float32)
        b2 = np.zeros((C,), np.float32)
        s2 = np.exp(np.zeros((C,), np.float32) * 3.0)
        w2p, b2p, s2p = w2[perm], b2[perm], s2[perm]
        w2f.append(_taps_flat(w2p * s2p[:, None, None, None]))
        b2f.append((b2p * s2p).reshape(C, 1))

    out = dict(wfa=np.stack(wfa), wfb=np.stack(wfb), bw=np.stack(bw),
               w0f=np.stack(w0f), b0f=np.stack(b0f),
               w1f=np.stack(w1f), b1f=np.stack(b1f),
               w2f=np.stack(w2f), b2f=np.stack(b2f))
    return out, const, perm


def init_glow_params(key, image_shape=(4, 16, 16), hidden=32, K=2, L=2,
                     batch_size=2):
    """Kernel-ready parameters mirroring the module __init__ (Conv2d ~N(0,.05)
    no bias; Conv2dZeros / prior zeros; InvConv1x1 orthogonal; ActNorm zeros,
    inited).  All folding / permutes / masks / selectors / logdet constants
    are precomputed here, outside the hot path."""
    # TODO(synk): the fused kernel body is written for the L=2 configuration;
    # general L would need the kernel generated from a per-level param list.
    assert L == 2
    C0, H0, W0 = image_shape
    B = batch_size
    keys = iter(jax.random.split(key, 1024))

    # ----- level 1 -----
    C1, H1, W1 = 4 * C0, H0 // 2, W0 // 2
    Ch1 = C1 // 2
    lev1, const1, perm1 = _build_level(keys, C1, hidden, K, H1 * W1)
    # Split2d prior: Conv2dZeros(Ch1 -> C1), cross-permuted, scale folded.
    wp = np.zeros((C1, Ch1, 3, 3), np.float32)
    bp = np.zeros((C1,), np.float32)
    sp = np.exp(np.zeros((C1,), np.float32) * 3.0)
    wp_p, bp_p, sp_p = wp[perm1], bp[perm1], sp[perm1]
    wp_f = _taps_flat(wp_p * sp_p[:, None, None, None])
    bp_f = (bp_p * sp_p).reshape(C1, 1)

    # ----- level 2 -----
    C2, H2, W2 = 4 * Ch1, H1 // 2, W1 // 2
    lev2, const2, _ = _build_level(keys, C2, hidden, K, H2 * W2)

    p = {
        'm1': jnp.asarray(_conv_masks(B, H1, W1)),
        'bsel1': jnp.asarray(_batch_selector(B, H1, W1)),
        'wfa1': jnp.asarray(lev1['wfa']), 'wfb1': jnp.asarray(lev1['wfb']),
        'bw1': jnp.asarray(lev1['bw']),
        'w0f1': jnp.asarray(lev1['w0f']), 'b0f1': jnp.asarray(lev1['b0f']),
        'w1f1': jnp.asarray(lev1['w1f']), 'b1f1': jnp.asarray(lev1['b1f']),
        'w2f1': jnp.asarray(lev1['w2f']), 'b2f1': jnp.asarray(lev1['b2f']),
        'wp1': jnp.asarray(wp_f), 'bp1': jnp.asarray(bp_f),
        'psel2': jnp.asarray(_squeeze_selectors(B, H1, W1)),
        'pchan2': jnp.asarray(_squeeze_channel_perm(Ch1)),
        'm2': jnp.asarray(_conv_masks(B, H2, W2)),
        'bsel2': jnp.asarray(_batch_selector(B, H2, W2)),
        'wfa2': jnp.asarray(lev2['wfa']), 'wfb2': jnp.asarray(lev2['wfb']),
        'bw2': jnp.asarray(lev2['bw']),
        'w0f2': jnp.asarray(lev2['w0f']), 'b0f2': jnp.asarray(lev2['b0f']),
        'w1f2': jnp.asarray(lev2['w1f']), 'b1f2': jnp.asarray(lev2['b1f']),
        'w2f2': jnp.asarray(lev2['w2f']), 'b2f2': jnp.asarray(lev2['b2f']),
    }
    params = {'p': p, 'const_logdet': np.float32(const1 + const2)}
    return params, (C2, H2, W2)


# TODO(synk): reverse_flow (sampling), learn_top / y_condition heads
# (project_ycond/project_class), BCE/CE losses and the dataset-loop helpers
# (generate_z / generate_attr_deltaz) are host-side / not on the forward hot
# path and are not implemented.

if __name__ == "__main__":
    key = jax.random.PRNGKey(0)
    k_params, k_x, k_noise = jax.random.split(key, 3)

    params, final_cshape = init_glow_params(
        k_params, image_shape=(4, 16, 16), hidden=32, K=2, L=2, batch_size=2)
    x = jax.random.normal(k_x, (2, 4, 16, 16), jnp.float32)   # NCHW

    fwd = jax.jit(glow_normal_flow)
    z, nll, y_logits, loss_dict = fwd(x, params, k_noise)
    jax.block_until_ready((z, nll, loss_dict['loss_logdet'],
                           loss_dict['loss_prior']))

    assert z.shape == (2,) + final_cshape, z.shape
    assert z.shape == (2, 32, 4, 4), z.shape
    assert nll.shape == (2,), nll.shape
    assert y_logits is None
    assert np.isfinite(np.asarray(nll)).all()
    assert np.isfinite(np.asarray(z)).all()
    print("KERNEL_OK")
</pallas_src>

<mosaic_0001>
module attributes {stable_mosaic.version = 11 : i64} {
  func.func @_glow_kernel(%arg0: i32, %arg1: memref<16x128xf32, #tpu.memory_space<vmem>>, %arg2: memref<9x128xf32, #tpu.memory_space<vmem>>, %arg3: memref<128x128xf32, #tpu.memory_space<vmem>>, %arg4: memref<2x16x8xf32, #tpu.memory_space<vmem>>, %arg5: memref<2x16x8xf32, #tpu.memory_space<vmem>>, %arg6: memref<2x16x1xf32, #tpu.memory_space<vmem>>, %arg7: memref<2x32x72xf32, #tpu.memory_space<vmem>>, %arg8: memref<2x32x1xf32, #tpu.memory_space<vmem>>, %arg9: memref<2x32x32xf32, #tpu.memory_space<vmem>>, %arg10: memref<2x32x1xf32, #tpu.memory_space<vmem>>, %arg11: memref<2x16x288xf32, #tpu.memory_space<vmem>>, %arg12: memref<2x16x1xf32, #tpu.memory_space<vmem>>, %arg13: memref<16x72xf32, #tpu.memory_space<vmem>>, %arg14: memref<16x1xf32, #tpu.memory_space<vmem>>, %arg15: memref<4x128x32xf32, #tpu.memory_space<vmem>>, %arg16: memref<32x32xf32, #tpu.memory_space<vmem>>, %arg17: memref<9x32xf32, #tpu.memory_space<vmem>>, %arg18: memref<32x128xf32, #tpu.memory_space<vmem>>, %arg19: memref<2x32x16xf32, #tpu.memory_space<vmem>>, %arg20: memref<2x32x16xf32, #tpu.memory_space<vmem>>, %arg21: memref<2x32x1xf32, #tpu.memory_space<vmem>>, %arg22: memref<2x32x144xf32, #tpu.memory_space<vmem>>, %arg23: memref<2x32x1xf32, #tpu.memory_space<vmem>>, %arg24: memref<2x32x32xf32, #tpu.memory_space<vmem>>, %arg25: memref<2x32x1xf32, #tpu.memory_space<vmem>>, %arg26: memref<2x32x288xf32, #tpu.memory_space<vmem>>, %arg27: memref<2x32x1xf32, #tpu.memory_space<vmem>>, %arg28: memref<32x32xf32, #tpu.memory_space<vmem>>, %arg29: memref<1x128xf32, #tpu.memory_space<vmem>>, %arg30: memref<1x128xf32, #tpu.memory_space<vmem>>) attributes {dimension_semantics = [#tpu.dimension_semantics<arbitrary>], iteration_bounds = array<i64: 1>, scalar_prefetch = 0 : i64, scratch_operands = 0 : i64, tpu.core_type = #tpu.core_type<tc>, window_params = [{pipeline_mode = #tpu.pipeline_mode<synchronous>, transform_indices = @transform_0, window_bounds = array<i64: 16, 128>}, {pipeline_mode = #tpu.pipeline_mode<synchronous>, transform_indices = @transform_1, window_bounds = array<i64: 9, 128>}, {pipeline_mode = #tpu.pipeline_mode<synchronous>, transform_indices = @transform_2, window_bounds = array<i64: 128, 128>}, {pipeline_mode = #tpu.pipeline_mode<synchronous>, transform_indices = @transform_3, window_bounds = array<i64: 2, 16, 8>}, {pipeline_mode = #tpu.pipeline_mode<synchronous>, transform_indices = @transform_4, window_bounds = array<i64: 2, 16, 8>}, {pipeline_mode = #tpu.pipeline_mode<synchronous>, transform_indices = @transform_5, window_bounds = array<i64: 2, 16, 1>}, {pipeline_mode = #tpu.pipeline_mode<synchronous>, transform_indices = @transform_6, window_bounds = array<i64: 2, 32, 72>}, {pipeline_mode = #tpu.pipeline_mode<synchronous>, transform_indices = @transform_7, window_bounds = array<i64: 2, 32, 1>}, {pipeline_mode = #tpu.pipeline_mode<synchronous>, transform_indices = @transform_8, window_bounds = array<i64: 2, 32, 32>}, {pipeline_mode = #tpu.pipeline_mode<synchronous>, transform_indices = @transform_9, window_bounds = array<i64: 2, 32, 1>}, {pipeline_mode = #tpu.pipeline_mode<synchronous>, transform_indices = @transform_10, window_bounds = array<i64: 2, 16, 288>}, {pipeline_mode = #tpu.pipeline_mode<synchronous>, transform_indices = @transform_11, window_bounds = array<i64: 2, 16, 1>}, {pipeline_mode = #tpu.pipeline_mode<synchronous>, transform_indices = @transform_12, window_bounds = array<i64: 16, 72>}, {pipeline_mode = #tpu.pipeline_mode<synchronous>, transform_indices = @transform_13, window_bounds = array<i64: 16, 1>}, {pipeline_mode = #tpu.pipeline_mode<synchronous>, transform_indices = @transform_14, window_bounds = array<i64: 4, 128, 32>}, {pipeline_mode = #tpu.pipeline_mode<synchronous>, transform_indices = @transform_15, window_bounds = array<i64: 32, 32>}, {pipeline_mode = #tpu.pipeline_mode<synchronous>, transform_indices = @transform_16, window_bounds = array<i64: 9, 32>}, {pipeline_mode = #tpu.pipeline_mode<synchronous>, transform_indices = @transform_17, window_bounds = array<i64: 32, 128>}, {pipeline_mode = #tpu.pipeline_mode<synchronous>, transform_indices = @transform_18, window_bounds = array<i64: 2, 32, 16>}, {pipeline_mode = #tpu.pipeline_mode<synchronous>, transform_indices = @transform_19, window_bounds = array<i64: 2, 32, 16>}, {pipeline_mode = #tpu.pipeline_mode<synchronous>, transform_indices = @transform_20, window_bounds = array<i64: 2, 32, 1>}, {pipeline_mode = #tpu.pipeline_mode<synchronous>, transform_indices = @transform_21, window_bounds = array<i64: 2, 32, 144>}, {pipeline_mode = #tpu.pipeline_mode<synchronous>, transform_indices = @transform_22, window_bounds = array<i64: 2, 32, 1>}, {pipeline_mode = #tpu.pipeline_mode<synchronous>, transform_indices = @transform_23, window_bounds = array<i64: 2, 32, 32>}, {pipeline_mode = #tpu.pipeline_mode<synchronous>, transform_indices = @transform_24, window_bounds = array<i64: 2, 32, 1>}, {pipeline_mode = #tpu.pipeline_mode<synchronous>, transform_indices = @transform_25, window_bounds = array<i64: 2, 32, 288>}, {pipeline_mode = #tpu.pipeline_mode<synchronous>, transform_indices = @transform_26, window_bounds = array<i64: 2, 32, 1>}, {pipeline_mode = #tpu.pipeline_mode<synchronous>, transform_indices = @transform_27, window_bounds = array<i64: 32, 32>}, {pipeline_mode = #tpu.pipeline_mode<synchronous>, transform_indices = @transform_28, window_bounds = array<i64: 1, 128>}, {pipeline_mode = #tpu.pipeline_mode<synchronous>, transform_indices = @transform_29, window_bounds = array<i64: 1, 128>}]} {
    %c0 = arith.constant 0 : index
    %c0_0 = arith.constant 0 : index
    %0 = vector.load %arg1[%c0, %c0_0] : memref<16x128xf32, #tpu.memory_space<vmem>>, vector<16x128xf32>
    %c0_1 = arith.constant 0 : index
    %c0_2 = arith.constant 0 : index
    %1 = vector.load %arg2[%c0_1, %c0_2] : memref<9x128xf32, #tpu.memory_space<vmem>>, vector<9x128xf32>
    %c0_3 = arith.constant 0 : index
    %c0_4 = arith.constant 0 : index
    %2 = vector.load %arg3[%c0_3, %c0_4] : memref<128x128xf32, #tpu.memory_space<vmem>>, vector<128x128xf32>
    %cst = arith.constant 0.000000e+00 : f32
    %3 = vector.broadcast %cst : f32 to vector<1x128xf32>
    %4 = vector.extract_strided_slice %0 {offsets = [0, 0], sizes = [8, 128], strides = [1, 1]} : vector<16x128xf32> to vector<8x128xf32>
    %5 = vector.extract_strided_slice %0 {offsets = [8, 0], sizes = [8, 128], strides = [1, 1]} : vector<16x128xf32> to vector<8x128xf32>
    %c0_5 = arith.constant 0 : index
    %c0_6 = arith.constant 0 : index
    %c0_7 = arith.constant 0 : index
    %6 = vector.load %arg4[%c0_5, %c0_6, %c0_7] : memref<2x16x8xf32, #tpu.memory_space<vmem>>, vector<1x16x8xf32>
    %7 = vector.shape_cast %6 : vector<1x16x8xf32> to vector<16x8xf32>
    %cst_8 = arith.constant dense<0.000000e+00> : vector<16x128xf32>
    %8 = tpu.matmul %7, %4, %cst_8 {dimension_numbers = #tpu.dot_dimension_numbers<[1], [0], [0], [1], [0, 0, 1, 1], [], []>} : vector<16x8xf32>, vector<8x128xf32>, vector<16x128xf32> -> vector<16x128xf32>
    %c0_9 = arith.constant 0 : index
    %c0_10 = arith.constant 0 : index
    %c0_11 = arith.constant 0 : index
    %9 = vector.load %arg5[%c0_9, %c0_10, %c0_11] : memref<2x16x8xf32, #tpu.memory_space<vmem>>, vector<1x16x8xf32>
    %10 = vector.shape_cast %9 : vector<1x16x8xf32> to vector<16x8xf32>
    %cst_12 = arith.constant dense<0.000000e+00> : vector<16x128xf32>
    %11 = tpu.matmul %10, %5, %cst_12 {dimension_numbers = #tpu.dot_dimension_numbers<[1], [0], [0], [1], [0, 0, 1, 1], [], []>} : vector<16x8xf32>, vector<8x128xf32>, vector<16x128xf32> -> vector<16x128xf32>
    %12 = arith.addf %8, %11 : vector<16x128xf32>
    %c0_13 = arith.constant 0 : index
    %c0_14 = arith.constant 0 : index
    %c0_15 = arith.constant 0 : index
    %13 = vector.load %arg6[%c0_13, %c0_14, %c0_15] : memref<2x16x1xf32, #tpu.memory_space<vmem>>, vector<1x16x1xf32>
    %14 = vector.shape_cast %13 : vector<1x16x1xf32> to vector<16x1xf32>
    %15 = vector.broadcast %14 : vector<16x1xf32> to vector<16x128xf32>
    %16 = arith.addf %12, %15 : vector<16x128xf32>
    %17 = vector.extract_strided_slice %16 {offsets = [0, 0], sizes = [8, 128], strides = [1, 1]} : vector<16x128xf32> to vector<8x128xf32>
    %18 = vector.extract_strided_slice %16 {offsets = [8, 0], sizes = [8, 128], strides = [1, 1]} : vector<16x128xf32> to vector<8x128xf32>
    %c0_16 = arith.constant 0 : index
    %c0_17 = arith.constant 0 : index
    %c0_18 = arith.constant 0 : index
    %19 = vector.load %arg7[%c0_16, %c0_17, %c0_18] : memref<2x32x72xf32, #tpu.memory_space<vmem>>, vector<1x32x72xf32>
    %20 = vector.shape_cast %19 : vector<1x32x72xf32> to vector<32x72xf32>
    %c9_i32 = arith.constant 9 : i32
    %21 = tpu.dynamic_rotate %17 by %c9_i32 dim 1 : vector<8x128xf32>, i32 -> vector<8x128xf32>
    %22 = vector.extract_strided_slice %1 {offsets = [0, 0], sizes = [1, 128], strides = [1, 1]} : vector<9x128xf32> to vector<1x128xf32>
    %23 = vector.broadcast %22 : vector<1x128xf32> to vector<8x128xf32>
    %24 = arith.mulf %21, %23 : vector<8x128xf32>
    %c8_i32 = arith.constant 8 : i32
    %25 = tpu.dynamic_rotate %17 by %c8_i32 dim 1 : vector<8x128xf32>, i32 -> vector<8x128xf32>
    %26 = vector.extract_strided_slice %1 {offsets = [1, 0], sizes = [1, 128], strides = [1, 1]} : vector<9x128xf32> to vector<1x128xf32>
    %27 = vector.broadcast %26 : vector<1x128xf32> to vector<8x128xf32>
    %28 = arith.mulf %25, %27 : vector<8x128xf32>
    %c7_i32 = arith.constant 7 : i32
    %29 = tpu.dynamic_rotate %17 by %c7_i32 dim 1 : vector<8x128xf32>, i32 -> vector<8x128xf32>
    %30 = vector.extract_strided_slice %1 {offsets = [2, 0], sizes = [1, 128], strides = [1, 1]} : vector<9x128xf32> to vector<1x128xf32>
    %31 = vector.broadcast %30 : vector<1x128xf32> to vector<8x128xf32>
    %32 = arith.mulf %29, %31 : vector<8x128xf32>
    %c1_i32 = arith.constant 1 : i32
    %33 = tpu.dynamic_rotate %17 by %c1_i32 dim 1 : vector<8x128xf32>, i32 -> vector<8x128xf32>
    %34 = vector.extract_strided_slice %1 {offsets = [3, 0], sizes = [1, 128], strides = [1, 1]} : vector<9x128xf32> to vector<1x128xf32>
    %35 = vector.broadcast %34 : vector<1x128xf32> to vector<8x128xf32>
    %36 = arith.mulf %33, %35 : vector<8x128xf32>
    %c127_i32 = arith.constant 127 : i32
    %37 = tpu.dynamic_rotate %17 by %c127_i32 dim 1 : vector<8x128xf32>, i32 -> vector<8x128xf32>
    %38 = vector.extract_strided_slice %1 {offsets = [5, 0], sizes = [1, 128], strides = [1, 1]} : vector<9x128xf32> to vector<1x128xf32>
    %39 = vector.broadcast %38 : vector<1x128xf32> to vector<8x128xf32>
    %40 = arith.mulf %37, %39 : vector<8x128xf32>
    %c121_i32 = arith.constant 121 : i32
    %41 = tpu.dynamic_rotate %17 by %c121_i32 dim 1 : vector<8x128xf32>, i32 -> vector<8x128xf32>
    %42 = vector.extract_strided_slice %1 {offsets = [6, 0], sizes = [1, 128], strides = [1, 1]} : vector<9x128xf32> to vector<1x128xf32>
    %43 = vector.broadcast %42 : vector<1x128xf32> to vector<8x128xf32>
    %44 = arith.mulf %41, %43 : vector<8x128xf32>
    %c120_i32 = arith.constant 120 : i32
    %45 = tpu.dynamic_rotate %17 by %c120_i32 dim 1 : vector<8x128xf32>, i32 -> vector<8x128xf32>
    %46 = vector.extract_strided_slice %1 {offsets = [7, 0], sizes = [1, 128], strides = [1, 1]} : vector<9x128xf32> to vector<1x128xf32>
    %47 = vector.broadcast %46 : vector<1x128xf32> to vector<8x128xf32>
    %48 = arith.mulf %45, %47 : vector<8x128xf32>
    %c119_i32 = arith.constant 119 : i32
    %49 = tpu.dynamic_rotate %17 by %c119_i32 dim 1 : vector<8x128xf32>, i32 -> vector<8x128xf32>
    %50 = vector.extract_strided_slice %1 {offsets = [8, 0], sizes = [1, 128], strides = [1, 1]} : vector<9x128xf32> to vector<1x128xf32>
    %51 = vector.broadcast %50 : vector<1x128xf32> to vector<8x128xf32>
    %52 = arith.mulf %49, %51 : vector<8x128xf32>
    %53 = tpu.concatenate %24, %28, %32, %36, %17, %40, %44, %48, %52 in 0 : vector<8x128xf32>, vector<8x128xf32>, vector<8x128xf32>, vector<8x128xf32>, vector<8x128xf32>, vector<8x128xf32>, vector<8x128xf32>, vector<8x128xf32>, vector<8x128xf32> -> vector<72x128xf32>
    %cst_19 = arith.constant dense<0.000000e+00> : vector<32x128xf32>
    %54 = tpu.matmul %20, %53, %cst_19 {dimension_numbers = #tpu.dot_dimension_numbers<[1], [0], [0], [1], [0, 0, 1, 1], [], []>} : vector<32x72xf32>, vector<72x128xf32>, vector<32x128xf32> -> vector<32x128xf32>
    %c0_20 = arith.constant 0 : index
    %c0_21 = arith.constant 0 : index
    %c0_22 = arith.constant 0 : index
    %55 = vector.load %arg8[%c0_20, %c0_21, %c0_22] : memref<2x32x1xf32, #tpu.memory_space<vmem>>, vector<1x32x1xf32>
    %56 = vector.shape_cast %55 : vector<1x32x1xf32> to vector<32x1xf32>
    %57 = vector.broadcast %56 : vector<32x1xf32> to vector<32x128xf32>
    %58 = arith.addf %54, %57 : vector<32x128xf32>
    %cst_23 = arith.constant 0.000000e+00 : f32
    %59 = vector.broadcast %cst_23 : f32 to vector<32x128xf32>
    %60 = arith.maximumf %58, %59 : vector<32x128xf32>
    %c0_24 = arith.constant 0 : index
    %c0_25 = arith.constant 0 : index
    %c0_26 = arith.constant 0 : index
    %61 = vector.load %arg9[%c0_24, %c0_25, %c0_26] : memref<2x32x32xf32, #tpu.memory_space<vmem>>, vector<1x32x32xf32>
    %62 = vector.shape_cast %61 : vector<1x32x32xf32> to vector<32x32xf32>
    %cst_27 = arith.constant dense<0.000000e+00> : vector<32x128xf32>
    %63 = tpu.matmul %62, %60, %cst_27 {dimension_numbers = #tpu.dot_dimension_numbers<[1], [0], [0], [1], [0, 0, 1, 1], [], []>} : vector<32x32xf32>, vector<32x128xf32>, vector<32x128xf32> -> vector<32x128xf32>
    %c0_28 = arith.constant 0 : index
    %c0_29 = arith.constant 0 : index
    %c0_30 = arith.constant 0 : index
    %64 = vector.load %arg10[%c0_28, %c0_29, %c0_30] : memref<2x32x1xf32, #tpu.memory_space<vmem>>, vector<1x32x1xf32>
    %65 = vector.shape_cast %64 : vector<1x32x1xf32> to vector<32x1xf32>
    %66 = vector.broadcast %65 : vector<32x1xf32> to vector<32x128xf32>
    %67 = arith.addf %63, %66 : vector<32x128xf32>
    %cst_31 = arith.constant 0.000000e+00 : f32
    %68 = vector.broadcast %cst_31 : f32 to vector<32x128xf32>
    %69 = arith.maximumf %67, %68 : vector<32x128xf32>
    %c0_32 = arith.constant 0 : index
    %c0_33 = arith.constant 0 : index
    %c0_34 = arith.constant 0 : index
    %70 = vector.load %arg11[%c0_32, %c0_33, %c0_34] : memref<2x16x288xf32, #tpu.memory_space<vmem>>, vector<1x16x288xf32>
    %71 = vector.shape_cast %70 : vector<1x16x288xf32> to vector<16x288xf32>
    %c9_i32_35 = arith.constant 9 : i32
    %72 = tpu.dynamic_rotate %69 by %c9_i32_35 dim 1 : vector<32x128xf32>, i32 -> vector<32x128xf32>
    %73 = vector.extract_strided_slice %1 {offsets = [0, 0], sizes = [1, 128], strides = [1, 1]} : vector<9x128xf32> to vector<1x128xf32>
    %74 = vector.broadcast %73 : vector<1x128xf32> to vector<32x128xf32>
    %75 = arith.mulf %72, %74 : vector<32x128xf32>
    %c8_i32_36 = arith.constant 8 : i32
    %76 = tpu.dynamic_rotate %69 by %c8_i32_36 dim 1 : vector<32x128xf32>, i32 -> vector<32x128xf32>
    %77 = vector.extract_strided_slice %1 {offsets = [1, 0], sizes = [1, 128], strides = [1, 1]} : vector<9x128xf32> to vector<1x128xf32>
    %78 = vector.broadcast %77 : vector<1x128xf32> to vector<32x128xf32>
    %79 = arith.mulf %76, %78 : vector<32x128xf32>
    %c7_i32_37 = arith.constant 7 : i32
    %80 = tpu.dynamic_rotate %69 by %c7_i32_37 dim 1 : vector<32x128xf32>, i32 -> vector<32x128xf32>
    %81 = vector.extract_strided_slice %1 {offsets = [2, 0], sizes = [1, 128], strides = [1, 1]} : vector<9x128xf32> to vector<1x128xf32>
    %82 = vector.broadcast %81 : vector<1x128xf32> to vector<32x128xf32>
    %83 = arith.mulf %80, %82 : vector<32x128xf32>
    %c1_i32_38 = arith.constant 1 : i32
    %84 = tpu.dynamic_rotate %69 by %c1_i32_38 dim 1 : vector<32x128xf32>, i32 -> vector<32x128xf32>
    %85 = vector.extract_strided_slice %1 {offsets = [3, 0], sizes = [1, 128], strides = [1, 1]} : vector<9x128xf32> to vector<1x128xf32>
    %86 = vector.broadcast %85 : vector<1x128xf32> to vector<32x128xf32>
    %87 = arith.mulf %84, %86 : vector<32x128xf32>
    %c127_i32_39 = arith.constant 127 : i32
    %88 = tpu.dynamic_rotate %69 by %c127_i32_39 dim 1 : vector<32x128xf32>, i32 -> vector<32x128xf32>
    %89 = vector.extract_strided_slice %1 {offsets = [5, 0], sizes = [1, 128], strides = [1, 1]} : vector<9x128xf32> to vector<1x128xf32>
    %90 = vector.broadcast %89 : vector<1x128xf32> to vector<32x128xf32>
    %91 = arith.mulf %88, %90 : vector<32x128xf32>
    %c121_i32_40 = arith.constant 121 : i32
    %92 = tpu.dynamic_rotate %69 by %c121_i32_40 dim 1 : vector<32x128xf32>, i32 -> vector<32x128xf32>
    %93 = vector.extract_strided_slice %1 {offsets = [6, 0], sizes = [1, 128], strides = [1, 1]} : vector<9x128xf32> to vector<1x128xf32>
    %94 = vector.broadcast %93 : vector<1x128xf32> to vector<32x128xf32>
    %95 = arith.mulf %92, %94 : vector<32x128xf32>
    %c120_i32_41 = arith.constant 120 : i32
    %96 = tpu.dynamic_rotate %69 by %c120_i32_41 dim 1 : vector<32x128xf32>, i32 -> vector<32x128xf32>
    %97 = vector.extract_strided_slice %1 {offsets = [7, 0], sizes = [1, 128], strides = [1, 1]} : vector<9x128xf32> to vector<1x128xf32>
    %98 = vector.broadcast %97 : vector<1x128xf32> to vector<32x128xf32>
    %99 = arith.mulf %96, %98 : vector<32x128xf32>
    %c119_i32_42 = arith.constant 119 : i32
    %100 = tpu.dynamic_rotate %69 by %c119_i32_42 dim 1 : vector<32x128xf32>, i32 -> vector<32x128xf32>
    %101 = vector.extract_strided_slice %1 {offsets = [8, 0], sizes = [1, 128], strides = [1, 1]} : vector<9x128xf32> to vector<1x128xf32>
    %102 = vector.broadcast %101 : vector<1x128xf32> to vector<32x128xf32>
    %103 = arith.mulf %100, %102 : vector<32x128xf32>
    %104 = tpu.concatenate %75, %79, %83, %87, %69, %91, %95, %99, %103 in 0 : vector<32x128xf32>, vector<32x128xf32>, vector<32x128xf32>, vector<32x128xf32>, vector<32x128xf32>, vector<32x128xf32>, vector<32x128xf32>, vector<32x128xf32>, vector<32x128xf32> -> vector<288x128xf32>
    %cst_43 = arith.constant dense<0.000000e+00> : vector<16x128xf32>
    %105 = tpu.matmul %71, %104, %cst_43 {dimension_numbers = #tpu.dot_dimension_numbers<[1], [0], [0], [1], [0, 0, 1, 1], [], []>} : vector<16x288xf32>, vector<288x128xf32>, vector<16x128xf32> -> vector<16x128xf32>
    %c0_44 = arith.constant 0 : index
    %c0_45 = arith.constant 0 : index
    %c0_46 = arith.constant 0 : index
    %106 = vector.load %arg12[%c0_44, %c0_45, %c0_46] : memref<2x16x1xf32, #tpu.memory_space<vmem>>, vector<1x16x1xf32>
    %107 = vector.shape_cast %106 : vector<1x16x1xf32> to vector<16x1xf32>
    %108 = vector.broadcast %107 : vector<16x1xf32> to vector<16x128xf32>
    %109 = arith.addf %105, %108 : vector<16x128xf32>
    %110 = vector.extract_strided_slice %109 {offsets = [0, 0], sizes = [8, 128], strides = [1, 1]} : vector<16x128xf32> to vector<8x128xf32>
    %111 = vector.extract_strided_slice %109 {offsets = [8, 0], sizes = [8, 128], strides = [1, 1]} : vector<16x128xf32> to vector<8x128xf32>
    %cst_47 = arith.constant 2.000000e+00 : f32
    %112 = vector.broadcast %cst_47 : f32 to vector<8x128xf32>
    %113 = arith.addf %111, %112 : vector<8x128xf32>
    %cst_48 = arith.constant 0.000000e+00 : f32
    %114 = vector.broadcast %cst_48 : f32 to vector<8x128xf32>
    %115 = arith.subf %114, %113 : vector<8x128xf32>
    %116 = math.exp %115 : vector<8x128xf32>
    %cst_49 = arith.constant 1.000000e+00 : f32
    %117 = vector.broadcast %cst_49 : f32 to vector<8x128xf32>
    %118 = arith.addf %117, %116 : vector<8x128xf32>
    %119 = arith.addf %18, %110 : vector<8x128xf32>
    %120 = tpu.reciprocal %118 {approx = true} : vector<8x128xf32> -> vector<8x128xf32>
    %121 = arith.mulf %119, %120 : vector<8x128xf32>
    %122 = math.log %118 : vector<8x128xf32>
    %cst_50 = arith.constant 0.000000e+00 : f32
    %123 = vector.broadcast %cst_50 : f32 to vector<8x128xf32>
    %124 = arith.subf %123, %122 : vector<8x128xf32>
    %cst_51 = arith.constant dense<0.000000e+00> : vector<8x128xf32>
    %125 = tpu.matmul %124, %2, %cst_51 {dimension_numbers = #tpu.dot_dimension_numbers<[1], [0], [0], [1], [0, 0, 1, 1], [], []>} : vector<8x128xf32>, vector<128x128xf32>, vector<8x128xf32> -> vector<8x128xf32>
    %cst_52 = arith.constant dense<0.000000e+00> : vector<128xf32>
    %126 = vector.multi_reduction <add>, %125, %cst_52 [0] : vector<8x128xf32> to vector<128xf32>
    %127 = vector.shape_cast %126 : vector<128xf32> to vector<1x128xf32>
    %128 = arith.addf %3, %127 : vector<1x128xf32>
    %c1 = arith.constant 1 : index
    %c0_53 = arith.constant 0 : index
    %c0_54 = arith.constant 0 : index
    %129 = vector.load %arg4[%c1, %c0_53, %c0_54] : memref<2x16x8xf32, #tpu.memory_space<vmem>>, vector<1x16x8xf32>
    %130 = vector.shape_cast %129 : vector<1x16x8xf32> to vector<16x8xf32>
    %cst_55 = arith.constant dense<0.000000e+00> : vector<16x128xf32>
    %131 = tpu.matmul %130, %17, %cst_55 {dimension_numbers = #tpu.dot_dimension_numbers<[1], [0], [0], [1], [0, 0, 1, 1], [], []>} : vector<16x8xf32>, vector<8x128xf32>, vector<16x128xf32> -> vector<16x128xf32>
    %c1_56 = arith.constant 1 : index
    %c0_57 = arith.constant 0 : index
    %c0_58 = arith.constant 0 : index
    %132 = vector.load %arg5[%c1_56, %c0_57, %c0_58] : memref<2x16x8xf32, #tpu.memory_space<vmem>>, vector<1x16x8xf32>
    %133 = vector.shape_cast %132 : vector<1x16x8xf32> to vector<16x8xf32>
    %cst_59 = arith.constant dense<0.000000e+00> : vector<16x128xf32>
    %134 = tpu.matmul %133, %121, %cst_59 {dimension_numbers = #tpu.dot_dimension_numbers<[1], [0], [0], [1], [0, 0, 1, 1], [], []>} : vector<16x8xf32>, vector<8x128xf32>, vector<16x128xf32> -> vector<16x128xf32>
    %135 = arith.addf %131, %134 : vector<16x128xf32>
    %c1_60 = arith.constant 1 : index
    %c0_61 = arith.constant 0 : index
    %c0_62 = arith.constant 0 : index
    %136 = vector.load %arg6[%c1_60, %c0_61, %c0_62] : memref<2x16x1xf32, #tpu.memory_space<vmem>>, vector<1x16x1xf32>
    %137 = vector.shape_cast %136 : vector<1x16x1xf32> to vector<16x1xf32>
    %138 = vector.broadcast %137 : vector<16x1xf32> to vector<16x128xf32>
    %139 = arith.addf %135, %138 : vector<16x128xf32>
    %140 = vector.extract_strided_slice %139 {offsets = [0, 0], sizes = [8, 128], strides = [1, 1]} : vector<16x128xf32> to vector<8x128xf32>
    %141 = vector.extract_strided_slice %139 {offsets = [8, 0], sizes = [8, 128], strides = [1, 1]} : vector<16x128xf32> to vector<8x128xf32>
    %c1_63 = arith.constant 1 : index
    %c0_64 = arith.constant 0 : index
    %c0_65 = arith.constant 0 : index
    %142 = vector.load %arg7[%c1_63, %c0_64, %c0_65] : memref<2x32x72xf32, #tpu.memory_space<vmem>>, vector<1x32x72xf32>
    %143 = vector.shape_cast %142 : vector<1x32x72xf32> to vector<32x72xf32>
    %c9_i32_66 = arith.constant 9 : i32
    %144 = tpu.dynamic_rotate %140 by %c9_i32_66 dim 1 : vector<8x128xf32>, i32 -> vector<8x128xf32>
    %145 = vector.extract_strided_slice %1 {offsets = [0, 0], sizes = [1, 128], strides = [1, 1]} : vector<9x128xf32> to vector<1x128xf32>
    %146 = vector.broadcast %145 : vector<1x128xf32> to vector<8x128xf32>
    %147 = arith.mulf %144, %146 : vector<8x128xf32>
    %c8_i32_67 = arith.constant 8 : i32
    %148 = tpu.dynamic_rotate %140 by %c8_i32_67 dim 1 : vector<8x128xf32>, i32 -> vector<8x128xf32>
    %149 = vector.extract_strided_slice %1 {offsets = [1, 0], sizes = [1, 128], strides = [1, 1]} : vector<9x128xf32> to vector<1x128xf32>
    %150 = vector.broadcast %149 : vector<1x128xf32> to vector<8x128xf32>
    %151 = arith.mulf %148, %150 : vector<8x128xf32>
    %c7_i32_68 = arith.constant 7 : i32
    %152 = tpu.dynamic_rotate %140 by %c7_i32_68 dim 1 : vector<8x128xf32>, i32 -> vector<8x128xf32>
    %153 = vector.extract_strided_slice %1 {offsets = [2, 0], sizes = [1, 128], strides = [1, 1]} : vector<9x128xf32> to vector<1x128xf32>
    %154 = vector.broadcast %153 : vector<1x128xf32> to vector<8x128xf32>
    %155 = arith.mulf %152, %154 : vector<8x128xf32>
    %c1_i32_69 = arith.constant 1 : i32
    %156 = tpu.dynamic_rotate %140 by %c1_i32_69 dim 1 : vector<8x128xf32>, i32 -> vector<8x128xf32>
    %157 = vector.extract_strided_slice %1 {offsets = [3, 0], sizes = [1, 128], strides = [1, 1]} : vector<9x128xf32> to vector<1x128xf32>
    %158 = vector.broadcast %157 : vector<1x128xf32> to vector<8x128xf32>
    %159 = arith.mulf %156, %158 : vector<8x128xf32>
    %c127_i32_70 = arith.constant 127 : i32
    %160 = tpu.dynamic_rotate %140 by %c127_i32_70 dim 1 : vector<8x128xf32>, i32 -> vector<8x128xf32>
    %161 = vector.extract_strided_slice %1 {offsets = [5, 0], sizes = [1, 128], strides = [1, 1]} : vector<9x128xf32> to vector<1x128xf32>
    %162 = vector.broadcast %161 : vector<1x128xf32> to vector<8x128xf32>
    %163 = arith.mulf %160, %162 : vector<8x128xf32>
    %c121_i32_71 = arith.constant 121 : i32
    %164 = tpu.dynamic_rotate %140 by %c121_i32_71 dim 1 : vector<8x128xf32>, i32 -> vector<8x128xf32>
    %165 = vector.extract_strided_slice %1 {offsets = [6, 0], sizes = [1, 128], strides = [1, 1]} : vector<9x128xf32> to vector<1x128xf32>
    %166 = vector.broadcast %165 : vector<1x128xf32> to vector<8x128xf32>
    %167 = arith.mulf %164, %166 : vector<8x128xf32>
    %c120_i32_72 = arith.constant 120 : i32
    %168 = tpu.dynamic_rotate %140 by %c120_i32_72 dim 1 : vector<8x128xf32>, i32 -> vector<8x128xf32>
    %169 = vector.extract_strided_slice %1 {offsets = [7, 0], sizes = [1, 128], strides = [1, 1]} : vector<9x128xf32> to vector<1x128xf32>
    %170 = vector.broadcast %169 : vector<1x128xf32> to vector<8x128xf32>
    %171 = arith.mulf %168, %170 : vector<8x128xf32>
    %c119_i32_73 = arith.constant 119 : i32
    %172 = tpu.dynamic_rotate %140 by %c119_i32_73 dim 1 : vector<8x128xf32>, i32 -> vector<8x128xf32>
    %173 = vector.extract_strided_slice %1 {offsets = [8, 0], sizes = [1, 128], strides = [1, 1]} : vector<9x128xf32> to vector<1x128xf32>
    %174 = vector.broadcast %173 : vector<1x128xf32> to vector<8x128xf32>
    %175 = arith.mulf %172, %174 : vector<8x128xf32>
    %176 = tpu.concatenate %147, %151, %155, %159, %140, %163, %167, %171, %175 in 0 : vector<8x128xf32>, vector<8x128xf32>, vector<8x128xf32>, vector<8x128xf32>, vector<8x128xf32>, vector<8x128xf32>, vector<8x128xf32>, vector<8x128xf32>, vector<8x128xf32> -> vector<72x128xf32>
    %cst_74 = arith.constant dense<0.000000e+00> : vector<32x128xf32>
    %177 = tpu.matmul %143, %176, %cst_74 {dimension_numbers = #tpu.dot_dimension_numbers<[1], [0], [0], [1], [0, 0, 1, 1], [], []>} : vector<32x72xf32>, vector<72x128xf32>, vector<32x128xf32> -> vector<32x128xf32>
    %c1_75 = arith.constant 1 : index
    %c0_76 = arith.constant 0 : index
    %c0_77 = arith.constant 0 : index
    %178 = vector.load %arg8[%c1_75, %c0_76, %c0_77] : memref<2x32x1xf32, #tpu.memory_space<vmem>>, vector<1x32x1xf32>
    %179 = vector.shape_cast %178 : vector<1x32x1xf32> to vector<32x1xf32>
    %180 = vector.broadcast %179 : vector<32x1xf32> to vector<32x128xf32>
    %181 = arith.addf %177, %180 : vector<32x128xf32>
    %cst_78 = arith.constant 0.000000e+00 : f32
    %182 = vector.broadcast %cst_78 : f32 to vector<32x128xf32>
    %183 = arith.maximumf %181, %182 : vector<32x128xf32>
    %c1_79 = arith.constant 1 : index
    %c0_80 = arith.constant 0 : index
    %c0_81 = arith.constant 0 : index
    %184 = vector.load %arg9[%c1_79, %c0_80, %c0_81] : memref<2x32x32xf32, #tpu.memory_space<vmem>>, vector<1x32x32xf32>
    %185 = vector.shape_cast %184 : vector<1x32x32xf32> to vector<32x32xf32>
    %cst_82 = arith.constant dense<0.000000e+00> : vector<32x128xf32>
    %186 = tpu.matmul %185, %183, %cst_82 {dimension_numbers = #tpu.dot_dimension_numbers<[1], [0], [0], [1], [0, 0, 1, 1], [], []>} : vector<32x32xf32>, vector<32x128xf32>, vector<32x128xf32> -> vector<32x128xf32>
    %c1_83 = arith.constant 1 : index
    %c0_84 = arith.constant 0 : index
    %c0_85 = arith.constant 0 : index
    %187 = vector.load %arg10[%c1_83, %c0_84, %c0_85] : memref<2x32x1xf32, #tpu.memory_space<vmem>>, vector<1x32x1xf32>
    %188 = vector.shape_cast %187 : vector<1x32x1xf32> to vector<32x1xf32>
    %189 = vector.broadcast %188 : vector<32x1xf32> to vector<32x128xf32>
    %190 = arith.addf %186, %189 : vector<32x128xf32>
    %cst_86 = arith.constant 0.000000e+00 : f32
    %191 = vector.broadcast %cst_86 : f32 to vector<32x128xf32>
    %192 = arith.maximumf %190, %191 : vector<32x128xf32>
    %c1_87 = arith.constant 1 : index
    %c0_88 = arith.constant 0 : index
    %c0_89 = arith.constant 0 : index
    %193 = vector.load %arg11[%c1_87, %c0_88, %c0_89] : memref<2x16x288xf32, #tpu.memory_space<vmem>>, vector<1x16x288xf32>
    %194 = vector.shape_cast %193 : vector<1x16x288xf32> to vector<16x288xf32>
    %c9_i32_90 = arith.constant 9 : i32
    %195 = tpu.dynamic_rotate %192 by %c9_i32_90 dim 1 : vector<32x128xf32>, i32 -> vector<32x128xf32>
    %196 = vector.extract_strided_slice %1 {offsets = [0, 0], sizes = [1, 128], strides = [1, 1]} : vector<9x128xf32> to vector<1x128xf32>
    %197 = vector.broadcast %196 : vector<1x128xf32> to vector<32x128xf32>
    %198 = arith.mulf %195, %197 : vector<32x128xf32>
    %c8_i32_91 = arith.constant 8 : i32
    %199 = tpu.dynamic_rotate %192 by %c8_i32_91 dim 1 : vector<32x128xf32>, i32 -> vector<32x128xf32>
    %200 = vector.extract_strided_slice %1 {offsets = [1, 0], sizes = [1, 128], strides = [1, 1]} : vector<9x128xf32> to vector<1x128xf32>
    %201 = vector.broadcast %200 : vector<1x128xf32> to vector<32x128xf32>
    %202 = arith.mulf %199, %201 : vector<32x128xf32>
    %c7_i32_92 = arith.constant 7 : i32
    %203 = tpu.dynamic_rotate %192 by %c7_i32_92 dim 1 : vector<32x128xf32>, i32 -> vector<32x128xf32>
    %204 = vector.extract_strided_slice %1 {offsets = [2, 0], sizes = [1, 128], strides = [1, 1]} : vector<9x128xf32> to vector<1x128xf32>
    %205 = vector.broadcast %204 : vector<1x128xf32> to vector<32x128xf32>
    %206 = arith.mulf %203, %205 : vector<32x128xf32>
    %c1_i32_93 = arith.constant 1 : i32
    %207 = tpu.dynamic_rotate %192 by %c1_i32_93 dim 1 : vector<32x128xf32>, i32 -> vector<32x128xf32>
    %208 = vector.extract_strided_slice %1 {offsets = [3, 0], sizes = [1, 128], strides = [1, 1]} : vector<9x128xf32> to vector<1x128xf32>
    %209 = vector.broadcast %208 : vector<1x128xf32> to vector<32x128xf32>
    %210 = arith.mulf %207, %209 : vector<32x128xf32>
    %c127_i32_94 = arith.constant 127 : i32
    %211 = tpu.dynamic_rotate %192 by %c127_i32_94 dim 1 : vector<32x128xf32>, i32 -> vector<32x128xf32>
    %212 = vector.extract_strided_slice %1 {offsets = [5, 0], sizes = [1, 128], strides = [1, 1]} : vector<9x128xf32> to vector<1x128xf32>
    %213 = vector.broadcast %212 : vector<1x128xf32> to vector<32x128xf32>
    %214 = arith.mulf %211, %213 : vector<32x128xf32>
    %c121_i32_95 = arith.constant 121 : i32
    %215 = tpu.dynamic_rotate %192 by %c121_i32_95 dim 1 : vector<32x128xf32>, i32 -> vector<32x128xf32>
    %216 = vector.extract_strided_slice %1 {offsets = [6, 0], sizes = [1, 128], strides = [1, 1]} : vector<9x128xf32> to vector<1x128xf32>
    %217 = vector.broadcast %216 : vector<1x128xf32> to vector<32x128xf32>
    %218 = arith.mulf %215, %217 : vector<32x128xf32>
    %c120_i32_96 = arith.constant 120 : i32
    %219 = tpu.dynamic_rotate %192 by %c120_i32_96 dim 1 : vector<32x128xf32>, i32 -> vector<32x128xf32>
    %220 = vector.extract_strided_slice %1 {offsets = [7, 0], sizes = [1, 128], strides = [1, 1]} : vector<9x128xf32> to vector<1x128xf32>
    %221 = vector.broadcast %220 : vector<1x128xf32> to vector<32x128xf32>
    %222 = arith.mulf %219, %221 : vector<32x128xf32>
    %c119_i32_97 = arith.constant 119 : i32
    %223 = tpu.dynamic_rotate %192 by %c119_i32_97 dim 1 : vector<32x128xf32>, i32 -> vector<32x128xf32>
    %224 = vector.extract_strided_slice %1 {offsets = [8, 0], sizes = [1, 128], strides = [1, 1]} : vector<9x128xf32> to vector<1x128xf32>
    %225 = vector.broadcast %224 : vector<1x128xf32> to vector<32x128xf32>
    %226 = arith.mulf %223, %225 : vector<32x128xf32>
    %227 = tpu.concatenate %198, %202, %206, %210, %192, %214, %218, %222, %226 in 0 : vector<32x128xf32>, vector<32x128xf32>, vector<32x128xf32>, vector<32x128xf32>, vector<32x128xf32>, vector<32x128xf32>, vector<32x128xf32>, vector<32x128xf32>, vector<32x128xf32> -> vector<288x128xf32>
    %cst_98 = arith.constant dense<0.000000e+00> : vector<16x128xf32>
    %228 = tpu.matmul %194, %227, %cst_98 {dimension_numbers = #tpu.dot_dimension_numbers<[1], [0], [0], [1], [0, 0, 1, 1], [], []>} : vector<16x288xf32>, vector<288x128xf32>, vector<16x128xf32> -> vector<16x128xf32>
    %c1_99 = arith.constant 1 : index
    %c0_100 = arith.constant 0 : index
    %c0_101 = arith.constant 0 : index
    %229 = vector.load %arg12[%c1_99, %c0_100, %c0_101] : memref<2x16x1xf32, #tpu.memory_space<vmem>>, vector<1x16x1xf32>
    %230 = vector.shape_cast %229 : vector<1x16x1xf32> to vector<16x1xf32>
    %231 = vector.broadcast %230 : vector<16x1xf32> to vector<16x128xf32>
    %232 = arith.addf %228, %231 : vector<16x128xf32>
    %233 = vector.extract_strided_slice %232 {offsets = [0, 0], sizes = [8, 128], strides = [1, 1]} : vector<16x128xf32> to vector<8x128xf32>
    %234 = vector.extract_strided_slice %232 {offsets = [8, 0], sizes = [8, 128], strides = [1, 1]} : vector<16x128xf32> to vector<8x128xf32>
    %cst_102 = arith.constant 2.000000e+00 : f32
    %235 = vector.broadcast %cst_102 : f32 to vector<8x128xf32>
    %236 = arith.addf %234, %235 : vector<8x128xf32>
    %cst_103 = arith.constant 0.000000e+00 : f32
    %237 = vector.broadcast %cst_103 : f32 to vector<8x128xf32>
    %238 = arith.subf %237, %236 : vector<8x128xf32>
    %239 = math.exp %238 : vector<8x128xf32>
    %cst_104 = arith.constant 1.000000e+00 : f32
    %240 = vector.broadcast %cst_104 : f32 to vector<8x128xf32>
    %241 = arith.addf %240, %239 : vector<8x128xf32>
    %242 = arith.addf %141, %233 : vector<8x128xf32>
    %243 = tpu.reciprocal %241 {approx = true} : vector<8x128xf32> -> vector<8x128xf32>
    %244 = arith.mulf %242, %243 : vector<8x128xf32>
    %245 = math.log %241 : vector<8x128xf32>
    %cst_105 = arith.constant 0.000000e+00 : f32
    %246 = vector.broadcast %cst_105 : f32 to vector<8x128xf32>
    %247 = arith.subf %246, %245 : vector<8x128xf32>
    %cst_106 = arith.constant dense<0.000000e+00> : vector<8x128xf32>
    %248 = tpu.matmul %247, %2, %cst_106 {dimension_numbers = #tpu.dot_dimension_numbers<[1], [0], [0], [1], [0, 0, 1, 1], [], []>} : vector<8x128xf32>, vector<128x128xf32>, vector<8x128xf32> -> vector<8x128xf32>
    %cst_107 = arith.constant dense<0.000000e+00> : vector<128xf32>
    %249 = vector.multi_reduction <add>, %248, %cst_107 [0] : vector<8x128xf32> to vector<128xf32>
    %250 = vector.shape_cast %249 : vector<128xf32> to vector<1x128xf32>
    %251 = arith.addf %128, %250 : vector<1x128xf32>
    %c0_108 = arith.constant 0 : index
    %c0_109 = arith.constant 0 : index
    %252 = vector.load %arg13[%c0_108, %c0_109] : memref<16x72xf32, #tpu.memory_space<vmem>>, vector<16x72xf32>
    %c9_i32_110 = arith.constant 9 : i32
    %253 = tpu.dynamic_rotate %140 by %c9_i32_110 dim 1 : vector<8x128xf32>, i32 -> vector<8x128xf32>
    %254 = vector.extract_strided_slice %1 {offsets = [0, 0], sizes = [1, 128], strides = [1, 1]} : vector<9x128xf32> to vector<1x128xf32>
    %255 = vector.broadcast %254 : vector<1x128xf32> to vector<8x128xf32>
    %256 = arith.mulf %253, %255 : vector<8x128xf32>
    %c8_i32_111 = arith.constant 8 : i32
    %257 = tpu.dynamic_rotate %140 by %c8_i32_111 dim 1 : vector<8x128xf32>, i32 -> vector<8x128xf32>
    %258 = vector.extract_strided_slice %1 {offsets = [1, 0], sizes = [1, 128], strides = [1, 1]} : vector<9x128xf32> to vector<1x128xf32>
    %259 = vector.broadcast %258 : vector<1x128xf32> to vector<8x128xf32>
    %260 = arith.mulf %257, %259 : vector<8x128xf32>
    %c7_i32_112 = arith.constant 7 : i32
    %261 = tpu.dynamic_rotate %140 by %c7_i32_112 dim 1 : vector<8x128xf32>, i32 -> vector<8x128xf32>
    %262 = vector.extract_strided_slice %1 {offsets = [2, 0], sizes = [1, 128], strides = [1, 1]} : vector<9x128xf32> to vector<1x128xf32>
    %263 = vector.broadcast %262 : vector<1x128xf32> to vector<8x128xf32>
    %264 = arith.mulf %261, %263 : vector<8x128xf32>
    %c1_i32_113 = arith.constant 1 : i32
    %265 = tpu.dynamic_rotate %140 by %c1_i32_113 dim 1 : vector<8x128xf32>, i32 -> vector<8x128xf32>
    %266 = vector.extract_strided_slice %1 {offsets = [3, 0], sizes = [1, 128], strides = [1, 1]} : vector<9x128xf32> to vector<1x128xf32>
    %267 = vector.broadcast %266 : vector<1x128xf32> to vector<8x128xf32>
    %268 = arith.mulf %265, %267 : vector<8x128xf32>
    %c127_i32_114 = arith.constant 127 : i32
    %269 = tpu.dynamic_rotate %140 by %c127_i32_114 dim 1 : vector<8x128xf32>, i32 -> vector<8x128xf32>
    %270 = vector.extract_strided_slice %1 {offsets = [5, 0], sizes = [1, 128], strides = [1, 1]} : vector<9x128xf32> to vector<1x128xf32>
    %271 = vector.broadcast %270 : vector<1x128xf32> to vector<8x128xf32>
    %272 = arith.mulf %269, %271 : vector<8x128xf32>
    %c121_i32_115 = arith.constant 121 : i32
    %273 = tpu.dynamic_rotate %140 by %c121_i32_115 dim 1 : vector<8x128xf32>, i32 -> vector<8x128xf32>
    %274 = vector.extract_strided_slice %1 {offsets = [6, 0], sizes = [1, 128], strides = [1, 1]} : vector<9x128xf32> to vector<1x128xf32>
    %275 = vector.broadcast %274 : vector<1x128xf32> to vector<8x128xf32>
    %276 = arith.mulf %273, %275 : vector<8x128xf32>
    %c120_i32_116 = arith.constant 120 : i32
    %277 = tpu.dynamic_rotate %140 by %c120_i32_116 dim 1 : vector<8x128xf32>, i32 -> vector<8x128xf32>
    %278 = vector.extract_strided_slice %1 {offsets = [7, 0], sizes = [1, 128], strides = [1, 1]} : vector<9x128xf32> to vector<1x128xf32>
    %279 = vector.broadcast %278 : vector<1x128xf32> to vector<8x128xf32>
    %280 = arith.mulf %277, %279 : vector<8x128xf32>
    %c119_i32_117 = arith.constant 119 : i32
    %281 = tpu.dynamic_rotate %140 by %c119_i32_117 dim 1 : vector<8x128xf32>, i32 -> vector<8x128xf32>
    %282 = vector.extract_strided_slice %1 {offsets = [8, 0], sizes = [1, 128], strides = [1, 1]} : vector<9x128xf32> to vector<1x128xf32>
    %283 = vector.broadcast %282 : vector<1x128xf32> to vector<8x128xf32>
    %284 = arith.mulf %281, %283 : vector<8x128xf32>
    %285 = tpu.concatenate %256, %260, %264, %268, %140, %272, %276, %280, %284 in 0 : vector<8x128xf32>, vector<8x128xf32>, vector<8x128xf32>, vector<8x128xf32>, vector<8x128xf32>, vector<8x128xf32>, vector<8x128xf32>, vector<8x128xf32>, vector<8x128xf32> -> vector<72x128xf32>
    %cst_118 = arith.constant dense<0.000000e+00> : vector<16x128xf32>
    %286 = tpu.matmul %252, %285, %cst_118 {dimension_numbers = #tpu.dot_dimension_numbers<[1], [0], [0], [1], [0, 0, 1, 1], [], []>} : vector<16x72xf32>, vector<72x128xf32>, vector<16x128xf32> -> vector<16x128xf32>
    %c0_119 = arith.constant 0 : index
    %c0_120 = arith.constant 0 : index
    %287 = vector.load %arg14[%c0_119, %c0_120] : memref<16x1xf32, #tpu.memory_space<vmem>>, vector<16x1xf32>
    %288 = vector.broadcast %287 : vector<16x1xf32> to vector<16x128xf32>
    %289 = arith.addf %286, %288 : vector<16x128xf32>
    %290 = vector.extract_strided_slice %289 {offsets = [0, 0], sizes = [8, 128], strides = [1, 1]} : vector<16x128xf32> to vector<8x128xf32>
    %291 = vector.extract_strided_slice %289 {offsets = [8, 0], sizes = [8, 128], strides = [1, 1]} : vector<16x128xf32> to vector<8x128xf32>
    %292 = arith.subf %244, %290 : vector<8x128xf32>
    %cst_121 = arith.constant 2.000000e+00 : f32
    %293 = vector.broadcast %cst_121 : f32 to vector<8x128xf32>
    %294 = arith.mulf %293, %291 : vector<8x128xf32>
    %295 = arith.mulf %292, %292 : vector<8x128xf32>
    %cst_122 = arith.constant -2.000000e+00 : f32
    %296 = vector.broadcast %cst_122 : f32 to vector<8x128xf32>
    %297 = arith.mulf %296, %291 : vector<8x128xf32>
    %298 = math.exp %297 : vector<8x128xf32>
    %299 = arith.mulf %295, %298 : vector<8x128xf32>
    %300 = arith.addf %294, %299 : vector<8x128xf32>
    %cst_123 = arith.constant 1.83787704 : f32
    %301 = vector.broadcast %cst_123 : f32 to vector<8x128xf32>
    %302 = arith.addf %300, %301 : vector<8x128xf32>
    %cst_124 = arith.constant -5.000000e-01 : f32
    %303 = vector.broadcast %cst_124 : f32 to vector<8x128xf32>
    %304 = arith.mulf %303, %302 : vector<8x128xf32>
    %cst_125 = arith.constant dense<0.000000e+00> : vector<8x128xf32>
    %305 = tpu.matmul %304, %2, %cst_125 {dimension_numbers = #tpu.dot_dimension_numbers<[1], [0], [0], [1], [0, 0, 1, 1], [], []>} : vector<8x128xf32>, vector<128x128xf32>, vector<8x128xf32> -> vector<8x128xf32>
    %cst_126 = arith.constant dense<0.000000e+00> : vector<128xf32>
    %306 = vector.multi_reduction <add>, %305, %cst_126 [0] : vector<8x128xf32> to vector<128xf32>
    %307 = vector.shape_cast %306 : vector<128xf32> to vector<1x128xf32>
    %308 = arith.addf %251, %307 : vector<1x128xf32>
    %c0_127 = arith.constant 0 : index
    %c0_128 = arith.constant 0 : index
    %c0_129 = arith.constant 0 : index
    %309 = vector.load %arg15[%c0_127, %c0_128, %c0_129] : memref<4x128x32xf32, #tpu.memory_space<vmem>>, vector<1x128x32xf32>
    %310 = vector.shape_cast %309 : vector<1x128x32xf32> to vector<128x32xf32>
    %cst_130 = arith.constant dense<0.000000e+00> : vector<8x32xf32>
    %311 = tpu.matmul %140, %310, %cst_130 {dimension_numbers = #tpu.dot_dimension_numbers<[1], [0], [0], [1], [0, 0, 1, 1], [], []>} : vector<8x128xf32>, vector<128x32xf32>, vector<8x32xf32> -> vector<8x32xf32>
    %c1_131 = arith.constant 1 : index
    %c0_132 = arith.constant 0 : index
    %c0_133 = arith.constant 0 : index
    %312 = vector.load %arg15[%c1_131, %c0_132, %c0_133] : memref<4x128x32xf32, #tpu.memory_space<vmem>>, vector<1x128x32xf32>
    %313 = vector.shape_cast %312 : vector<1x128x32xf32> to vector<128x32xf32>
    %cst_134 = arith.constant dense<0.000000e+00> : vector<8x32xf32>
    %314 = tpu.matmul %140, %313, %cst_134 {dimension_numbers = #tpu.dot_dimension_numbers<[1], [0], [0], [1], [0, 0, 1, 1], [], []>} : vector<8x128xf32>, vector<128x32xf32>, vector<8x32xf32> -> vector<8x32xf32>
    %c2 = arith.constant 2 : index
    %c0_135 = arith.constant 0 : index
    %c0_136 = arith.constant 0 : index
    %315 = vector.load %arg15[%c2, %c0_135, %c0_136] : memref<4x128x32xf32, #tpu.memory_space<vmem>>, vector<1x128x32xf32>
    %316 = vector.shape_cast %315 : vector<1x128x32xf32> to vector<128x32xf32>
    %cst_137 = arith.constant dense<0.000000e+00> : vector<8x32xf32>
    %317 = tpu.matmul %140, %316, %cst_137 {dimension_numbers = #tpu.dot_dimension_numbers<[1], [0], [0], [1], [0, 0, 1, 1], [], []>} : vector<8x128xf32>, vector<128x32xf32>, vector<8x32xf32> -> vector<8x32xf32>
    %c3 = arith.constant 3 : index
    %c0_138 = arith.constant 0 : index
    %c0_139 = arith.constant 0 : index
    %318 = vector.load %arg15[%c3, %c0_138, %c0_139] : memref<4x128x32xf32, #tpu.memory_space<vmem>>, vector<1x128x32xf32>
    %319 = vector.shape_cast %318 : vector<1x128x32xf32> to vector<128x32xf32>
    %cst_140 = arith.constant dense<0.000000e+00> : vector<8x32xf32>
    %320 = tpu.matmul %140, %319, %cst_140 {dimension_numbers = #tpu.dot_dimension_numbers<[1], [0], [0], [1], [0, 0, 1, 1], [], []>} : vector<8x128xf32>, vector<128x32xf32>, vector<8x32xf32> -> vector<8x32xf32>
    %321 = tpu.concatenate %311, %314, %317, %320 in 0 : vector<8x32xf32>, vector<8x32xf32>, vector<8x32xf32>, vector<8x32xf32> -> vector<32x32xf32>
    %c0_141 = arith.constant 0 : index
    %c0_142 = arith.constant 0 : index
    %322 = vector.load %arg16[%c0_141, %c0_142] : memref<32x32xf32, #tpu.memory_space<vmem>>, vector<32x32xf32>
    %cst_143 = arith.constant dense<0.000000e+00> : vector<32x32xf32>
    %323 = tpu.matmul %322, %321, %cst_143 {dimension_numbers = #tpu.dot_dimension_numbers<[1], [0], [0], [1], [0, 0, 1, 1], [], []>} : vector<32x32xf32>, vector<32x32xf32>, vector<32x32xf32> -> vector<32x32xf32>
    %c0_144 = arith.constant 0 : index
    %c0_145 = arith.constant 0 : index
    %324 = vector.load %arg17[%c0_144, %c0_145] : memref<9x32xf32, #tpu.memory_space<vmem>>, vector<9x32xf32>
    %c0_146 = arith.constant 0 : index
    %c0_147 = arith.constant 0 : index
    %325 = vector.load %arg18[%c0_146, %c0_147] : memref<32x128xf32, #tpu.memory_space<vmem>>, vector<32x128xf32>
    %326 = vector.extract_strided_slice %323 {offsets = [0, 0], sizes = [16, 32], strides = [1, 1]} : vector<32x32xf32> to vector<16x32xf32>
    %327 = vector.extract_strided_slice %323 {offsets = [16, 0], sizes = [16, 32], strides = [1, 1]} : vector<32x32xf32> to vector<16x32xf32>
    %c0_148 = arith.constant 0 : index
    %c0_149 = arith.constant 0 : index
    %c0_150 = arith.constant 0 : index
    %328 = vector.load %arg19[%c0_148, %c0_149, %c0_150] : memref<2x32x16xf32, #tpu.memory_space<vmem>>, vector<1x32x16xf32>
    %329 = vector.shape_cast %328 : vector<1x32x16xf32> to vector<32x16xf32>
    %cst_151 = arith.constant dense<0.000000e+00> : vector<32x32xf32>
    %330 = tpu.matmul %329, %326, %cst_151 {dimension_numbers = #tpu.dot_dimension_numbers<[1], [0], [0], [1], [0, 0, 1, 1], [], []>} : vector<32x16xf32>, vector<16x32xf32>, vector<32x32xf32> -> vector<32x32xf32>
    %c0_152 = arith.constant 0 : index
    %c0_153 = arith.constant 0 : index
    %c0_154 = arith.constant 0 : index
    %331 = vector.load %arg20[%c0_152, %c0_153, %c0_154] : memref<2x32x16xf32, #tpu.memory_space<vmem>>, vector<1x32x16xf32>
    %332 = vector.shape_cast %331 : vector<1x32x16xf32> to vector<32x16xf32>
    %cst_155 = arith.constant dense<0.000000e+00> : vector<32x32xf32>
    %333 = tpu.matmul %332, %327, %cst_155 {dimension_numbers = #tpu.dot_dimension_numbers<[1], [0], [0], [1], [0, 0, 1, 1], [], []>} : vector<32x16xf32>, vector<16x32xf32>, vector<32x32xf32> -> vector<32x32xf32>
    %334 = arith.addf %330, %333 : vector<32x32xf32>
    %c0_156 = arith.constant 0 : index
    %c0_157 = arith.constant 0 : index
    %c0_158 = arith.constant 0 : index
    %335 = vector.load %arg21[%c0_156, %c0_157, %c0_158] : memref<2x32x1xf32, #tpu.memory_space<vmem>>, vector<1x32x1xf32>
    %336 = vector.shape_cast %335 : vector<1x32x1xf32> to vector<32x1xf32>
    %337 = vector.broadcast %336 : vector<32x1xf32> to vector<32x32xf32>
    %338 = arith.addf %334, %337 : vector<32x32xf32>
    %339 = vector.extract_strided_slice %338 {offsets = [0, 0], sizes = [16, 32], strides = [1, 1]} : vector<32x32xf32> to vector<16x32xf32>
    %340 = vector.extract_strided_slice %338 {offsets = [16, 0], sizes = [16, 32], strides = [1, 1]} : vector<32x32xf32> to vector<16x32xf32>
    %c0_159 = arith.constant 0 : index
    %c0_160 = arith.constant 0 : index
    %c0_161 = arith.constant 0 : index
    %341 = vector.load %arg22[%c0_159, %c0_160, %c0_161] : memref<2x32x144xf32, #tpu.memory_space<vmem>>, vector<1x32x144xf32>
    %342 = vector.shape_cast %341 : vector<1x32x144xf32> to vector<32x144xf32>
    %c5_i32 = arith.constant 5 : i32
    %343 = tpu.dynamic_rotate %339 by %c5_i32 dim 1 : vector<16x32xf32>, i32 -> vector<16x32xf32>
    %344 = vector.extract_strided_slice %324 {offsets = [0, 0], sizes = [1, 32], strides = [1, 1]} : vector<9x32xf32> to vector<1x32xf32>
    %345 = vector.broadcast %344 : vector<1x32xf32> to vector<16x32xf32>
    %346 = arith.mulf %343, %345 : vector<16x32xf32>
    %c4_i32 = arith.constant 4 : i32
    %347 = tpu.dynamic_rotate %339 by %c4_i32 dim 1 : vector<16x32xf32>, i32 -> vector<16x32xf32>
    %348 = vector.extract_strided_slice %324 {offsets = [1, 0], sizes = [1, 32], strides = [1, 1]} : vector<9x32xf32> to vector<1x32xf32>
    %349 = vector.broadcast %348 : vector<1x32xf32> to vector<16x32xf32>
    %350 = arith.mulf %347, %349 : vector<16x32xf32>
    %c3_i32 = arith.constant 3 : i32
    %351 = tpu.dynamic_rotate %339 by %c3_i32 dim 1 : vector<16x32xf32>, i32 -> vector<16x32xf32>
    %352 = vector.extract_strided_slice %324 {offsets = [2, 0], sizes = [1, 32], strides = [1, 1]} : vector<9x32xf32> to vector<1x32xf32>
    %353 = vector.broadcast %352 : vector<1x32xf32> to vector<16x32xf32>
    %354 = arith.mulf %351, %353 : vector<16x32xf32>
    %c1_i32_162 = arith.constant 1 : i32
    %355 = tpu.dynamic_rotate %339 by %c1_i32_162 dim 1 : vector<16x32xf32>, i32 -> vector<16x32xf32>
    %356 = vector.extract_strided_slice %324 {offsets = [3, 0], sizes = [1, 32], strides = [1, 1]} : vector<9x32xf32> to vector<1x32xf32>
    %357 = vector.broadcast %356 : vector<1x32xf32> to vector<16x32xf32>
    %358 = arith.mulf %355, %357 : vector<16x32xf32>
    %c31_i32 = arith.constant 31 : i32
    %359 = tpu.dynamic_rotate %339 by %c31_i32 dim 1 : vector<16x32xf32>, i32 -> vector<16x32xf32>
    %360 = vector.extract_strided_slice %324 {offsets = [5, 0], sizes = [1, 32], strides = [1, 1]} : vector<9x32xf32> to vector<1x32xf32>
    %361 = vector.broadcast %360 : vector<1x32xf32> to vector<16x32xf32>
    %362 = arith.mulf %359, %361 : vector<16x32xf32>
    %c29_i32 = arith.constant 29 : i32
    %363 = tpu.dynamic_rotate %339 by %c29_i32 dim 1 : vector<16x32xf32>, i32 -> vector<16x32xf32>
    %364 = vector.extract_strided_slice %324 {offsets = [6, 0], sizes = [1, 32], strides = [1, 1]} : vector<9x32xf32> to vector<1x32xf32>
    %365 = vector.broadcast %364 : vector<1x32xf32> to vector<16x32xf32>
    %366 = arith.mulf %363, %365 : vector<16x32xf32>
    %c28_i32 = arith.constant 28 : i32
    %367 = tpu.dynamic_rotate %339 by %c28_i32 dim 1 : vector<16x32xf32>, i32 -> vector<16x32xf32>
    %368 = vector.extract_strided_slice %324 {offsets = [7, 0], sizes = [1, 32], strides = [1, 1]} : vector<9x32xf32> to vector<1x32xf32>
    %369 = vector.broadcast %368 : vector<1x32xf32> to vector<16x32xf32>
    %370 = arith.mulf %367, %369 : vector<16x32xf32>
    %c27_i32 = arith.constant 27 : i32
    %371 = tpu.dynamic_rotate %339 by %c27_i32 dim 1 : vector<16x32xf32>, i32 -> vector<16x32xf32>
    %372 = vector.extract_strided_slice %324 {offsets = [8, 0], sizes = [1, 32], strides = [1, 1]} : vector<9x32xf32> to vector<1x32xf32>
    %373 = vector.broadcast %372 : vector<1x32xf32> to vector<16x32xf32>
    %374 = arith.mulf %371, %373 : vector<16x32xf32>
    %375 = tpu.concatenate %346, %350, %354, %358, %339, %362, %366, %370, %374 in 0 : vector<16x32xf32>, vector<16x32xf32>, vector<16x32xf32>, vector<16x32xf32>, vector<16x32xf32>, vector<16x32xf32>, vector<16x32xf32>, vector<16x32xf32>, vector<16x32xf32> -> vector<144x32xf32>
    %cst_163 = arith.constant dense<0.000000e+00> : vector<32x32xf32>
    %376 = tpu.matmul %342, %375, %cst_163 {dimension_numbers = #tpu.dot_dimension_numbers<[1], [0], [0], [1], [0, 0, 1, 1], [], []>} : vector<32x144xf32>, vector<144x32xf32>, vector<32x32xf32> -> vector<32x32xf32>
    %c0_164 = arith.constant 0 : index
    %c0_165 = arith.constant 0 : index
    %c0_166 = arith.constant 0 : index
    %377 = vector.load %arg23[%c0_164, %c0_165, %c0_166] : memref<2x32x1xf32, #tpu.memory_space<vmem>>, vector<1x32x1xf32>
    %378 = vector.shape_cast %377 : vector<1x32x1xf32> to vector<32x1xf32>
    %379 = vector.broadcast %378 : vector<32x1xf32> to vector<32x32xf32>
    %380 = arith.addf %376, %379 : vector<32x32xf32>
    %cst_167 = arith.constant 0.000000e+00 : f32
    %381 = vector.broadcast %cst_167 : f32 to vector<32x32xf32>
    %382 = arith.maximumf %380, %381 : vector<32x32xf32>
    %c0_168 = arith.constant 0 : index
    %c0_169 = arith.constant 0 : index
    %c0_170 = arith.constant 0 : index
    %383 = vector.load %arg24[%c0_168, %c0_169, %c0_170] : memref<2x32x32xf32, #tpu.memory_space<vmem>>, vector<1x32x32xf32>
    %384 = vector.shape_cast %383 : vector<1x32x32xf32> to vector<32x32xf32>
    %cst_171 = arith.constant dense<0.000000e+00> : vector<32x32xf32>
    %385 = tpu.matmul %384, %382, %cst_171 {dimension_numbers = #tpu.dot_dimension_numbers<[1], [0], [0], [1], [0, 0, 1, 1], [], []>} : vector<32x32xf32>, vector<32x32xf32>, vector<32x32xf32> -> vector<32x32xf32>
    %c0_172 = arith.constant 0 : index
    %c0_173 = arith.constant 0 : index
    %c0_174 = arith.constant 0 : index
    %386 = vector.load %arg25[%c0_172, %c0_173, %c0_174] : memref<2x32x1xf32, #tpu.memory_space<vmem>>, vector<1x32x1xf32>
    %387 = vector.shape_cast %386 : vector<1x32x1xf32> to vector<32x1xf32>
    %388 = vector.broadcast %387 : vector<32x1xf32> to vector<32x32xf32>
    %389 = arith.addf %385, %388 : vector<32x32xf32>
    %cst_175 = arith.constant 0.000000e+00 : f32
    %390 = vector.broadcast %cst_175 : f32 to vector<32x32xf32>
    %391 = arith.maximumf %389, %390 : vector<32x32xf32>
    %c0_176 = arith.constant 0 : index
    %c0_177 = arith.constant 0 : index
    %c0_178 = arith.constant 0 : index
    %392 = vector.load %arg26[%c0_176, %c0_177, %c0_178] : memref<2x32x288xf32, #tpu.memory_space<vmem>>, vector<1x32x288xf32>
    %393 = vector.shape_cast %392 : vector<1x32x288xf32> to vector<32x288xf32>
    %c5_i32_179 = arith.constant 5 : i32
    %394 = tpu.dynamic_rotate %391 by %c5_i32_179 dim 1 : vector<32x32xf32>, i32 -> vector<32x32xf32>
    %395 = vector.extract_strided_slice %324 {offsets = [0, 0], sizes = [1, 32], strides = [1, 1]} : vector<9x32xf32> to vector<1x32xf32>
    %396 = vector.broadcast %395 : vector<1x32xf32> to vector<32x32xf32>
    %397 = arith.mulf %394, %396 : vector<32x32xf32>
    %c4_i32_180 = arith.constant 4 : i32
    %398 = tpu.dynamic_rotate %391 by %c4_i32_180 dim 1 : vector<32x32xf32>, i32 -> vector<32x32xf32>
    %399 = vector.extract_strided_slice %324 {offsets = [1, 0], sizes = [1, 32], strides = [1, 1]} : vector<9x32xf32> to vector<1x32xf32>
    %400 = vector.broadcast %399 : vector<1x32xf32> to vector<32x32xf32>
    %401 = arith.mulf %398, %400 : vector<32x32xf32>
    %c3_i32_181 = arith.constant 3 : i32
    %402 = tpu.dynamic_rotate %391 by %c3_i32_181 dim 1 : vector<32x32xf32>, i32 -> vector<32x32xf32>
    %403 = vector.extract_strided_slice %324 {offsets = [2, 0], sizes = [1, 32], strides = [1, 1]} : vector<9x32xf32> to vector<1x32xf32>
    %404 = vector.broadcast %403 : vector<1x32xf32> to vector<32x32xf32>
    %405 = arith.mulf %402, %404 : vector<32x32xf32>
    %c1_i32_182 = arith.constant 1 : i32
    %406 = tpu.dynamic_rotate %391 by %c1_i32_182 dim 1 : vector<32x32xf32>, i32 -> vector<32x32xf32>
    %407 = vector.extract_strided_slice %324 {offsets = [3, 0], sizes = [1, 32], strides = [1, 1]} : vector<9x32xf32> to vector<1x32xf32>
    %408 = vector.broadcast %407 : vector<1x32xf32> to vector<32x32xf32>
    %409 = arith.mulf %406, %408 : vector<32x32xf32>
    %c31_i32_183 = arith.constant 31 : i32
    %410 = tpu.dynamic_rotate %391 by %c31_i32_183 dim 1 : vector<32x32xf32>, i32 -> vector<32x32xf32>
    %411 = vector.extract_strided_slice %324 {offsets = [5, 0], sizes = [1, 32], strides = [1, 1]} : vector<9x32xf32> to vector<1x32xf32>
    %412 = vector.broadcast %411 : vector<1x32xf32> to vector<32x32xf32>
    %413 = arith.mulf %410, %412 : vector<32x32xf32>
    %c29_i32_184 = arith.constant 29 : i32
    %414 = tpu.dynamic_rotate %391 by %c29_i32_184 dim 1 : vector<32x32xf32>, i32 -> vector<32x32xf32>
    %415 = vector.extract_strided_slice %324 {offsets = [6, 0], sizes = [1, 32], strides = [1, 1]} : vector<9x32xf32> to vector<1x32xf32>
    %416 = vector.broadcast %415 : vector<1x32xf32> to vector<32x32xf32>
    %417 = arith.mulf %414, %416 : vector<32x32xf32>
    %c28_i32_185 = arith.constant 28 : i32
    %418 = tpu.dynamic_rotate %391 by %c28_i32_185 dim 1 : vector<32x32xf32>, i32 -> vector<32x32xf32>
    %419 = vector.extract_strided_slice %324 {offsets = [7, 0], sizes = [1, 32], strides = [1, 1]} : vector<9x32xf32> to vector<1x32xf32>
    %420 = vector.broadcast %419 : vector<1x32xf32> to vector<32x32xf32>
    %421 = arith.mulf %418, %420 : vector<32x32xf32>
    %c27_i32_186 = arith.constant 27 : i32
    %422 = tpu.dynamic_rotate %391 by %c27_i32_186 dim 1 : vector<32x32xf32>, i32 -> vector<32x32xf32>
    %423 = vector.extract_strided_slice %324 {offsets = [8, 0], sizes = [1, 32], strides = [1, 1]} : vector<9x32xf32> to vector<1x32xf32>
    %424 = vector.broadcast %423 : vector<1x32xf32> to vector<32x32xf32>
    %425 = arith.mulf %422, %424 : vector<32x32xf32>
    %426 = tpu.concatenate %397, %401, %405, %409, %391, %413, %417, %421, %425 in 0 : vector<32x32xf32>, vector<32x32xf32>, vector<32x32xf32>, vector<32x32xf32>, vector<32x32xf32>, vector<32x32xf32>, vector<32x32xf32>, vector<32x32xf32>, vector<32x32xf32> -> vector<288x32xf32>
    %cst_187 = arith.constant dense<0.000000e+00> : vector<32x32xf32>
    %427 = tpu.matmul %393, %426, %cst_187 {dimension_numbers = #tpu.dot_dimension_numbers<[1], [0], [0], [1], [0, 0, 1, 1], [], []>} : vector<32x288xf32>, vector<288x32xf32>, vector<32x32xf32> -> vector<32x32xf32>
    %c0_188 = arith.constant 0 : index
    %c0_189 = arith.constant 0 : index
    %c0_190 = arith.constant 0 : index
    %428 = vector.load %arg27[%c0_188, %c0_189, %c0_190] : memref<2x32x1xf32, #tpu.memory_space<vmem>>, vector<1x32x1xf32>
    %429 = vector.shape_cast %428 : vector<1x32x1xf32> to vector<32x1xf32>
    %430 = vector.broadcast %429 : vector<32x1xf32> to vector<32x32xf32>
    %431 = arith.addf %427, %430 : vector<32x32xf32>
    %432 = vector.extract_strided_slice %431 {offsets = [0, 0], sizes = [16, 32], strides = [1, 1]} : vector<32x32xf32> to vector<16x32xf32>
    %433 = vector.extract_strided_slice %431 {offsets = [16, 0], sizes = [16, 32], strides = [1, 1]} : vector<32x32xf32> to vector<16x32xf32>
    %cst_191 = arith.constant 2.000000e+00 : f32
    %434 = vector.broadcast %cst_191 : f32 to vector<16x32xf32>
    %435 = arith.addf %433, %434 : vector<16x32xf32>
    %cst_192 = arith.constant 0.000000e+00 : f32
    %436 = vector.broadcast %cst_192 : f32 to vector<16x32xf32>
    %437 = arith.subf %436, %435 : vector<16x32xf32>
    %438 = math.exp %437 : vector<16x32xf32>
    %cst_193 = arith.constant 1.000000e+00 : f32
    %439 = vector.broadcast %cst_193 : f32 to vector<16x32xf32>
    %440 = arith.addf %439, %438 : vector<16x32xf32>
    %441 = arith.addf %340, %432 : vector<16x32xf32>
    %442 = tpu.reciprocal %440 {approx = true} : vector<16x32xf32> -> vector<16x32xf32>
    %443 = arith.mulf %441, %442 : vector<16x32xf32>
    %444 = math.log %440 : vector<16x32xf32>
    %cst_194 = arith.constant 0.000000e+00 : f32
    %445 = vector.broadcast %cst_194 : f32 to vector<16x32xf32>
    %446 = arith.subf %445, %444 : vector<16x32xf32>
    %cst_195 = arith.constant dense<0.000000e+00> : vector<16x128xf32>
    %447 = tpu.matmul %446, %325, %cst_195 {dimension_numbers = #tpu.dot_dimension_numbers<[1], [0], [0], [1], [0, 0, 1, 1], [], []>} : vector<16x32xf32>, vector<32x128xf32>, vector<16x128xf32> -> vector<16x128xf32>
    %cst_196 = arith.constant dense<0.000000e+00> : vector<128xf32>
    %448 = vector.multi_reduction <add>, %447, %cst_196 [0] : vector<16x128xf32> to vector<128xf32>
    %449 = vector.shape_cast %448 : vector<128xf32> to vector<1x128xf32>
    %450 = arith.addf %308, %449 : vector<1x128xf32>
    %c1_197 = arith.constant 1 : index
    %c0_198 = arith.constant 0 : index
    %c0_199 = arith.constant 0 : index
    %451 = vector.load %arg19[%c1_197, %c0_198, %c0_199] : memref<2x32x16xf32, #tpu.memory_space<vmem>>, vector<1x32x16xf32>
    %452 = vector.shape_cast %451 : vector<1x32x16xf32> to vector<32x16xf32>
    %cst_200 = arith.constant dense<0.000000e+00> : vector<32x32xf32>
    %453 = tpu.matmul %452, %339, %cst_200 {dimension_numbers = #tpu.dot_dimension_numbers<[1], [0], [0], [1], [0, 0, 1, 1], [], []>} : vector<32x16xf32>, vector<16x32xf32>, vector<32x32xf32> -> vector<32x32xf32>
    %c1_201 = arith.constant 1 : index
    %c0_202 = arith.constant 0 : index
    %c0_203 = arith.constant 0 : index
    %454 = vector.load %arg20[%c1_201, %c0_202, %c0_203] : memref<2x32x16xf32, #tpu.memory_space<vmem>>, vector<1x32x16xf32>
    %455 = vector.shape_cast %454 : vector<1x32x16xf32> to vector<32x16xf32>
    %cst_204 = arith.constant dense<0.000000e+00> : vector<32x32xf32>
    %456 = tpu.matmul %455, %443, %cst_204 {dimension_numbers = #tpu.dot_dimension_numbers<[1], [0], [0], [1], [0, 0, 1, 1], [], []>} : vector<32x16xf32>, vector<16x32xf32>, vector<32x32xf32> -> vector<32x32xf32>
    %457 = arith.addf %453, %456 : vector<32x32xf32>
    %c1_205 = arith.constant 1 : index
    %c0_206 = arith.constant 0 : index
    %c0_207 = arith.constant 0 : index
    %458 = vector.load %arg21[%c1_205, %c0_206, %c0_207] : memref<2x32x1xf32, #tpu.memory_space<vmem>>, vector<1x32x1xf32>
    %459 = vector.shape_cast %458 : vector<1x32x1xf32> to vector<32x1xf32>
    %460 = vector.broadcast %459 : vector<32x1xf32> to vector<32x32xf32>
    %461 = arith.addf %457, %460 : vector<32x32xf32>
    %462 = vector.extract_strided_slice %461 {offsets = [0, 0], sizes = [16, 32], strides = [1, 1]} : vector<32x32xf32> to vector<16x32xf32>
    %463 = vector.extract_strided_slice %461 {offsets = [16, 0], sizes = [16, 32], strides = [1, 1]} : vector<32x32xf32> to vector<16x32xf32>
    %c1_208 = arith.constant 1 : index
    %c0_209 = arith.constant 0 : index
    %c0_210 = arith.constant 0 : index
    %464 = vector.load %arg22[%c1_208, %c0_209, %c0_210] : memref<2x32x144xf32, #tpu.memory_space<vmem>>, vector<1x32x144xf32>
    %465 = vector.shape_cast %464 : vector<1x32x144xf32> to vector<32x144xf32>
    %c5_i32_211 = arith.constant 5 : i32
    %466 = tpu.dynamic_rotate %462 by %c5_i32_211 dim 1 : vector<16x32xf32>, i32 -> vector<16x32xf32>
    %467 = vector.extract_strided_slice %324 {offsets = [0, 0], sizes = [1, 32], strides = [1, 1]} : vector<9x32xf32> to vector<1x32xf32>
    %468 = vector.broadcast %467 : vector<1x32xf32> to vector<16x32xf32>
    %469 = arith.mulf %466, %468 : vector<16x32xf32>
    %c4_i32_212 = arith.constant 4 : i32
    %470 = tpu.dynamic_rotate %462 by %c4_i32_212 dim 1 : vector<16x32xf32>, i32 -> vector<16x32xf32>
    %471 = vector.extract_strided_slice %324 {offsets = [1, 0], sizes = [1, 32], strides = [1, 1]} : vector<9x32xf32> to vector<1x32xf32>
    %472 = vector.broadcast %471 : vector<1x32xf32> to vector<16x32xf32>
    %473 = arith.mulf %470, %472 : vector<16x32xf32>
    %c3_i32_213 = arith.constant 3 : i32
    %474 = tpu.dynamic_rotate %462 by %c3_i32_213 dim 1 : vector<16x32xf32>, i32 -> vector<16x32xf32>
    %475 = vector.extract_strided_slice %324 {offsets = [2, 0], sizes = [1, 32], strides = [1, 1]} : vector<9x32xf32> to vector<1x32xf32>
    %476 = vector.broadcast %475 : vector<1x32xf32> to vector<16x32xf32>
    %477 = arith.mulf %474, %476 : vector<16x32xf32>
    %c1_i32_214 = arith.constant 1 : i32
    %478 = tpu.dynamic_rotate %462 by %c1_i32_214 dim 1 : vector<16x32xf32>, i32 -> vector<16x32xf32>
    %479 = vector.extract_strided_slice %324 {offsets = [3, 0], sizes = [1, 32], strides = [1, 1]} : vector<9x32xf32> to vector<1x32xf32>
    %480 = vector.broadcast %479 : vector<1x32xf32> to vector<16x32xf32>
    %481 = arith.mulf %478, %480 : vector<16x32xf32>
    %c31_i32_215 = arith.constant 31 : i32
    %482 = tpu.dynamic_rotate %462 by %c31_i32_215 dim 1 : vector<16x32xf32>, i32 -> vector<16x32xf32>
    %483 = vector.extract_strided_slice %324 {offsets = [5, 0], sizes = [1, 32], strides = [1, 1]} : vector<9x32xf32> to vector<1x32xf32>
    %484 = vector.broadcast %483 : vector<1x32xf32> to vector<16x32xf32>
    %485 = arith.mulf %482, %484 : vector<16x32xf32>
    %c29_i32_216 = arith.constant 29 : i32
    %486 = tpu.dynamic_rotate %462 by %c29_i32_216 dim 1 : vector<16x32xf32>, i32 -> vector<16x32xf32>
    %487 = vector.extract_strided_slice %324 {offsets = [6, 0], sizes = [1, 32], strides = [1, 1]} : vector<9x32xf32> to vector<1x32xf32>
    %488 = vector.broadcast %487 : vector<1x32xf32> to vector<16x32xf32>
    %489 = arith.mulf %486, %488 : vector<16x32xf32>
    %c28_i32_217 = arith.constant 28 : i32
    %490 = tpu.dynamic_rotate %462 by %c28_i32_217 dim 1 : vector<16x32xf32>, i32 -> vector<16x32xf32>
    %491 = vector.extract_strided_slice %324 {offsets = [7, 0], sizes = [1, 32], strides = [1, 1]} : vector<9x32xf32> to vector<1x32xf32>
    %492 = vector.broadcast %491 : vector<1x32xf32> to vector<16x32xf32>
    %493 = arith.mulf %490, %492 : vector<16x32xf32>
    %c27_i32_218 = arith.constant 27 : i32
    %494 = tpu.dynamic_rotate %462 by %c27_i32_218 dim 1 : vector<16x32xf32>, i32 -> vector<16x32xf32>
    %495 = vector.extract_strided_slice %324 {offsets = [8, 0], sizes = [1, 32], strides = [1, 1]} : vector<9x32xf32> to vector<1x32xf32>
    %496 = vector.broadcast %495 : vector<1x32xf32> to vector<16x32xf32>
    %497 = arith.mulf %494, %496 : vector<16x32xf32>
    %498 = tpu.concatenate %469, %473, %477, %481, %462, %485, %489, %493, %497 in 0 : vector<16x32xf32>, vector<16x32xf32>, vector<16x32xf32>, vector<16x32xf32>, vector<16x32xf32>, vector<16x32xf32>, vector<16x32xf32>, vector<16x32xf32>, vector<16x32xf32> -> vector<144x32xf32>
    %cst_219 = arith.constant dense<0.000000e+00> : vector<32x32xf32>
    %499 = tpu.matmul %465, %498, %cst_219 {dimension_numbers = #tpu.dot_dimension_numbers<[1], [0], [0], [1], [0, 0, 1, 1], [], []>} : vector<32x144xf32>, vector<144x32xf32>, vector<32x32xf32> -> vector<32x32xf32>
    %c1_220 = arith.constant 1 : index
    %c0_221 = arith.constant 0 : index
    %c0_222 = arith.constant 0 : index
    %500 = vector.load %arg23[%c1_220, %c0_221, %c0_222] : memref<2x32x1xf32, #tpu.memory_space<vmem>>, vector<1x32x1xf32>
    %501 = vector.shape_cast %500 : vector<1x32x1xf32> to vector<32x1xf32>
    %502 = vector.broadcast %501 : vector<32x1xf32> to vector<32x32xf32>
    %503 = arith.addf %499, %502 : vector<32x32xf32>
    %cst_223 = arith.constant 0.000000e+00 : f32
    %504 = vector.broadcast %cst_223 : f32 to vector<32x32xf32>
    %505 = arith.maximumf %503, %504 : vector<32x32xf32>
    %c1_224 = arith.constant 1 : index
    %c0_225 = arith.constant 0 : index
    %c0_226 = arith.constant 0 : index
    %506 = vector.load %arg24[%c1_224, %c0_225, %c0_226] : memref<2x32x32xf32, #tpu.memory_space<vmem>>, vector<1x32x32xf32>
    %507 = vector.shape_cast %506 : vector<1x32x32xf32> to vector<32x32xf32>
    %cst_227 = arith.constant dense<0.000000e+00> : vector<32x32xf32>
    %508 = tpu.matmul %507, %505, %cst_227 {dimension_numbers = #tpu.dot_dimension_numbers<[1], [0], [0], [1], [0, 0, 1, 1], [], []>} : vector<32x32xf32>, vector<32x32xf32>, vector<32x32xf32> -> vector<32x32xf32>
    %c1_228 = arith.constant 1 : index
    %c0_229 = arith.constant 0 : index
    %c0_230 = arith.constant 0 : index
    %509 = vector.load %arg25[%c1_228, %c0_229, %c0_230] : memref<2x32x1xf32, #tpu.memory_space<vmem>>, vector<1x32x1xf32>
    %510 = vector.shape_cast %509 : vector<1x32x1xf32> to vector<32x1xf32>
    %511 = vector.broadcast %510 : vector<32x1xf32> to vector<32x32xf32>
    %512 = arith.addf %508, %511 : vector<32x32xf32>
    %cst_231 = arith.constant 0.000000e+00 : f32
    %513 = vector.broadcast %cst_231 : f32 to vector<32x32xf32>
    %514 = arith.maximumf %512, %513 : vector<32x32xf32>
    %c1_232 = arith.constant 1 : index
    %c0_233 = arith.constant 0 : index
    %c0_234 = arith.constant 0 : index
    %515 = vector.load %arg26[%c1_232, %c0_233, %c0_234] : memref<2x32x288xf32, #tpu.memory_space<vmem>>, vector<1x32x288xf32>
    %516 = vector.shape_cast %515 : vector<1x32x288xf32> to vector<32x288xf32>
    %c5_i32_235 = arith.constant 5 : i32
    %517 = tpu.dynamic_rotate %514 by %c5_i32_235 dim 1 : vector<32x32xf32>, i32 -> vector<32x32xf32>
    %518 = vector.extract_strided_slice %324 {offsets = [0, 0], sizes = [1, 32], strides = [1, 1]} : vector<9x32xf32> to vector<1x32xf32>
    %519 = vector.broadcast %518 : vector<1x32xf32> to vector<32x32xf32>
    %520 = arith.mulf %517, %519 : vector<32x32xf32>
    %c4_i32_236 = arith.constant 4 : i32
    %521 = tpu.dynamic_rotate %514 by %c4_i32_236 dim 1 : vector<32x32xf32>, i32 -> vector<32x32xf32>
    %522 = vector.extract_strided_slice %324 {offsets = [1, 0], sizes = [1, 32], strides = [1, 1]} : vector<9x32xf32> to vector<1x32xf32>
    %523 = vector.broadcast %522 : vector<1x32xf32> to vector<32x32xf32>
    %524 = arith.mulf %521, %523 : vector<32x32xf32>
    %c3_i32_237 = arith.constant 3 : i32
    %525 = tpu.dynamic_rotate %514 by %c3_i32_237 dim 1 : vector<32x32xf32>, i32 -> vector<32x32xf32>
    %526 = vector.extract_strided_slice %324 {offsets = [2, 0], sizes = [1, 32], strides = [1, 1]} : vector<9x32xf32> to vector<1x32xf32>
    %527 = vector.broadcast %526 : vector<1x32xf32> to vector<32x32xf32>
    %528 = arith.mulf %525, %527 : vector<32x32xf32>
    %c1_i32_238 = arith.constant 1 : i32
    %529 = tpu.dynamic_rotate %514 by %c1_i32_238 dim 1 : vector<32x32xf32>, i32 -> vector<32x32xf32>
    %530 = vector.extract_strided_slice %324 {offsets = [3, 0], sizes = [1, 32], strides = [1, 1]} : vector<9x32xf32> to vector<1x32xf32>
    %531 = vector.broadcast %530 : vector<1x32xf32> to vector<32x32xf32>
    %532 = arith.mulf %529, %531 : vector<32x32xf32>
    %c31_i32_239 = arith.constant 31 : i32
    %533 = tpu.dynamic_rotate %514 by %c31_i32_239 dim 1 : vector<32x32xf32>, i32 -> vector<32x32xf32>
    %534 = vector.extract_strided_slice %324 {offsets = [5, 0], sizes = [1, 32], strides = [1, 1]} : vector<9x32xf32> to vector<1x32xf32>
    %535 = vector.broadcast %534 : vector<1x32xf32> to vector<32x32xf32>
    %536 = arith.mulf %533, %535 : vector<32x32xf32>
    %c29_i32_240 = arith.constant 29 : i32
    %537 = tpu.dynamic_rotate %514 by %c29_i32_240 dim 1 : vector<32x32xf32>, i32 -> vector<32x32xf32>
    %538 = vector.extract_strided_slice %324 {offsets = [6, 0], sizes = [1, 32], strides = [1, 1]} : vector<9x32xf32> to vector<1x32xf32>
    %539 = vector.broadcast %538 : vector<1x32xf32> to vector<32x32xf32>
    %540 = arith.mulf %537, %539 : vector<32x32xf32>
    %c28_i32_241 = arith.constant 28 : i32
    %541 = tpu.dynamic_rotate %514 by %c28_i32_241 dim 1 : vector<32x32xf32>, i32 -> vector<32x32xf32>
    %542 = vector.extract_strided_slice %324 {offsets = [7, 0], sizes = [1, 32], strides = [1, 1]} : vector<9x32xf32> to vector<1x32xf32>
    %543 = vector.broadcast %542 : vector<1x32xf32> to vector<32x32xf32>
    %544 = arith.mulf %541, %543 : vector<32x32xf32>
    %c27_i32_242 = arith.constant 27 : i32
    %545 = tpu.dynamic_rotate %514 by %c27_i32_242 dim 1 : vector<32x32xf32>, i32 -> vector<32x32xf32>
    %546 = vector.extract_strided_slice %324 {offsets = [8, 0], sizes = [1, 32], strides = [1, 1]} : vector<9x32xf32> to vector<1x32xf32>
    %547 = vector.broadcast %546 : vector<1x32xf32> to vector<32x32xf32>
    %548 = arith.mulf %545, %547 : vector<32x32xf32>
    %549 = tpu.concatenate %520, %524, %528, %532, %514, %536, %540, %544, %548 in 0 : vector<32x32xf32>, vector<32x32xf32>, vector<32x32xf32>, vector<32x32xf32>, vector<32x32xf32>, vector<32x32xf32>, vector<32x32xf32>, vector<32x32xf32>, vector<32x32xf32> -> vector<288x32xf32>
    %cst_243 = arith.constant dense<0.000000e+00> : vector<32x32xf32>
    %550 = tpu.matmul %516, %549, %cst_243 {dimension_numbers = #tpu.dot_dimension_numbers<[1], [0], [0], [1], [0, 0, 1, 1], [], []>} : vector<32x288xf32>, vector<288x32xf32>, vector<32x32xf32> -> vector<32x32xf32>
    %c1_244 = arith.constant 1 : index
    %c0_245 = arith.constant 0 : index
    %c0_246 = arith.constant 0 : index
    %551 = vector.load %arg27[%c1_244, %c0_245, %c0_246] : memref<2x32x1xf32, #tpu.memory_space<vmem>>, vector<1x32x1xf32>
    %552 = vector.shape_cast %551 : vector<1x32x1xf32> to vector<32x1xf32>
    %553 = vector.broadcast %552 : vector<32x1xf32> to vector<32x32xf32>
    %554 = arith.addf %550, %553 : vector<32x32xf32>
    %555 = vector.extract_strided_slice %554 {offsets = [0, 0], sizes = [16, 32], strides = [1, 1]} : vector<32x32xf32> to vector<16x32xf32>
    %556 = vector.extract_strided_slice %554 {offsets = [16, 0], sizes = [16, 32], strides = [1, 1]} : vector<32x32xf32> to vector<16x32xf32>
    %cst_247 = arith.constant 2.000000e+00 : f32
    %557 = vector.broadcast %cst_247 : f32 to vector<16x32xf32>
    %558 = arith.addf %556, %557 : vector<16x32xf32>
    %cst_248 = arith.constant 0.000000e+00 : f32
    %559 = vector.broadcast %cst_248 : f32 to vector<16x32xf32>
    %560 = arith.subf %559, %558 : vector<16x32xf32>
    %561 = math.exp %560 : vector<16x32xf32>
    %cst_249 = arith.constant 1.000000e+00 : f32
    %562 = vector.broadcast %cst_249 : f32 to vector<16x32xf32>
    %563 = arith.addf %562, %561 : vector<16x32xf32>
    %564 = arith.addf %463, %555 : vector<16x32xf32>
    %565 = tpu.reciprocal %563 {approx = true} : vector<16x32xf32> -> vector<16x32xf32>
    %566 = arith.mulf %564, %565 : vector<16x32xf32>
    %567 = math.log %563 : vector<16x32xf32>
    %cst_250 = arith.constant 0.000000e+00 : f32
    %568 = vector.broadcast %cst_250 : f32 to vector<16x32xf32>
    %569 = arith.subf %568, %567 : vector<16x32xf32>
    %cst_251 = arith.constant dense<0.000000e+00> : vector<16x128xf32>
    %570 = tpu.matmul %569, %325, %cst_251 {dimension_numbers = #tpu.dot_dimension_numbers<[1], [0], [0], [1], [0, 0, 1, 1], [], []>} : vector<16x32xf32>, vector<32x128xf32>, vector<16x128xf32> -> vector<16x128xf32>
    %cst_252 = arith.constant dense<0.000000e+00> : vector<128xf32>
    %571 = vector.multi_reduction <add>, %570, %cst_252 [0] : vector<16x128xf32> to vector<128xf32>
    %572 = vector.shape_cast %571 : vector<128xf32> to vector<1x128xf32>
    %573 = arith.addf %450, %572 : vector<1x128xf32>
    %574 = arith.mulf %462, %462 : vector<16x32xf32>
    %cst_253 = arith.constant 1.83787704 : f32
    %575 = vector.broadcast %cst_253 : f32 to vector<16x32xf32>
    %576 = arith.addf %574, %575 : vector<16x32xf32>
    %cst_254 = arith.constant -5.000000e-01 : f32
    %577 = vector.broadcast %cst_254 : f32 to vector<16x32xf32>
    %578 = arith.mulf %577, %576 : vector<16x32xf32>
    %cst_255 = arith.constant dense<0.000000e+00> : vector<16x128xf32>
    %579 = tpu.matmul %578, %325, %cst_255 {dimension_numbers = #tpu.dot_dimension_numbers<[1], [0], [0], [1], [0, 0, 1, 1], [], []>} : vector<16x32xf32>, vector<32x128xf32>, vector<16x128xf32> -> vector<16x128xf32>
    %cst_256 = arith.constant dense<0.000000e+00> : vector<128xf32>
    %580 = vector.multi_reduction <add>, %579, %cst_256 [0] : vector<16x128xf32> to vector<128xf32>
    %581 = vector.shape_cast %580 : vector<128xf32> to vector<1x128xf32>
    %582 = arith.mulf %566, %566 : vector<16x32xf32>
    %cst_257 = arith.constant 1.83787704 : f32
    %583 = vector.broadcast %cst_257 : f32 to vector<16x32xf32>
    %584 = arith.addf %582, %583 : vector<16x32xf32>
    %cst_258 = arith.constant -5.000000e-01 : f32
    %585 = vector.broadcast %cst_258 : f32 to vector<16x32xf32>
    %586 = arith.mulf %585, %584 : vector<16x32xf32>
    %cst_259 = arith.constant dense<0.000000e+00> : vector<16x128xf32>
    %587 = tpu.matmul %586, %325, %cst_259 {dimension_numbers = #tpu.dot_dimension_numbers<[1], [0], [0], [1], [0, 0, 1, 1], [], []>} : vector<16x32xf32>, vector<32x128xf32>, vector<16x128xf32> -> vector<16x128xf32>
    %cst_260 = arith.constant dense<0.000000e+00> : vector<128xf32>
    %588 = vector.multi_reduction <add>, %587, %cst_260 [0] : vector<16x128xf32> to vector<128xf32>
    %589 = vector.shape_cast %588 : vector<128xf32> to vector<1x128xf32>
    %590 = arith.addf %581, %589 : vector<1x128xf32>
    %c0_261 = arith.constant 0 : index
    %c0_262 = arith.constant 0 : index
    %591 = vector.load %arg28[%c0_261, %c0_262] : memref<32x32xf32, #tpu.memory_space<vmem>>, vector<16x32xf32>
    tpu.vector_store %arg28[%c0_261, %c0_262], %462 {strides = array<i32>} : memref<32x32xf32, #tpu.memory_space<vmem>>, vector<16x32xf32>,
    %c16 = arith.constant 16 : index
    %c0_263 = arith.constant 0 : index
    %592 = vector.load %arg28[%c16, %c0_263] : memref<32x32xf32, #tpu.memory_space<vmem>>, vector<16x32xf32>
    tpu.vector_store %arg28[%c16, %c0_263], %566 {strides = array<i32>} : memref<32x32xf32, #tpu.memory_space<vmem>>, vector<16x32xf32>,
    %c0_264 = arith.constant 0 : index
    %c0_265 = arith.constant 0 : index
    %593 = vector.load %arg29[%c0_264, %c0_265] : memref<1x128xf32, #tpu.memory_space<vmem>>, vector<1x128xf32>
    tpu.vector_store %arg29[%c0_264, %c0_265], %573 {strides = array<i32>} : memref<1x128xf32, #tpu.memory_space<vmem>>, vector<1x128xf32>,
    %c0_266 = arith.constant 0 : index
    %c0_267 = arith.constant 0 : index
    %594 = vector.load %arg30[%c0_266, %c0_267] : memref<1x128xf32, #tpu.memory_space<vmem>>, vector<1x128xf32>
    tpu.vector_store %arg30[%c0_266, %c0_267], %590 {strides = array<i32>} : memref<1x128xf32, #tpu.memory_space<vmem>>, vector<1x128xf32>,
    return
  }
  func.func @transform_0(%arg0: i32) -> (i32, i32) {
    %c0_i32 = arith.constant 0 : i32
    %c0_i32_0 = arith.constant 0 : i32
    %c0_i32_1 = arith.constant 0 : i32
    return %c0_i32, %c0_i32_0 : i32, i32
  }
  func.func @transform_1(%arg0: i32) -> (i32, i32) {
    %c0_i32 = arith.constant 0 : i32
    %c0_i32_0 = arith.constant 0 : i32
    %c0_i32_1 = arith.constant 0 : i32
    return %c0_i32, %c0_i32_0 : i32, i32
  }
  func.func @transform_2(%arg0: i32) -> (i32, i32) {
    %c0_i32 = arith.constant 0 : i32
    %c0_i32_0 = arith.constant 0 : i32
    %c0_i32_1 = arith.constant 0 : i32
    return %c0_i32, %c0_i32_0 : i32, i32
  }
  func.func @transform_3(%arg0: i32) -> (i32, i32, i32) {
    %c0_i32 = arith.constant 0 : i32
    %c0_i32_0 = arith.constant 0 : i32
    %c0_i32_1 = arith.constant 0 : i32
    %c0_i32_2 = arith.constant 0 : i32
    return %c0_i32, %c0_i32_0, %c0_i32_1 : i32, i32, i32
  }
  func.func @transform_4(%arg0: i32) -> (i32, i32, i32) {
    %c0_i32 = arith.constant 0 : i32
    %c0_i32_0 = arith.constant 0 : i32
    %c0_i32_1 = arith.constant 0 : i32
    %c0_i32_2 = arith.constant 0 : i32
    return %c0_i32, %c0_i32_0, %c0_i32_1 : i32, i32, i32
  }
  func.func @transform_5(%arg0: i32) -> (i32, i32, i32) {
    %c0_i32 = arith.constant 0 : i32
    %c0_i32_0 = arith.constant 0 : i32
    %c0_i32_1 = arith.constant 0 : i32
    %c0_i32_2 = arith.constant 0 : i32
    return %c0_i32, %c0_i32_0, %c0_i32_1 : i32, i32, i32
  }
  func.func @transform_6(%arg0: i32) -> (i32, i32, i32) {
    %c0_i32 = arith.constant 0 : i32
    %c0_i32_0 = arith.constant 0 : i32
    %c0_i32_1 = arith.constant 0 : i32
    %c0_i32_2 = arith.constant 0 : i32
    return %c0_i32, %c0_i32_0, %c0_i32_1 : i32, i32, i32
  }
  func.func @transform_7(%arg0: i32) -> (i32, i32, i32) {
    %c0_i32 = arith.constant 0 : i32
    %c0_i32_0 = arith.constant 0 : i32
    %c0_i32_1 = arith.constant 0 : i32
    %c0_i32_2 = arith.constant 0 : i32
    return %c0_i32, %c0_i32_0, %c0_i32_1 : i32, i32, i32
  }
  func.func @transform_8(%arg0: i32) -> (i32, i32, i32) {
    %c0_i32 = arith.constant 0 : i32
    %c0_i32_0 = arith.constant 0 : i32
    %c0_i32_1 = arith.constant 0 : i32
    %c0_i32_2 = arith.constant 0 : i32
    return %c0_i32, %c0_i32_0, %c0_i32_1 : i32, i32, i32
  }
  func.func @transform_9(%arg0: i32) -> (i32, i32, i32) {
    %c0_i32 = arith.constant 0 : i32
    %c0_i32_0 = arith.constant 0 : i32
    %c0_i32_1 = arith.constant 0 : i32
    %c0_i32_2 = arith.constant 0 : i32
    return %c0_i32, %c0_i32_0, %c0_i32_1 : i32, i32, i32
  }
  func.func @transform_10(%arg0: i32) -> (i32, i32, i32) {
    %c0_i32 = arith.constant 0 : i32
    %c0_i32_0 = arith.constant 0 : i32
    %c0_i32_1 = arith.constant 0 : i32
    %c0_i32_2 = arith.constant 0 : i32
    return %c0_i32, %c0_i32_0, %c0_i32_1 : i32, i32, i32
  }
  func.func @transform_11(%arg0: i32) -> (i32, i32, i32) {
    %c0_i32 = arith.constant 0 : i32
    %c0_i32_0 = arith.constant 0 : i32
    %c0_i32_1 = arith.constant 0 : i32
    %c0_i32_2 = arith.constant 0 : i32
    return %c0_i32, %c0_i32_0, %c0_i32_1 : i32, i32, i32
  }
  func.func @transform_12(%arg0: i32) -> (i32, i32) {
    %c0_i32 = arith.constant 0 : i32
    %c0_i32_0 = arith.constant 0 : i32
    %c0_i32_1 = arith.constant 0 : i32
    return %c0_i32, %c0_i32_0 : i32, i32
  }
  func.func @transform_13(%arg0: i32) -> (i32, i32) {
    %c0_i32 = arith.constant 0 : i32
    %c0_i32_0 = arith.constant 0 : i32
    %c0_i32_1 = arith.constant 0 : i32
    return %c0_i32, %c0_i32_0 : i32, i32
  }
  func.func @transform_14(%arg0: i32) -> (i32, i32, i32) {
    %c0_i32 = arith.constant 0 : i32
    %c0_i32_0 = arith.constant 0 : i32
    %c0_i32_1 = arith.constant 0 : i32
    %c0_i32_2 = arith.constant 0 : i32
    return %c0_i32, %c0_i32_0, %c0_i32_1 : i32, i32, i32
  }
  func.func @transform_15(%arg0: i32) -> (i32, i32) {
    %c0_i32 = arith.constant 0 : i32
    %c0_i32_0 = arith.constant 0 : i32
    %c0_i32_1 = arith.constant 0 : i32
    return %c0_i32, %c0_i32_0 : i32, i32
  }
  func.func @transform_16(%arg0: i32) -> (i32, i32) {
    %c0_i32 = arith.constant 0 : i32
    %c0_i32_0 = arith.constant 0 : i32
    %c0_i32_1 = arith.constant 0 : i32
    return %c0_i32, %c0_i32_0 : i32, i32
  }
  func.func @transform_17(%arg0: i32) -> (i32, i32) {
    %c0_i32 = arith.constant 0 : i32
    %c0_i32_0 = arith.constant 0 : i32
    %c0_i32_1 = arith.constant 0 : i32
    return %c0_i32, %c0_i32_0 : i32, i32
  }
  func.func @transform_18(%arg0: i32) -> (i32, i32, i32) {
    %c0_i32 = arith.constant 0 : i32
    %c0_i32_0 = arith.constant 0 : i32
    %c0_i32_1 = arith.constant 0 : i32
    %c0_i32_2 = arith.constant 0 : i32
    return %c0_i32, %c0_i32_0, %c0_i32_1 : i32, i32, i32
  }
  func.func @transform_19(%arg0: i32) -> (i32, i32, i32) {
    %c0_i32 = arith.constant 0 : i32
    %c0_i32_0 = arith.constant 0 : i32
    %c0_i32_1 = arith.constant 0 : i32
    %c0_i32_2 = arith.constant 0 : i32
    return %c0_i32, %c0_i32_0, %c0_i32_1 : i32, i32, i32
  }
  func.func @transform_20(%arg0: i32) -> (i32, i32, i32) {
    %c0_i32 = arith.constant 0 : i32
    %c0_i32_0 = arith.constant 0 : i32
    %c0_i32_1 = arith.constant 0 : i32
    %c0_i32_2 = arith.constant 0 : i32
    return %c0_i32, %c0_i32_0, %c0_i32_1 : i32, i32, i32
  }
  func.func @transform_21(%arg0: i32) -> (i32, i32, i32) {
    %c0_i32 = arith.constant 0 : i32
    %c0_i32_0 = arith.constant 0 : i32
    %c0_i32_1 = arith.constant 0 : i32
    %c0_i32_2 = arith.constant 0 : i32
    return %c0_i32, %c0_i32_0, %c0_i32_1 : i32, i32, i32
  }
  func.func @transform_22(%arg0: i32) -> (i32, i32, i32) {
    %c0_i32 = arith.constant 0 : i32
    %c0_i32_0 = arith.constant 0 : i32
    %c0_i32_1 = arith.constant 0 : i32
    %c0_i32_2 = arith.constant 0 : i32
    return %c0_i32, %c0_i32_0, %c0_i32_1 : i32, i32, i32
  }
  func.func @transform_23(%arg0: i32) -> (i32, i32, i32) {
    %c0_i32 = arith.constant 0 : i32
    %c0_i32_0 = arith.constant 0 : i32
    %c0_i32_1 = arith.constant 0 : i32
    %c0_i32_2 = arith.constant 0 : i32
    return %c0_i32, %c0_i32_0, %c0_i32_1 : i32, i32, i32
  }
  func.func @transform_24(%arg0: i32) -> (i32, i32, i32) {
    %c0_i32 = arith.constant 0 : i32
    %c0_i32_0 = arith.constant 0 : i32
    %c0_i32_1 = arith.constant 0 : i32
    %c0_i32_2 = arith.constant 0 : i32
    return %c0_i32, %c0_i32_0, %c0_i32_1 : i32, i32, i32
  }
  func.func @transform_25(%arg0: i32) -> (i32, i32, i32) {
    %c0_i32 = arith.constant 0 : i32
    %c0_i32_0 = arith.constant 0 : i32
    %c0_i32_1 = arith.constant 0 : i32
    %c0_i32_2 = arith.constant 0 : i32
    return %c0_i32, %c0_i32_0, %c0_i32_1 : i32, i32, i32
  }
  func.func @transform_26(%arg0: i32) -> (i32, i32, i32) {
    %c0_i32 = arith.constant 0 : i32
    %c0_i32_0 = arith.constant 0 : i32
    %c0_i32_1 = arith.constant 0 : i32
    %c0_i32_2 = arith.constant 0 : i32
    return %c0_i32, %c0_i32_0, %c0_i32_1 : i32, i32, i32
  }
  func.func @transform_27(%arg0: i32) -> (i32, i32) {
    %c0_i32 = arith.constant 0 : i32
    %c0_i32_0 = arith.constant 0 : i32
    %c0_i32_1 = arith.constant 0 : i32
    return %c0_i32, %c0_i32_0 : i32, i32
  }
  func.func @transform_28(%arg0: i32) -> (i32, i32) {
    %c0_i32 = arith.constant 0 : i32
    %c0_i32_0 = arith.constant 0 : i32
    %c0_i32_1 = arith.constant 0 : i32
    return %c0_i32, %c0_i32_0 : i32, i32
  }
  func.func @transform_29(%arg0: i32) -> (i32, i32) {
    %c0_i32 = arith.constant 0 : i32
    %c0_i32_0 = arith.constant 0 : i32
    %c0_i32_1 = arith.constant 0 : i32
    return %c0_i32, %c0_i32_0 : i32, i32
  }
}

</mosaic_0001>

<llo_original>
// kernel: glow_normal_flow.1
$region0: #{glow_normal_flow.1}
  #allocation0 [shape = 'u32[]', space=smem, size = 0x4, offset = 0x4, fixed_abs, tag = 'smem constant byte address 0x4 - core index']
  #allocation1 [shape = 'u32[144,128]{1,0:T(1,128)}', space=vmem, size = 0x12000, scoped, tag = 'internal scratch']
  %s0 = inlined_call_operand.smem [shape: u32[30], index: -1, kind: input, shape index: {}]
  %s1 = sld [smem:[%s0]]
  %s2 = scalar_lea.smem %s0, 1
  %s3 = sld [smem:[%s2]]
  %s4 = scalar_lea.smem %s0, 2
  %s5 = sld [smem:[%s4]]
  %s6 = scalar_lea.smem %s0, 3
  %s7 = sld [smem:[%s6]]
  %s8 = scalar_lea.smem %s0, 4
  %s9 = sld [smem:[%s8]]
  %s10 = scalar_lea.smem %s0, 5
  %s11 = sld [smem:[%s10]]
  %s12 = scalar_lea.smem %s0, 6
  %s13 = sld [smem:[%s12]]
  %s14 = scalar_lea.smem %s0, 7
  %s15 = sld [smem:[%s14]]
  %s16 = scalar_lea.smem %s0, 8
  %s17 = sld [smem:[%s16]]
  %s18 = scalar_lea.smem %s0, 9
  %s19 = sld [smem:[%s18]]
  %s20 = scalar_lea.smem %s0, 10
  %s21 = sld [smem:[%s20]]
  %s22 = scalar_lea.smem %s0, 11
  %s23 = sld [smem:[%s22]]
  %s24 = scalar_lea.smem %s0, 12
  %s25 = sld [smem:[%s24]]
  %s26 = scalar_lea.smem %s0, 13
  %s27 = sld [smem:[%s26]]
  %s28 = scalar_lea.smem %s0, 14
  %s29 = sld [smem:[%s28]]
  %s30 = scalar_lea.smem %s0, 15
  %s31 = sld [smem:[%s30]]
  %s32 = scalar_lea.smem %s0, 16
  %s33 = sld [smem:[%s32]]
  %s34 = scalar_lea.smem %s0, 17
  %s35 = sld [smem:[%s34]]
  %s36 = scalar_lea.smem %s0, 18
  %s37 = sld [smem:[%s36]]
  %s38 = scalar_lea.smem %s0, 19
  %s39 = sld [smem:[%s38]]
  %s40 = scalar_lea.smem %s0, 20
  %s41 = sld [smem:[%s40]]
  %s42 = scalar_lea.smem %s0, 21
  %s43 = sld [smem:[%s42]]
  %s44 = scalar_lea.smem %s0, 22
  %s45 = sld [smem:[%s44]]
  %s46 = scalar_lea.smem %s0, 23
  %s47 = sld [smem:[%s46]]
  %s48 = scalar_lea.smem %s0, 24
  %s49 = sld [smem:[%s48]]
  %s50 = scalar_lea.smem %s0, 25
  %s51 = sld [smem:[%s50]]
  %s52 = scalar_lea.smem %s0, 26
  %s53 = sld [smem:[%s52]]
  %s54 = scalar_lea.smem %s0, 27
  %s55 = sld [smem:[%s54]]
  %s56 = scalar_lea.smem %s0, 28
  %s57 = sld [smem:[%s56]]
  %s58 = scalar_lea.smem %s0, 29
  %s59 = sld [smem:[%s58]]
  %60 = xla_tuple %s55, %s57, %s59
  %s61 = sld [smem:[#allocation0]]
  $region134: #{glow_normal_flow.1} parent=0
    _
  %s63 = ssub.s32 1, %s61
  %s64 = scalar_select 0, %s63, %s61
  // Predicated region
  $region2: #{glow_normal_flow.1} parent=0 // pred_check
    _
  $region3: #{glow_normal_flow.1} parent=0 // pred_check_branch
    %66 = sbr.rel (0) target = $region5
  $region4: #{glow_normal_flow.1} parent=0 // pred_region
    _
  $region5: #{glow_normal_flow.1} parent=0 // pred_fallthru
    _
  // Predicated region
  $region6: #{glow_normal_flow.1} parent=0 // pred_check
    _
  $region7: #{glow_normal_flow.1} parent=0 // pred_check_branch
    %68 = sbr.rel (0) target = $region9
  $region8: #{glow_normal_flow.1} parent=0 // pred_region
    _
  $region9: #{glow_normal_flow.1} parent=0 // pred_fallthru
    _
  // Predicated region
  $region10: #{glow_normal_flow.1} parent=0 // pred_check
    _
  $region11: #{glow_normal_flow.1} parent=0 // pred_check_branch
    %70 = sbr.rel (0) target = $region13
  $region12: #{glow_normal_flow.1} parent=0 // pred_region
    _
  $region13: #{glow_normal_flow.1} parent=0 // pred_fallthru
    _
  // Predicated region
  $region14: #{glow_normal_flow.1} parent=0 // pred_check
    _
  $region15: #{glow_normal_flow.1} parent=0 // pred_check_branch
    %72 = sbr.rel (0) target = $region17
  $region16: #{glow_normal_flow.1} parent=0 // pred_region
    _
  $region17: #{glow_normal_flow.1} parent=0 // pred_fallthru
    _
  // Predicated region
  $region18: #{glow_normal_flow.1} parent=0 // pred_check
    _
  $region19: #{glow_normal_flow.1} parent=0 // pred_check_branch
    %74 = sbr.rel (0) target = $region21
  $region20: #{glow_normal_flow.1} parent=0 // pred_region
    _
  $region21: #{glow_normal_flow.1} parent=0 // pred_fallthru
    _
  // Predicated region
  $region22: #{glow_normal_flow.1} parent=0 // pred_check
    _
  $region23: #{glow_normal_flow.1} parent=0 // pred_check_branch
    %76 = sbr.rel (0) target = $region25
  $region24: #{glow_normal_flow.1} parent=0 // pred_region
    _
  $region25: #{glow_normal_flow.1} parent=0 // pred_fallthru
    _
  // Predicated region
  $region26: #{glow_normal_flow.1} parent=0 // pred_check
    _
  $region27: #{glow_normal_flow.1} parent=0 // pred_check_branch
    %78 = sbr.rel (0) target = $region29
  $region28: #{glow_normal_flow.1} parent=0 // pred_region
    _
  $region29: #{glow_normal_flow.1} parent=0 // pred_fallthru
    _
  // Predicated region
  $region30: #{glow_normal_flow.1} parent=0 // pred_check
    _
  $region31: #{glow_normal_flow.1} parent=0 // pred_check_branch
    %80 = sbr.rel (0) target = $region33
  $region32: #{glow_normal_flow.1} parent=0 // pred_region
    _
  $region33: #{glow_normal_flow.1} parent=0 // pred_fallthru
    _
  // Predicated region
  $region34: #{glow_normal_flow.1} parent=0 // pred_check
    _
  $region35: #{glow_normal_flow.1} parent=0 // pred_check_branch
    %82 = sbr.rel (0) target = $region37
  $region36: #{glow_normal_flow.1} parent=0 // pred_region
    _
  $region37: #{glow_normal_flow.1} parent=0 // pred_fallthru
    _
  // Predicated region
  $region38: #{glow_normal_flow.1} parent=0 // pred_check
    _
  $region39: #{glow_normal_flow.1} parent=0 // pred_check_branch
    %84 = sbr.rel (0) target = $region41
  $region40: #{glow_normal_flow.1} parent=0 // pred_region
    _
  $region41: #{glow_normal_flow.1} parent=0 // pred_fallthru
    _
  // Predicated region
  $region42: #{glow_normal_flow.1} parent=0 // pred_check
    _
  $region43: #{glow_normal_flow.1} parent=0 // pred_check_branch
    %86 = sbr.rel (0) target = $region45
  $region44: #{glow_normal_flow.1} parent=0 // pred_region
    _
  $region45: #{glow_normal_flow.1} parent=0 // pred_fallthru
    _
  // Predicated region
  $region46: #{glow_normal_flow.1} parent=0 // pred_check
    _
  $region47: #{glow_normal_flow.1} parent=0 // pred_check_branch
    %88 = sbr.rel (0) target = $region49
  $region48: #{glow_normal_flow.1} parent=0 // pred_region
    _
  $region49: #{glow_normal_flow.1} parent=0 // pred_fallthru
    _
  // Predicated region
  $region50: #{glow_normal_flow.1} parent=0 // pred_check
    _
  $region51: #{glow_normal_flow.1} parent=0 // pred_check_branch
    %90 = sbr.rel (0) target = $region53
  $region52: #{glow_normal_flow.1} parent=0 // pred_region
    _
  $region53: #{glow_normal_flow.1} parent=0 // pred_fallthru
    _
  // Predicated region
  $region54: #{glow_normal_flow.1} parent=0 // pred_check
    _
  $region55: #{glow_normal_flow.1} parent=0 // pred_check_branch
    %92 = sbr.rel (0) target = $region57
  $region56: #{glow_normal_flow.1} parent=0 // pred_region
    _
  $region57: #{glow_normal_flow.1} parent=0 // pred_fallthru
    _
  // Predicated region
  $region58: #{glow_normal_flow.1} parent=0 // pred_check
    _
  $region59: #{glow_normal_flow.1} parent=0 // pred_check_branch
    %94 = sbr.rel (0) target = $region61
  $region60: #{glow_normal_flow.1} parent=0 // pred_region
    _
  $region61: #{glow_normal_flow.1} parent=0 // pred_fallthru
    _
  // Predicated region
  $region62: #{glow_normal_flow.1} parent=0 // pred_check
    _
  $region63: #{glow_normal_flow.1} parent=0 // pred_check_branch
    %96 = sbr.rel (0) target = $region65
  $region64: #{glow_normal_flow.1} parent=0 // pred_region
    _
  $region65: #{glow_normal_flow.1} parent=0 // pred_fallthru
    _
  // Predicated region
  $region66: #{glow_normal_flow.1} parent=0 // pred_check
    _
  $region67: #{glow_normal_flow.1} parent=0 // pred_check_branch
    %98 = sbr.rel (0) target = $region69
  $region68: #{glow_normal_flow.1} parent=0 // pred_region
    _
  $region69: #{glow_normal_flow.1} parent=0 // pred_fallthru
    _
  // Predicated region
  $region70: #{glow_normal_flow.1} parent=0 // pred_check
    _
  $region71: #{glow_normal_flow.1} parent=0 // pred_check_branch
    %100 = sbr.rel (0) target = $region73
  $region72: #{glow_normal_flow.1} parent=0 // pred_region
    _
  $region73: #{glow_normal_flow.1} parent=0 // pred_fallthru
    _
  // Predicated region
  $region74: #{glow_normal_flow.1} parent=0 // pred_check
    _
  $region75: #{glow_normal_flow.1} parent=0 // pred_check_branch
    %102 = sbr.rel (0) target = $region77
  $region76: #{glow_normal_flow.1} parent=0 // pred_region
    _
  $region77: #{glow_normal_flow.1} parent=0 // pred_fallthru
    _
  // Predicated region
  $region78: #{glow_normal_flow.1} parent=0 // pred_check
    _
  $region79: #{glow_normal_flow.1} parent=0 // pred_check_branch
    %104 = sbr.rel (0) target = $region81
  $region80: #{glow_normal_flow.1} parent=0 // pred_region
    _
  $region81: #{glow_normal_flow.1} parent=0 // pred_fallthru
    _
  // Predicated region
  $region82: #{glow_normal_flow.1} parent=0 // pred_check
    _
  $region83: #{glow_normal_flow.1} parent=0 // pred_check_branch
    %106 = sbr.rel (0) target = $region85
  $region84: #{glow_normal_flow.1} parent=0 // pred_region
    _
  $region85: #{glow_normal_flow.1} parent=0 // pred_fallthru
    _
  // Predicated region
  $region86: #{glow_normal_flow.1} parent=0 // pred_check
    _
  $region87: #{glow_normal_flow.1} parent=0 // pred_check_branch
    %108 = sbr.rel (0) target = $region89
  $region88: #{glow_normal_flow.1} parent=0 // pred_region
    _
  $region89: #{glow_normal_flow.1} parent=0 // pred_fallthru
    _
  // Predicated region
  $region90: #{glow_normal_flow.1} parent=0 // pred_check
    _
  $region91: #{glow_normal_flow.1} parent=0 // pred_check_branch
    %110 = sbr.rel (0) target = $region93
  $region92: #{glow_normal_flow.1} parent=0 // pred_region
    _
  $region93: #{glow_normal_flow.1} parent=0 // pred_fallthru
    _
  // Predicated region
  $region94: #{glow_normal_flow.1} parent=0 // pred_check
    _
  $region95: #{glow_normal_flow.1} parent=0 // pred_check_branch
    %112 = sbr.rel (0) target = $region97
  $region96: #{glow_normal_flow.1} parent=0 // pred_region
    _
  $region97: #{glow_normal_flow.1} parent=0 // pred_fallthru
    _
  // Predicated region
  $region98: #{glow_normal_flow.1} parent=0 // pred_check
    _
  $region99: #{glow_normal_flow.1} parent=0 // pred_check_branch
    %114 = sbr.rel (0) target = $region101
  $region100: #{glow_normal_flow.1} parent=0 // pred_region
    _
  $region101: #{glow_normal_flow.1} parent=0 // pred_fallthru
    _
  // Predicated region
  $region102: #{glow_normal_flow.1} parent=0 // pred_check
    _
  $region103: #{glow_normal_flow.1} parent=0 // pred_check_branch
    %116 = sbr.rel (0) target = $region105
  $region104: #{glow_normal_flow.1} parent=0 // pred_region
    _
  $region105: #{glow_normal_flow.1} parent=0 // pred_fallthru
    _
  // Predicated region
  $region106: #{glow_normal_flow.1} parent=0 // pred_check
    _
  $region107: #{glow_normal_flow.1} parent=0 // pred_check_branch
    %118 = sbr.rel (0) target = $region109
  $region108: #{glow_normal_flow.1} parent=0 // pred_region
    _
  $region109: #{glow_normal_flow.1} parent=0 // pred_fallthru
    _
  %v119 = vld [vmem:[%s1] sm:$0xff]
  %v120 = vld [vmem:[%s1 + $0x8] sm:$0xff]
  %v121 = vld [vmem:[%s3] sm:$0xff]
  %v122 = vld [vmem:[%s3 + $0x8] sm:$0x1]
  %v123 = vld [vmem:[%s5] sm:$0xff]
  %v124 = vld [vmem:[%s5 + $0x8] sm:$0xff]
  %v125 = vld [vmem:[%s5 + $0x10] sm:$0xff]
  %v126 = vld [vmem:[%s5 + $0x18] sm:$0xff]
  %v127 = vld [vmem:[%s5 + $0x20] sm:$0xff]
  %v128 = vld [vmem:[%s5 + $0x28] sm:$0xff]
  %v129 = vld [vmem:[%s5 + $0x30] sm:$0xff]
  %v130 = vld [vmem:[%s5 + $0x38] sm:$0xff]
  %v131 = vld [vmem:[%s5 + $0x40] sm:$0xff]
  %v132 = vld [vmem:[%s5 + $0x48] sm:$0xff]
  %v133 = vld [vmem:[%s5 + $0x50] sm:$0xff]
  %v134 = vld [vmem:[%s5 + $0x58] sm:$0xff]
  %v135 = vld [vmem:[%s5 + $0x60] sm:$0xff]
  %v136 = vld [vmem:[%s5 + $0x68] sm:$0xff]
  %v137 = vld [vmem:[%s5 + $0x70] sm:$0xff]
  %v138 = vld [vmem:[%s5 + $0x78] sm:$0xff]
  %v139 = vld [vmem:[%s7] sm:$0xff]
  %v140 = vld [vmem:[%s7 + $0x8] sm:$0xff]
  %v141 = vld [vmem:[%s9] sm:$0xff]
  %v142 = vld [vmem:[%s9 + $0x8] sm:$0xff]
  %vm143 = vcmask 64512
  %v145 = vsel %vm143, %v141, 0
  %v148 = vsel %vm143, %v142, 0
  %150 = vmatprep.subr.mxu0 0.0
  %151 = vmatpush1.msra.mxu0 %v120
  %152 = vmatprep.subr.mxu0 0.0
  %153 = vmatpush1.msra.mxu0 0.0
  %154 = vmatprep.subr.mxu0 0.0
  %155 = vmatpush1.msra.mxu0 0.0
  %156 = vmatprep.subr.mxu0 0.0
  %157 = vmatpush1.msra.mxu0 0.0
  %158 = vmatprep.subr.mxu0 0.0
  %159 = vmatpush1.msra.mxu0 0.0
  %160 = vmatprep.subr.mxu0 0.0
  %161 = vmatpush1.msra.mxu0 0.0
  %162 = vmatprep.subr.mxu0 0.0
  %163 = vmatpush1.msra.mxu0 0.0
  %164 = vmatprep.subr.mxu0 0.0
  %165 = vmatpush1.msra.mxu0 0.0
  %166 = vmatprep.subr.mxu0 0.0
  %167 = vmatpush1.msra.mxu0 0.0
  %168 = vmatprep.subr.mxu0 0.0
  %169 = vmatpush1.msra.mxu0 0.0
  %170 = vmatprep.subr.mxu0 0.0
  %171 = vmatpush1.msra.mxu0 0.0
  %172 = vmatprep.subr.mxu0 0.0
  %173 = vmatpush1.msra.mxu0 0.0
  %174 = vmatprep.subr.mxu0 0.0
  %175 = vmatpush1.msra.mxu0 0.0
  %176 = vmatprep.subr.mxu0 0.0
  %177 = vmatpush1.msra.mxu0 0.0
  %178 = vmatprep.subr.mxu0 0.0
  %179 = vmatpush1.msra.mxu0 0.0
  %180 = vmatprep.subr.mxu0 0.0
  %181 = vmatpush1.msra.mxu0 0.0
  %182 = vmatprep.subr.mxu0 0.0
  %183 = vmatpush1.msra.mxu0 0.0
  %184 = vmatprep.subr.mxu0 0.0
  %185 = vmatpush1.msra.mxu0 0.0
  %186 = vmatprep.subr.mxu0 0.0
  %187 = vmatpush1.msra.mxu0 0.0
  %188 = vmatprep.subr.mxu0 0.0
  %189 = vmatpush1.msra.mxu0 0.0
  %190 = vmatprep.subr.mxu0 0.0
  %191 = vmatpush1.msra.mxu0 0.0
  %192 = vmatprep.subr.mxu0 0.0
  %193 = vmatpush1.msra.mxu0 0.0
  %194 = vmatprep.subr.mxu0 0.0
  %195 = vmatpush1.msra.mxu0 0.0
  %196 = vmatprep.subr.mxu0 0.0
  %197 = vmatpush1.msra.mxu0 0.0
  %198 = vmatprep.subr.mxu0 0.0
  %199 = vmatpush1.msra.mxu0 0.0
  %200 = vmatprep.subr.mxu0 0.0
  %201 = vmatpush1.msra.mxu0 0.0
  %202 = vmatprep.subr.mxu0 0.0
  %203 = vmatpush1.msra.mxu0 0.0
  %204 = vmatprep.subr.mxu0 0.0
  %205 = vmatpush1.msra.mxu0 0.0
  %206 = vmatprep.subr.mxu0 0.0
  %207 = vmatpush1.msra.mxu0 0.0
  %208 = vmatprep.subr.mxu0 0.0
  %209 = vmatpush1.msra.mxu0 0.0
  %210 = vmatprep.subr.mxu0 0.0
  %211 = vmatpush1.msra.mxu0 0.0
  %212 = vmatprep.subr.mxu0 0.0
  %213 = vmatpush1.msra.mxu0 0.0
  %214 = vmatprep.mubr.f32.mxu0 0.0
  %215 = vmatmul.mubr.f32.gmra.mrb[0].mxu0 %v145
  %v216 = vpop.f32.mrb[0].mxu0
  %v217 = vadd.f32 0.0, %v216
  %v218 = vpop.f32.mrb[0].mxu0
  %219 = vmatprep.mubr.f32.mxu0 0.0
  %220 = vmatmul.mubr.f32.gmra.mrb[0].mxu0 %v148
  %v221 = vpop.f32.mrb[0].mxu0
  %v222 = vadd.f32 0.0, %v221
  %v223 = vpop.f32.mrb[0].mxu0
  %224 = vdwg.mxu0
  %v226 = vsel %vm143, %v139, 0
  %v229 = vsel %vm143, %v140, 0
  %231 = vmatprep.subr.mxu0 0.0
  %232 = vmatpush1.msra.mxu0 %v119
  %233 = vmatprep.subr.mxu0 0.0
  %234 = vmatpush1.msra.mxu0 0.0
  %235 = vmatprep.subr.mxu0 0.0
  %236 = vmatpush1.msra.mxu0 0.0
  %237 = vmatprep.subr.mxu0 0.0
  %238 = vmatpush1.msra.mxu0 0.0
  %239 = vmatprep.subr.mxu0 0.0
  %240 = vmatpush1.msra.mxu0 0.0
  %241 = vmatprep.subr.mxu0 0.0
  %242 = vmatpush1.msra.mxu0 0.0
  %243 = vmatprep.subr.mxu0 0.0
  %244 = vmatpush1.msra.mxu0 0.0
  %245 = vmatprep.subr.mxu0 0.0
  %246 = vmatpush1.msra.mxu0 0.0
  %247 = vmatprep.subr.mxu0 0.0
  %248 = vmatpush1.msra.mxu0 0.0
  %249 = vmatprep.subr.mxu0 0.0
  %250 = vmatpush1.msra.mxu0 0.0
  %251 = vmatprep.subr.mxu0 0.0
  %252 = vmatpush1.msra.mxu0 0.0
  %253 = vmatprep.subr.mxu0 0.0
  %254 = vmatpush1.msra.mxu0 0.0
  %255 = vmatprep.subr.mxu0 0.0
  %256 = vmatpush1.msra.mxu0 0.0
  %257 = vmatprep.subr.mxu0 0.0
  %258 = vmatpush1.msra.mxu0 0.0
  %259 = vmatprep.subr.mxu0 0.0
  %260 = vmatpush1.msra.mxu0 0.0
  %261 = vmatprep.subr.mxu0 0.0
  %262 = vmatpush1.msra.mxu0 0.0
  %263 = vmatprep.subr.mxu0 0.0
  %264 = vmatpush1.msra.mxu0 0.0
  %265 = vmatprep.subr.mxu0 0.0
  %266 = vmatpush1.msra.mxu0 0.0
  %267 = vmatprep.subr.mxu0 0.0
  %268 = vmatpush1.msra.mxu0 0.0
  %269 = vmatprep.subr.mxu0 0.0
  %270 = vmatpush1.msra.mxu0 0.0
  %271 = vmatprep.subr.mxu0 0.0
  %272 = vmatpush1.msra.mxu0 0.0
  %273 = vmatprep.subr.mxu0 0.0
  %274 = vmatpush1.msra.mxu0 0.0
  %275 = vmatprep.subr.mxu0 0.0
  %276 = vmatpush1.msra.mxu0 0.0
  %277 = vmatprep.subr.mxu0 0.0
  %278 = vmatpush1.msra.mxu0 0.0
  %279 = vmatprep.subr.mxu0 0.0
  %280 = vmatpush1.msra.mxu0 0.0
  %281 = vmatprep.subr.mxu0 0.0
  %282 = vmatpush1.msra.mxu0 0.0
  %283 = vmatprep.subr.mxu0 0.0
  %284 = vmatpush1.msra.mxu0 0.0
  %285 = vmatprep.subr.mxu0 0.0
  %286 = vmatpush1.msra.mxu0 0.0
  %287 = vmatprep.subr.mxu0 0.0
  %288 = vmatpush1.msra.mxu0 0.0
  %289 = vmatprep.subr.mxu0 0.0
  %290 = vmatpush1.msra.mxu0 0.0
  %291 = vmatprep.subr.mxu0 0.0
  %292 = vmatpush1.msra.mxu0 0.0
  %293 = vmatprep.subr.mxu0 0.0
  %294 = vmatpush1.msra.mxu0 0.0
  %295 = vmatprep.mubr.f32.mxu0 0.0
  %296 = vmatmul.mubr.f32.gmra.mrb[0].mxu0 %v226
  %v297 = vpop.f32.mrb[0].mxu0
  %v298 = vadd.f32 %v217, %v297
  %v299 = vpop.f32.mrb[0].mxu0
  %300 = vmatprep.mubr.f32.mxu0 0.0
  %301 = vmatmul.mubr.f32.gmra.mrb[0].mxu0 %v229
  %v302 = vpop.f32.mrb[0].mxu0
  %v303 = vadd.f32 %v222, %v302
  %v304 = vpop.f32.mrb[0].mxu0
  %305 = vdwg.mxu0
  %v306 = vld [vmem:[%s11] sm:$0xff]
  %v307 = vld [vmem:[%s11 + $0x8] sm:$0xff]
  %309 = vset.pattern.permute.xlu0 0
  %310 = vperm.xlu0 %309, %v306
  %v311 = vpop.permute.xlu0 %310
  %314 = vset.pattern.permute.xlu0 0
  %315 = vperm.xlu0 %314, %v307
  %v316 = vpop.permute.xlu0 %315
  %v318 = vadd.f32 %v298, %v311
  %v319 = vadd.f32 %v303, %v316
  %v320 = vld [vmem:[%s13] sm:$0xff]
  %v321 = vld [vmem:[%s13 + $0x8] sm:$0xff]
  %v322 = vld [vmem:[%s13 + $0x10] sm:$0xff]
  %v323 = vld [vmem:[%s13 + $0x18] sm:$0xff]
  %324 = vrot.lane.b32.xlu0 %v318, 9
  %v325 = vpop.permute.xlu0 %324
  %v326 = vlaneseq
  %v327 = vshrl.u32 %v326, 7
  %v328 = vsub.s32 0, %v327
  %v329 = vrot.slane %v121, %v328
  %v330 = vmul.f32 %v325, %v329
  %331 = vrot.lane.b32.xlu0 %v318, 8
  %v332 = vpop.permute.xlu0 %331
  %v333 = vlaneseq
  %v334 = vshrl.u32 %v333, 7
  %v335 = vsub.s32 1, %v334
  %v336 = vrot.slane %v121, %v335
  %v337 = vmul.f32 %v332, %v336
  %338 = vrot.lane.b32.xlu0 %v318, 7
  %v339 = vpop.permute.xlu0 %338
  %v340 = vlaneseq
  %v341 = vshrl.u32 %v340, 7
  %v342 = vsub.s32 2, %v341
  %v343 = vrot.slane %v121, %v342
  %v344 = vmul.f32 %v339, %v343
  %345 = vrot.lane.b32.xlu0 %v318, 1
  %v346 = vpop.permute.xlu0 %345
  %v347 = vlaneseq
  %v348 = vshrl.u32 %v347, 7
  %v349 = vsub.s32 3, %v348
  %v350 = vrot.slane %v121, %v349
  %v351 = vmul.f32 %v346, %v350
  %352 = vrot.lane.b32.xlu0 %v318, 127
  %v353 = vpop.permute.xlu0 %352
  %v354 = vlaneseq
  %v355 = vshrl.u32 %v354, 7
  %v356 = vsub.s32 5, %v355
  %v357 = vrot.slane %v121, %v356
  %v358 = vmul.f32 %v353, %v357
  %359 = vrot.lane.b32.xlu0 %v318, 121
  %v360 = vpop.permute.xlu0 %359
  %v361 = vlaneseq
  %v362 = vshrl.u32 %v361, 7
  %v363 = vsub.s32 6, %v362
  %v364 = vrot.slane %v121, %v363
  %v365 = vmul.f32 %v360, %v364
  %366 = vrot.lane.b32.xlu0 %v318, 120
  %v367 = vpop.permute.xlu0 %366
  %v368 = vlaneseq
  %v369 = vshrl.u32 %v368, 7
  %v370 = vsub.s32 7, %v369
  %v371 = vrot.slane %v121, %v370
  %v372 = vmul.f32 %v367, %v371
  %373 = vrot.lane.b32.xlu0 %v318, 119
  %v374 = vpop.permute.xlu0 %373
  %v375 = vlaneseq
  %v376 = vshrl.u32 %v375, 7
  %v377 = vsub.s32 0, %v376
  %v378 = vrot.slane %v122, %v377
  %v379 = vmul.f32 %v374, %v378
  %v380 = vld [vmem:[%s15] sm:$0xff]
  %v381 = vld [vmem:[%s15 + $0x8] sm:$0xff]
  %v382 = vld [vmem:[%s15 + $0x10] sm:$0xff]
  %v383 = vld [vmem:[%s15 + $0x18] sm:$0xff]
  %385 = vset.pattern.permute.xlu0 0
  %386 = vperm.xlu0 %385, %v380
  %v387 = vpop.permute.xlu0 %386
  %390 = vset.pattern.permute.xlu0 0
  %391 = vperm.xlu0 %390, %v381
  %v392 = vpop.permute.xlu0 %391
  %395 = vset.pattern.permute.xlu0 0
  %396 = vperm.xlu0 %395, %v382
  %v397 = vpop.permute.xlu0 %396
  %400 = vset.pattern.permute.xlu0 0
  %401 = vperm.xlu0 %400, %v383
  %v402 = vpop.permute.xlu0 %401
  %vm404 = vcmask 588800
  %v406 = vsel %vm404, %v320, 0
  %v409 = vsel %vm404, %v321, 0
  %v412 = vsel %vm404, %v322, 0
  %v415 = vsel %vm404, %v323, 0
  %417 = vmatprep.subr.mxu0 0.0
  %418 = vmatpush1.msra.mxu0 %v330
  %419 = vmatprep.subr.mxu0 0.0
  %420 = vmatpush1.msra.mxu0 %v337
  %421 = vmatprep.subr.mxu0 0.0
  %422 = vmatpush1.msra.mxu0 %v344
  %423 = vmatprep.subr.mxu0 0.0
  %424 = vmatpush1.msra.mxu0 %v351
  %425 = vmatprep.subr.mxu0 0.0
  %426 = vmatpush1.msra.mxu0 %v318
  %427 = vmatprep.subr.mxu0 0.0
  %428 = vmatpush1.msra.mxu0 %v358
  %429 = vmatprep.subr.mxu0 0.0
  %430 = vmatpush1.msra.mxu0 %v365
  %431 = vmatprep.subr.mxu0 0.0
  %432 = vmatpush1.msra.mxu0 %v372
  %433 = vmatprep.subr.mxu0 0.0
  %434 = vmatpush1.msra.mxu0 %v379
  %435 = vmatprep.subr.mxu0 0.0
  %436 = vmatpush1.msra.mxu0 0.0
  %437 = vmatprep.subr.mxu0 0.0
  %438 = vmatpush1.msra.mxu0 0.0
  %439 = vmatprep.subr.mxu0 0.0
  %440 = vmatpush1.msra.mxu0 0.0
  %441 = vmatprep.subr.mxu0 0.0
  %442 = vmatpush1.msra.mxu0 0.0
  %443 = vmatprep.subr.mxu0 0.0
  %444 = vmatpush1.msra.mxu0 0.0
  %445 = vmatprep.subr.mxu0 0.0
  %446 = vmatpush1.msra.mxu0 0.0
  %447 = vmatprep.subr.mxu0 0.0
  %448 = vmatpush1.msra.mxu0 0.0
  %449 = vmatprep.subr.mxu0 0.0
  %450 = vmatpush1.msra.mxu0 0.0
  %451 = vmatprep.subr.mxu0 0.0
  %452 = vmatpush1.msra.mxu0 0.0
  %453 = vmatprep.subr.mxu0 0.0
  %454 = vmatpush1.msra.mxu0 0.0
  %455 = vmatprep.subr.mxu0 0.0
  %456 = vmatpush1.msra.mxu0 0.0
  %457 = vmatprep.subr.mxu0 0.0
  %458 = vmatpush1.msra.mxu0 0.0
  %459 = vmatprep.subr.mxu0 0.0
  %460 = vmatpush1.msra.mxu0 0.0
  %461 = vmatprep.subr.mxu0 0.0
  %462 = vmatpush1.msra.mxu0 0.0
  %463 = vmatprep.subr.mxu0 0.0
  %464 = vmatpush1.msra.mxu0 0.0
  %465 = vmatprep.subr.mxu0 0.0
  %466 = vmatpush1.msra.mxu0 0.0
  %467 = vmatprep.subr.mxu0 0.0
  %468 = vmatpush1.msra.mxu0 0.0
  %469 = vmatprep.subr.mxu0 0.0
  %470 = vmatpush1.msra.mxu0 0.0
  %471 = vmatprep.subr.mxu0 0.0
  %472 = vmatpush1.msra.mxu0 0.0
  %473 = vmatprep.subr.mxu0 0.0
  %474 = vmatpush1.msra.mxu0 0.0
  %475 = vmatprep.subr.mxu0 0.0
  %476 = vmatpush1.msra.mxu0 0.0
  %477 = vmatprep.subr.mxu0 0.0
  %478 = vmatpush1.msra.mxu0 0.0
  %479 = vmatprep.subr.mxu0 0.0
  %480 = vmatpush1.msra.mxu0 0.0
  %481 = vmatprep.mubr.f32.mxu0 0.0
  %482 = vmatmul.mubr.f32.gmra.mrb[0].mxu0 %v406
  %v483 = vpop.f32.mrb[0].mxu0
  %v484 = vadd.f32 %v387, %v483
  %v485 = vpop.f32.mrb[0].mxu0
  %486 = vmatprep.mubr.f32.mxu0 0.0
  %487 = vmatmul.mubr.f32.gmra.mrb[0].mxu0 %v409
  %v488 = vpop.f32.mrb[0].mxu0
  %v489 = vadd.f32 %v392, %v488
  %v490 = vpop.f32.mrb[0].mxu0
  %491 = vmatprep.mubr.f32.mxu0 0.0
  %492 = vmatmul.mubr.f32.gmra.mrb[0].mxu0 %v412
  %v493 = vpop.f32.mrb[0].mxu0
  %v494 = vadd.f32 %v397, %v493
  %v495 = vpop.f32.mrb[0].mxu0
  %496 = vmatprep.mubr.f32.mxu0 0.0
  %497 = vmatmul.mubr.f32.gmra.mrb[0].mxu0 %v415
  %v498 = vpop.f32.mrb[0].mxu0
  %v499 = vadd.f32 %v402, %v498
  %v500 = vpop.f32.mrb[0].mxu0
  %501 = vdwg.mxu0
  %v502 = vmax.f32 %v484, 0.0
  %v503 = vmax.f32 %v489, 0.0
  %v504 = vmax.f32 %v494, 0.0
  %v505 = vmax.f32 %v499, 0.0
  %v506 = vld [vmem:[%s17] sm:$0xff]
  %v507 = vld [vmem:[%s17 + $0x8] sm:$0xff]
  %v508 = vld [vmem:[%s17 + $0x10] sm:$0xff]
  %v509 = vld [vmem:[%s17 + $0x18] sm:$0xff]
  %v510 = vld [vmem:[%s19] sm:$0xff]
  %v511 = vld [vmem:[%s19 + $0x8] sm:$0xff]
  %v512 = vld [vmem:[%s19 + $0x10] sm:$0xff]
  %v513 = vld [vmem:[%s19 + $0x18] sm:$0xff]
  %515 = vset.pattern.permute.xlu0 0
  %516 = vperm.xlu0 %515, %v510
  %v517 = vpop.permute.xlu0 %516
  %520 = vset.pattern.permute.xlu0 0
  %521 = vperm.xlu0 %520, %v511
  %v522 = vpop.permute.xlu0 %521
  %525 = vset.pattern.permute.xlu0 0
  %526 = vperm.xlu0 %525, %v512
  %v527 = vpop.permute.xlu0 %526
  %530 = vset.pattern.permute.xlu0 0
  %531 = vperm.xlu0 %530, %v513
  %v532 = vpop.permute.xlu0 %531
  %vm534 = vcmask 261120
  %v536 = vsel %vm534, %v506, 0
  %v539 = vsel %vm534, %v507, 0
  %v542 = vsel %vm534, %v508, 0
  %v545 = vsel %vm534, %v509, 0
  %547 = vmatprep.subr.mxu0 0.0
  %548 = vmatpush1.msra.mxu0 %v502
  %549 = vmatprep.subr.mxu0 0.0
  %550 = vmatpush1.msra.mxu0 %v503
  %551 = vmatprep.subr.mxu0 0.0
  %552 = vmatpush1.msra.mxu0 %v504
  %553 = vmatprep.subr.mxu0 0.0
  %554 = vmatpush1.msra.mxu0 %v505
  %555 = vmatprep.subr.mxu0 0.0
  %556 = vmatpush1.msra.mxu0 0.0
  %557 = vmatprep.subr.mxu0 0.0
  %558 = vmatpush1.msra.mxu0 0.0
  %559 = vmatprep.subr.mxu0 0.0
  %560 = vmatpush1.msra.mxu0 0.0
  %561 = vmatprep.subr.mxu0 0.0
  %562 = vmatpush1.msra.mxu0 0.0
  %563 = vmatprep.subr.mxu0 0.0
  %564 = vmatpush1.msra.mxu0 0.0
  %565 = vmatprep.subr.mxu0 0.0
  %566 = vmatpush1.msra.mxu0 0.0
  %567 = vmatprep.subr.mxu0 0.0
  %568 = vmatpush1.msra.mxu0 0.0
  %569 = vmatprep.subr.mxu0 0.0
  %570 = vmatpush1.msra.mxu0 0.0
  %571 = vmatprep.subr.mxu0 0.0
  %572 = vmatpush1.msra.mxu0 0.0
  %573 = vmatprep.subr.mxu0 0.0
  %574 = vmatpush1.msra.mxu0 0.0
  %575 = vmatprep.subr.mxu0 0.0
  %576 = vmatpush1.msra.mxu0 0.0
  %577 = vmatprep.subr.mxu0 0.0
  %578 = vmatpush1.msra.mxu0 0.0
  %579 = vmatprep.subr.mxu0 0.0
  %580 = vmatpush1.msra.mxu0 0.0
  %581 = vmatprep.subr.mxu0 0.0
  %582 = vmatpush1.msra.mxu0 0.0
  %583 = vmatprep.subr.mxu0 0.0
  %584 = vmatpush1.msra.mxu0 0.0
  %585 = vmatprep.subr.mxu0 0.0
  %586 = vmatpush1.msra.mxu0 0.0
  %587 = vmatprep.subr.mxu0 0.0
  %588 = vmatpush1.msra.mxu0 0.0
  %589 = vmatprep.subr.mxu0 0.0
  %590 = vmatpush1.msra.mxu0 0.0
  %591 = vmatprep.subr.mxu0 0.0
  %592 = vmatpush1.msra.mxu0 0.0
  %593 = vmatprep.subr.mxu0 0.0
  %594 = vmatpush1.msra.mxu0 0.0
  %595 = vmatprep.subr.mxu0 0.0
  %596 = vmatpush1.msra.mxu0 0.0
  %597 = vmatprep.subr.mxu0 0.0
  %598 = vmatpush1.msra.mxu0 0.0
  %599 = vmatprep.subr.mxu0 0.0
  %600 = vmatpush1.msra.mxu0 0.0
  %601 = vmatprep.subr.mxu0 0.0
  %602 = vmatpush1.msra.mxu0 0.0
  %603 = vmatprep.subr.mxu0 0.0
  %604 = vmatpush1.msra.mxu0 0.0
  %605 = vmatprep.subr.mxu0 0.0
  %606 = vmatpush1.msra.mxu0 0.0
  %607 = vmatprep.subr.mxu0 0.0
  %608 = vmatpush1.msra.mxu0 0.0
  %609 = vmatprep.subr.mxu0 0.0
  %610 = vmatpush1.msra.mxu0 0.0
  %611 = vmatprep.mubr.f32.mxu0 0.0
  %612 = vmatmul.mubr.f32.gmra.mrb[0].mxu0 %v536
  %v613 = vpop.f32.mrb[0].mxu0
  %v614 = vadd.f32 %v517, %v613
  %v615 = vpop.f32.mrb[0].mxu0
  %616 = vmatprep.mubr.f32.mxu0 0.0
  %617 = vmatmul.mubr.f32.gmra.mrb[0].mxu0 %v539
  %v618 = vpop.f32.mrb[0].mxu0
  %v619 = vadd.f32 %v522, %v618
  %v620 = vpop.f32.mrb[0].mxu0
  %621 = vmatprep.mubr.f32.mxu0 0.0
  %622 = vmatmul.mubr.f32.gmra.mrb[0].mxu0 %v542
  %v623 = vpop.f32.mrb[0].mxu0
  %v624 = vadd.f32 %v527, %v623
  %v625 = vpop.f32.mrb[0].mxu0
  %626 = vmatprep.mubr.f32.mxu0 0.0
  %627 = vmatmul.mubr.f32.gmra.mrb[0].mxu0 %v545
  %v628 = vpop.f32.mrb[0].mxu0
  %v629 = vadd.f32 %v532, %v628
  %v630 = vpop.f32.mrb[0].mxu0
  %631 = vdwg.mxu0
  %v632 = vmax.f32 %v614, 0.0
  %v633 = vmax.f32 %v619, 0.0
  %v634 = vmax.f32 %v624, 0.0
  %v635 = vmax.f32 %v629, 0.0
  %v636 = vld [vmem:[%s21] sm:$0xff]
  %v637 = vld [vmem:[%s21 + $0x8] sm:$0xff]
  %v638 = vld [vmem:[%s21 + $0x10] sm:$0xff]
  %v639 = vld [vmem:[%s21 + $0x18] sm:$0xff]
  %v640 = vld [vmem:[%s21 + $0x20] sm:$0xff]
  %v641 = vld [vmem:[%s21 + $0x28] sm:$0xff]
  %642 = vrot.lane.b32.xlu0 %v632, 9
  %v643 = vpop.permute.xlu0 %642
  %644 = vrot.lane.b32.xlu0 %v633, 9
  %v645 = vpop.permute.xlu0 %644
  %646 = vrot.lane.b32.xlu0 %v634, 9
  %v647 = vpop.permute.xlu0 %646
  %648 = vrot.lane.b32.xlu0 %v635, 9
  %v649 = vpop.permute.xlu0 %648
  %v650 = vmul.f32 %v643, %v329
  %v651 = vmul.f32 %v645, %v329
  %v652 = vmul.f32 %v647, %v329
  %v653 = vmul.f32 %v649, %v329
  %654 = vrot.lane.b32.xlu0 %v632, 8
  %v655 = vpop.permute.xlu0 %654
  %656 = vrot.lane.b32.xlu0 %v633, 8
  %v657 = vpop.permute.xlu0 %656
  %658 = vrot.lane.b32.xlu0 %v634, 8
  %v659 = vpop.permute.xlu0 %658
  %660 = vrot.lane.b32.xlu0 %v635, 8
  %v661 = vpop.permute.xlu0 %660
  %v662 = vmul.f32 %v655, %v336
  %v663 = vmul.f32 %v657, %v336
  %v664 = vmul.f32 %v659, %v336
  %v665 = vmul.f32 %v661, %v336
  %666 = vrot.lane.b32.xlu0 %v632, 7
  %v667 = vpop.permute.xlu0 %666
  %668 = vrot.lane.b32.xlu0 %v633, 7
  %v669 = vpop.permute.xlu0 %668
  %670 = vrot.lane.b32.xlu0 %v634, 7
  %v671 = vpop.permute.xlu0 %670
  %672 = vrot.lane.b32.xlu0 %v635, 7
  %v673 = vpop.permute.xlu0 %672
  %v674 = vmul.f32 %v667, %v343
  %v675 = vmul.f32 %v669, %v343
  %v676 = vmul.f32 %v671, %v343
  %v677 = vmul.f32 %v673, %v343
  %678 = vrot.lane.b32.xlu0 %v632, 1
  %v679 = vpop.permute.xlu0 %678
  %680 = vrot.lane.b32.xlu0 %v633, 1
  %v681 = vpop.permute.xlu0 %680
  %682 = vrot.lane.b32.xlu0 %v634, 1
  %v683 = vpop.permute.xlu0 %682
  %684 = vrot.lane.b32.xlu0 %v635, 1
  %v685 = vpop.permute.xlu0 %684
  %v686 = vmul.f32 %v679, %v350
  %v687 = vmul.f32 %v681, %v350
  %v688 = vmul.f32 %v683, %v350
  %v689 = vmul.f32 %v685, %v350
  %690 = vrot.lane.b32.xlu0 %v632, 127
  %v691 = vpop.permute.xlu0 %690
  %692 = vrot.lane.b32.xlu0 %v633, 127
  %v693 = vpop.permute.xlu0 %692
  %694 = vrot.lane.b32.xlu0 %v634, 127
  %v695 = vpop.permute.xlu0 %694
  %696 = vrot.lane.b32.xlu0 %v635, 127
  %v697 = vpop.permute.xlu0 %696
  %v698 = vmul.f32 %v691, %v357
  %v699 = vmul.f32 %v693, %v357
  %v700 = vmul.f32 %v695, %v357
  %v701 = vmul.f32 %v697, %v357
  %702 = vrot.lane.b32.xlu0 %v632, 121
  %v703 = vpop.permute.xlu0 %702
  %704 = vrot.lane.b32.xlu0 %v633, 121
  %v705 = vpop.permute.xlu0 %704
  %706 = vrot.lane.b32.xlu0 %v634, 121
  %v707 = vpop.permute.xlu0 %706
  %708 = vrot.lane.b32.xlu0 %v635, 121
  %v709 = vpop.permute.xlu0 %708
  %v710 = vmul.f32 %v703, %v364
  %v711 = vmul.f32 %v705, %v364
  %v712 = vmul.f32 %v707, %v364
  %v713 = vmul.f32 %v709, %v364
  %714 = vrot.lane.b32.xlu0 %v632, 120
  %v715 = vpop.permute.xlu0 %714
  %716 = vrot.lane.b32.xlu0 %v633, 120
  %v717 = vpop.permute.xlu0 %716
  %718 = vrot.lane.b32.xlu0 %v634, 120
  %v719 = vpop.permute.xlu0 %718
  %720 = vrot.lane.b32.xlu0 %v635, 120
  %v721 = vpop.permute.xlu0 %720
  %v722 = vmul.f32 %v715, %v371
  %v723 = vmul.f32 %v717, %v371
  %v724 = vmul.f32 %v719, %v371
  %v725 = vmul.f32 %v721, %v371
  %726 = vrot.lane.b32.xlu0 %v632, 119
  %v727 = vpop.permute.xlu0 %726
  %728 = vrot.lane.b32.xlu0 %v633, 119
  %v729 = vpop.permute.xlu0 %728
  %730 = vrot.lane.b32.xlu0 %v634, 119
  %v731 = vpop.permute.xlu0 %730
  %732 = vrot.lane.b32.xlu0 %v635, 119
  %v733 = vpop.permute.xlu0 %732
  %v734 = vmul.f32 %v727, %v378
  %v735 = vmul.f32 %v729, %v378
  %v736 = vmul.f32 %v731, %v378
  %v737 = vmul.f32 %v733, %v378
  %v738 = vld [vmem:[%s23] sm:$0xff]
  %v739 = vld [vmem:[%s23 + $0x8] sm:$0xff]
  %741 = vset.pattern.permute.xlu0 0
  %742 = vperm.xlu0 %741, %v738
  %v743 = vpop.permute.xlu0 %742
  %746 = vset.pattern.permute.xlu0 0
  %747 = vperm.xlu0 %746, %v739
  %v748 = vpop.permute.xlu0 %747
  %v751 = vsel %vm534, %v638, 0
  %v754 = vsel %vm534, %v641, 0
  %756 = vmatprep.subr.mxu0 0.0
  %757 = vmatpush1.msra.mxu0 %v650
  %758 = vmatprep.subr.mxu0 0.0
  %759 = vmatpush1.msra.mxu0 %v651
  %760 = vmatprep.subr.mxu0 0.0
  %761 = vmatpush1.msra.mxu0 %v652
  %762 = vmatprep.subr.mxu0 0.0
  %763 = vmatpush1.msra.mxu0 %v653
  %764 = vmatprep.subr.mxu0 0.0
  %765 = vmatpush1.msra.mxu0 %v662
  %766 = vmatprep.subr.mxu0 0.0
  %767 = vmatpush1.msra.mxu0 %v663
  %768 = vmatprep.subr.mxu0 0.0
  %769 = vmatpush1.msra.mxu0 %v664
  %770 = vmatprep.subr.mxu0 0.0
  %771 = vmatpush1.msra.mxu0 %v665
  %772 = vmatprep.subr.mxu0 0.0
  %773 = vmatpush1.msra.mxu0 %v674
  %774 = vmatprep.subr.mxu0 0.0
  %775 = vmatpush1.msra.mxu0 %v675
  %776 = vmatprep.subr.mxu0 0.0
  %777 = vmatpush1.msra.mxu0 %v676
  %778 = vmatprep.subr.mxu0 0.0
  %779 = vmatpush1.msra.mxu0 %v677
  %780 = vmatprep.subr.mxu0 0.0
  %781 = vmatpush1.msra.mxu0 %v686
  %782 = vmatprep.subr.mxu0 0.0
  %783 = vmatpush1.msra.mxu0 %v687
  %784 = vmatprep.subr.mxu0 0.0
  %785 = vmatpush1.msra.mxu0 %v688
  %786 = vmatprep.subr.mxu0 0.0
  %787 = vmatpush1.msra.mxu0 %v689
  %788 = vmatprep.subr.mxu0 0.0
  %789 = vmatpush1.msra.mxu0 %v632
  %790 = vmatprep.subr.mxu0 0.0
  %791 = vmatpush1.msra.mxu0 %v633
  %792 = vmatprep.subr.mxu0 0.0
  %793 = vmatpush1.msra.mxu0 %v634
  %794 = vmatprep.subr.mxu0 0.0
  %795 = vmatpush1.msra.mxu0 %v635
  %796 = vmatprep.subr.mxu0 0.0
  %797 = vmatpush1.msra.mxu0 %v698
  %798 = vmatprep.subr.mxu0 0.0
  %799 = vmatpush1.msra.mxu0 %v699
  %800 = vmatprep.subr.mxu0 0.0
  %801 = vmatpush1.msra.mxu0 %v700
  %802 = vmatprep.subr.mxu0 0.0
  %803 = vmatpush1.msra.mxu0 %v701
  %804 = vmatprep.subr.mxu0 0.0
  %805 = vmatpush1.msra.mxu0 %v710
  %806 = vmatprep.subr.mxu0 0.0
  %807 = vmatpush1.msra.mxu0 %v711
  %808 = vmatprep.subr.mxu0 0.0
  %809 = vmatpush1.msra.mxu0 %v712
  %810 = vmatprep.subr.mxu0 0.0
  %811 = vmatpush1.msra.mxu0 %v713
  %812 = vmatprep.subr.mxu0 0.0
  %813 = vmatpush1.msra.mxu0 %v722
  %814 = vmatprep.subr.mxu0 0.0
  %815 = vmatpush1.msra.mxu0 %v723
  %816 = vmatprep.subr.mxu0 0.0
  %817 = vmatpush1.msra.mxu0 %v724
  %818 = vmatprep.subr.mxu0 0.0
  %819 = vmatpush1.msra.mxu0 %v725
  %820 = vmatprep.mubr.f32.mxu0 %v637
  %821 = vmatmul.mubr.f32.gmra.mrb[0].mxu0 %v636
  %v822 = vpop.f32.mrb[0].mxu0
  %v823 = vadd.f32 %v743, %v822
  %v824 = vpop.f32.mrb[0].mxu0
  %825 = vmatprep.mubr.f32.mxu0 %v640
  %826 = vmatmul.mubr.f32.gmra.mrb[0].mxu0 %v639
  %v827 = vpop.f32.mrb[0].mxu0
  %v828 = vadd.f32 %v748, %v827
  %v829 = vpop.f32.mrb[0].mxu0
  %830 = vdwg.mxu0
  %831 = vmatprep.subr.mxu0 0.0
  %832 = vmatpush1.msra.mxu0 %v734
  %833 = vmatprep.subr.mxu0 0.0
  %834 = vmatpush1.msra.mxu0 %v735
  %835 = vmatprep.subr.mxu0 0.0
  %836 = vmatpush1.msra.mxu0 %v736
  %837 = vmatprep.subr.mxu0 0.0
  %838 = vmatpush1.msra.mxu0 %v737
  %839 = vmatprep.subr.mxu0 0.0
  %840 = vmatpush1.msra.mxu0 0.0
  %841 = vmatprep.subr.mxu0 0.0
  %842 = vmatpush1.msra.mxu0 0.0
  %843 = vmatprep.subr.mxu0 0.0
  %844 = vmatpush1.msra.mxu0 0.0
  %845 = vmatprep.subr.mxu0 0.0
  %846 = vmatpush1.msra.mxu0 0.0
  %847 = vmatprep.subr.mxu0 0.0
  %848 = vmatpush1.msra.mxu0 0.0
  %849 = vmatprep.subr.mxu0 0.0
  %850 = vmatpush1.msra.mxu0 0.0
  %851 = vmatprep.subr.mxu0 0.0
  %852 = vmatpush1.msra.mxu0 0.0
  %853 = vmatprep.subr.mxu0 0.0
  %854 = vmatpush1.msra.mxu0 0.0
  %855 = vmatprep.subr.mxu0 0.0
  %856 = vmatpush1.msra.mxu0 0.0
  %857 = vmatprep.subr.mxu0 0.0
  %858 = vmatpush1.msra.mxu0 0.0
  %859 = vmatprep.subr.mxu0 0.0
  %860 = vmatpush1.msra.mxu0 0.0
  %861 = vmatprep.subr.mxu0 0.0
  %862 = vmatpush1.msra.mxu0 0.0
  %863 = vmatprep.subr.mxu0 0.0
  %864 = vmatpush1.msra.mxu0 0.0
  %865 = vmatprep.subr.mxu0 0.0
  %866 = vmatpush1.msra.mxu0 0.0
  %867 = vmatprep.subr.mxu0 0.0
  %868 = vmatpush1.msra.mxu0 0.0
  %869 = vmatprep.subr.mxu0 0.0
  %870 = vmatpush1.msra.mxu0 0.0
  %871 = vmatprep.subr.mxu0 0.0
  %872 = vmatpush1.msra.mxu0 0.0
  %873 = vmatprep.subr.mxu0 0.0
  %874 = vmatpush1.msra.mxu0 0.0
  %875 = vmatprep.subr.mxu0 0.0
  %876 = vmatpush1.msra.mxu0 0.0
  %877 = vmatprep.subr.mxu0 0.0
  %878 = vmatpush1.msra.mxu0 0.0
  %879 = vmatprep.subr.mxu0 0.0
  %880 = vmatpush1.msra.mxu0 0.0
  %881 = vmatprep.subr.mxu0 0.0
  %882 = vmatpush1.msra.mxu0 0.0
  %883 = vmatprep.subr.mxu0 0.0
  %884 = vmatpush1.msra.mxu0 0.0
  %885 = vmatprep.subr.mxu0 0.0
  %886 = vmatpush1.msra.mxu0 0.0
  %887 = vmatprep.subr.mxu0 0.0
  %888 = vmatpush1.msra.mxu0 0.0
  %889 = vmatprep.subr.mxu0 0.0
  %890 = vmatpush1.msra.mxu0 0.0
  %891 = vmatprep.subr.mxu0 0.0
  %892 = vmatpush1.msra.mxu0 0.0
  %893 = vmatprep.subr.mxu0 0.0
  %894 = vmatpush1.msra.mxu0 0.0
  %895 = vmatprep.mubr.f32.mxu0 0.0
  %896 = vmatmul.mubr.f32.gmra.mrb[0].mxu0 %v751
  %v897 = vpop.f32.mrb[0].mxu0
  %v898 = vadd.f32 %v823, %v897
  %v899 = vpop.f32.mrb[0].mxu0
  %900 = vmatprep.mubr.f32.mxu0 0.0
  %901 = vmatmul.mubr.f32.gmra.mrb[0].mxu0 %v754
  %v902 = vpop.f32.mrb[0].mxu0
  %v903 = vadd.f32 %v828, %v902
  %v904 = vpop.f32.mrb[0].mxu0
  %905 = vdwg.mxu0
  %v906 = vadd.f32 %v903, 2.0
  %v907 = vsub.f32 0.0, %v906
  %v908 = vmul.f32 %v907, 1.442695
  %v909 = vpow.pop %v908
  %v910 = vadd.f32 %v909, 1.0
  %v911 = vadd.f32 %v319, %v898
  %v912 = vrcp.pop %v910
  %v913 = vmul.f32 %v911, %v912
  %v914 = vlog2.pop %v910
  %v915 = vmul.f32 %v914, 0.6931472
  %v916 = vsub.f32 0.0, %v915
  %917 = vmatprep.subr.mxu0 0.0
  %918 = vmatpush1.msra.mxu0 %v123
  %919 = vmatprep.subr.mxu0 0.0
  %920 = vmatpush1.msra.mxu0 %v124
  %921 = vmatprep.subr.mxu0 0.0
  %922 = vmatpush1.msra.mxu0 %v125
  %923 = vmatprep.subr.mxu0 0.0
  %924 = vmatpush1.msra.mxu0 %v126
  %925 = vmatprep.subr.mxu0 0.0
  %926 = vmatpush1.msra.mxu0 %v127
  %927 = vmatprep.subr.mxu0 0.0
  %928 = vmatpush1.msra.mxu0 %v128
  %929 = vmatprep.subr.mxu0 0.0
  %930 = vmatpush1.msra.mxu0 %v129
  %931 = vmatprep.subr.mxu0 0.0
  %932 = vmatpush1.msra.mxu0 %v130
  %933 = vmatprep.subr.mxu0 0.0
  %934 = vmatpush1.msra.mxu0 %v131
  %935 = vmatprep.subr.mxu0 0.0
  %936 = vmatpush1.msra.mxu0 %v132
  %937 = vmatprep.subr.mxu0 0.0
  %938 = vmatpush1.msra.mxu0 %v133
  %939 = vmatprep.subr.mxu0 0.0
  %940 = vmatpush1.msra.mxu0 %v134
  %941 = vmatprep.subr.mxu0 0.0
  %942 = vmatpush1.msra.mxu0 %v135
  %943 = vmatprep.subr.mxu0 0.0
  %944 = vmatpush1.msra.mxu0 %v136
  %945 = vmatprep.subr.mxu0 0.0
  %946 = vmatpush1.msra.mxu0 %v137
  %947 = vmatprep.subr.mxu0 0.0
  %948 = vmatpush1.msra.mxu0 %v138
  %949 = vmatprep.subr.mxu0 0.0
  %950 = vmatpush1.msra.mxu0 0.0
  %951 = vmatprep.subr.mxu0 0.0
  %952 = vmatpush1.msra.mxu0 0.0
  %953 = vmatprep.subr.mxu0 0.0
  %954 = vmatpush1.msra.mxu0 0.0
  %955 = vmatprep.subr.mxu0 0.0
  %956 = vmatpush1.msra.mxu0 0.0
  %957 = vmatprep.subr.mxu0 0.0
  %958 = vmatpush1.msra.mxu0 0.0
  %959 = vmatprep.subr.mxu0 0.0
  %960 = vmatpush1.msra.mxu0 0.0
  %961 = vmatprep.subr.mxu0 0.0
  %962 = vmatpush1.msra.mxu0 0.0
  %963 = vmatprep.subr.mxu0 0.0
  %964 = vmatpush1.msra.mxu0 0.0
  %965 = vmatprep.subr.mxu0 0.0
  %966 = vmatpush1.msra.mxu0 0.0
  %967 = vmatprep.subr.mxu0 0.0
  %968 = vmatpush1.msra.mxu0 0.0
  %969 = vmatprep.subr.mxu0 0.0
  %970 = vmatpush1.msra.mxu0 0.0
  %971 = vmatprep.subr.mxu0 0.0
  %972 = vmatpush1.msra.mxu0 0.0
  %973 = vmatprep.subr.mxu0 0.0
  %974 = vmatpush1.msra.mxu0 0.0
  %975 = vmatprep.subr.mxu0 0.0
  %976 = vmatpush1.msra.mxu0 0.0
  %977 = vmatprep.subr.mxu0 0.0
  %978 = vmatpush1.msra.mxu0 0.0
  %979 = vmatprep.subr.mxu0 0.0
  %980 = vmatpush1.msra.mxu0 0.0
  %981 = vmatprep.mubr.f32.mxu0 0.0
  %982 = vmatmul.mubr.f32.gmra.mrb[0].mxu0 %v916
  %v983 = vpop.f32.mrb[0].mxu0
  %v984 = vadd.f32 0.0, %v983
  %v985 = vpop.f32.mrb[0].mxu0
  %986 = vdwg.mxu0
  %v987 = vrot.slane %v984, 4
  %v988 = vadd.f32 %v984, %v987
  %v989 = vrot.slane %v988, 2
  %v990 = vadd.f32 %v988, %v989
  %v991 = vrot.slane %v990, 1
  %v992 = vadd.f32 %v990, %v991
  %v993 = vadd.f32 %v992, 0.0
  %s994 = scalar_lea.vmem %s7, 16
  %v995 = vld [vmem:[%s994] sm:$0xff]
  %v996 = vld [vmem:[%s994 + $0x8] sm:$0xff]
  %s997 = scalar_lea.vmem %s9, 16
  %v998 = vld [vmem:[%s997] sm:$0xff]
  %v999 = vld [vmem:[%s997 + $0x8] sm:$0xff]
  %v1001 = vsel %vm143, %v998, 0
  %v1004 = vsel %vm143, %v999, 0
  %1006 = vmatprep.subr.mxu0 0.0
  %1007 = vmatpush1.msra.mxu0 %v913
  %1008 = vmatprep.subr.mxu0 0.0
  %1009 = vmatpush1.msra.mxu0 0.0
  %1010 = vmatprep.subr.mxu0 0.0
  %1011 = vmatpush1.msra.mxu0 0.0
  %1012 = vmatprep.subr.mxu0 0.0
  %1013 = vmatpush1.msra.mxu0 0.0
  %1014 = vmatprep.subr.mxu0 0.0
  %1015 = vmatpush1.msra.mxu0 0.0
  %1016 = vmatprep.subr.mxu0 0.0
  %1017 = vmatpush1.msra.mxu0 0.0
  %1018 = vmatprep.subr.mxu0 0.0
  %1019 = vmatpush1.msra.mxu0 0.0
  %1020 = vmatprep.subr.mxu0 0.0
  %1021 = vmatpush1.msra.mxu0 0.0
  %1022 = vmatprep.subr.mxu0 0.0
  %1023 = vmatpush1.msra.mxu0 0.0
  %1024 = vmatprep.subr.mxu0 0.0
  %1025 = vmatpush1.msra.mxu0 0.0
  %1026 = vmatprep.subr.mxu0 0.0
  %1027 = vmatpush1.msra.mxu0 0.0
  %1028 = vmatprep.subr.mxu0 0.0
  %1029 = vmatpush1.msra.mxu0 0.0
  %1030 = vmatprep.subr.mxu0 0.0
  %1031 = vmatpush1.msra.mxu0 0.0
  %1032 = vmatprep.subr.mxu0 0.0
  %1033 = vmatpush1.msra.mxu0 0.0
  %1034 = vmatprep.subr.mxu0 0.0
  %1035 = vmatpush1.msra.mxu0 0.0
  %1036 = vmatprep.subr.mxu0 0.0
  %1037 = vmatpush1.msra.mxu0 0.0
  %1038 = vmatprep.subr.mxu0 0.0
  %1039 = vmatpush1.msra.mxu0 0.0
  %1040 = vmatprep.subr.mxu0 0.0
  %1041 = vmatpush1.msra.mxu0 0.0
  %1042 = vmatprep.subr.mxu0 0.0
  %1043 = vmatpush1.msra.mxu0 0.0
  %1044 = vmatprep.subr.mxu0 0.0
  %1045 = vmatpush1.msra.mxu0 0.0
  %1046 = vmatprep.subr.mxu0 0.0
  %1047 = vmatpush1.msra.mxu0 0.0
  %1048 = vmatprep.subr.mxu0 0.0
  %1049 = vmatpush1.msra.mxu0 0.0
  %1050 = vmatprep.subr.mxu0 0.0
  %1051 = vmatpush1.msra.mxu0 0.0
  %1052 = vmatprep.subr.mxu0 0.0
  %1053 = vmatpush1.msra.mxu0 0.0
  %1054 = vmatprep.subr.mxu0 0.0
  %1055 = vmatpush1.msra.mxu0 0.0
  %1056 = vmatprep.subr.mxu0 0.0
  %1057 = vmatpush1.msra.mxu0 0.0
  %1058 = vmatprep.subr.mxu0 0.0
  %1059 = vmatpush1.msra.mxu0 0.0
  %1060 = vmatprep.subr.mxu0 0.0
  %1061 = vmatpush1.msra.mxu0 0.0
  %1062 = vmatprep.subr.mxu0 0.0
  %1063 = vmatpush1.msra.mxu0 0.0
  %1064 = vmatprep.subr.mxu0 0.0
  %1065 = vmatpush1.msra.mxu0 0.0
  %1066 = vmatprep.subr.mxu0 0.0
  %1067 = vmatpush1.msra.mxu0 0.0
  %1068 = vmatprep.subr.mxu0 0.0
  %1069 = vmatpush1.msra.mxu0 0.0
  %1070 = vmatprep.mubr.f32.mxu0 0.0
  %1071 = vmatmul.mubr.f32.gmra.mrb[0].mxu0 %v1001
  %v1072 = vpop.f32.mrb[0].mxu0
  %v1073 = vadd.f32 0.0, %v1072
  %v1074 = vpop.f32.mrb[0].mxu0
  %1075 = vmatprep.mubr.f32.mxu0 0.0
  %1076 = vmatmul.mubr.f32.gmra.mrb[0].mxu0 %v1004
  %v1077 = vpop.f32.mrb[0].mxu0
  %v1078 = vadd.f32 0.0, %v1077
  %v1079 = vpop.f32.mrb[0].mxu0
  %1080 = vdwg.mxu0
  %v1082 = vsel %vm143, %v995, 0
  %v1085 = vsel %vm143, %v996, 0
  %1087 = vmatprep.subr.mxu0 0.0
  %1088 = vmatpush1.msra.mxu0 %v318
  %1089 = vmatprep.subr.mxu0 0.0
  %1090 = vmatpush1.msra.mxu0 0.0
  %1091 = vmatprep.subr.mxu0 0.0
  %1092 = vmatpush1.msra.mxu0 0.0
  %1093 = vmatprep.subr.mxu0 0.0
  %1094 = vmatpush1.msra.mxu0 0.0
  %1095 = vmatprep.subr.mxu0 0.0
  %1096 = vmatpush1.msra.mxu0 0.0
  %1097 = vmatprep.subr.mxu0 0.0
  %1098 = vmatpush1.msra.mxu0 0.0
  %1099 = vmatprep.subr.mxu0 0.0
  %1100 = vmatpush1.msra.mxu0 0.0
  %1101 = vmatprep.subr.mxu0 0.0
  %1102 = vmatpush1.msra.mxu0 0.0
  %1103 = vmatprep.subr.mxu0 0.0
  %1104 = vmatpush1.msra.mxu0 0.0
  %1105 = vmatprep.subr.mxu0 0.0
  %1106 = vmatpush1.msra.mxu0 0.0
  %1107 = vmatprep.subr.mxu0 0.0
  %1108 = vmatpush1.msra.mxu0 0.0
  %1109 = vmatprep.subr.mxu0 0.0
  %1110 = vmatpush1.msra.mxu0 0.0
  %1111 = vmatprep.subr.mxu0 0.0
  %1112 = vmatpush1.msra.mxu0 0.0
  %1113 = vmatprep.subr.mxu0 0.0
  %1114 = vmatpush1.msra.mxu0 0.0
  %1115 = vmatprep.subr.mxu0 0.0
  %1116 = vmatpush1.msra.mxu0 0.0
  %1117 = vmatprep.subr.mxu0 0.0
  %1118 = vmatpush1.msra.mxu0 0.0
  %1119 = vmatprep.subr.mxu0 0.0
  %1120 = vmatpush1.msra.mxu0 0.0
  %1121 = vmatprep.subr.mxu0 0.0
  %1122 = vmatpush1.msra.mxu0 0.0
  %1123 = vmatprep.subr.mxu0 0.0
  %1124 = vmatpush1.msra.mxu0 0.0
  %1125 = vmatprep.subr.mxu0 0.0
  %1126 = vmatpush1.msra.mxu0 0.0
  %1127 = vmatprep.subr.mxu0 0.0
  %1128 = vmatpush1.msra.mxu0 0.0
  %1129 = vmatprep.subr.mxu0 0.0
  %1130 = vmatpush1.msra.mxu0 0.0
  %1131 = vmatprep.subr.mxu0 0.0
  %1132 = vmatpush1.msra.mxu0 0.0
  %1133 = vmatprep.subr.mxu0 0.0
  %1134 = vmatpush1.msra.mxu0 0.0
  %1135 = vmatprep.subr.mxu0 0.0
  %1136 = vmatpush1.msra.mxu0 0.0
  %1137 = vmatprep.subr.mxu0 0.0
  %1138 = vmatpush1.msra.mxu0 0.0
  %1139 = vmatprep.subr.mxu0 0.0
  %1140 = vmatpush1.msra.mxu0 0.0
  %1141 = vmatprep.subr.mxu0 0.0
  %1142 = vmatpush1.msra.mxu0 0.0
  %1143 = vmatprep.subr.mxu0 0.0
  %1144 = vmatpush1.msra.mxu0 0.0
  %1145 = vmatprep.subr.mxu0 0.0
  %1146 = vmatpush1.msra.mxu0 0.0
  %1147 = vmatprep.subr.mxu0 0.0
  %1148 = vmatpush1.msra.mxu0 0.0
  %1149 = vmatprep.subr.mxu0 0.0
  %1150 = vmatpush1.msra.mxu0 0.0
  %1151 = vmatprep.mubr.f32.mxu0 0.0
  %1152 = vmatmul.mubr.f32.gmra.mrb[0].mxu0 %v1082
  %v1153 = vpop.f32.mrb[0].mxu0
  %v1154 = vadd.f32 %v1073, %v1153
  %v1155 = vpop.f32.mrb[0].mxu0
  %1156 = vmatprep.mubr.f32.mxu0 0.0
  %1157 = vmatmul.mubr.f32.gmra.mrb[0].mxu0 %v1085
  %v1158 = vpop.f32.mrb[0].mxu0
  %v1159 = vadd.f32 %v1078, %v1158
  %v1160 = vpop.f32.mrb[0].mxu0
  %1161 = vdwg.mxu0
  %s1162 = scalar_lea.vmem %s11, 16
  %v1163 = vld [vmem:[%s1162] sm:$0xff]
  %v1164 = vld [vmem:[%s1162 + $0x8] sm:$0xff]
  %1166 = vset.pattern.permute.xlu0 0
  %1167 = vperm.xlu0 %1166, %v1163
  %v1168 = vpop.permute.xlu0 %1167
  %1171 = vset.pattern.permute.xlu0 0
  %1172 = vperm.xlu0 %1171, %v1164
  %v1173 = vpop.permute.xlu0 %1172
  %v1175 = vadd.f32 %v1154, %v1168
  %v1176 = vadd.f32 %v1159, %v1173
  %s1177 = scalar_lea.vmem %s13, 32
  %v1178 = vld [vmem:[%s1177] sm:$0xff]
  %v1179 = vld [vmem:[%s1177 + $0x8] sm:$0xff]
  %v1180 = vld [vmem:[%s1177 + $0x10] sm:$0xff]
  %v1181 = vld [vmem:[%s1177 + $0x18] sm:$0xff]
  %1182 = vrot.lane.b32.xlu0 %v1175, 9
  %v1183 = vpop.permute.xlu0 %1182
  %v1184 = vmul.f32 %v1183, %v329
  %1185 = vrot.lane.b32.xlu0 %v1175, 8
  %v1186 = vpop.permute.xlu0 %1185
  %v1187 = vmul.f32 %v1186, %v336
  %1188 = vrot.lane.b32.xlu0 %v1175, 7
  %v1189 = vpop.permute.xlu0 %1188
  %v1190 = vmul.f32 %v1189, %v343
  %1191 = vrot.lane.b32.xlu0 %v1175, 1
  %v1192 = vpop.permute.xlu0 %1191
  %v1193 = vmul.f32 %v1192, %v350
  %1194 = vrot.lane.b32.xlu0 %v1175, 127
  %v1195 = vpop.permute.xlu0 %1194
  %v1196 = vmul.f32 %v1195, %v357
  %1197 = vrot.lane.b32.xlu0 %v1175, 121
  %v1198 = vpop.permute.xlu0 %1197
  %v1199 = vmul.f32 %v1198, %v364
  %1200 = vrot.lane.b32.xlu0 %v1175, 120
  %v1201 = vpop.permute.xlu0 %1200
  %v1202 = vmul.f32 %v1201, %v371
  %1203 = vrot.lane.b32.xlu0 %v1175, 119
  %v1204 = vpop.permute.xlu0 %1203
  %v1205 = vmul.f32 %v1204, %v378
  %s1206 = scalar_lea.vmem %s15, 32
  %v1207 = vld [vmem:[%s1206] sm:$0xff]
  %v1208 = vld [vmem:[%s1206 + $0x8] sm:$0xff]
  %v1209 = vld [vmem:[%s1206 + $0x10] sm:$0xff]
  %v1210 = vld [vmem:[%s1206 + $0x18] sm:$0xff]
  %1212 = vset.pattern.permute.xlu0 0
  %1213 = vperm.xlu0 %1212, %v1207
  %v1214 = vpop.permute.xlu0 %1213
  %1217 = vset.pattern.permute.xlu0 0
  %1218 = vperm.xlu0 %1217, %v1208
  %v1219 = vpop.permute.xlu0 %1218
  %1222 = vset.pattern.permute.xlu0 0
  %1223 = vperm.xlu0 %1222, %v1209
  %v1224 = vpop.permute.xlu0 %1223
  %1227 = vset.pattern.permute.xlu0 0
  %1228 = vperm.xlu0 %1227, %v1210
  %v1229 = vpop.permute.xlu0 %1228
  %v1232 = vsel %vm404, %v1178, 0
  %v1235 = vsel %vm404, %v1179, 0
  %v1238 = vsel %vm404, %v1180, 0
  %v1241 = vsel %vm404, %v1181, 0
  %1243 = vmatprep.subr.mxu0 0.0
  %1244 = vmatpush1.msra.mxu0 %v1184
  %1245 = vmatprep.subr.mxu0 0.0
  %1246 = vmatpush1.msra.mxu0 %v1187
  %1247 = vmatprep.subr.mxu0 0.0
  %1248 = vmatpush1.msra.mxu0 %v1190
  %1249 = vmatprep.subr.mxu0 0.0
  %1250 = vmatpush1.msra.mxu0 %v1193
  %1251 = vmatprep.subr.mxu0 0.0
  %1252 = vmatpush1.msra.mxu0 %v1175
  %1253 = vmatprep.subr.mxu0 0.0
  %1254 = vmatpush1.msra.mxu0 %v1196
  %1255 = vmatprep.subr.mxu0 0.0
  %1256 = vmatpush1.msra.mxu0 %v1199
  %1257 = vmatprep.subr.mxu0 0.0
  %1258 = vmatpush1.msra.mxu0 %v1202
  %1259 = vmatprep.subr.mxu0 0.0
  %1260 = vmatpush1.msra.mxu0 %v1205
  %1261 = vmatprep.subr.mxu0 0.0
  %1262 = vmatpush1.msra.mxu0 0.0
  %1263 = vmatprep.subr.mxu0 0.0
  %1264 = vmatpush1.msra.mxu0 0.0
  %1265 = vmatprep.subr.mxu0 0.0
  %1266 = vmatpush1.msra.mxu0 0.0
  %1267 = vmatprep.subr.mxu0 0.0
  %1268 = vmatpush1.msra.mxu0 0.0
  %1269 = vmatprep.subr.mxu0 0.0
  %1270 = vmatpush1.msra.mxu0 0.0
  %1271 = vmatprep.subr.mxu0 0.0
  %1272 = vmatpush1.msra.mxu0 0.0
  %1273 = vmatprep.subr.mxu0 0.0
  %1274 = vmatpush1.msra.mxu0 0.0
  %1275 = vmatprep.subr.mxu0 0.0
  %1276 = vmatpush1.msra.mxu0 0.0
  %1277 = vmatprep.subr.mxu0 0.0
  %1278 = vmatpush1.msra.mxu0 0.0
  %1279 = vmatprep.subr.mxu0 0.0
  %1280 = vmatpush1.msra.mxu0 0.0
  %1281 = vmatprep.subr.mxu0 0.0
  %1282 = vmatpush1.msra.mxu0 0.0
  %1283 = vmatprep.subr.mxu0 0.0
  %1284 = vmatpush1.msra.mxu0 0.0
  %1285 = vmatprep.subr.mxu0 0.0
  %1286 = vmatpush1.msra.mxu0 0.0
  %1287 = vmatprep.subr.mxu0 0.0
  %1288 = vmatpush1.msra.mxu0 0.0
  %1289 = vmatprep.subr.mxu0 0.0
  %1290 = vmatpush1.msra.mxu0 0.0
  %1291 = vmatprep.subr.mxu0 0.0
  %1292 = vmatpush1.msra.mxu0 0.0
  %1293 = vmatprep.subr.mxu0 0.0
  %1294 = vmatpush1.msra.mxu0 0.0
  %1295 = vmatprep.subr.mxu0 0.0
  %1296 = vmatpush1.msra.mxu0 0.0
  %1297 = vmatprep.subr.mxu0 0.0
  %1298 = vmatpush1.msra.mxu0 0.0
  %1299 = vmatprep.subr.mxu0 0.0
  %1300 = vmatpush1.msra.mxu0 0.0
  %1301 = vmatprep.subr.mxu0 0.0
  %1302 = vmatpush1.msra.mxu0 0.0
  %1303 = vmatprep.subr.mxu0 0.0
  %1304 = vmatpush1.msra.mxu0 0.0
  %1305 = vmatprep.subr.mxu0 0.0
  %1306 = vmatpush1.msra.mxu0 0.0
  %1307 = vmatprep.mubr.f32.mxu0 0.0
  %1308 = vmatmul.mubr.f32.gmra.mrb[0].mxu0 %v1232
  %v1309 = vpop.f32.mrb[0].mxu0
  %v1310 = vadd.f32 %v1214, %v1309
  %v1311 = vpop.f32.mrb[0].mxu0
  %1312 = vmatprep.mubr.f32.mxu0 0.0
  %1313 = vmatmul.mubr.f32.gmra.mrb[0].mxu0 %v1235
  %v1314 = vpop.f32.mrb[0].mxu0
  %v1315 = vadd.f32 %v1219, %v1314
  %v1316 = vpop.f32.mrb[0].mxu0
  %1317 = vmatprep.mubr.f32.mxu0 0.0
  %1318 = vmatmul.mubr.f32.gmra.mrb[0].mxu0 %v1238
  %v1319 = vpop.f32.mrb[0].mxu0
  %v1320 = vadd.f32 %v1224, %v1319
  %v1321 = vpop.f32.mrb[0].mxu0
  %1322 = vmatprep.mubr.f32.mxu0 0.0
  %1323 = vmatmul.mubr.f32.gmra.mrb[0].mxu0 %v1241
  %v1324 = vpop.f32.mrb[0].mxu0
  %v1325 = vadd.f32 %v1229, %v1324
  %v1326 = vpop.f32.mrb[0].mxu0
  %1327 = vdwg.mxu0
  %v1328 = vmax.f32 %v1310, 0.0
  %v1329 = vmax.f32 %v1315, 0.0
  %v1330 = vmax.f32 %v1320, 0.0
  %v1331 = vmax.f32 %v1325, 0.0
  %s1332 = scalar_lea.vmem %s17, 32
  %v1333 = vld [vmem:[%s1332] sm:$0xff]
  %v1334 = vld [vmem:[%s1332 + $0x8] sm:$0xff]
  %v1335 = vld [vmem:[%s1332 + $0x10] sm:$0xff]
  %v1336 = vld [vmem:[%s1332 + $0x18] sm:$0xff]
  %s1337 = scalar_lea.vmem %s19, 32
  %v1338 = vld [vmem:[%s1337] sm:$0xff]
  %v1339 = vld [vmem:[%s1337 + $0x8] sm:$0xff]
  %v1340 = vld [vmem:[%s1337 + $0x10] sm:$0xff]
  %v1341 = vld [vmem:[%s1337 + $0x18] sm:$0xff]
  %1343 = vset.pattern.permute.xlu0 0
  %1344 = vperm.xlu0 %1343, %v1338
  %v1345 = vpop.permute.xlu0 %1344
  %1348 = vset.pattern.permute.xlu0 0
  %1349 = vperm.xlu0 %1348, %v1339
  %v1350 = vpop.permute.xlu0 %1349
  %1353 = vset.pattern.permute.xlu0 0
  %1354 = vperm.xlu0 %1353, %v1340
  %v1355 = vpop.permute.xlu0 %1354
  %1358 = vset.pattern.permute.xlu0 0
  %1359 = vperm.xlu0 %1358, %v1341
  %v1360 = vpop.permute.xlu0 %1359
  %v1363 = vsel %vm534, %v1333, 0
  %v1366 = vsel %vm534, %v1334, 0
  %v1369 = vsel %vm534, %v1335, 0
  %v1372 = vsel %vm534, %v1336, 0
  %1374 = vmatprep.subr.mxu0 0.0
  %1375 = vmatpush1.msra.mxu0 %v1328
  %1376 = vmatprep.subr.mxu0 0.0
  %1377 = vmatpush1.msra.mxu0 %v1329
  %1378 = vmatprep.subr.mxu0 0.0
  %1379 = vmatpush1.msra.mxu0 %v1330
  %1380 = vmatprep.subr.mxu0 0.0
  %1381 = vmatpush1.msra.mxu0 %v1331
  %1382 = vmatprep.subr.mxu0 0.0
  %1383 = vmatpush1.msra.mxu0 0.0
  %1384 = vmatprep.subr.mxu0 0.0
  %1385 = vmatpush1.msra.mxu0 0.0
  %1386 = vmatprep.subr.mxu0 0.0
  %1387 = vmatpush1.msra.mxu0 0.0
  %1388 = vmatprep.subr.mxu0 0.0
  %1389 = vmatpush1.msra.mxu0 0.0
  %1390 = vmatprep.subr.mxu0 0.0
  %1391 = vmatpush1.msra.mxu0 0.0
  %1392 = vmatprep.subr.mxu0 0.0
  %1393 = vmatpush1.msra.mxu0 0.0
  %1394 = vmatprep.subr.mxu0 0.0
  %1395 = vmatpush1.msra.mxu0 0.0
  %1396 = vmatprep.subr.mxu0 0.0
  %1397 = vmatpush1.msra.mxu0 0.0
  %1398 = vmatprep.subr.mxu0 0.0
  %1399 = vmatpush1.msra.mxu0 0.0
  %1400 = vmatprep.subr.mxu0 0.0
  %1401 = vmatpush1.msra.mxu0 0.0
  %1402 = vmatprep.subr.mxu0 0.0
  %1403 = vmatpush1.msra.mxu0 0.0
  %1404 = vmatprep.subr.mxu0 0.0
  %1405 = vmatpush1.msra.mxu0 0.0
  %1406 = vmatprep.subr.mxu0 0.0
  %1407 = vmatpush1.msra.mxu0 0.0
  %1408 = vmatprep.subr.mxu0 0.0
  %1409 = vmatpush1.msra.mxu0 0.0
  %1410 = vmatprep.subr.mxu0 0.0
  %1411 = vmatpush1.msra.mxu0 0.0
  %1412 = vmatprep.subr.mxu0 0.0
  %1413 = vmatpush1.msra.mxu0 0.0
  %1414 = vmatprep.subr.mxu0 0.0
  %1415 = vmatpush1.msra.mxu0 0.0
  %1416 = vmatprep.subr.mxu0 0.0
  %1417 = vmatpush1.msra.mxu0 0.0
  %1418 = vmatprep.subr.mxu0 0.0
  %1419 = vmatpush1.msra.mxu0 0.0
  %1420 = vmatprep.subr.mxu0 0.0
  %1421 = vmatpush1.msra.mxu0 0.0
  %1422 = vmatprep.subr.mxu0 0.0
  %1423 = vmatpush1.msra.mxu0 0.0
  %1424 = vmatprep.subr.mxu0 0.0
  %1425 = vmatpush1.msra.mxu0 0.0
  %1426 = vmatprep.subr.mxu0 0.0
  %1427 = vmatpush1.msra.mxu0 0.0
  %1428 = vmatprep.subr.mxu0 0.0
  %1429 = vmatpush1.msra.mxu0 0.0
  %1430 = vmatprep.subr.mxu0 0.0
  %1431 = vmatpush1.msra.mxu0 0.0
  %1432 = vmatprep.subr.mxu0 0.0
  %1433 = vmatpush1.msra.mxu0 0.0
  %1434 = vmatprep.subr.mxu0 0.0
  %1435 = vmatpush1.msra.mxu0 0.0
  %1436 = vmatprep.subr.mxu0 0.0
  %1437 = vmatpush1.msra.mxu0 0.0
  %1438 = vmatprep.mubr.f32.mxu0 0.0
  %1439 = vmatmul.mubr.f32.gmra.mrb[0].mxu0 %v1363
  %v1440 = vpop.f32.mrb[0].mxu0
  %v1441 = vadd.f32 %v1345, %v1440
  %v1442 = vpop.f32.mrb[0].mxu0
  %1443 = vmatprep.mubr.f32.mxu0 0.0
  %1444 = vmatmul.mubr.f32.gmra.mrb[0].mxu0 %v1366
  %v1445 = vpop.f32.mrb[0].mxu0
  %v1446 = vadd.f32 %v1350, %v1445
  %v1447 = vpop.f32.mrb[0].mxu0
  %1448 = vmatprep.mubr.f32.mxu0 0.0
  %1449 = vmatmul.mubr.f32.gmra.mrb[0].mxu0 %v1369
  %v1450 = vpop.f32.mrb[0].mxu0
  %v1451 = vadd.f32 %v1355, %v1450
  %v1452 = vpop.f32.mrb[0].mxu0
  %1453 = vmatprep.mubr.f32.mxu0 0.0
  %1454 = vmatmul.mubr.f32.gmra.mrb[0].mxu0 %v1372
  %v1455 = vpop.f32.mrb[0].mxu0
  %v1456 = vadd.f32 %v1360, %v1455
  %v1457 = vpop.f32.mrb[0].mxu0
  %1458 = vdwg.mxu0
  %v1459 = vmax.f32 %v1441, 0.0
  %v1460 = vmax.f32 %v1446, 0.0
  %v1461 = vmax.f32 %v1451, 0.0
  %v1462 = vmax.f32 %v1456, 0.0
  %s1463 = scalar_lea.vmem %s21, 48
  %v1464 = vld [vmem:[%s1463] sm:$0xff]
  %v1465 = vld [vmem:[%s1463 + $0x8] sm:$0xff]
  %v1466 = vld [vmem:[%s1463 + $0x10] sm:$0xff]
  %v1467 = vld [vmem:[%s1463 + $0x18] sm:$0xff]
  %v1468 = vld [vmem:[%s1463 + $0x20] sm:$0xff]
  %v1469 = vld [vmem:[%s1463 + $0x28] sm:$0xff]
  %1470 = vrot.lane.b32.xlu0 %v1459, 9
  %v1471 = vpop.permute.xlu0 %1470
  %1472 = vrot.lane.b32.xlu0 %v1460, 9
  %v1473 = vpop.permute.xlu0 %1472
  %1474 = vrot.lane.b32.xlu0 %v1461, 9
  %v1475 = vpop.permute.xlu0 %1474
  %1476 = vrot.lane.b32.xlu0 %v1462, 9
  %v1477 = vpop.permute.xlu0 %1476
  %v1478 = vmul.f32 %v1471, %v329
  %v1479 = vmul.f32 %v1473, %v329
  %v1480 = vmul.f32 %v1475, %v329
  %v1481 = vmul.f32 %v1477, %v329
  %1482 = vrot.lane.b32.xlu0 %v1459, 8
  %v1483 = vpop.permute.xlu0 %1482
  %1484 = vrot.lane.b32.xlu0 %v1460, 8
  %v1485 = vpop.permute.xlu0 %1484
  %1486 = vrot.lane.b32.xlu0 %v1461, 8
  %v1487 = vpop.permute.xlu0 %1486
  %1488 = vrot.lane.b32.xlu0 %v1462, 8
  %v1489 = vpop.permute.xlu0 %1488
  %v1490 = vmul.f32 %v1483, %v336
  %v1491 = vmul.f32 %v1485, %v336
  %v1492 = vmul.f32 %v1487, %v336
  %v1493 = vmul.f32 %v1489, %v336
  %1494 = vrot.lane.b32.xlu0 %v1459, 7
  %v1495 = vpop.permute.xlu0 %1494
  %1496 = vrot.lane.b32.xlu0 %v1460, 7
  %v1497 = vpop.permute.xlu0 %1496
  %1498 = vrot.lane.b32.xlu0 %v1461, 7
  %v1499 = vpop.permute.xlu0 %1498
  %1500 = vrot.lane.b32.xlu0 %v1462, 7
  %v1501 = vpop.permute.xlu0 %1500
  %v1502 = vmul.f32 %v1495, %v343
  %v1503 = vmul.f32 %v1497, %v343
  %v1504 = vmul.f32 %v1499, %v343
  %v1505 = vmul.f32 %v1501, %v343
  %1506 = vrot.lane.b32.xlu0 %v1459, 1
  %v1507 = vpop.permute.xlu0 %1506
  %1508 = vrot.lane.b32.xlu0 %v1460, 1
  %v1509 = vpop.permute.xlu0 %1508
  %1510 = vrot.lane.b32.xlu0 %v1461, 1
  %v1511 = vpop.permute.xlu0 %1510
  %1512 = vrot.lane.b32.xlu0 %v1462, 1
  %v1513 = vpop.permute.xlu0 %1512
  %v1514 = vmul.f32 %v1507, %v350
  %v1515 = vmul.f32 %v1509, %v350
  %v1516 = vmul.f32 %v1511, %v350
  %v1517 = vmul.f32 %v1513, %v350
  %1518 = vrot.lane.b32.xlu0 %v1459, 127
  %v1519 = vpop.permute.xlu0 %1518
  %1520 = vrot.lane.b32.xlu0 %v1460, 127
  %v1521 = vpop.permute.xlu0 %1520
  %1522 = vrot.lane.b32.xlu0 %v1461, 127
  %v1523 = vpop.permute.xlu0 %1522
  %1524 = vrot.lane.b32.xlu0 %v1462, 127
  %v1525 = vpop.permute.xlu0 %1524
  %v1526 = vmul.f32 %v1519, %v357
  %v1527 = vmul.f32 %v1521, %v357
  %v1528 = vmul.f32 %v1523, %v357
  %v1529 = vmul.f32 %v1525, %v357
  %1530 = vrot.lane.b32.xlu0 %v1459, 121
  %v1531 = vpop.permute.xlu0 %1530
  %1532 = vrot.lane.b32.xlu0 %v1460, 121
  %v1533 = vpop.permute.xlu0 %1532
  %1534 = vrot.lane.b32.xlu0 %v1461, 121
  %v1535 = vpop.permute.xlu0 %1534
  %1536 = vrot.lane.b32.xlu0 %v1462, 121
  %v1537 = vpop.permute.xlu0 %1536
  %v1538 = vmul.f32 %v1531, %v364
  %v1539 = vmul.f32 %v1533, %v364
  %v1540 = vmul.f32 %v1535, %v364
  %v1541 = vmul.f32 %v1537, %v364
  %1542 = vrot.lane.b32.xlu0 %v1459, 120
  %v1543 = vpop.permute.xlu0 %1542
  %1544 = vrot.lane.b32.xlu0 %v1460, 120
  %v1545 = vpop.permute.xlu0 %1544
  %1546 = vrot.lane.b32.xlu0 %v1461, 120
  %v1547 = vpop.permute.xlu0 %1546
  %1548 = vrot.lane.b32.xlu0 %v1462, 120
  %v1549 = vpop.permute.xlu0 %1548
  %v1550 = vmul.f32 %v1543, %v371
  %v1551 = vmul.f32 %v1545, %v371
  %v1552 = vmul.f32 %v1547, %v371
  %v1553 = vmul.f32 %v1549, %v371
  %1554 = vrot.lane.b32.xlu0 %v1459, 119
  %v1555 = vpop.permute.xlu0 %1554
  %1556 = vrot.lane.b32.xlu0 %v1460, 119
  %v1557 = vpop.permute.xlu0 %1556
  %1558 = vrot.lane.b32.xlu0 %v1461, 119
  %v1559 = vpop.permute.xlu0 %1558
  %1560 = vrot.lane.b32.xlu0 %v1462, 119
  %v1561 = vpop.permute.xlu0 %1560
  %v1562 = vmul.f32 %v1555, %v378
  %v1563 = vmul.f32 %v1557, %v378
  %v1564 = vmul.f32 %v1559, %v378
  %v1565 = vmul.f32 %v1561, %v378
  %s1566 = scalar_lea.vmem %s23, 16
  %v1567 = vld [vmem:[%s1566] sm:$0xff]
  %v1568 = vld [vmem:[%s1566 + $0x8] sm:$0xff]
  %1570 = vset.pattern.permute.xlu0 0
  %1571 = vperm.xlu0 %1570, %v1567
  %v1572 = vpop.permute.xlu0 %1571
  %1575 = vset.pattern.permute.xlu0 0
  %1576 = vperm.xlu0 %1575, %v1568
  %v1577 = vpop.permute.xlu0 %1576
  %v1580 = vsel %vm534, %v1466, 0
  %v1583 = vsel %vm534, %v1469, 0
  %1585 = vmatprep.subr.mxu0 0.0
  %1586 = vmatpush1.msra.mxu0 %v1478
  %1587 = vmatprep.subr.mxu0 0.0
  %1588 = vmatpush1.msra.mxu0 %v1479
  %1589 = vmatprep.subr.mxu0 0.0
  %1590 = vmatpush1.msra.mxu0 %v1480
  %1591 = vmatprep.subr.mxu0 0.0
  %1592 = vmatpush1.msra.mxu0 %v1481
  %1593 = vmatprep.subr.mxu0 0.0
  %1594 = vmatpush1.msra.mxu0 %v1490
  %1595 = vmatprep.subr.mxu0 0.0
  %1596 = vmatpush1.msra.mxu0 %v1491
  %1597 = vmatprep.subr.mxu0 0.0
  %1598 = vmatpush1.msra.mxu0 %v1492
  %1599 = vmatprep.subr.mxu0 0.0
  %1600 = vmatpush1.msra.mxu0 %v1493
  %1601 = vmatprep.subr.mxu0 0.0
  %1602 = vmatpush1.msra.mxu0 %v1502
  %1603 = vmatprep.subr.mxu0 0.0
  %1604 = vmatpush1.msra.mxu0 %v1503
  %1605 = vmatprep.subr.mxu0 0.0
  %1606 = vmatpush1.msra.mxu0 %v1504
  %1607 = vmatprep.subr.mxu0 0.0
  %1608 = vmatpush1.msra.mxu0 %v1505
  %1609 = vmatprep.subr.mxu0 0.0
  %1610 = vmatpush1.msra.mxu0 %v1514
  %1611 = vmatprep.subr.mxu0 0.0
  %1612 = vmatpush1.msra.mxu0 %v1515
  %1613 = vmatprep.subr.mxu0 0.0
  %1614 = vmatpush1.msra.mxu0 %v1516
  %1615 = vmatprep.subr.mxu0 0.0
  %1616 = vmatpush1.msra.mxu0 %v1517
  %1617 = vmatprep.subr.mxu0 0.0
  %1618 = vmatpush1.msra.mxu0 %v1459
  %1619 = vmatprep.subr.mxu0 0.0
  %1620 = vmatpush1.msra.mxu0 %v1460
  %1621 = vmatprep.subr.mxu0 0.0
  %1622 = vmatpush1.msra.mxu0 %v1461
  %1623 = vmatprep.subr.mxu0 0.0
  %1624 = vmatpush1.msra.mxu0 %v1462
  %1625 = vmatprep.subr.mxu0 0.0
  %1626 = vmatpush1.msra.mxu0 %v1526
  %1627 = vmatprep.subr.mxu0 0.0
  %1628 = vmatpush1.msra.mxu0 %v1527
  %1629 = vmatprep.subr.mxu0 0.0
  %1630 = vmatpush1.msra.mxu0 %v1528
  %1631 = vmatprep.subr.mxu0 0.0
  %1632 = vmatpush1.msra.mxu0 %v1529
  %1633 = vmatprep.subr.mxu0 0.0
  %1634 = vmatpush1.msra.mxu0 %v1538
  %1635 = vmatprep.subr.mxu0 0.0
  %1636 = vmatpush1.msra.mxu0 %v1539
  %1637 = vmatprep.subr.mxu0 0.0
  %1638 = vmatpush1.msra.mxu0 %v1540
  %1639 = vmatprep.subr.mxu0 0.0
  %1640 = vmatpush1.msra.mxu0 %v1541
  %1641 = vmatprep.subr.mxu0 0.0
  %1642 = vmatpush1.msra.mxu0 %v1550
  %1643 = vmatprep.subr.mxu0 0.0
  %1644 = vmatpush1.msra.mxu0 %v1551
  %1645 = vmatprep.subr.mxu0 0.0
  %1646 = vmatpush1.msra.mxu0 %v1552
  %1647 = vmatprep.subr.mxu0 0.0
  %1648 = vmatpush1.msra.mxu0 %v1553
  %1649 = vmatprep.mubr.f32.mxu0 %v1465
  %1650 = vmatmul.mubr.f32.gmra.mrb[0].mxu0 %v1464
  %v1651 = vpop.f32.mrb[0].mxu0
  %v1652 = vadd.f32 %v1572, %v1651
  %v1653 = vpop.f32.mrb[0].mxu0
  %1654 = vmatprep.mubr.f32.mxu0 %v1468
  %1655 = vmatmul.mubr.f32.gmra.mrb[0].mxu0 %v1467
  %v1656 = vpop.f32.mrb[0].mxu0
  %v1657 = vadd.f32 %v1577, %v1656
  %v1658 = vpop.f32.mrb[0].mxu0
  %1659 = vdwg.mxu0
  %1660 = vmatprep.subr.mxu0 0.0
  %1661 = vmatpush1.msra.mxu0 %v1562
  %1662 = vmatprep.subr.mxu0 0.0
  %1663 = vmatpush1.msra.mxu0 %v1563
  %1664 = vmatprep.subr.mxu0 0.0
  %1665 = vmatpush1.msra.mxu0 %v1564
  %1666 = vmatprep.subr.mxu0 0.0
  %1667 = vmatpush1.msra.mxu0 %v1565
  %1668 = vmatprep.subr.mxu0 0.0
  %1669 = vmatpush1.msra.mxu0 0.0
  %1670 = vmatprep.subr.mxu0 0.0
  %1671 = vmatpush1.msra.mxu0 0.0
  %1672 = vmatprep.subr.mxu0 0.0
  %1673 = vmatpush1.msra.mxu0 0.0
  %1674 = vmatprep.subr.mxu0 0.0
  %1675 = vmatpush1.msra.mxu0 0.0
  %1676 = vmatprep.subr.mxu0 0.0
  %1677 = vmatpush1.msra.mxu0 0.0
  %1678 = vmatprep.subr.mxu0 0.0
  %1679 = vmatpush1.msra.mxu0 0.0
  %1680 = vmatprep.subr.mxu0 0.0
  %1681 = vmatpush1.msra.mxu0 0.0
  %1682 = vmatprep.subr.mxu0 0.0
  %1683 = vmatpush1.msra.mxu0 0.0
  %1684 = vmatprep.subr.mxu0 0.0
  %1685 = vmatpush1.msra.mxu0 0.0
  %1686 = vmatprep.subr.mxu0 0.0
  %1687 = vmatpush1.msra.mxu0 0.0
  %1688 = vmatprep.subr.mxu0 0.0
  %1689 = vmatpush1.msra.mxu0 0.0
  %1690 = vmatprep.subr.mxu0 0.0
  %1691 = vmatpush1.msra.mxu0 0.0
  %1692 = vmatprep.subr.mxu0 0.0
  %1693 = vmatpush1.msra.mxu0 0.0
  %1694 = vmatprep.subr.mxu0 0.0
  %1695 = vmatpush1.msra.mxu0 0.0
  %1696 = vmatprep.subr.mxu0 0.0
  %1697 = vmatpush1.msra.mxu0 0.0
  %1698 = vmatprep.subr.mxu0 0.0
  %1699 = vmatpush1.msra.mxu0 0.0
  %1700 = vmatprep.subr.mxu0 0.0
  %1701 = vmatpush1.msra.mxu0 0.0
  %1702 = vmatprep.subr.mxu0 0.0
  %1703 = vmatpush1.msra.mxu0 0.0
  %1704 = vmatprep.subr.mxu0 0.0
  %1705 = vmatpush1.msra.mxu0 0.0
  %1706 = vmatprep.subr.mxu0 0.0
  %1707 = vmatpush1.msra.mxu0 0.0
  %1708 = vmatprep.subr.mxu0 0.0
  %1709 = vmatpush1.msra.mxu0 0.0
  %1710 = vmatprep.subr.mxu0 0.0
  %1711 = vmatpush1.msra.mxu0 0.0
  %1712 = vmatprep.subr.mxu0 0.0
  %1713 = vmatpush1.msra.mxu0 0.0
  %1714 = vmatprep.subr.mxu0 0.0
  %1715 = vmatpush1.msra.mxu0 0.0
  %1716 = vmatprep.subr.mxu0 0.0
  %1717 = vmatpush1.msra.mxu0 0.0
  %1718 = vmatprep.subr.mxu0 0.0
  %1719 = vmatpush1.msra.mxu0 0.0
  %1720 = vmatprep.subr.mxu0 0.0
  %1721 = vmatpush1.msra.mxu0 0.0
  %1722 = vmatprep.subr.mxu0 0.0
  %1723 = vmatpush1.msra.mxu0 0.0
  %1724 = vmatprep.mubr.f32.mxu0 0.0
  %1725 = vmatmul.mubr.f32.gmra.mrb[0].mxu0 %v1580
  %v1726 = vpop.f32.mrb[0].mxu0
  %v1727 = vadd.f32 %v1652, %v1726
  %v1728 = vpop.f32.mrb[0].mxu0
  %1729 = vmatprep.mubr.f32.mxu0 0.0
  %1730 = vmatmul.mubr.f32.gmra.mrb[0].mxu0 %v1583
  %v1731 = vpop.f32.mrb[0].mxu0
  %v1732 = vadd.f32 %v1657, %v1731
  %v1733 = vpop.f32.mrb[0].mxu0
  %1734 = vdwg.mxu0
  %v1735 = vadd.f32 %v1732, 2.0
  %v1736 = vsub.f32 0.0, %v1735
  %v1737 = vmul.f32 %v1736, 1.442695
  %v1738 = vpow.pop %v1737
  %v1739 = vadd.f32 %v1738, 1.0
  %v1740 = vadd.f32 %v1176, %v1727
  %v1741 = vrcp.pop %v1739
  %v1742 = vmul.f32 %v1740, %v1741
  %v1743 = vlog2.pop %v1739
  %v1744 = vmul.f32 %v1743, 0.6931472
  %v1745 = vsub.f32 0.0, %v1744
  %1746 = vmatprep.subr.mxu0 0.0
  %1747 = vmatpush1.msra.mxu0 %v123
  %1748 = vmatprep.subr.mxu0 0.0
  %1749 = vmatpush1.msra.mxu0 %v124
  %1750 = vmatprep.subr.mxu0 0.0
  %1751 = vmatpush1.msra.mxu0 %v125
  %1752 = vmatprep.subr.mxu0 0.0
  %1753 = vmatpush1.msra.mxu0 %v126
  %1754 = vmatprep.subr.mxu0 0.0
  %1755 = vmatpush1.msra.mxu0 %v127
  %1756 = vmatprep.subr.mxu0 0.0
  %1757 = vmatpush1.msra.mxu0 %v128
  %1758 = vmatprep.subr.mxu0 0.0
  %1759 = vmatpush1.msra.mxu0 %v129
  %1760 = vmatprep.subr.mxu0 0.0
  %1761 = vmatpush1.msra.mxu0 %v130
  %1762 = vmatprep.subr.mxu0 0.0
  %1763 = vmatpush1.msra.mxu0 %v131
  %1764 = vmatprep.subr.mxu0 0.0
  %1765 = vmatpush1.msra.mxu0 %v132
  %1766 = vmatprep.subr.mxu0 0.0
  %1767 = vmatpush1.msra.mxu0 %v133
  %1768 = vmatprep.subr.mxu0 0.0
  %1769 = vmatpush1.msra.mxu0 %v134
  %1770 = vmatprep.subr.mxu0 0.0
  %1771 = vmatpush1.msra.mxu0 %v135
  %1772 = vmatprep.subr.mxu0 0.0
  %1773 = vmatpush1.msra.mxu0 %v136
  %1774 = vmatprep.subr.mxu0 0.0
  %1775 = vmatpush1.msra.mxu0 %v137
  %1776 = vmatprep.subr.mxu0 0.0
  %1777 = vmatpush1.msra.mxu0 %v138
  %1778 = vmatprep.subr.mxu0 0.0
  %1779 = vmatpush1.msra.mxu0 0.0
  %1780 = vmatprep.subr.mxu0 0.0
  %1781 = vmatpush1.msra.mxu0 0.0
  %1782 = vmatprep.subr.mxu0 0.0
  %1783 = vmatpush1.msra.mxu0 0.0
  %1784 = vmatprep.subr.mxu0 0.0
  %1785 = vmatpush1.msra.mxu0 0.0
  %1786 = vmatprep.subr.mxu0 0.0
  %1787 = vmatpush1.msra.mxu0 0.0
  %1788 = vmatprep.subr.mxu0 0.0
  %1789 = vmatpush1.msra.mxu0 0.0
  %1790 = vmatprep.subr.mxu0 0.0
  %1791 = vmatpush1.msra.mxu0 0.0
  %1792 = vmatprep.subr.mxu0 0.0
  %1793 = vmatpush1.msra.mxu0 0.0
  %1794 = vmatprep.subr.mxu0 0.0
  %1795 = vmatpush1.msra.mxu0 0.0
  %1796 = vmatprep.subr.mxu0 0.0
  %1797 = vmatpush1.msra.mxu0 0.0
  %1798 = vmatprep.subr.mxu0 0.0
  %1799 = vmatpush1.msra.mxu0 0.0
  %1800 = vmatprep.subr.mxu0 0.0
  %1801 = vmatpush1.msra.mxu0 0.0
  %1802 = vmatprep.subr.mxu0 0.0
  %1803 = vmatpush1.msra.mxu0 0.0
  %1804 = vmatprep.subr.mxu0 0.0
  %1805 = vmatpush1.msra.mxu0 0.0
  %1806 = vmatprep.subr.mxu0 0.0
  %1807 = vmatpush1.msra.mxu0 0.0
  %1808 = vmatprep.subr.mxu0 0.0
  %1809 = vmatpush1.msra.mxu0 0.0
  %1810 = vmatprep.mubr.f32.mxu0 0.0
  %1811 = vmatmul.mubr.f32.gmra.mrb[0].mxu0 %v1745
  %v1812 = vpop.f32.mrb[0].mxu0
  %v1813 = vadd.f32 0.0, %v1812
  %v1814 = vpop.f32.mrb[0].mxu0
  %1815 = vdwg.mxu0
  %v1816 = vrot.slane %v1813, 4
  %v1817 = vadd.f32 %v1813, %v1816
  %v1818 = vrot.slane %v1817, 2
  %v1819 = vadd.f32 %v1817, %v1818
  %v1820 = vrot.slane %v1819, 1
  %v1821 = vadd.f32 %v1819, %v1820
  %v1822 = vadd.f32 %v993, %v1821
  %v1823 = vld [vmem:[%s25] sm:$0xff]
  %v1824 = vld [vmem:[%s25 + $0x8] sm:$0xff]
  %v1825 = vld [vmem:[%s27] sm:$0xff]
  %v1826 = vld [vmem:[%s27 + $0x8] sm:$0xff]
  %1828 = vset.pattern.permute.xlu0 0
  %1829 = vperm.xlu0 %1828, %v1825
  %v1830 = vpop.permute.xlu0 %1829
  %1833 = vset.pattern.permute.xlu0 0
  %1834 = vperm.xlu0 %1833, %v1826
  %v1835 = vpop.permute.xlu0 %1834
  %v1838 = vsel %vm404, %v1823, 0
  %v1841 = vsel %vm404, %v1824, 0
  %1843 = vmatprep.subr.mxu0 0.0
  %1844 = vmatpush1.msra.mxu0 %v1184
  %1845 = vmatprep.subr.mxu0 0.0
  %1846 = vmatpush1.msra.mxu0 %v1187
  %1847 = vmatprep.subr.mxu0 0.0
  %1848 = vmatpush1.msra.mxu0 %v1190
  %1849 = vmatprep.subr.mxu0 0.0
  %1850 = vmatpush1.msra.mxu0 %v1193
  %1851 = vmatprep.subr.mxu0 0.0
  %1852 = vmatpush1.msra.mxu0 %v1175
  %1853 = vmatprep.subr.mxu0 0.0
  %1854 = vmatpush1.msra.mxu0 %v1196
  %1855 = vmatprep.subr.mxu0 0.0
  %1856 = vmatpush1.msra.mxu0 %v1199
  %1857 = vmatprep.subr.mxu0 0.0
  %1858 = vmatpush1.msra.mxu0 %v1202
  %1859 = vmatprep.subr.mxu0 0.0
  %1860 = vmatpush1.msra.mxu0 %v1205
  %1861 = vmatprep.subr.mxu0 0.0
  %1862 = vmatpush1.msra.mxu0 0.0
  %1863 = vmatprep.subr.mxu0 0.0
  %1864 = vmatpush1.msra.mxu0 0.0
  %1865 = vmatprep.subr.mxu0 0.0
  %1866 = vmatpush1.msra.mxu0 0.0
  %1867 = vmatprep.subr.mxu0 0.0
  %1868 = vmatpush1.msra.mxu0 0.0
  %1869 = vmatprep.subr.mxu0 0.0
  %1870 = vmatpush1.msra.mxu0 0.0
  %1871 = vmatprep.subr.mxu0 0.0
  %1872 = vmatpush1.msra.mxu0 0.0
  %1873 = vmatprep.subr.mxu0 0.0
  %1874 = vmatpush1.msra.mxu0 0.0
  %1875 = vmatprep.subr.mxu0 0.0
  %1876 = vmatpush1.msra.mxu0 0.0
  %1877 = vmatprep.subr.mxu0 0.0
  %1878 = vmatpush1.msra.mxu0 0.0
  %1879 = vmatprep.subr.mxu0 0.0
  %1880 = vmatpush1.msra.mxu0 0.0
  %1881 = vmatprep.subr.mxu0 0.0
  %1882 = vmatpush1.msra.mxu0 0.0
  %1883 = vmatprep.subr.mxu0 0.0
  %1884 = vmatpush1.msra.mxu0 0.0
  %1885 = vmatprep.subr.mxu0 0.0
  %1886 = vmatpush1.msra.mxu0 0.0
  %1887 = vmatprep.subr.mxu0 0.0
  %1888 = vmatpush1.msra.mxu0 0.0
  %1889 = vmatprep.subr.mxu0 0.0
  %1890 = vmatpush1.msra.mxu0 0.0
  %1891 = vmatprep.subr.mxu0 0.0
  %1892 = vmatpush1.msra.mxu0 0.0
  %1893 = vmatprep.subr.mxu0 0.0
  %1894 = vmatpush1.msra.mxu0 0.0
  %1895 = vmatprep.subr.mxu0 0.0
  %1896 = vmatpush1.msra.mxu0 0.0
  %1897 = vmatprep.subr.mxu0 0.0
  %1898 = vmatpush1.msra.mxu0 0.0
  %1899 = vmatprep.subr.mxu0 0.0
  %1900 = vmatpush1.msra.mxu0 0.0
  %1901 = vmatprep.subr.mxu0 0.0
  %1902 = vmatpush1.msra.mxu0 0.0
  %1903 = vmatprep.subr.mxu0 0.0
  %1904 = vmatpush1.msra.mxu0 0.0
  %1905 = vmatprep.subr.mxu0 0.0
  %1906 = vmatpush1.msra.mxu0 0.0
  %1907 = vmatprep.mubr.f32.mxu0 0.0
  %1908 = vmatmul.mubr.f32.gmra.mrb[0].mxu0 %v1838
  %v1909 = vpop.f32.mrb[0].mxu0
  %v1910 = vadd.f32 %v1830, %v1909
  %v1911 = vpop.f32.mrb[0].mxu0
  %1912 = vmatprep.mubr.f32.mxu0 0.0
  %1913 = vmatmul.mubr.f32.gmra.mrb[0].mxu0 %v1841
  %v1914 = vpop.f32.mrb[0].mxu0
  %v1915 = vadd.f32 %v1835, %v1914
  %v1916 = vpop.f32.mrb[0].mxu0
  %1917 = vdwg.mxu0
  %v1918 = vsub.f32 %v1742, %v1910
  %v1919 = vmul.f32 %v1915, 2.0
  %v1920 = vmul.f32 %v1918, %v1918
  %v1921 = vmul.f32 %v1915, -2.0
  %v1922 = vmul.f32 %v1921, 1.442695
  %v1923 = vpow.pop %v1922
  %v1924 = vmul.f32 %v1920, %v1923
  %v1925 = vadd.f32 %v1919, %v1924
  %v1926 = vadd.f32 %v1925, 1.837877
  %v1927 = vmul.f32 %v1926, -0.5
  %1928 = vmatprep.subr.mxu0 0.0
  %1929 = vmatpush1.msra.mxu0 %v123
  %1930 = vmatprep.subr.mxu0 0.0
  %1931 = vmatpush1.msra.mxu0 %v124
  %1932 = vmatprep.subr.mxu0 0.0
  %1933 = vmatpush1.msra.mxu0 %v125
  %1934 = vmatprep.subr.mxu0 0.0
  %1935 = vmatpush1.msra.mxu0 %v126
  %1936 = vmatprep.subr.mxu0 0.0
  %1937 = vmatpush1.msra.mxu0 %v127
  %1938 = vmatprep.subr.mxu0 0.0
  %1939 = vmatpush1.msra.mxu0 %v128
  %1940 = vmatprep.subr.mxu0 0.0
  %1941 = vmatpush1.msra.mxu0 %v129
  %1942 = vmatprep.subr.mxu0 0.0
  %1943 = vmatpush1.msra.mxu0 %v130
  %1944 = vmatprep.subr.mxu0 0.0
  %1945 = vmatpush1.msra.mxu0 %v131
  %1946 = vmatprep.subr.mxu0 0.0
  %1947 = vmatpush1.msra.mxu0 %v132
  %1948 = vmatprep.subr.mxu0 0.0
  %1949 = vmatpush1.msra.mxu0 %v133
  %1950 = vmatprep.subr.mxu0 0.0
  %1951 = vmatpush1.msra.mxu0 %v134
  %1952 = vmatprep.subr.mxu0 0.0
  %1953 = vmatpush1.msra.mxu0 %v135
  %1954 = vmatprep.subr.mxu0 0.0
  %1955 = vmatpush1.msra.mxu0 %v136
  %1956 = vmatprep.subr.mxu0 0.0
  %1957 = vmatpush1.msra.mxu0 %v137
  %1958 = vmatprep.subr.mxu0 0.0
  %1959 = vmatpush1.msra.mxu0 %v138
  %1960 = vmatprep.subr.mxu0 0.0
  %1961 = vmatpush1.msra.mxu0 0.0
  %1962 = vmatprep.subr.mxu0 0.0
  %1963 = vmatpush1.msra.mxu0 0.0
  %1964 = vmatprep.subr.mxu0 0.0
  %1965 = vmatpush1.msra.mxu0 0.0
  %1966 = vmatprep.subr.mxu0 0.0
  %1967 = vmatpush1.msra.mxu0 0.0
  %1968 = vmatprep.subr.mxu0 0.0
  %1969 = vmatpush1.msra.mxu0 0.0
  %1970 = vmatprep.subr.mxu0 0.0
  %1971 = vmatpush1.msra.mxu0 0.0
  %1972 = vmatprep.subr.mxu0 0.0
  %1973 = vmatpush1.msra.mxu0 0.0
  %1974 = vmatprep.subr.mxu0 0.0
  %1975 = vmatpush1.msra.mxu0 0.0
  %1976 = vmatprep.subr.mxu0 0.0
  %1977 = vmatpush1.msra.mxu0 0.0
  %1978 = vmatprep.subr.mxu0 0.0
  %1979 = vmatpush1.msra.mxu0 0.0
  %1980 = vmatprep.subr.mxu0 0.0
  %1981 = vmatpush1.msra.mxu0 0.0
  %1982 = vmatprep.subr.mxu0 0.0
  %1983 = vmatpush1.msra.mxu0 0.0
  %1984 = vmatprep.subr.mxu0 0.0
  %1985 = vmatpush1.msra.mxu0 0.0
  %1986 = vmatprep.subr.mxu0 0.0
  %1987 = vmatpush1.msra.mxu0 0.0
  %1988 = vmatprep.subr.mxu0 0.0
  %1989 = vmatpush1.msra.mxu0 0.0
  %1990 = vmatprep.subr.mxu0 0.0
  %1991 = vmatpush1.msra.mxu0 0.0
  %1992 = vmatprep.mubr.f32.mxu0 0.0
  %1993 = vmatmul.mubr.f32.gmra.mrb[0].mxu0 %v1927
  %v1994 = vpop.f32.mrb[0].mxu0
  %v1995 = vadd.f32 0.0, %v1994
  %v1996 = vpop.f32.mrb[0].mxu0
  %1997 = vdwg.mxu0
  %v1998 = vrot.slane %v1995, 4
  %v1999 = vadd.f32 %v1995, %v1998
  %v2000 = vrot.slane %v1999, 2
  %v2001 = vadd.f32 %v1999, %v2000
  %v2002 = vrot.slane %v2001, 1
  %v2003 = vadd.f32 %v2001, %v2002
  %v2004 = vadd.f32 %v1822, %v2003
  %v2005 = vld [vmem:[%s29] sm:$0xff]
  %v2006 = vld [vmem:[%s29 + $0x8] sm:$0xff]
  %v2007 = vld [vmem:[%s29 + $0x10] sm:$0xff]
  %v2008 = vld [vmem:[%s29 + $0x18] sm:$0xff]
  %v2009 = vld [vmem:[%s29 + $0x20] sm:$0xff]
  %v2010 = vld [vmem:[%s29 + $0x28] sm:$0xff]
  %v2011 = vld [vmem:[%s29 + $0x30] sm:$0xff]
  %v2012 = vld [vmem:[%s29 + $0x38] sm:$0xff]
  %v2013 = vld [vmem:[%s29 + $0x40] sm:$0xff]
  %v2014 = vld [vmem:[%s29 + $0x48] sm:$0xff]
  %v2015 = vld [vmem:[%s29 + $0x50] sm:$0xff]
  %v2016 = vld [vmem:[%s29 + $0x58] sm:$0xff]
  %v2017 = vld [vmem:[%s29 + $0x60] sm:$0xff]
  %v2018 = vld [vmem:[%s29 + $0x68] sm:$0xff]
  %v2019 = vld [vmem:[%s29 + $0x70] sm:$0xff]
  %v2020 = vld [vmem:[%s29 + $0x78] sm:$0xff]
  %2021 = vmatprep.subr.mxu0 0.0
  %2022 = vmatpush1.msra.mxu0 %v2005
  %2023 = vmatprep.subr.mxu0 0.0
  %2024 = vmatpush1.msra.mxu0 %v2006
  %2025 = vmatprep.subr.mxu0 0.0
  %2026 = vmatpush1.msra.mxu0 %v2007
  %2027 = vmatprep.subr.mxu0 0.0
  %2028 = vmatpush1.msra.mxu0 %v2008
  %2029 = vmatprep.subr.mxu0 0.0
  %2030 = vmatpush1.msra.mxu0 %v2009
  %2031 = vmatprep.subr.mxu0 0.0
  %2032 = vmatpush1.msra.mxu0 %v2010
  %2033 = vmatprep.subr.mxu0 0.0
  %2034 = vmatpush1.msra.mxu0 %v2011
  %2035 = vmatprep.subr.mxu0 0.0
  %2036 = vmatpush1.msra.mxu0 %v2012
  %2037 = vmatprep.subr.mxu0 0.0
  %2038 = vmatpush1.msra.mxu0 %v2013
  %2039 = vmatprep.subr.mxu0 0.0
  %2040 = vmatpush1.msra.mxu0 %v2014
  %2041 = vmatprep.subr.mxu0 0.0
  %2042 = vmatpush1.msra.mxu0 %v2015
  %2043 = vmatprep.subr.mxu0 0.0
  %2044 = vmatpush1.msra.mxu0 %v2016
  %2045 = vmatprep.subr.mxu0 0.0
  %2046 = vmatpush1.msra.mxu0 %v2017
  %2047 = vmatprep.subr.mxu0 0.0
  %2048 = vmatpush1.msra.mxu0 %v2018
  %2049 = vmatprep.subr.mxu0 0.0
  %2050 = vmatpush1.msra.mxu0 %v2019
  %2051 = vmatprep.subr.mxu0 0.0
  %2052 = vmatpush1.msra.mxu0 %v2020
  %2053 = vmatprep.subr.mxu0 0.0
  %2054 = vmatpush1.msra.mxu0 0.0
  %2055 = vmatprep.subr.mxu0 0.0
  %2056 = vmatpush1.msra.mxu0 0.0
  %2057 = vmatprep.subr.mxu0 0.0
  %2058 = vmatpush1.msra.mxu0 0.0
  %2059 = vmatprep.subr.mxu0 0.0
  %2060 = vmatpush1.msra.mxu0 0.0
  %2061 = vmatprep.subr.mxu0 0.0
  %2062 = vmatpush1.msra.mxu0 0.0
  %2063 = vmatprep.subr.mxu0 0.0
  %2064 = vmatpush1.msra.mxu0 0.0
  %2065 = vmatprep.subr.mxu0 0.0
  %2066 = vmatpush1.msra.mxu0 0.0
  %2067 = vmatprep.subr.mxu0 0.0
  %2068 = vmatpush1.msra.mxu0 0.0
  %2069 = vmatprep.subr.mxu0 0.0
  %2070 = vmatpush1.msra.mxu0 0.0
  %2071 = vmatprep.subr.mxu0 0.0
  %2072 = vmatpush1.msra.mxu0 0.0
  %2073 = vmatprep.subr.mxu0 0.0
  %2074 = vmatpush1.msra.mxu0 0.0
  %2075 = vmatprep.subr.mxu0 0.0
  %2076 = vmatpush1.msra.mxu0 0.0
  %2077 = vmatprep.subr.mxu0 0.0
  %2078 = vmatpush1.msra.mxu0 0.0
  %2079 = vmatprep.subr.mxu0 0.0
  %2080 = vmatpush1.msra.mxu0 0.0
  %2081 = vmatprep.subr.mxu0 0.0
  %2082 = vmatpush1.msra.mxu0 0.0
  %2083 = vmatprep.subr.mxu0 0.0
  %2084 = vmatpush1.msra.mxu0 0.0
  %2085 = vmatprep.mubr.f32.mxu0 0.0
  %2086 = vmatmul.mubr.f32.gmra.mrb[0].mxu0 %v1175
  %v2087 = vpop.f32.mrb[0].mxu0
  %v2088 = vadd.f32 0.0, %v2087
  %v2089 = vpop.f32.mrb[0].mxu0
  %2090 = vdwg.mxu0
  %s2091 = scalar_lea.vmem %s29, 128
  %v2092 = vld [vmem:[%s2091] sm:$0xff]
  %v2093 = vld [vmem:[%s2091 + $0x8] sm:$0xff]
  %v2094 = vld [vmem:[%s2091 + $0x10] sm:$0xff]
  %v2095 = vld [vmem:[%s2091 + $0x18] sm:$0xff]
  %v2096 = vld [vmem:[%s2091 + $0x20] sm:$0xff]
  %v2097 = vld [vmem:[%s2091 + $0x28] sm:$0xff]
  %v2098 = vld [vmem:[%s2091 + $0x30] sm:$0xff]
  %v2099 = vld [vmem:[%s2091 + $0x38] sm:$0xff]
  %v2100 = vld [vmem:[%s2091 + $0x40] sm:$0xff]
  %v2101 = vld [vmem:[%s2091 + $0x48] sm:$0xff]
  %v2102 = vld [vmem:[%s2091 + $0x50] sm:$0xff]
  %v2103 = vld [vmem:[%s2091 + $0x58] sm:$0xff]
  %v2104 = vld [vmem:[%s2091 + $0x60] sm:$0xff]
  %v2105 = vld [vmem:[%s2091 + $0x68] sm:$0xff]
  %v2106 = vld [vmem:[%s2091 + $0x70] sm:$0xff]
  %v2107 = vld [vmem:[%s2091 + $0x78] sm:$0xff]
  %2108 = vmatprep.subr.mxu0 0.0
  %2109 = vmatpush1.msra.mxu0 %v2092
  %2110 = vmatprep.subr.mxu0 0.0
  %2111 = vmatpush1.msra.mxu0 %v2093
  %2112 = vmatprep.subr.mxu0 0.0
  %2113 = vmatpush1.msra.mxu0 %v2094
  %2114 = vmatprep.subr.mxu0 0.0
  %2115 = vmatpush1.msra.mxu0 %v2095
  %2116 = vmatprep.subr.mxu0 0.0
  %2117 = vmatpush1.msra.mxu0 %v2096
  %2118 = vmatprep.subr.mxu0 0.0
  %2119 = vmatpush1.msra.mxu0 %v2097
  %2120 = vmatprep.subr.mxu0 0.0
  %2121 = vmatpush1.msra.mxu0 %v2098
  %2122 = vmatprep.subr.mxu0 0.0
  %2123 = vmatpush1.msra.mxu0 %v2099
  %2124 = vmatprep.subr.mxu0 0.0
  %2125 = vmatpush1.msra.mxu0 %v2100
  %2126 = vmatprep.subr.mxu0 0.0
  %2127 = vmatpush1.msra.mxu0 %v2101
  %2128 = vmatprep.subr.mxu0 0.0
  %2129 = vmatpush1.msra.mxu0 %v2102
  %2130 = vmatprep.subr.mxu0 0.0
  %2131 = vmatpush1.msra.mxu0 %v2103
  %2132 = vmatprep.subr.mxu0 0.0
  %2133 = vmatpush1.msra.mxu0 %v2104
  %2134 = vmatprep.subr.mxu0 0.0
  %2135 = vmatpush1.msra.mxu0 %v2105
  %2136 = vmatprep.subr.mxu0 0.0
  %2137 = vmatpush1.msra.mxu0 %v2106
  %2138 = vmatprep.subr.mxu0 0.0
  %2139 = vmatpush1.msra.mxu0 %v2107
  %2140 = vmatprep.subr.mxu0 0.0
  %2141 = vmatpush1.msra.mxu0 0.0
  %2142 = vmatprep.subr.mxu0 0.0
  %2143 = vmatpush1.msra.mxu0 0.0
  %2144 = vmatprep.subr.mxu0 0.0
  %2145 = vmatpush1.msra.mxu0 0.0
  %2146 = vmatprep.subr.mxu0 0.0
  %2147 = vmatpush1.msra.mxu0 0.0
  %2148 = vmatprep.subr.mxu0 0.0
  %2149 = vmatpush1.msra.mxu0 0.0
  %2150 = vmatprep.subr.mxu0 0.0
  %2151 = vmatpush1.msra.mxu0 0.0
  %2152 = vmatprep.subr.mxu0 0.0
  %2153 = vmatpush1.msra.mxu0 0.0
  %2154 = vmatprep.subr.mxu0 0.0
  %2155 = vmatpush1.msra.mxu0 0.0
  %2156 = vmatprep.subr.mxu0 0.0
  %2157 = vmatpush1.msra.mxu0 0.0
  %2158 = vmatprep.subr.mxu0 0.0
  %2159 = vmatpush1.msra.mxu0 0.0
  %2160 = vmatprep.subr.mxu0 0.0
  %2161 = vmatpush1.msra.mxu0 0.0
  %2162 = vmatprep.subr.mxu0 0.0
  %2163 = vmatpush1.msra.mxu0 0.0
  %2164 = vmatprep.subr.mxu0 0.0
  %2165 = vmatpush1.msra.mxu0 0.0
  %2166 = vmatprep.subr.mxu0 0.0
  %2167 = vmatpush1.msra.mxu0 0.0
  %2168 = vmatprep.subr.mxu0 0.0
  %2169 = vmatpush1.msra.mxu0 0.0
  %2170 = vmatprep.subr.mxu0 0.0
  %2171 = vmatpush1.msra.mxu0 0.0
  %2172 = vmatprep.mubr.f32.mxu0 0.0
  %2173 = vmatmul.mubr.f32.gmra.mrb[0].mxu0 %v1175
  %v2174 = vpop.f32.mrb[0].mxu0
  %v2175 = vadd.f32 0.0, %v2174
  %v2176 = vpop.f32.mrb[0].mxu0
  %2177 = vdwg.mxu0
  %s2178 = scalar_lea.vmem %s29, 256
  %v2179 = vld [vmem:[%s2178] sm:$0xff]
  %v2180 = vld [vmem:[%s2178 + $0x8] sm:$0xff]
  %v2181 = vld [vmem:[%s2178 + $0x10] sm:$0xff]
  %v2182 = vld [vmem:[%s2178 + $0x18] sm:$0xff]
  %v2183 = vld [vmem:[%s2178 + $0x20] sm:$0xff]
  %v2184 = vld [vmem:[%s2178 + $0x28] sm:$0xff]
  %v2185 = vld [vmem:[%s2178 + $0x30] sm:$0xff]
  %v2186 = vld [vmem:[%s2178 + $0x38] sm:$0xff]
  %v2187 = vld [vmem:[%s2178 + $0x40] sm:$0xff]
  %v2188 = vld [vmem:[%s2178 + $0x48] sm:$0xff]
  %v2189 = vld [vmem:[%s2178 + $0x50] sm:$0xff]
  %v2190 = vld [vmem:[%s2178 + $0x58] sm:$0xff]
  %v2191 = vld [vmem:[%s2178 + $0x60] sm:$0xff]
  %v2192 = vld [vmem:[%s2178 + $0x68] sm:$0xff]
  %v2193 = vld [vmem:[%s2178 + $0x70] sm:$0xff]
  %v2194 = vld [vmem:[%s2178 + $0x78] sm:$0xff]
  %2195 = vmatprep.subr.mxu0 0.0
  %2196 = vmatpush1.msra.mxu0 %v2179
  %2197 = vmatprep.subr.mxu0 0.0
  %2198 = vmatpush1.msra.mxu0 %v2180
  %2199 = vmatprep.subr.mxu0 0.0
  %2200 = vmatpush1.msra.mxu0 %v2181
  %2201 = vmatprep.subr.mxu0 0.0
  %2202 = vmatpush1.msra.mxu0 %v2182
  %2203 = vmatprep.subr.mxu0 0.0
  %2204 = vmatpush1.msra.mxu0 %v2183
  %2205 = vmatprep.subr.mxu0 0.0
  %2206 = vmatpush1.msra.mxu0 %v2184
  %2207 = vmatprep.subr.mxu0 0.0
  %2208 = vmatpush1.msra.mxu0 %v2185
  %2209 = vmatprep.subr.mxu0 0.0
  %2210 = vmatpush1.msra.mxu0 %v2186
  %2211 = vmatprep.subr.mxu0 0.0
  %2212 = vmatpush1.msra.mxu0 %v2187
  %2213 = vmatprep.subr.mxu0 0.0
  %2214 = vmatpush1.msra.mxu0 %v2188
  %2215 = vmatprep.subr.mxu0 0.0
  %2216 = vmatpush1.msra.mxu0 %v2189
  %2217 = vmatprep.subr.mxu0 0.0
  %2218 = vmatpush1.msra.mxu0 %v2190
  %2219 = vmatprep.subr.mxu0 0.0
  %2220 = vmatpush1.msra.mxu0 %v2191
  %2221 = vmatprep.subr.mxu0 0.0
  %2222 = vmatpush1.msra.mxu0 %v2192
  %2223 = vmatprep.subr.mxu0 0.0
  %2224 = vmatpush1.msra.mxu0 %v2193
  %2225 = vmatprep.subr.mxu0 0.0
  %2226 = vmatpush1.msra.mxu0 %v2194
  %2227 = vmatprep.subr.mxu0 0.0
  %2228 = vmatpush1.msra.mxu0 0.0
  %2229 = vmatprep.subr.mxu0 0.0
  %2230 = vmatpush1.msra.mxu0 0.0
  %2231 = vmatprep.subr.mxu0 0.0
  %2232 = vmatpush1.msra.mxu0 0.0
  %2233 = vmatprep.subr.mxu0 0.0
  %2234 = vmatpush1.msra.mxu0 0.0
  %2235 = vmatprep.subr.mxu0 0.0
  %2236 = vmatpush1.msra.mxu0 0.0
  %2237 = vmatprep.subr.mxu0 0.0
  %2238 = vmatpush1.msra.mxu0 0.0
  %2239 = vmatprep.subr.mxu0 0.0
  %2240 = vmatpush1.msra.mxu0 0.0
  %2241 = vmatprep.subr.mxu0 0.0
  %2242 = vmatpush1.msra.mxu0 0.0
  %2243 = vmatprep.subr.mxu0 0.0
  %2244 = vmatpush1.msra.mxu0 0.0
  %2245 = vmatprep.subr.mxu0 0.0
  %2246 = vmatpush1.msra.mxu0 0.0
  %2247 = vmatprep.subr.mxu0 0.0
  %2248 = vmatpush1.msra.mxu0 0.0
  %2249 = vmatprep.subr.mxu0 0.0
  %2250 = vmatpush1.msra.mxu0 0.0
  %2251 = vmatprep.subr.mxu0 0.0
  %2252 = vmatpush1.msra.mxu0 0.0
  %2253 = vmatprep.subr.mxu0 0.0
  %2254 = vmatpush1.msra.mxu0 0.0
  %2255 = vmatprep.subr.mxu0 0.0
  %2256 = vmatpush1.msra.mxu0 0.0
  %2257 = vmatprep.subr.mxu0 0.0
  %2258 = vmatpush1.msra.mxu0 0.0
  %2259 = vmatprep.mubr.f32.mxu0 0.0
  %2260 = vmatmul.mubr.f32.gmra.mrb[0].mxu0 %v1175
  %v2261 = vpop.f32.mrb[0].mxu0
  %v2262 = vadd.f32 0.0, %v2261
  %v2263 = vpop.f32.mrb[0].mxu0
  %2264 = vdwg.mxu0
  %s2265 = scalar_lea.vmem %s29, 384
  %v2266 = vld [vmem:[%s2265] sm:$0xff]
  %v2267 = vld [vmem:[%s2265 + $0x8] sm:$0xff]
  %v2268 = vld [vmem:[%s2265 + $0x10] sm:$0xff]
  %v2269 = vld [vmem:[%s2265 + $0x18] sm:$0xff]
  %v2270 = vld [vmem:[%s2265 + $0x20] sm:$0xff]
  %v2271 = vld [vmem:[%s2265 + $0x28] sm:$0xff]
  %v2272 = vld [vmem:[%s2265 + $0x30] sm:$0xff]
  %v2273 = vld [vmem:[%s2265 + $0x38] sm:$0xff]
  %v2274 = vld [vmem:[%s2265 + $0x40] sm:$0xff]
  %v2275 = vld [vmem:[%s2265 + $0x48] sm:$0xff]
  %v2276 = vld [vmem:[%s2265 + $0x50] sm:$0xff]
  %v2277 = vld [vmem:[%s2265 + $0x58] sm:$0xff]
  %v2278 = vld [vmem:[%s2265 + $0x60] sm:$0xff]
  %v2279 = vld [vmem:[%s2265 + $0x68] sm:$0xff]
  %v2280 = vld [vmem:[%s2265 + $0x70] sm:$0xff]
  %v2281 = vld [vmem:[%s2265 + $0x78] sm:$0xff]
  %2282 = vmatprep.subr.mxu0 0.0
  %2283 = vmatpush1.msra.mxu0 %v2266
  %2284 = vmatprep.subr.mxu0 0.0
  %2285 = vmatpush1.msra.mxu0 %v2267
  %2286 = vmatprep.subr.mxu0 0.0
  %2287 = vmatpush1.msra.mxu0 %v2268
  %2288 = vmatprep.subr.mxu0 0.0
  %2289 = vmatpush1.msra.mxu0 %v2269
  %2290 = vmatprep.subr.mxu0 0.0
  %2291 = vmatpush1.msra.mxu0 %v2270
  %2292 = vmatprep.subr.mxu0 0.0
  %2293 = vmatpush1.msra.mxu0 %v2271
  %2294 = vmatprep.subr.mxu0 0.0
  %2295 = vmatpush1.msra.mxu0 %v2272
  %2296 = vmatprep.subr.mxu0 0.0
  %2297 = vmatpush1.msra.mxu0 %v2273
  %2298 = vmatprep.subr.mxu0 0.0
  %2299 = vmatpush1.msra.mxu0 %v2274
  %2300 = vmatprep.subr.mxu0 0.0
  %2301 = vmatpush1.msra.mxu0 %v2275
  %2302 = vmatprep.subr.mxu0 0.0
  %2303 = vmatpush1.msra.mxu0 %v2276
  %2304 = vmatprep.subr.mxu0 0.0
  %2305 = vmatpush1.msra.mxu0 %v2277
  %2306 = vmatprep.subr.mxu0 0.0
  %2307 = vmatpush1.msra.mxu0 %v2278
  %2308 = vmatprep.subr.mxu0 0.0
  %2309 = vmatpush1.msra.mxu0 %v2279
  %2310 = vmatprep.subr.mxu0 0.0
  %2311 = vmatpush1.msra.mxu0 %v2280
  %2312 = vmatprep.subr.mxu0 0.0
  %2313 = vmatpush1.msra.mxu0 %v2281
  %2314 = vmatprep.subr.mxu0 0.0
  %2315 = vmatpush1.msra.mxu0 0.0
  %2316 = vmatprep.subr.mxu0 0.0
  %2317 = vmatpush1.msra.mxu0 0.0
  %2318 = vmatprep.subr.mxu0 0.0
  %2319 = vmatpush1.msra.mxu0 0.0
  %2320 = vmatprep.subr.mxu0 0.0
  %2321 = vmatpush1.msra.mxu0 0.0
  %2322 = vmatprep.subr.mxu0 0.0
  %2323 = vmatpush1.msra.mxu0 0.0
  %2324 = vmatprep.subr.mxu0 0.0
  %2325 = vmatpush1.msra.mxu0 0.0
  %2326 = vmatprep.subr.mxu0 0.0
  %2327 = vmatpush1.msra.mxu0 0.0
  %2328 = vmatprep.subr.mxu0 0.0
  %2329 = vmatpush1.msra.mxu0 0.0
  %2330 = vmatprep.subr.mxu0 0.0
  %2331 = vmatpush1.msra.mxu0 0.0
  %2332 = vmatprep.subr.mxu0 0.0
  %2333 = vmatpush1.msra.mxu0 0.0
  %2334 = vmatprep.subr.mxu0 0.0
  %2335 = vmatpush1.msra.mxu0 0.0
  %2336 = vmatprep.subr.mxu0 0.0
  %2337 = vmatpush1.msra.mxu0 0.0
  %2338 = vmatprep.subr.mxu0 0.0
  %2339 = vmatpush1.msra.mxu0 0.0
  %2340 = vmatprep.subr.mxu0 0.0
  %2341 = vmatpush1.msra.mxu0 0.0
  %2342 = vmatprep.subr.mxu0 0.0
  %2343 = vmatpush1.msra.mxu0 0.0
  %2344 = vmatprep.subr.mxu0 0.0
  %2345 = vmatpush1.msra.mxu0 0.0
  %2346 = vmatprep.mubr.f32.mxu0 0.0
  %2347 = vmatmul.mubr.f32.gmra.mrb[0].mxu0 %v1175
  %v2348 = vpop.f32.mrb[0].mxu0
  %v2349 = vadd.f32 0.0, %v2348
  %v2350 = vpop.f32.mrb[0].mxu0
  %2351 = vdwg.mxu0
  %v2352 = vld [vmem:[%s31] sm:$0xff]
  %v2353 = vld [vmem:[%s31 + $0x8] sm:$0xff]
  %v2354 = vld [vmem:[%s31 + $0x10] sm:$0xff]
  %v2355 = vld [vmem:[%s31 + $0x18] sm:$0xff]
  %v2357 = vsel %vm534, %v2352, 0
  %v2360 = vsel %vm534, %v2353, 0
  %v2363 = vsel %vm534, %v2354, 0
  %v2366 = vsel %vm534, %v2355, 0
  %2368 = vmatprep.subr.mxu0 0.0
  %2369 = vmatpush1.msra.mxu0 %v2088
  %2370 = vmatprep.subr.mxu0 0.0
  %2371 = vmatpush1.msra.mxu0 %v2175
  %2372 = vmatprep.subr.mxu0 0.0
  %2373 = vmatpush1.msra.mxu0 %v2262
  %2374 = vmatprep.subr.mxu0 0.0
  %2375 = vmatpush1.msra.mxu0 %v2349
  %2376 = vmatprep.subr.mxu0 0.0
  %2377 = vmatpush1.msra.mxu0 0.0
  %2378 = vmatprep.subr.mxu0 0.0
  %2379 = vmatpush1.msra.mxu0 0.0
  %2380 = vmatprep.subr.mxu0 0.0
  %2381 = vmatpush1.msra.mxu0 0.0
  %2382 = vmatprep.subr.mxu0 0.0
  %2383 = vmatpush1.msra.mxu0 0.0
  %2384 = vmatprep.subr.mxu0 0.0
  %2385 = vmatpush1.msra.mxu0 0.0
  %2386 = vmatprep.subr.mxu0 0.0
  %2387 = vmatpush1.msra.mxu0 0.0
  %2388 = vmatprep.subr.mxu0 0.0
  %2389 = vmatpush1.msra.mxu0 0.0
  %2390 = vmatprep.subr.mxu0 0.0
  %2391 = vmatpush1.msra.mxu0 0.0
  %2392 = vmatprep.subr.mxu0 0.0
  %2393 = vmatpush1.msra.mxu0 0.0
  %2394 = vmatprep.subr.mxu0 0.0
  %2395 = vmatpush1.msra.mxu0 0.0
  %2396 = vmatprep.subr.mxu0 0.0
  %2397 = vmatpush1.msra.mxu0 0.0
  %2398 = vmatprep.subr.mxu0 0.0
  %2399 = vmatpush1.msra.mxu0 0.0
  %2400 = vmatprep.subr.mxu0 0.0
  %2401 = vmatpush1.msra.mxu0 0.0
  %2402 = vmatprep.subr.mxu0 0.0
  %2403 = vmatpush1.msra.mxu0 0.0
  %2404 = vmatprep.subr.mxu0 0.0
  %2405 = vmatpush1.msra.mxu0 0.0
  %2406 = vmatprep.subr.mxu0 0.0
  %2407 = vmatpush1.msra.mxu0 0.0
  %2408 = vmatprep.subr.mxu0 0.0
  %2409 = vmatpush1.msra.mxu0 0.0
  %2410 = vmatprep.subr.mxu0 0.0
  %2411 = vmatpush1.msra.mxu0 0.0
  %2412 = vmatprep.subr.mxu0 0.0
  %2413 = vmatpush1.msra.mxu0 0.0
  %2414 = vmatprep.subr.mxu0 0.0
  %2415 = vmatpush1.msra.mxu0 0.0
  %2416 = vmatprep.subr.mxu0 0.0
  %2417 = vmatpush1.msra.mxu0 0.0
  %2418 = vmatprep.subr.mxu0 0.0
  %2419 = vmatpush1.msra.mxu0 0.0
  %2420 = vmatprep.subr.mxu0 0.0
  %2421 = vmatpush1.msra.mxu0 0.0
  %2422 = vmatprep.subr.mxu0 0.0
  %2423 = vmatpush1.msra.mxu0 0.0
  %2424 = vmatprep.subr.mxu0 0.0
  %2425 = vmatpush1.msra.mxu0 0.0
  %2426 = vmatprep.subr.mxu0 0.0
  %2427 = vmatpush1.msra.mxu0 0.0
  %2428 = vmatprep.subr.mxu0 0.0
  %2429 = vmatpush1.msra.mxu0 0.0
  %2430 = vmatprep.subr.mxu0 0.0
  %2431 = vmatpush1.msra.mxu0 0.0
  %2432 = vmatprep.mubr.f32.mxu0 0.0
  %2433 = vmatmul.mubr.f32.gmra.mrb[0].mxu0 %v2357
  %v2434 = vpop.f32.mrb[0].mxu0
  %v2435 = vadd.f32 0.0, %v2434
  %v2436 = vpop.f32.mrb[0].mxu0
  %2437 = vmatprep.mubr.f32.mxu0 0.0
  %2438 = vmatmul.mubr.f32.gmra.mrb[0].mxu0 %v2360
  %v2439 = vpop.f32.mrb[0].mxu0
  %v2440 = vadd.f32 0.0, %v2439
  %v2441 = vpop.f32.mrb[0].mxu0
  %2442 = vmatprep.mubr.f32.mxu0 0.0
  %2443 = vmatmul.mubr.f32.gmra.mrb[0].mxu0 %v2363
  %v2444 = vpop.f32.mrb[0].mxu0
  %v2445 = vadd.f32 0.0, %v2444
  %v2446 = vpop.f32.mrb[0].mxu0
  %2447 = vmatprep.mubr.f32.mxu0 0.0
  %2448 = vmatmul.mubr.f32.gmra.mrb[0].mxu0 %v2366
  %v2449 = vpop.f32.mrb[0].mxu0
  %v2450 = vadd.f32 0.0, %v2449
  %v2451 = vpop.f32.mrb[0].mxu0
  %2452 = vdwg.mxu0
  %v2453 = vld [vmem:[%s33] sm:$0xff]
  %v2454 = vld [vmem:[%s33 + $0x8] sm:$0x1]
  %v2455 = vld [vmem:[%s35] sm:$0xff]
  %v2456 = vld [vmem:[%s35 + $0x8] sm:$0xff]
  %v2457 = vld [vmem:[%s35 + $0x10] sm:$0xff]
  %v2458 = vld [vmem:[%s35 + $0x18] sm:$0xff]
  %v2459 = vld [vmem:[%s37] sm:$0xff]
  %v2460 = vld [vmem:[%s37 + $0x8] sm:$0xff]
  %v2461 = vld [vmem:[%s37 + $0x10] sm:$0xff]
  %v2462 = vld [vmem:[%s37 + $0x18] sm:$0xff]
  %v2463 = vld [vmem:[%s39] sm:$0xff]
  %v2464 = vld [vmem:[%s39 + $0x8] sm:$0xff]
  %v2465 = vld [vmem:[%s39 + $0x10] sm:$0xff]
  %v2466 = vld [vmem:[%s39 + $0x18] sm:$0xff]
  %vm2467 = vcmask 130048
  %v2469 = vsel %vm2467, %v2463, 0
  %v2472 = vsel %vm2467, %v2464, 0
  %v2475 = vsel %vm2467, %v2465, 0
  %v2478 = vsel %vm2467, %v2466, 0
  %2480 = vmatprep.subr.mxu0 0.0
  %2481 = vmatpush1.msra.mxu0 %v2445
  %2482 = vmatprep.subr.mxu0 0.0
  %2483 = vmatpush1.msra.mxu0 %v2450
  %2484 = vmatprep.subr.mxu0 0.0
  %2485 = vmatpush1.msra.mxu0 0.0
  %2486 = vmatprep.subr.mxu0 0.0
  %2487 = vmatpush1.msra.mxu0 0.0
  %2488 = vmatprep.subr.mxu0 0.0
  %2489 = vmatpush1.msra.mxu0 0.0
  %2490 = vmatprep.subr.mxu0 0.0
  %2491 = vmatpush1.msra.mxu0 0.0
  %2492 = vmatprep.subr.mxu0 0.0
  %2493 = vmatpush1.msra.mxu0 0.0
  %2494 = vmatprep.subr.mxu0 0.0
  %2495 = vmatpush1.msra.mxu0 0.0
  %2496 = vmatprep.subr.mxu0 0.0
  %2497 = vmatpush1.msra.mxu0 0.0
  %2498 = vmatprep.subr.mxu0 0.0
  %2499 = vmatpush1.msra.mxu0 0.0
  %2500 = vmatprep.subr.mxu0 0.0
  %2501 = vmatpush1.msra.mxu0 0.0
  %2502 = vmatprep.subr.mxu0 0.0
  %2503 = vmatpush1.msra.mxu0 0.0
  %2504 = vmatprep.subr.mxu0 0.0
  %2505 = vmatpush1.msra.mxu0 0.0
  %2506 = vmatprep.subr.mxu0 0.0
  %2507 = vmatpush1.msra.mxu0 0.0
  %2508 = vmatprep.subr.mxu0 0.0
  %2509 = vmatpush1.msra.mxu0 0.0
  %2510 = vmatprep.subr.mxu0 0.0
  %2511 = vmatpush1.msra.mxu0 0.0
  %2512 = vmatprep.subr.mxu0 0.0
  %2513 = vmatpush1.msra.mxu0 0.0
  %2514 = vmatprep.subr.mxu0 0.0
  %2515 = vmatpush1.msra.mxu0 0.0
  %2516 = vmatprep.subr.mxu0 0.0
  %2517 = vmatpush1.msra.mxu0 0.0
  %2518 = vmatprep.subr.mxu0 0.0
  %2519 = vmatpush1.msra.mxu0 0.0
  %2520 = vmatprep.subr.mxu0 0.0
  %2521 = vmatpush1.msra.mxu0 0.0
  %2522 = vmatprep.subr.mxu0 0.0
  %2523 = vmatpush1.msra.mxu0 0.0
  %2524 = vmatprep.subr.mxu0 0.0
  %2525 = vmatpush1.msra.mxu0 0.0
  %2526 = vmatprep.subr.mxu0 0.0
  %2527 = vmatpush1.msra.mxu0 0.0
  %2528 = vmatprep.subr.mxu0 0.0
  %2529 = vmatpush1.msra.mxu0 0.0
  %2530 = vmatprep.subr.mxu0 0.0
  %2531 = vmatpush1.msra.mxu0 0.0
  %2532 = vmatprep.subr.mxu0 0.0
  %2533 = vmatpush1.msra.mxu0 0.0
  %2534 = vmatprep.subr.mxu0 0.0
  %2535 = vmatpush1.msra.mxu0 0.0
  %2536 = vmatprep.subr.mxu0 0.0
  %2537 = vmatpush1.msra.mxu0 0.0
  %2538 = vmatprep.subr.mxu0 0.0
  %2539 = vmatpush1.msra.mxu0 0.0
  %2540 = vmatprep.subr.mxu0 0.0
  %2541 = vmatpush1.msra.mxu0 0.0
  %2542 = vmatprep.subr.mxu0 0.0
  %2543 = vmatpush1.msra.mxu0 0.0
  %2544 = vmatprep.mubr.f32.mxu0 0.0
  %2545 = vmatmul.mubr.f32.gmra.mrb[0].mxu0 %v2469
  %v2546 = vpop.f32.mrb[0].mxu0
  %v2547 = vadd.f32 0.0, %v2546
  %v2548 = vpop.f32.mrb[0].mxu0
  %2549 = vmatprep.mubr.f32.mxu0 0.0
  %2550 = vmatmul.mubr.f32.gmra.mrb[0].mxu0 %v2472
  %v2551 = vpop.f32.mrb[0].mxu0
  %v2552 = vadd.f32 0.0, %v2551
  %v2553 = vpop.f32.mrb[0].mxu0
  %2554 = vmatprep.mubr.f32.mxu0 0.0
  %2555 = vmatmul.mubr.f32.gmra.mrb[0].mxu0 %v2475
  %v2556 = vpop.f32.mrb[0].mxu0
  %v2557 = vadd.f32 0.0, %v2556
  %v2558 = vpop.f32.mrb[0].mxu0
  %2559 = vmatprep.mubr.f32.mxu0 0.0
  %2560 = vmatmul.mubr.f32.gmra.mrb[0].mxu0 %v2478
  %v2561 = vpop.f32.mrb[0].mxu0
  %v2562 = vadd.f32 0.0, %v2561
  %v2563 = vpop.f32.mrb[0].mxu0
  %2564 = vdwg.mxu0
  %v2566 = vsel %vm2467, %v2459, 0
  %v2569 = vsel %vm2467, %v2460, 0
  %v2572 = vsel %vm2467, %v2461, 0
  %v2575 = vsel %vm2467, %v2462, 0
  %2577 = vmatprep.subr.mxu0 0.0
  %2578 = vmatpush1.msra.mxu0 %v2435
  %2579 = vmatprep.subr.mxu0 0.0
  %2580 = vmatpush1.msra.mxu0 %v2440
  %2581 = vmatprep.subr.mxu0 0.0
  %2582 = vmatpush1.msra.mxu0 0.0
  %2583 = vmatprep.subr.mxu0 0.0
  %2584 = vmatpush1.msra.mxu0 0.0
  %2585 = vmatprep.subr.mxu0 0.0
  %2586 = vmatpush1.msra.mxu0 0.0
  %2587 = vmatprep.subr.mxu0 0.0
  %2588 = vmatpush1.msra.mxu0 0.0
  %2589 = vmatprep.subr.mxu0 0.0
  %2590 = vmatpush1.msra.mxu0 0.0
  %2591 = vmatprep.subr.mxu0 0.0
  %2592 = vmatpush1.msra.mxu0 0.0
  %2593 = vmatprep.subr.mxu0 0.0
  %2594 = vmatpush1.msra.mxu0 0.0
  %2595 = vmatprep.subr.mxu0 0.0
  %2596 = vmatpush1.msra.mxu0 0.0
  %2597 = vmatprep.subr.mxu0 0.0
  %2598 = vmatpush1.msra.mxu0 0.0
  %2599 = vmatprep.subr.mxu0 0.0
  %2600 = vmatpush1.msra.mxu0 0.0
  %2601 = vmatprep.subr.mxu0 0.0
  %2602 = vmatpush1.msra.mxu0 0.0
  %2603 = vmatprep.subr.mxu0 0.0
  %2604 = vmatpush1.msra.mxu0 0.0
  %2605 = vmatprep.subr.mxu0 0.0
  %2606 = vmatpush1.msra.mxu0 0.0
  %2607 = vmatprep.subr.mxu0 0.0
  %2608 = vmatpush1.msra.mxu0 0.0
  %2609 = vmatprep.subr.mxu0 0.0
  %2610 = vmatpush1.msra.mxu0 0.0
  %2611 = vmatprep.subr.mxu0 0.0
  %2612 = vmatpush1.msra.mxu0 0.0
  %2613 = vmatprep.subr.mxu0 0.0
  %2614 = vmatpush1.msra.mxu0 0.0
  %2615 = vmatprep.subr.mxu0 0.0
  %2616 = vmatpush1.msra.mxu0 0.0
  %2617 = vmatprep.subr.mxu0 0.0
  %2618 = vmatpush1.msra.mxu0 0.0
  %2619 = vmatprep.subr.mxu0 0.0
  %2620 = vmatpush1.msra.mxu0 0.0
  %2621 = vmatprep.subr.mxu0 0.0
  %2622 = vmatpush1.msra.mxu0 0.0
  %2623 = vmatprep.subr.mxu0 0.0
  %2624 = vmatpush1.msra.mxu0 0.0
  %2625 = vmatprep.subr.mxu0 0.0
  %2626 = vmatpush1.msra.mxu0 0.0
  %2627 = vmatprep.subr.mxu0 0.0
  %2628 = vmatpush1.msra.mxu0 0.0
  %2629 = vmatprep.subr.mxu0 0.0
  %2630 = vmatpush1.msra.mxu0 0.0
  %2631 = vmatprep.subr.mxu0 0.0
  %2632 = vmatpush1.msra.mxu0 0.0
  %2633 = vmatprep.subr.mxu0 0.0
  %2634 = vmatpush1.msra.mxu0 0.0
  %2635 = vmatprep.subr.mxu0 0.0
  %2636 = vmatpush1.msra.mxu0 0.0
  %2637 = vmatprep.subr.mxu0 0.0
  %2638 = vmatpush1.msra.mxu0 0.0
  %2639 = vmatprep.subr.mxu0 0.0
  %2640 = vmatpush1.msra.mxu0 0.0
  %2641 = vmatprep.mubr.f32.mxu0 0.0
  %2642 = vmatmul.mubr.f32.gmra.mrb[0].mxu0 %v2566
  %v2643 = vpop.f32.mrb[0].mxu0
  %v2644 = vadd.f32 %v2547, %v2643
  %v2645 = vpop.f32.mrb[0].mxu0
  %2646 = vmatprep.mubr.f32.mxu0 0.0
  %2647 = vmatmul.mubr.f32.gmra.mrb[0].mxu0 %v2569
  %v2648 = vpop.f32.mrb[0].mxu0
  %v2649 = vadd.f32 %v2552, %v2648
  %v2650 = vpop.f32.mrb[0].mxu0
  %2651 = vmatprep.mubr.f32.mxu0 0.0
  %2652 = vmatmul.mubr.f32.gmra.mrb[0].mxu0 %v2572
  %v2653 = vpop.f32.mrb[0].mxu0
  %v2654 = vadd.f32 %v2557, %v2653
  %v2655 = vpop.f32.mrb[0].mxu0
  %2656 = vmatprep.mubr.f32.mxu0 0.0
  %2657 = vmatmul.mubr.f32.gmra.mrb[0].mxu0 %v2575
  %v2658 = vpop.f32.mrb[0].mxu0
  %v2659 = vadd.f32 %v2562, %v2658
  %v2660 = vpop.f32.mrb[0].mxu0
  %2661 = vdwg.mxu0
  %v2662 = vld [vmem:[%s41] sm:$0xff]
  %v2663 = vld [vmem:[%s41 + $0x8] sm:$0xff]
  %v2664 = vld [vmem:[%s41 + $0x10] sm:$0xff]
  %v2665 = vld [vmem:[%s41 + $0x18] sm:$0xff]
  %2667 = vset.pattern.permute.xlu0 0
  %2668 = vperm.xlu0 %2667, %v2662
  %v2669 = vpop.permute.xlu0 %2668
  %2672 = vset.pattern.permute.xlu0 0
  %2673 = vperm.xlu0 %2672, %v2663
  %v2674 = vpop.permute.xlu0 %2673
  %2677 = vset.pattern.permute.xlu0 0
  %2678 = vperm.xlu0 %2677, %v2664
  %v2679 = vpop.permute.xlu0 %2678
  %2682 = vset.pattern.permute.xlu0 0
  %2683 = vperm.xlu0 %2682, %v2665
  %v2684 = vpop.permute.xlu0 %2683
  %v2686 = vadd.f32 %v2644, %v2669
  %v2687 = vadd.f32 %v2649, %v2674
  %v2688 = vadd.f32 %v2654, %v2679
  %v2689 = vadd.f32 %v2659, %v2684
  %v2690 = vld [vmem:[%s43] sm:$0xff]
  %v2691 = vld [vmem:[%s43 + $0x8] sm:$0xff]
  %v2692 = vld [vmem:[%s43 + $0x10] sm:$0xff]
  %v2693 = vld [vmem:[%s43 + $0x18] sm:$0xff]
  %v2694 = vld [vmem:[%s43 + $0x20] sm:$0xff]
  %v2695 = vld [vmem:[%s43 + $0x28] sm:$0xff]
  %v2696 = vld [vmem:[%s43 + $0x30] sm:$0xff]
  %v2697 = vld [vmem:[%s43 + $0x38] sm:$0xff]
  %vm2698 = vcmask 1047808
  %2699 = vrot.lane.b32.xlu0 %v2686, 32
  %v2700 = vpop.permute.xlu0 %2699
  %v2701 = vsel %vm2698, %v2700, %v2686
  %2702 = vrot.lane.b32.xlu0 %v2687, 32
  %v2703 = vpop.permute.xlu0 %2702
  %v2704 = vsel %vm2698, %v2703, %v2687
  %2705 = vrot.lane.b32.xlu0 %v2701, 32
  %v2706 = vpop.permute.xlu0 %2705
  %2707 = vrot.lane.b32.xlu0 %v2704, 32
  %v2708 = vpop.permute.xlu0 %2707
  %v2709 = vsel %vm2698, %v2706, %v2686
  %v2710 = vsel %vm2698, %v2708, %v2687
  %v2711 = vlaneseq
  %v2712 = vshrl.u32 %v2711, 7
  %v2713 = vsub.s32 0, %v2712
  %v2714 = vrot.slane %v2453, %v2713
  %2716 = vrot.lane.b32.xlu0 %v2714, 27
  %v2717 = vpop.permute.xlu0 %2716
  %v2719 = vmul.f32 %v2709, %v2717
  %v2720 = vmul.f32 %v2710, %v2717
  %v2721 = vlaneseq
  %v2722 = vshrl.u32 %v2721, 7
  %v2723 = vsub.s32 1, %v2722
  %v2724 = vrot.slane %v2453, %v2723
  %2726 = vrot.lane.b32.xlu0 %v2724, 28
  %v2727 = vpop.permute.xlu0 %2726
  %v2729 = vmul.f32 %v2709, %v2727
  %v2730 = vmul.f32 %v2710, %v2727
  %v2731 = vlaneseq
  %v2732 = vshrl.u32 %v2731, 7
  %v2733 = vsub.s32 2, %v2732
  %v2734 = vrot.slane %v2453, %v2733
  %2736 = vrot.lane.b32.xlu0 %v2734, 29
  %v2737 = vpop.permute.xlu0 %2736
  %v2739 = vmul.f32 %v2709, %v2737
  %v2740 = vmul.f32 %v2710, %v2737
  %v2741 = vlaneseq
  %v2742 = vshrl.u32 %v2741, 7
  %v2743 = vsub.s32 3, %v2742
  %v2744 = vrot.slane %v2453, %v2743
  %2746 = vrot.lane.b32.xlu0 %v2744, 31
  %v2747 = vpop.permute.xlu0 %2746
  %v2749 = vmul.f32 %v2709, %v2747
  %v2750 = vmul.f32 %v2710, %v2747
  %v2751 = vlaneseq
  %v2752 = vshrl.u32 %v2751, 7
  %v2753 = vsub.s32 5, %v2752
  %v2754 = vrot.slane %v2453, %v2753
  %2756 = vrot.lane.b32.xlu0 %v2754, 1
  %v2757 = vpop.permute.xlu0 %2756
  %v2759 = vmul.f32 %v2709, %v2757
  %v2760 = vmul.f32 %v2710, %v2757
  %v2761 = vlaneseq
  %v2762 = vshrl.u32 %v2761, 7
  %v2763 = vsub.s32 6, %v2762
  %v2764 = vrot.slane %v2453, %v2763
  %2766 = vrot.lane.b32.xlu0 %v2764, 3
  %v2767 = vpop.permute.xlu0 %2766
  %v2769 = vmul.f32 %v2709, %v2767
  %v2770 = vmul.f32 %v2710, %v2767
  %v2771 = vlaneseq
  %v2772 = vshrl.u32 %v2771, 7
  %v2773 = vsub.s32 7, %v2772
  %v2774 = vrot.slane %v2453, %v2773
  %2776 = vrot.lane.b32.xlu0 %v2774, 4
  %v2777 = vpop.permute.xlu0 %2776
  %v2779 = vmul.f32 %v2709, %v2777
  %v2780 = vmul.f32 %v2710, %v2777
  %v2781 = vlaneseq
  %v2782 = vshrl.u32 %v2781, 7
  %v2783 = vsub.s32 0, %v2782
  %v2784 = vrot.slane %v2454, %v2783
  %2786 = vrot.lane.b32.xlu0 %v2784, 5
  %v2787 = vpop.permute.xlu0 %2786
  %v2789 = vmul.f32 %v2709, %v2787
  %v2790 = vmul.f32 %v2710, %v2787
  %2793 = vrot.lane.b32.xlu0 %v2729, 127
  %v2794 = vpop.permute.xlu0 %2793
  %2795 = vrot.lane.b32.xlu0 %v2730, 127
  %v2796 = vpop.permute.xlu0 %2795
  %2799 = vrot.lane.b32.xlu0 %v2739, 126
  %v2800 = vpop.permute.xlu0 %2799
  %2801 = vrot.lane.b32.xlu0 %v2740, 126
  %v2802 = vpop.permute.xlu0 %2801
  %2805 = vrot.lane.b32.xlu0 %v2749, 124
  %v2806 = vpop.permute.xlu0 %2805
  %2807 = vrot.lane.b32.xlu0 %v2750, 124
  %v2808 = vpop.permute.xlu0 %2807
  %2811 = vrot.lane.b32.xlu0 %v2686, 27
  %v2812 = vpop.permute.xlu0 %2811
  %2813 = vrot.lane.b32.xlu0 %v2687, 27
  %v2814 = vpop.permute.xlu0 %2813
  %2817 = vrot.lane.b32.xlu0 %v2759, 26
  %v2818 = vpop.permute.xlu0 %2817
  %2819 = vrot.lane.b32.xlu0 %v2760, 26
  %v2820 = vpop.permute.xlu0 %2819
  %2823 = vrot.lane.b32.xlu0 %v2769, 24
  %v2824 = vpop.permute.xlu0 %2823
  %2825 = vrot.lane.b32.xlu0 %v2770, 24
  %v2826 = vpop.permute.xlu0 %2825
  %2829 = vrot.lane.b32.xlu0 %v2779, 23
  %v2830 = vpop.permute.xlu0 %2829
  %2831 = vrot.lane.b32.xlu0 %v2780, 23
  %v2832 = vpop.permute.xlu0 %2831
  %2835 = vrot.lane.b32.xlu0 %v2789, 22
  %v2836 = vpop.permute.xlu0 %2835
  %2837 = vrot.lane.b32.xlu0 %v2790, 22
  %v2838 = vpop.permute.xlu0 %2837
  %v2839 = vld [vmem:[%s45] sm:$0xff]
  %v2840 = vld [vmem:[%s45 + $0x8] sm:$0xff]
  %v2841 = vld [vmem:[%s45 + $0x10] sm:$0xff]
  %v2842 = vld [vmem:[%s45 + $0x18] sm:$0xff]
  %2844 = vset.pattern.permute.xlu0 0
  %2845 = vperm.xlu0 %2844, %v2839
  %v2846 = vpop.permute.xlu0 %2845
  %2849 = vset.pattern.permute.xlu0 0
  %2850 = vperm.xlu0 %2849, %v2840
  %v2851 = vpop.permute.xlu0 %2850
  %2854 = vset.pattern.permute.xlu0 0
  %2855 = vperm.xlu0 %2854, %v2841
  %v2856 = vpop.permute.xlu0 %2855
  %2859 = vset.pattern.permute.xlu0 0
  %2860 = vperm.xlu0 %2859, %v2842
  %v2861 = vpop.permute.xlu0 %2860
  %2865 = vrot.lane.b32.xlu0 %v2719, 101
  %v2866 = vpop.permute.xlu0 %2865
  %2867 = vrot.lane.b32.xlu0 %v2720, 101
  %v2868 = vpop.permute.xlu0 %2867
  %2869 = vrot.lane.b32.xlu0 %v2794, 101
  %v2870 = vpop.permute.xlu0 %2869
  %2871 = vrot.lane.b32.xlu0 %v2796, 101
  %v2872 = vpop.permute.xlu0 %2871
  %2873 = vrot.lane.b32.xlu0 %v2800, 101
  %v2874 = vpop.permute.xlu0 %2873
  %2875 = vrot.lane.b32.xlu0 %v2802, 101
  %v2876 = vpop.permute.xlu0 %2875
  %2877 = vrot.lane.b32.xlu0 %v2806, 101
  %v2878 = vpop.permute.xlu0 %2877
  %2879 = vrot.lane.b32.xlu0 %v2808, 101
  %v2880 = vpop.permute.xlu0 %2879
  %2881 = vrot.lane.b32.xlu0 %v2812, 101
  %v2882 = vpop.permute.xlu0 %2881
  %2883 = vrot.lane.b32.xlu0 %v2814, 101
  %v2884 = vpop.permute.xlu0 %2883
  %2885 = vrot.lane.b32.xlu0 %v2818, 101
  %v2886 = vpop.permute.xlu0 %2885
  %2887 = vrot.lane.b32.xlu0 %v2820, 101
  %v2888 = vpop.permute.xlu0 %2887
  %2889 = vrot.lane.b32.xlu0 %v2824, 101
  %v2890 = vpop.permute.xlu0 %2889
  %2891 = vrot.lane.b32.xlu0 %v2826, 101
  %v2892 = vpop.permute.xlu0 %2891
  %2893 = vrot.lane.b32.xlu0 %v2830, 101
  %v2894 = vpop.permute.xlu0 %2893
  %2895 = vrot.lane.b32.xlu0 %v2832, 101
  %v2896 = vpop.permute.xlu0 %2895
  %2897 = vrot.lane.b32.xlu0 %v2836, 101
  %v2898 = vpop.permute.xlu0 %2897
  %2899 = vrot.lane.b32.xlu0 %v2838, 101
  %v2900 = vpop.permute.xlu0 %2899
  %v2920 = vsel %vm2467, %v2691, 0
  %v2923 = vsel %vm2467, %v2693, 0
  %v2926 = vsel %vm2467, %v2695, 0
  %v2929 = vsel %vm2467, %v2697, 0
  %2931 = vmatprep.subr.mxu0 0.0
  %2932 = vmatpush1.msra.mxu0 %v2866
  %2933 = vmatprep.subr.mxu0 0.0
  %2934 = vmatpush1.msra.mxu0 %v2868
  %2935 = vmatprep.subr.mxu0 0.0
  %2936 = vmatpush1.msra.mxu0 %v2870
  %2937 = vmatprep.subr.mxu0 0.0
  %2938 = vmatpush1.msra.mxu0 %v2872
  %2939 = vmatprep.subr.mxu0 0.0
  %2940 = vmatpush1.msra.mxu0 %v2874
  %2941 = vmatprep.subr.mxu0 0.0
  %2942 = vmatpush1.msra.mxu0 %v2876
  %2943 = vmatprep.subr.mxu0 0.0
  %2944 = vmatpush1.msra.mxu0 %v2878
  %2945 = vmatprep.subr.mxu0 0.0
  %2946 = vmatpush1.msra.mxu0 %v2880
  %2947 = vmatprep.subr.mxu0 0.0
  %2948 = vmatpush1.msra.mxu0 %v2882
  %2949 = vmatprep.subr.mxu0 0.0
  %2950 = vmatpush1.msra.mxu0 %v2884
  %2951 = vmatprep.subr.mxu0 0.0
  %2952 = vmatpush1.msra.mxu0 %v2886
  %2953 = vmatprep.subr.mxu0 0.0
  %2954 = vmatpush1.msra.mxu0 %v2888
  %2955 = vmatprep.subr.mxu0 0.0
  %2956 = vmatpush1.msra.mxu0 %v2890
  %2957 = vmatprep.subr.mxu0 0.0
  %2958 = vmatpush1.msra.mxu0 %v2892
  %2959 = vmatprep.subr.mxu0 0.0
  %2960 = vmatpush1.msra.mxu0 %v2894
  %2961 = vmatprep.subr.mxu0 0.0
  %2962 = vmatpush1.msra.mxu0 %v2896
  %2963 = vmatprep.subr.mxu0 0.0
  %2964 = vmatpush1.msra.mxu0 %v2898
  %2965 = vmatprep.subr.mxu0 0.0
  %2966 = vmatpush1.msra.mxu0 %v2900
  %2967 = vmatprep.subr.mxu0 0.0
  %2968 = vmatpush1.msra.mxu0 0.0
  %2969 = vmatprep.subr.mxu0 0.0
  %2970 = vmatpush1.msra.mxu0 0.0
  %2971 = vmatprep.subr.mxu0 0.0
  %2972 = vmatpush1.msra.mxu0 0.0
  %2973 = vmatprep.subr.mxu0 0.0
  %2974 = vmatpush1.msra.mxu0 0.0
  %2975 = vmatprep.subr.mxu0 0.0
  %2976 = vmatpush1.msra.mxu0 0.0
  %2977 = vmatprep.subr.mxu0 0.0
  %2978 = vmatpush1.msra.mxu0 0.0
  %2979 = vmatprep.subr.mxu0 0.0
  %2980 = vmatpush1.msra.mxu0 0.0
  %2981 = vmatprep.subr.mxu0 0.0
  %2982 = vmatpush1.msra.mxu0 0.0
  %2983 = vmatprep.subr.mxu0 0.0
  %2984 = vmatpush1.msra.mxu0 0.0
  %2985 = vmatprep.subr.mxu0 0.0
  %2986 = vmatpush1.msra.mxu0 0.0
  %2987 = vmatprep.subr.mxu0 0.0
  %2988 = vmatpush1.msra.mxu0 0.0
  %2989 = vmatprep.subr.mxu0 0.0
  %2990 = vmatpush1.msra.mxu0 0.0
  %2991 = vmatprep.subr.mxu0 0.0
  %2992 = vmatpush1.msra.mxu0 0.0
  %2993 = vmatprep.subr.mxu0 0.0
  %2994 = vmatpush1.msra.mxu0 0.0
  %2995 = vmatprep.mubr.f32.mxu0 %v2920
  %2996 = vmatmul.mubr.f32.gmra.mrb[0].mxu0 %v2690
  %v2997 = vpop.f32.mrb[0].mxu0
  %v2998 = vadd.f32 %v2846, %v2997
  %v2999 = vpop.f32.mrb[0].mxu0
  %3000 = vmatprep.mubr.f32.mxu0 %v2923
  %3001 = vmatmul.mubr.f32.gmra.mrb[0].mxu0 %v2692
  %v3002 = vpop.f32.mrb[0].mxu0
  %v3003 = vadd.f32 %v2851, %v3002
  %v3004 = vpop.f32.mrb[0].mxu0
  %3005 = vmatprep.mubr.f32.mxu0 %v2926
  %3006 = vmatmul.mubr.f32.gmra.mrb[0].mxu0 %v2694
  %v3007 = vpop.f32.mrb[0].mxu0
  %v3008 = vadd.f32 %v2856, %v3007
  %v3009 = vpop.f32.mrb[0].mxu0
  %3010 = vmatprep.mubr.f32.mxu0 %v2929
  %3011 = vmatmul.mubr.f32.gmra.mrb[0].mxu0 %v2696
  %v3012 = vpop.f32.mrb[0].mxu0
  %v3013 = vadd.f32 %v2861, %v3012
  %v3014 = vpop.f32.mrb[0].mxu0
  %3015 = vdwg.mxu0
  %v3016 = vmax.f32 %v2998, 0.0
  %v3017 = vmax.f32 %v3003, 0.0
  %v3018 = vmax.f32 %v3008, 0.0
  %v3019 = vmax.f32 %v3013, 0.0
  %v3020 = vld [vmem:[%s47] sm:$0xff]
  %v3021 = vld [vmem:[%s47 + $0x8] sm:$0xff]
  %v3022 = vld [vmem:[%s47 + $0x10] sm:$0xff]
  %v3023 = vld [vmem:[%s47 + $0x18] sm:$0xff]
  %v3024 = vld [vmem:[%s49] sm:$0xff]
  %v3025 = vld [vmem:[%s49 + $0x8] sm:$0xff]
  %v3026 = vld [vmem:[%s49 + $0x10] sm:$0xff]
  %v3027 = vld [vmem:[%s49 + $0x18] sm:$0xff]
  %3029 = vset.pattern.permute.xlu0 0
  %3030 = vperm.xlu0 %3029, %v3024
  %v3031 = vpop.permute.xlu0 %3030
  %3034 = vset.pattern.permute.xlu0 0
  %3035 = vperm.xlu0 %3034, %v3025
  %v3036 = vpop.permute.xlu0 %3035
  %3039 = vset.pattern.permute.xlu0 0
  %3040 = vperm.xlu0 %3039, %v3026
  %v3041 = vpop.permute.xlu0 %3040
  %3044 = vset.pattern.permute.xlu0 0
  %3045 = vperm.xlu0 %3044, %v3027
  %v3046 = vpop.permute.xlu0 %3045
  %v3049 = vsel %vm534, %v3020, 0
  %v3052 = vsel %vm534, %v3021, 0
  %v3055 = vsel %vm534, %v3022, 0
  %v3058 = vsel %vm534, %v3023, 0
  %3060 = vmatprep.subr.mxu0 0.0
  %3061 = vmatpush1.msra.mxu0 %v3016
  %3062 = vmatprep.subr.mxu0 0.0
  %3063 = vmatpush1.msra.mxu0 %v3017
  %3064 = vmatprep.subr.mxu0 0.0
  %3065 = vmatpush1.msra.mxu0 %v3018
  %3066 = vmatprep.subr.mxu0 0.0
  %3067 = vmatpush1.msra.mxu0 %v3019
  %3068 = vmatprep.subr.mxu0 0.0
  %3069 = vmatpush1.msra.mxu0 0.0
  %3070 = vmatprep.subr.mxu0 0.0
  %3071 = vmatpush1.msra.mxu0 0.0
  %3072 = vmatprep.subr.mxu0 0.0
  %3073 = vmatpush1.msra.mxu0 0.0
  %3074 = vmatprep.subr.mxu0 0.0
  %3075 = vmatpush1.msra.mxu0 0.0
  %3076 = vmatprep.subr.mxu0 0.0
  %3077 = vmatpush1.msra.mxu0 0.0
  %3078 = vmatprep.subr.mxu0 0.0
  %3079 = vmatpush1.msra.mxu0 0.0
  %3080 = vmatprep.subr.mxu0 0.0
  %3081 = vmatpush1.msra.mxu0 0.0
  %3082 = vmatprep.subr.mxu0 0.0
  %3083 = vmatpush1.msra.mxu0 0.0
  %3084 = vmatprep.subr.mxu0 0.0
  %3085 = vmatpush1.msra.mxu0 0.0
  %3086 = vmatprep.subr.mxu0 0.0
  %3087 = vmatpush1.msra.mxu0 0.0
  %3088 = vmatprep.subr.mxu0 0.0
  %3089 = vmatpush1.msra.mxu0 0.0
  %3090 = vmatprep.subr.mxu0 0.0
  %3091 = vmatpush1.msra.mxu0 0.0
  %3092 = vmatprep.subr.mxu0 0.0
  %3093 = vmatpush1.msra.mxu0 0.0
  %3094 = vmatprep.subr.mxu0 0.0
  %3095 = vmatpush1.msra.mxu0 0.0
  %3096 = vmatprep.subr.mxu0 0.0
  %3097 = vmatpush1.msra.mxu0 0.0
  %3098 = vmatprep.subr.mxu0 0.0
  %3099 = vmatpush1.msra.mxu0 0.0
  %3100 = vmatprep.subr.mxu0 0.0
  %3101 = vmatpush1.msra.mxu0 0.0
  %3102 = vmatprep.subr.mxu0 0.0
  %3103 = vmatpush1.msra.mxu0 0.0
  %3104 = vmatprep.subr.mxu0 0.0
  %3105 = vmatpush1.msra.mxu0 0.0
  %3106 = vmatprep.subr.mxu0 0.0
  %3107 = vmatpush1.msra.mxu0 0.0
  %3108 = vmatprep.subr.mxu0 0.0
  %3109 = vmatpush1.msra.mxu0 0.0
  %3110 = vmatprep.subr.mxu0 0.0
  %3111 = vmatpush1.msra.mxu0 0.0
  %3112 = vmatprep.subr.mxu0 0.0
  %3113 = vmatpush1.msra.mxu0 0.0
  %3114 = vmatprep.subr.mxu0 0.0
  %3115 = vmatpush1.msra.mxu0 0.0
  %3116 = vmatprep.subr.mxu0 0.0
  %3117 = vmatpush1.msra.mxu0 0.0
  %3118 = vmatprep.subr.mxu0 0.0
  %3119 = vmatpush1.msra.mxu0 0.0
  %3120 = vmatprep.subr.mxu0 0.0
  %3121 = vmatpush1.msra.mxu0 0.0
  %3122 = vmatprep.subr.mxu0 0.0
  %3123 = vmatpush1.msra.mxu0 0.0
  %3124 = vmatprep.mubr.f32.mxu0 0.0
  %3125 = vmatmul.mubr.f32.gmra.mrb[0].mxu0 %v3049
  %v3126 = vpop.f32.mrb[0].mxu0
  %v3127 = vadd.f32 %v3031, %v3126
  %v3128 = vpop.f32.mrb[0].mxu0
  %3129 = vmatprep.mubr.f32.mxu0 0.0
  %3130 = vmatmul.mubr.f32.gmra.mrb[0].mxu0 %v3052
  %v3131 = vpop.f32.mrb[0].mxu0
  %v3132 = vadd.f32 %v3036, %v3131
  %v3133 = vpop.f32.mrb[0].mxu0
  %3134 = vmatprep.mubr.f32.mxu0 0.0
  %3135 = vmatmul.mubr.f32.gmra.mrb[0].mxu0 %v3055
  %v3136 = vpop.f32.mrb[0].mxu0
  %v3137 = vadd.f32 %v3041, %v3136
  %v3138 = vpop.f32.mrb[0].mxu0
  %3139 = vmatprep.mubr.f32.mxu0 0.0
  %3140 = vmatmul.mubr.f32.gmra.mrb[0].mxu0 %v3058
  %v3141 = vpop.f32.mrb[0].mxu0
  %v3142 = vadd.f32 %v3046, %v3141
  %v3143 = vpop.f32.mrb[0].mxu0
  %3144 = vdwg.mxu0
  %v3145 = vmax.f32 %v3127, 0.0
  %v3146 = vmax.f32 %v3132, 0.0
  %v3147 = vmax.f32 %v3137, 0.0
  %v3148 = vmax.f32 %v3142, 0.0
  %v3149 = vld [vmem:[%s51] sm:$0xff]
  %v3150 = vld [vmem:[%s51 + $0x8] sm:$0xff]
  %v3151 = vld [vmem:[%s51 + $0x10] sm:$0xff]
  %v3152 = vld [vmem:[%s51 + $0x18] sm:$0xff]
  %v3153 = vld [vmem:[%s51 + $0x20] sm:$0xff]
  %v3154 = vld [vmem:[%s51 + $0x28] sm:$0xff]
  %v3155 = vld [vmem:[%s51 + $0x30] sm:$0xff]
  %v3156 = vld [vmem:[%s51 + $0x38] sm:$0xff]
  %v3157 = vld [vmem:[%s51 + $0x40] sm:$0xff]
  %v3158 = vld [vmem:[%s51 + $0x48] sm:$0xff]
  %v3159 = vld [vmem:[%s51 + $0x50] sm:$0xff]
  %v3160 = vld [vmem:[%s51 + $0x58] sm:$0xff]
  %3161 = vrot.lane.b32.xlu0 %v3145, 32
  %v3162 = vpop.permute.xlu0 %3161
  %v3163 = vsel %vm2698, %v3162, %v3145
  %3164 = vrot.lane.b32.xlu0 %v3146, 32
  %v3165 = vpop.permute.xlu0 %3164
  %v3166 = vsel %vm2698, %v3165, %v3146
  %3167 = vrot.lane.b32.xlu0 %v3147, 32
  %v3168 = vpop.permute.xlu0 %3167
  %v3169 = vsel %vm2698, %v3168, %v3147
  %3170 = vrot.lane.b32.xlu0 %v3148, 32
  %v3171 = vpop.permute.xlu0 %3170
  %v3172 = vsel %vm2698, %v3171, %v3148
  %3173 = vrot.lane.b32.xlu0 %v3163, 32
  %v3174 = vpop.permute.xlu0 %3173
  %3175 = vrot.lane.b32.xlu0 %v3166, 32
  %v3176 = vpop.permute.xlu0 %3175
  %3177 = vrot.lane.b32.xlu0 %v3169, 32
  %v3178 = vpop.permute.xlu0 %3177
  %3179 = vrot.lane.b32.xlu0 %v3172, 32
  %v3180 = vpop.permute.xlu0 %3179
  %v3181 = vsel %vm2698, %v3174, %v3145
  %v3182 = vsel %vm2698, %v3176, %v3146
  %v3183 = vsel %vm2698, %v3178, %v3147
  %v3184 = vsel %vm2698, %v3180, %v3148
  %v3185 = vmul.f32 %v3181, %v2717
  %v3186 = vmul.f32 %v3182, %v2717
  %v3187 = vmul.f32 %v3183, %v2717
  %v3188 = vmul.f32 %v3184, %v2717
  %v3189 = vmul.f32 %v3181, %v2727
  %v3190 = vmul.f32 %v3182, %v2727
  %v3191 = vmul.f32 %v3183, %v2727
  %v3192 = vmul.f32 %v3184, %v2727
  %v3193 = vmul.f32 %v3181, %v2737
  %v3194 = vmul.f32 %v3182, %v2737
  %v3195 = vmul.f32 %v3183, %v2737
  %v3196 = vmul.f32 %v3184, %v2737
  %v3197 = vmul.f32 %v3181, %v2747
  %v3198 = vmul.f32 %v3182, %v2747
  %v3199 = vmul.f32 %v3183, %v2747
  %v3200 = vmul.f32 %v3184, %v2747
  %v3201 = vmul.f32 %v3181, %v2757
  %v3202 = vmul.f32 %v3182, %v2757
  %v3203 = vmul.f32 %v3183, %v2757
  %v3204 = vmul.f32 %v3184, %v2757
  %v3205 = vmul.f32 %v3181, %v2767
  %v3206 = vmul.f32 %v3182, %v2767
  %v3207 = vmul.f32 %v3183, %v2767
  %v3208 = vmul.f32 %v3184, %v2767
  %v3209 = vmul.f32 %v3181, %v2777
  %v3210 = vmul.f32 %v3182, %v2777
  %v3211 = vmul.f32 %v3183, %v2777
  %v3212 = vmul.f32 %v3184, %v2777
  %v3213 = vmul.f32 %v3181, %v2787
  %v3214 = vmul.f32 %v3182, %v2787
  %v3215 = vmul.f32 %v3183, %v2787
  %v3216 = vmul.f32 %v3184, %v2787
  %3221 = vrot.lane.b32.xlu0 %v3189, 127
  %v3222 = vpop.permute.xlu0 %3221
  %3223 = vrot.lane.b32.xlu0 %v3190, 127
  %v3224 = vpop.permute.xlu0 %3223
  %3225 = vrot.lane.b32.xlu0 %v3191, 127
  %v3226 = vpop.permute.xlu0 %3225
  %3227 = vrot.lane.b32.xlu0 %v3192, 127
  %v3228 = vpop.permute.xlu0 %3227
  %3233 = vrot.lane.b32.xlu0 %v3193, 126
  %v3234 = vpop.permute.xlu0 %3233
  %3235 = vrot.lane.b32.xlu0 %v3194, 126
  %v3236 = vpop.permute.xlu0 %3235
  %3237 = vrot.lane.b32.xlu0 %v3195, 126
  %v3238 = vpop.permute.xlu0 %3237
  %3239 = vrot.lane.b32.xlu0 %v3196, 126
  %v3240 = vpop.permute.xlu0 %3239
  %3245 = vrot.lane.b32.xlu0 %v3197, 124
  %v3246 = vpop.permute.xlu0 %3245
  %3247 = vrot.lane.b32.xlu0 %v3198, 124
  %v3248 = vpop.permute.xlu0 %3247
  %3249 = vrot.lane.b32.xlu0 %v3199, 124
  %v3250 = vpop.permute.xlu0 %3249
  %3251 = vrot.lane.b32.xlu0 %v3200, 124
  %v3252 = vpop.permute.xlu0 %3251
  %3257 = vrot.lane.b32.xlu0 %v3145, 27
  %v3258 = vpop.permute.xlu0 %3257
  %3259 = vrot.lane.b32.xlu0 %v3146, 27
  %v3260 = vpop.permute.xlu0 %3259
  %3261 = vrot.lane.b32.xlu0 %v3147, 27
  %v3262 = vpop.permute.xlu0 %3261
  %3263 = vrot.lane.b32.xlu0 %v3148, 27
  %v3264 = vpop.permute.xlu0 %3263
  %3269 = vrot.lane.b32.xlu0 %v3201, 26
  %v3270 = vpop.permute.xlu0 %3269
  %3271 = vrot.lane.b32.xlu0 %v3202, 26
  %v3272 = vpop.permute.xlu0 %3271
  %3273 = vrot.lane.b32.xlu0 %v3203, 26
  %v3274 = vpop.permute.xlu0 %3273
  %3275 = vrot.lane.b32.xlu0 %v3204, 26
  %v3276 = vpop.permute.xlu0 %3275
  %3281 = vrot.lane.b32.xlu0 %v3205, 24
  %v3282 = vpop.permute.xlu0 %3281
  %3283 = vrot.lane.b32.xlu0 %v3206, 24
  %v3284 = vpop.permute.xlu0 %3283
  %3285 = vrot.lane.b32.xlu0 %v3207, 24
  %v3286 = vpop.permute.xlu0 %3285
  %3287 = vrot.lane.b32.xlu0 %v3208, 24
  %v3288 = vpop.permute.xlu0 %3287
  %3293 = vrot.lane.b32.xlu0 %v3209, 23
  %v3294 = vpop.permute.xlu0 %3293
  %3295 = vrot.lane.b32.xlu0 %v3210, 23
  %v3296 = vpop.permute.xlu0 %3295
  %3297 = vrot.lane.b32.xlu0 %v3211, 23
  %v3298 = vpop.permute.xlu0 %3297
  %3299 = vrot.lane.b32.xlu0 %v3212, 23
  %v3300 = vpop.permute.xlu0 %3299
  %3305 = vrot.lane.b32.xlu0 %v3213, 22
  %v3306 = vpop.permute.xlu0 %3305
  %3307 = vrot.lane.b32.xlu0 %v3214, 22
  %v3308 = vpop.permute.xlu0 %3307
  %3309 = vrot.lane.b32.xlu0 %v3215, 22
  %v3310 = vpop.permute.xlu0 %3309
  %3311 = vrot.lane.b32.xlu0 %v3216, 22
  %v3312 = vpop.permute.xlu0 %3311
  %v3313 = vld [vmem:[%s53] sm:$0xff]
  %v3314 = vld [vmem:[%s53 + $0x8] sm:$0xff]
  %v3315 = vld [vmem:[%s53 + $0x10] sm:$0xff]
  %v3316 = vld [vmem:[%s53 + $0x18] sm:$0xff]
  %3318 = vset.pattern.permute.xlu0 0
  %3319 = vperm.xlu0 %3318, %v3313
  %v3320 = vpop.permute.xlu0 %3319
  %3323 = vset.pattern.permute.xlu0 0
  %3324 = vperm.xlu0 %3323, %v3314
  %v3325 = vpop.permute.xlu0 %3324
  %3328 = vset.pattern.permute.xlu0 0
  %3329 = vperm.xlu0 %3328, %v3315
  %v3330 = vpop.permute.xlu0 %3329
  %3333 = vset.pattern.permute.xlu0 0
  %3334 = vperm.xlu0 %3333, %v3316
  %v3335 = vpop.permute.xlu0 %3334
  %3341 = vrot.lane.b32.xlu0 %v3185, 101
  %v3342 = vpop.permute.xlu0 %3341
  %3343 = vrot.lane.b32.xlu0 %v3186, 101
  %v3344 = vpop.permute.xlu0 %3343
  %3345 = vrot.lane.b32.xlu0 %v3187, 101
  %v3346 = vpop.permute.xlu0 %3345
  %3347 = vrot.lane.b32.xlu0 %v3188, 101
  %v3348 = vpop.permute.xlu0 %3347
  %3349 = vrot.lane.b32.xlu0 %v3222, 101
  %v3350 = vpop.permute.xlu0 %3349
  %3351 = vrot.lane.b32.xlu0 %v3224, 101
  %v3352 = vpop.permute.xlu0 %3351
  %3353 = vrot.lane.b32.xlu0 %v3226, 101
  %v3354 = vpop.permute.xlu0 %3353
  %3355 = vrot.lane.b32.xlu0 %v3228, 101
  %v3356 = vpop.permute.xlu0 %3355
  %3357 = vrot.lane.b32.xlu0 %v3234, 101
  %v3358 = vpop.permute.xlu0 %3357
  %3359 = vrot.lane.b32.xlu0 %v3236, 101
  %v3360 = vpop.permute.xlu0 %3359
  %3361 = vrot.lane.b32.xlu0 %v3238, 101
  %v3362 = vpop.permute.xlu0 %3361
  %3363 = vrot.lane.b32.xlu0 %v3240, 101
  %v3364 = vpop.permute.xlu0 %3363
  %3365 = vrot.lane.b32.xlu0 %v3246, 101
  %v3366 = vpop.permute.xlu0 %3365
  %3367 = vrot.lane.b32.xlu0 %v3248, 101
  %v3368 = vpop.permute.xlu0 %3367
  %3369 = vrot.lane.b32.xlu0 %v3250, 101
  %v3370 = vpop.permute.xlu0 %3369
  %3371 = vrot.lane.b32.xlu0 %v3252, 101
  %v3372 = vpop.permute.xlu0 %3371
  %3373 = vrot.lane.b32.xlu0 %v3258, 101
  %v3374 = vpop.permute.xlu0 %3373
  %3375 = vrot.lane.b32.xlu0 %v3260, 101
  %v3376 = vpop.permute.xlu0 %3375
  %3377 = vrot.lane.b32.xlu0 %v3262, 101
  %v3378 = vpop.permute.xlu0 %3377
  %3379 = vrot.lane.b32.xlu0 %v3264, 101
  %v3380 = vpop.permute.xlu0 %3379
  %3381 = vrot.lane.b32.xlu0 %v3270, 101
  %v3382 = vpop.permute.xlu0 %3381
  %3383 = vrot.lane.b32.xlu0 %v3272, 101
  %v3384 = vpop.permute.xlu0 %3383
  %3385 = vrot.lane.b32.xlu0 %v3274, 101
  %v3386 = vpop.permute.xlu0 %3385
  %3387 = vrot.lane.b32.xlu0 %v3276, 101
  %v3388 = vpop.permute.xlu0 %3387
  %3389 = vrot.lane.b32.xlu0 %v3282, 101
  %v3390 = vpop.permute.xlu0 %3389
  %3391 = vrot.lane.b32.xlu0 %v3284, 101
  %v3392 = vpop.permute.xlu0 %3391
  %3393 = vrot.lane.b32.xlu0 %v3286, 101
  %v3394 = vpop.permute.xlu0 %3393
  %3395 = vrot.lane.b32.xlu0 %v3288, 101
  %v3396 = vpop.permute.xlu0 %3395
  %3397 = vrot.lane.b32.xlu0 %v3294, 101
  %v3398 = vpop.permute.xlu0 %3397
  %3399 = vrot.lane.b32.xlu0 %v3296, 101
  %v3400 = vpop.permute.xlu0 %3399
  %3401 = vrot.lane.b32.xlu0 %v3298, 101
  %v3402 = vpop.permute.xlu0 %3401
  %3403 = vrot.lane.b32.xlu0 %v3300, 101
  %v3404 = vpop.permute.xlu0 %3403
  %3405 = vrot.lane.b32.xlu0 %v3306, 101
  %v3406 = vpop.permute.xlu0 %3405
  %3407 = vrot.lane.b32.xlu0 %v3308, 101
  %v3408 = vpop.permute.xlu0 %3407
  %3409 = vrot.lane.b32.xlu0 %v3310, 101
  %v3410 = vpop.permute.xlu0 %3409
  %3411 = vrot.lane.b32.xlu0 %v3312, 101
  %v3412 = vpop.permute.xlu0 %3411
  %v3450 = vsel %vm534, %v3151, 0
  %v3453 = vsel %vm534, %v3154, 0
  %v3456 = vsel %vm534, %v3157, 0
  %v3459 = vsel %vm534, %v3160, 0
  %3461 = vmatprep.subr.mxu0 0.0
  %3462 = vmatpush1.msra.mxu0 %v3342
  %3463 = vmatprep.subr.mxu0 0.0
  %3464 = vmatpush1.msra.mxu0 %v3344
  %3465 = vmatprep.subr.mxu0 0.0
  %3466 = vmatpush1.msra.mxu0 %v3346
  %3467 = vmatprep.subr.mxu0 0.0
  %3468 = vmatpush1.msra.mxu0 %v3348
  %3469 = vmatprep.subr.mxu0 0.0
  %3470 = vmatpush1.msra.mxu0 %v3350
  %3471 = vmatprep.subr.mxu0 0.0
  %3472 = vmatpush1.msra.mxu0 %v3352
  %3473 = vmatprep.subr.mxu0 0.0
  %3474 = vmatpush1.msra.mxu0 %v3354
  %3475 = vmatprep.subr.mxu0 0.0
  %3476 = vmatpush1.msra.mxu0 %v3356
  %3477 = vmatprep.subr.mxu0 0.0
  %3478 = vmatpush1.msra.mxu0 %v3358
  %3479 = vmatprep.subr.mxu0 0.0
  %3480 = vmatpush1.msra.mxu0 %v3360
  %3481 = vmatprep.subr.mxu0 0.0
  %3482 = vmatpush1.msra.mxu0 %v3362
  %3483 = vmatprep.subr.mxu0 0.0
  %3484 = vmatpush1.msra.mxu0 %v3364
  %3485 = vmatprep.subr.mxu0 0.0
  %3486 = vmatpush1.msra.mxu0 %v3366
  %3487 = vmatprep.subr.mxu0 0.0
  %3488 = vmatpush1.msra.mxu0 %v3368
  %3489 = vmatprep.subr.mxu0 0.0
  %3490 = vmatpush1.msra.mxu0 %v3370
  %3491 = vmatprep.subr.mxu0 0.0
  %3492 = vmatpush1.msra.mxu0 %v3372
  %3493 = vmatprep.subr.mxu0 0.0
  %3494 = vmatpush1.msra.mxu0 %v3374
  %3495 = vmatprep.subr.mxu0 0.0
  %3496 = vmatpush1.msra.mxu0 %v3376
  %3497 = vmatprep.subr.mxu0 0.0
  %3498 = vmatpush1.msra.mxu0 %v3378
  %3499 = vmatprep.subr.mxu0 0.0
  %3500 = vmatpush1.msra.mxu0 %v3380
  %3501 = vmatprep.subr.mxu0 0.0
  %3502 = vmatpush1.msra.mxu0 %v3382
  %3503 = vmatprep.subr.mxu0 0.0
  %3504 = vmatpush1.msra.mxu0 %v3384
  %3505 = vmatprep.subr.mxu0 0.0
  %3506 = vmatpush1.msra.mxu0 %v3386
  %3507 = vmatprep.subr.mxu0 0.0
  %3508 = vmatpush1.msra.mxu0 %v3388
  %3509 = vmatprep.subr.mxu0 0.0
  %3510 = vmatpush1.msra.mxu0 %v3390
  %3511 = vmatprep.subr.mxu0 0.0
  %3512 = vmatpush1.msra.mxu0 %v3392
  %3513 = vmatprep.subr.mxu0 0.0
  %3514 = vmatpush1.msra.mxu0 %v3394
  %3515 = vmatprep.subr.mxu0 0.0
  %3516 = vmatpush1.msra.mxu0 %v3396
  %3517 = vmatprep.subr.mxu0 0.0
  %3518 = vmatpush1.msra.mxu0 %v3398
  %3519 = vmatprep.subr.mxu0 0.0
  %3520 = vmatpush1.msra.mxu0 %v3400
  %3521 = vmatprep.subr.mxu0 0.0
  %3522 = vmatpush1.msra.mxu0 %v3402
  %3523 = vmatprep.subr.mxu0 0.0
  %3524 = vmatpush1.msra.mxu0 %v3404
  %3525 = vmatprep.mubr.f32.mxu0 %v3150
  %3526 = vmatmul.mubr.f32.gmra.mrb[0].mxu0 %v3149
  %v3527 = vpop.f32.mrb[0].mxu0
  %v3528 = vadd.f32 %v3320, %v3527
  %v3529 = vpop.f32.mrb[0].mxu0
  %3530 = vmatprep.mubr.f32.mxu0 %v3153
  %3531 = vmatmul.mubr.f32.gmra.mrb[0].mxu0 %v3152
  %v3532 = vpop.f32.mrb[0].mxu0
  %v3533 = vadd.f32 %v3325, %v3532
  %v3534 = vpop.f32.mrb[0].mxu0
  %3535 = vmatprep.mubr.f32.mxu0 %v3156
  %3536 = vmatmul.mubr.f32.gmra.mrb[0].mxu0 %v3155
  %v3537 = vpop.f32.mrb[0].mxu0
  %v3538 = vadd.f32 %v3330, %v3537
  %v3539 = vpop.f32.mrb[0].mxu0
  %3540 = vmatprep.mubr.f32.mxu0 %v3159
  %3541 = vmatmul.mubr.f32.gmra.mrb[0].mxu0 %v3158
  %v3542 = vpop.f32.mrb[0].mxu0
  %v3543 = vadd.f32 %v3335, %v3542
  %v3544 = vpop.f32.mrb[0].mxu0
  %3545 = vdwg.mxu0
  %3546 = vmatprep.subr.mxu0 0.0
  %3547 = vmatpush1.msra.mxu0 %v3406
  %3548 = vmatprep.subr.mxu0 0.0
  %3549 = vmatpush1.msra.mxu0 %v3408
  %3550 = vmatprep.subr.mxu0 0.0
  %3551 = vmatpush1.msra.mxu0 %v3410
  %3552 = vmatprep.subr.mxu0 0.0
  %3553 = vmatpush1.msra.mxu0 %v3412
  %3554 = vmatprep.subr.mxu0 0.0
  %3555 = vmatpush1.msra.mxu0 0.0
  %3556 = vmatprep.subr.mxu0 0.0
  %3557 = vmatpush1.msra.mxu0 0.0
  %3558 = vmatprep.subr.mxu0 0.0
  %3559 = vmatpush1.msra.mxu0 0.0
  %3560 = vmatprep.subr.mxu0 0.0
  %3561 = vmatpush1.msra.mxu0 0.0
  %3562 = vmatprep.subr.mxu0 0.0
  %3563 = vmatpush1.msra.mxu0 0.0
  %3564 = vmatprep.subr.mxu0 0.0
  %3565 = vmatpush1.msra.mxu0 0.0
  %3566 = vmatprep.subr.mxu0 0.0
  %3567 = vmatpush1.msra.mxu0 0.0
  %3568 = vmatprep.subr.mxu0 0.0
  %3569 = vmatpush1.msra.mxu0 0.0
  %3570 = vmatprep.subr.mxu0 0.0
  %3571 = vmatpush1.msra.mxu0 0.0
  %3572 = vmatprep.subr.mxu0 0.0
  %3573 = vmatpush1.msra.mxu0 0.0
  %3574 = vmatprep.subr.mxu0 0.0
  %3575 = vmatpush1.msra.mxu0 0.0
  %3576 = vmatprep.subr.mxu0 0.0
  %3577 = vmatpush1.msra.mxu0 0.0
  %3578 = vmatprep.subr.mxu0 0.0
  %3579 = vmatpush1.msra.mxu0 0.0
  %3580 = vmatprep.subr.mxu0 0.0
  %3581 = vmatpush1.msra.mxu0 0.0
  %3582 = vmatprep.subr.mxu0 0.0
  %3583 = vmatpush1.msra.mxu0 0.0
  %3584 = vmatprep.subr.mxu0 0.0
  %3585 = vmatpush1.msra.mxu0 0.0
  %3586 = vmatprep.subr.mxu0 0.0
  %3587 = vmatpush1.msra.mxu0 0.0
  %3588 = vmatprep.subr.mxu0 0.0
  %3589 = vmatpush1.msra.mxu0 0.0
  %3590 = vmatprep.subr.mxu0 0.0
  %3591 = vmatpush1.msra.mxu0 0.0
  %3592 = vmatprep.subr.mxu0 0.0
  %3593 = vmatpush1.msra.mxu0 0.0
  %3594 = vmatprep.subr.mxu0 0.0
  %3595 = vmatpush1.msra.mxu0 0.0
  %3596 = vmatprep.subr.mxu0 0.0
  %3597 = vmatpush1.msra.mxu0 0.0
  %3598 = vmatprep.subr.mxu0 0.0
  %3599 = vmatpush1.msra.mxu0 0.0
  %3600 = vmatprep.subr.mxu0 0.0
  %3601 = vmatpush1.msra.mxu0 0.0
  %3602 = vmatprep.subr.mxu0 0.0
  %3603 = vmatpush1.msra.mxu0 0.0
  %3604 = vmatprep.subr.mxu0 0.0
  %3605 = vmatpush1.msra.mxu0 0.0
  %3606 = vmatprep.subr.mxu0 0.0
  %3607 = vmatpush1.msra.mxu0 0.0
  %3608 = vmatprep.subr.mxu0 0.0
  %3609 = vmatpush1.msra.mxu0 0.0
  %3610 = vmatprep.mubr.f32.mxu0 0.0
  %3611 = vmatmul.mubr.f32.gmra.mrb[0].mxu0 %v3450
  %v3612 = vpop.f32.mrb[0].mxu0
  %v3613 = vadd.f32 %v3528, %v3612
  %v3614 = vpop.f32.mrb[0].mxu0
  %3615 = vmatprep.mubr.f32.mxu0 0.0
  %3616 = vmatmul.mubr.f32.gmra.mrb[0].mxu0 %v3453
  %v3617 = vpop.f32.mrb[0].mxu0
  %v3618 = vadd.f32 %v3533, %v3617
  %v3619 = vpop.f32.mrb[0].mxu0
  %3620 = vmatprep.mubr.f32.mxu0 0.0
  %3621 = vmatmul.mubr.f32.gmra.mrb[0].mxu0 %v3456
  %v3622 = vpop.f32.mrb[0].mxu0
  %v3623 = vadd.f32 %v3538, %v3622
  %v3624 = vpop.f32.mrb[0].mxu0
  %3625 = vmatprep.mubr.f32.mxu0 0.0
  %3626 = vmatmul.mubr.f32.gmra.mrb[0].mxu0 %v3459
  %v3627 = vpop.f32.mrb[0].mxu0
  %v3628 = vadd.f32 %v3543, %v3627
  %v3629 = vpop.f32.mrb[0].mxu0
  %3630 = vdwg.mxu0
  %v3631 = vadd.f32 %v3623, 2.0
  %v3632 = vadd.f32 %v3628, 2.0
  %v3633 = vsub.f32 0.0, %v3631
  %v3634 = vsub.f32 0.0, %v3632
  %v3635 = vmul.f32 %v3633, 1.442695
  %v3636 = vpow.pop %v3635
  %v3637 = vmul.f32 %v3634, 1.442695
  %v3638 = vpow.pop %v3637
  %v3639 = vadd.f32 %v3636, 1.0
  %v3640 = vadd.f32 %v3638, 1.0
  %v3641 = vadd.f32 %v2688, %v3613
  %v3642 = vadd.f32 %v2689, %v3618
  %v3643 = vrcp.pop %v3639
  %v3644 = vrcp.pop %v3640
  %v3645 = vmul.f32 %v3641, %v3643
  %v3646 = vmul.f32 %v3642, %v3644
  %v3647 = vlog2.pop %v3639
  %v3648 = vmul.f32 %v3647, 0.6931472
  %v3649 = vlog2.pop %v3640
  %v3650 = vmul.f32 %v3649, 0.6931472
  %v3651 = vsub.f32 0.0, %v3648
  %v3652 = vsub.f32 0.0, %v3650
  %v3654 = vsel %vm534, %v3651, 0
  %v3657 = vsel %vm534, %v3652, 0
  %3659 = vmatprep.subr.mxu0 0.0
  %3660 = vmatpush1.msra.mxu0 %v2455
  %3661 = vmatprep.subr.mxu0 0.0
  %3662 = vmatpush1.msra.mxu0 %v2456
  %3663 = vmatprep.subr.mxu0 0.0
  %3664 = vmatpush1.msra.mxu0 %v2457
  %3665 = vmatprep.subr.mxu0 0.0
  %3666 = vmatpush1.msra.mxu0 %v2458
  %3667 = vmatprep.subr.mxu0 0.0
  %3668 = vmatpush1.msra.mxu0 0.0
  %3669 = vmatprep.subr.mxu0 0.0
  %3670 = vmatpush1.msra.mxu0 0.0
  %3671 = vmatprep.subr.mxu0 0.0
  %3672 = vmatpush1.msra.mxu0 0.0
  %3673 = vmatprep.subr.mxu0 0.0
  %3674 = vmatpush1.msra.mxu0 0.0
  %3675 = vmatprep.subr.mxu0 0.0
  %3676 = vmatpush1.msra.mxu0 0.0
  %3677 = vmatprep.subr.mxu0 0.0
  %3678 = vmatpush1.msra.mxu0 0.0
  %3679 = vmatprep.subr.mxu0 0.0
  %3680 = vmatpush1.msra.mxu0 0.0
  %3681 = vmatprep.subr.mxu0 0.0
  %3682 = vmatpush1.msra.mxu0 0.0
  %3683 = vmatprep.subr.mxu0 0.0
  %3684 = vmatpush1.msra.mxu0 0.0
  %3685 = vmatprep.subr.mxu0 0.0
  %3686 = vmatpush1.msra.mxu0 0.0
  %3687 = vmatprep.subr.mxu0 0.0
  %3688 = vmatpush1.msra.mxu0 0.0
  %3689 = vmatprep.subr.mxu0 0.0
  %3690 = vmatpush1.msra.mxu0 0.0
  %3691 = vmatprep.subr.mxu0 0.0
  %3692 = vmatpush1.msra.mxu0 0.0
  %3693 = vmatprep.subr.mxu0 0.0
  %3694 = vmatpush1.msra.mxu0 0.0
  %3695 = vmatprep.subr.mxu0 0.0
  %3696 = vmatpush1.msra.mxu0 0.0
  %3697 = vmatprep.subr.mxu0 0.0
  %3698 = vmatpush1.msra.mxu0 0.0
  %3699 = vmatprep.subr.mxu0 0.0
  %3700 = vmatpush1.msra.mxu0 0.0
  %3701 = vmatprep.subr.mxu0 0.0
  %3702 = vmatpush1.msra.mxu0 0.0
  %3703 = vmatprep.subr.mxu0 0.0
  %3704 = vmatpush1.msra.mxu0 0.0
  %3705 = vmatprep.subr.mxu0 0.0
  %3706 = vmatpush1.msra.mxu0 0.0
  %3707 = vmatprep.subr.mxu0 0.0
  %3708 = vmatpush1.msra.mxu0 0.0
  %3709 = vmatprep.subr.mxu0 0.0
  %3710 = vmatpush1.msra.mxu0 0.0
  %3711 = vmatprep.subr.mxu0 0.0
  %3712 = vmatpush1.msra.mxu0 0.0
  %3713 = vmatprep.subr.mxu0 0.0
  %3714 = vmatpush1.msra.mxu0 0.0
  %3715 = vmatprep.subr.mxu0 0.0
  %3716 = vmatpush1.msra.mxu0 0.0
  %3717 = vmatprep.subr.mxu0 0.0
  %3718 = vmatpush1.msra.mxu0 0.0
  %3719 = vmatprep.subr.mxu0 0.0
  %3720 = vmatpush1.msra.mxu0 0.0
  %3721 = vmatprep.subr.mxu0 0.0
  %3722 = vmatpush1.msra.mxu0 0.0
  %3723 = vmatprep.mubr.f32.mxu0 0.0
  %3724 = vmatmul.mubr.f32.gmra.mrb[0].mxu0 %v3654
  %v3725 = vpop.f32.mrb[0].mxu0
  %v3726 = vadd.f32 0.0, %v3725
  %v3727 = vpop.f32.mrb[0].mxu0
  %3728 = vmatprep.mubr.f32.mxu0 0.0
  %3729 = vmatmul.mubr.f32.gmra.mrb[0].mxu0 %v3657
  %v3730 = vpop.f32.mrb[0].mxu0
  %v3731 = vadd.f32 0.0, %v3730
  %v3732 = vpop.f32.mrb[0].mxu0
  %3733 = vdwg.mxu0
  %v3734 = vadd.f32 %v3726, %v3731
  %v3735 = vrot.slane %v3734, 4
  %v3736 = vadd.f32 %v3734, %v3735
  %v3737 = vrot.slane %v3736, 2
  %v3738 = vadd.f32 %v3736, %v3737
  %v3739 = vrot.slane %v3738, 1
  %v3740 = vadd.f32 %v3738, %v3739
  %v3741 = vadd.f32 %v2004, %v3740
  %s3742 = scalar_lea.vmem %s37, 32
  %v3743 = vld [vmem:[%s3742] sm:$0xff]
  %v3744 = vld [vmem:[%s3742 + $0x8] sm:$0xff]
  %v3745 = vld [vmem:[%s3742 + $0x10] sm:$0xff]
  %v3746 = vld [vmem:[%s3742 + $0x18] sm:$0xff]
  %s3747 = scalar_lea.vmem %s39, 32
  %v3748 = vld [vmem:[%s3747] sm:$0xff]
  %v3749 = vld [vmem:[%s3747 + $0x8] sm:$0xff]
  %v3750 = vld [vmem:[%s3747 + $0x10] sm:$0xff]
  %v3751 = vld [vmem:[%s3747 + $0x18] sm:$0xff]
  %v3753 = vsel %vm2467, %v3748, 0
  %v3756 = vsel %vm2467, %v3749, 0
  %v3759 = vsel %vm2467, %v3750, 0
  %v3762 = vsel %vm2467, %v3751, 0
  %3764 = vmatprep.subr.mxu0 0.0
  %3765 = vmatpush1.msra.mxu0 %v3645
  %3766 = vmatprep.subr.mxu0 0.0
  %3767 = vmatpush1.msra.mxu0 %v3646
  %3768 = vmatprep.subr.mxu0 0.0
  %3769 = vmatpush1.msra.mxu0 0.0
  %3770 = vmatprep.subr.mxu0 0.0
  %3771 = vmatpush1.msra.mxu0 0.0
  %3772 = vmatprep.subr.mxu0 0.0
  %3773 = vmatpush1.msra.mxu0 0.0
  %3774 = vmatprep.subr.mxu0 0.0
  %3775 = vmatpush1.msra.mxu0 0.0
  %3776 = vmatprep.subr.mxu0 0.0
  %3777 = vmatpush1.msra.mxu0 0.0
  %3778 = vmatprep.subr.mxu0 0.0
  %3779 = vmatpush1.msra.mxu0 0.0
  %3780 = vmatprep.subr.mxu0 0.0
  %3781 = vmatpush1.msra.mxu0 0.0
  %3782 = vmatprep.subr.mxu0 0.0
  %3783 = vmatpush1.msra.mxu0 0.0
  %3784 = vmatprep.subr.mxu0 0.0
  %3785 = vmatpush1.msra.mxu0 0.0
  %3786 = vmatprep.subr.mxu0 0.0
  %3787 = vmatpush1.msra.mxu0 0.0
  %3788 = vmatprep.subr.mxu0 0.0
  %3789 = vmatpush1.msra.mxu0 0.0
  %3790 = vmatprep.subr.mxu0 0.0
  %3791 = vmatpush1.msra.mxu0 0.0
  %3792 = vmatprep.subr.mxu0 0.0
  %3793 = vmatpush1.msra.mxu0 0.0
  %3794 = vmatprep.subr.mxu0 0.0
  %3795 = vmatpush1.msra.mxu0 0.0
  %3796 = vmatprep.subr.mxu0 0.0
  %3797 = vmatpush1.msra.mxu0 0.0
  %3798 = vmatprep.subr.mxu0 0.0
  %3799 = vmatpush1.msra.mxu0 0.0
  %3800 = vmatprep.subr.mxu0 0.0
  %3801 = vmatpush1.msra.mxu0 0.0
  %3802 = vmatprep.subr.mxu0 0.0
  %3803 = vmatpush1.msra.mxu0 0.0
  %3804 = vmatprep.subr.mxu0 0.0
  %3805 = vmatpush1.msra.mxu0 0.0
  %3806 = vmatprep.subr.mxu0 0.0
  %3807 = vmatpush1.msra.mxu0 0.0
  %3808 = vmatprep.subr.mxu0 0.0
  %3809 = vmatpush1.msra.mxu0 0.0
  %3810 = vmatprep.subr.mxu0 0.0
  %3811 = vmatpush1.msra.mxu0 0.0
  %3812 = vmatprep.subr.mxu0 0.0
  %3813 = vmatpush1.msra.mxu0 0.0
  %3814 = vmatprep.subr.mxu0 0.0
  %3815 = vmatpush1.msra.mxu0 0.0
  %3816 = vmatprep.subr.mxu0 0.0
  %3817 = vmatpush1.msra.mxu0 0.0
  %3818 = vmatprep.subr.mxu0 0.0
  %3819 = vmatpush1.msra.mxu0 0.0
  %3820 = vmatprep.subr.mxu0 0.0
  %3821 = vmatpush1.msra.mxu0 0.0
  %3822 = vmatprep.subr.mxu0 0.0
  %3823 = vmatpush1.msra.mxu0 0.0
  %3824 = vmatprep.subr.mxu0 0.0
  %3825 = vmatpush1.msra.mxu0 0.0
  %3826 = vmatprep.subr.mxu0 0.0
  %3827 = vmatpush1.msra.mxu0 0.0
  %3828 = vmatprep.mubr.f32.mxu0 0.0
  %3829 = vmatmul.mubr.f32.gmra.mrb[0].mxu0 %v3753
  %v3830 = vpop.f32.mrb[0].mxu0
  %v3831 = vadd.f32 0.0, %v3830
  %v3832 = vpop.f32.mrb[0].mxu0
  %3833 = vmatprep.mubr.f32.mxu0 0.0
  %3834 = vmatmul.mubr.f32.gmra.mrb[0].mxu0 %v3756
  %v3835 = vpop.f32.mrb[0].mxu0
  %v3836 = vadd.f32 0.0, %v3835
  %v3837 = vpop.f32.mrb[0].mxu0
  %3838 = vmatprep.mubr.f32.mxu0 0.0
  %3839 = vmatmul.mubr.f32.gmra.mrb[0].mxu0 %v3759
  %v3840 = vpop.f32.mrb[0].mxu0
  %v3841 = vadd.f32 0.0, %v3840
  %v3842 = vpop.f32.mrb[0].mxu0
  %3843 = vmatprep.mubr.f32.mxu0 0.0
  %3844 = vmatmul.mubr.f32.gmra.mrb[0].mxu0 %v3762
  %v3845 = vpop.f32.mrb[0].mxu0
  %v3846 = vadd.f32 0.0, %v3845
  %v3847 = vpop.f32.mrb[0].mxu0
  %3848 = vdwg.mxu0
  %v3850 = vsel %vm2467, %v3743, 0
  %v3853 = vsel %vm2467, %v3744, 0
  %v3856 = vsel %vm2467, %v3745, 0
  %v3859 = vsel %vm2467, %v3746, 0
  %3861 = vmatprep.subr.mxu0 0.0
  %3862 = vmatpush1.msra.mxu0 %v2686
  %3863 = vmatprep.subr.mxu0 0.0
  %3864 = vmatpush1.msra.mxu0 %v2687
  %3865 = vmatprep.subr.mxu0 0.0
  %3866 = vmatpush1.msra.mxu0 0.0
  %3867 = vmatprep.subr.mxu0 0.0
  %3868 = vmatpush1.msra.mxu0 0.0
  %3869 = vmatprep.subr.mxu0 0.0
  %3870 = vmatpush1.msra.mxu0 0.0
  %3871 = vmatprep.subr.mxu0 0.0
  %3872 = vmatpush1.msra.mxu0 0.0
  %3873 = vmatprep.subr.mxu0 0.0
  %3874 = vmatpush1.msra.mxu0 0.0
  %3875 = vmatprep.subr.mxu0 0.0
  %3876 = vmatpush1.msra.mxu0 0.0
  %3877 = vmatprep.subr.mxu0 0.0
  %3878 = vmatpush1.msra.mxu0 0.0
  %3879 = vmatprep.subr.mxu0 0.0
  %3880 = vmatpush1.msra.mxu0 0.0
  %3881 = vmatprep.subr.mxu0 0.0
  %3882 = vmatpush1.msra.mxu0 0.0
  %3883 = vmatprep.subr.mxu0 0.0
  %3884 = vmatpush1.msra.mxu0 0.0
  %3885 = vmatprep.subr.mxu0 0.0
  %3886 = vmatpush1.msra.mxu0 0.0
  %3887 = vmatprep.subr.mxu0 0.0
  %3888 = vmatpush1.msra.mxu0 0.0
  %3889 = vmatprep.subr.mxu0 0.0
  %3890 = vmatpush1.msra.mxu0 0.0
  %3891 = vmatprep.subr.mxu0 0.0
  %3892 = vmatpush1.msra.mxu0 0.0
  %3893 = vmatprep.subr.mxu0 0.0
  %3894 = vmatpush1.msra.mxu0 0.0
  %3895 = vmatprep.subr.mxu0 0.0
  %3896 = vmatpush1.msra.mxu0 0.0
  %3897 = vmatprep.subr.mxu0 0.0
  %3898 = vmatpush1.msra.mxu0 0.0
  %3899 = vmatprep.subr.mxu0 0.0
  %3900 = vmatpush1.msra.mxu0 0.0
  %3901 = vmatprep.subr.mxu0 0.0
  %3902 = vmatpush1.msra.mxu0 0.0
  %3903 = vmatprep.subr.mxu0 0.0
  %3904 = vmatpush1.msra.mxu0 0.0
  %3905 = vmatprep.subr.mxu0 0.0
  %3906 = vmatpush1.msra.mxu0 0.0
  %3907 = vmatprep.subr.mxu0 0.0
  %3908 = vmatpush1.msra.mxu0 0.0
  %3909 = vmatprep.subr.mxu0 0.0
  %3910 = vmatpush1.msra.mxu0 0.0
  %3911 = vmatprep.subr.mxu0 0.0
  %3912 = vmatpush1.msra.mxu0 0.0
  %3913 = vmatprep.subr.mxu0 0.0
  %3914 = vmatpush1.msra.mxu0 0.0
  %3915 = vmatprep.subr.mxu0 0.0
  %3916 = vmatpush1.msra.mxu0 0.0
  %3917 = vmatprep.subr.mxu0 0.0
  %3918 = vmatpush1.msra.mxu0 0.0
  %3919 = vmatprep.subr.mxu0 0.0
  %3920 = vmatpush1.msra.mxu0 0.0
  %3921 = vmatprep.subr.mxu0 0.0
  %3922 = vmatpush1.msra.mxu0 0.0
  %3923 = vmatprep.subr.mxu0 0.0
  %3924 = vmatpush1.msra.mxu0 0.0
  %3925 = vmatprep.mubr.f32.mxu0 0.0
  %3926 = vmatmul.mubr.f32.gmra.mrb[0].mxu0 %v3850
  %v3927 = vpop.f32.mrb[0].mxu0
  %v3928 = vadd.f32 %v3831, %v3927
  %v3929 = vpop.f32.mrb[0].mxu0
  %3930 = vmatprep.mubr.f32.mxu0 0.0
  %3931 = vmatmul.mubr.f32.gmra.mrb[0].mxu0 %v3853
  %v3932 = vpop.f32.mrb[0].mxu0
  %v3933 = vadd.f32 %v3836, %v3932
  %v3934 = vpop.f32.mrb[0].mxu0
  %3935 = vmatprep.mubr.f32.mxu0 0.0
  %3936 = vmatmul.mubr.f32.gmra.mrb[0].mxu0 %v3856
  %v3937 = vpop.f32.mrb[0].mxu0
  %v3938 = vadd.f32 %v3841, %v3937
  %v3939 = vpop.f32.mrb[0].mxu0
  %3940 = vmatprep.mubr.f32.mxu0 0.0
  %3941 = vmatmul.mubr.f32.gmra.mrb[0].mxu0 %v3859
  %v3942 = vpop.f32.mrb[0].mxu0
  %v3943 = vadd.f32 %v3846, %v3942
  %v3944 = vpop.f32.mrb[0].mxu0
  %3945 = vdwg.mxu0
  %s3946 = scalar_lea.vmem %s41, 32
  %v3947 = vld [vmem:[%s3946] sm:$0xff]
  %v3948 = vld [vmem:[%s3946 + $0x8] sm:$0xff]
  %v3949 = vld [vmem:[%s3946 + $0x10] sm:$0xff]
  %v3950 = vld [vmem:[%s3946 + $0x18] sm:$0xff]
  %3952 = vset.pattern.permute.xlu0 0
  %3953 = vperm.xlu0 %3952, %v3947
  %v3954 = vpop.permute.xlu0 %3953
  %3957 = vset.pattern.permute.xlu0 0
  %3958 = vperm.xlu0 %3957, %v3948
  %v3959 = vpop.permute.xlu0 %3958
  %3962 = vset.pattern.permute.xlu0 0
  %3963 = vperm.xlu0 %3962, %v3949
  %v3964 = vpop.permute.xlu0 %3963
  %3967 = vset.pattern.permute.xlu0 0
  %3968 = vperm.xlu0 %3967, %v3950
  %v3969 = vpop.permute.xlu0 %3968
  %v3971 = vadd.f32 %v3928, %v3954
  %v3972 = vadd.f32 %v3933, %v3959
  %v3973 = vadd.f32 %v3938, %v3964
  %v3974 = vadd.f32 %v3943, %v3969
  %s3975 = scalar_lea.vmem %s43, 64
  %v3976 = vld [vmem:[%s3975] sm:$0xff]
  %v3977 = vld [vmem:[%s3975 + $0x8] sm:$0xff]
  %v3978 = vld [vmem:[%s3975 + $0x10] sm:$0xff]
  %v3979 = vld [vmem:[%s3975 + $0x18] sm:$0xff]
  %v3980 = vld [vmem:[%s3975 + $0x20] sm:$0xff]
  %v3981 = vld [vmem:[%s3975 + $0x28] sm:$0xff]
  %v3982 = vld [vmem:[%s3975 + $0x30] sm:$0xff]
  %v3983 = vld [vmem:[%s3975 + $0x38] sm:$0xff]
  %3984 = vrot.lane.b32.xlu0 %v3971, 32
  %v3985 = vpop.permute.xlu0 %3984
  %v3986 = vsel %vm2698, %v3985, %v3971
  %3987 = vrot.lane.b32.xlu0 %v3972, 32
  %v3988 = vpop.permute.xlu0 %3987
  %v3989 = vsel %vm2698, %v3988, %v3972
  %3990 = vrot.lane.b32.xlu0 %v3986, 32
  %v3991 = vpop.permute.xlu0 %3990
  %3992 = vrot.lane.b32.xlu0 %v3989, 32
  %v3993 = vpop.permute.xlu0 %3992
  %v3994 = vsel %vm2698, %v3991, %v3971
  %v3995 = vsel %vm2698, %v3993, %v3972
  %v3996 = vmul.f32 %v3994, %v2717
  %v3997 = vmul.f32 %v3995, %v2717
  %v3998 = vmul.f32 %v3994, %v2727
  %v3999 = vmul.f32 %v3995, %v2727
  %v4000 = vmul.f32 %v3994, %v2737
  %v4001 = vmul.f32 %v3995, %v2737
  %v4002 = vmul.f32 %v3994, %v2747
  %v4003 = vmul.f32 %v3995, %v2747
  %v4004 = vmul.f32 %v3994, %v2757
  %v4005 = vmul.f32 %v3995, %v2757
  %v4006 = vmul.f32 %v3994, %v2767
  %v4007 = vmul.f32 %v3995, %v2767
  %v4008 = vmul.f32 %v3994, %v2777
  %v4009 = vmul.f32 %v3995, %v2777
  %v4010 = vmul.f32 %v3994, %v2787
  %v4011 = vmul.f32 %v3995, %v2787
  %4014 = vrot.lane.b32.xlu0 %v3998, 127
  %v4015 = vpop.permute.xlu0 %4014
  %4016 = vrot.lane.b32.xlu0 %v3999, 127
  %v4017 = vpop.permute.xlu0 %4016
  %4020 = vrot.lane.b32.xlu0 %v4000, 126
  %v4021 = vpop.permute.xlu0 %4020
  %4022 = vrot.lane.b32.xlu0 %v4001, 126
  %v4023 = vpop.permute.xlu0 %4022
  %4026 = vrot.lane.b32.xlu0 %v4002, 124
  %v4027 = vpop.permute.xlu0 %4026
  %4028 = vrot.lane.b32.xlu0 %v4003, 124
  %v4029 = vpop.permute.xlu0 %4028
  %4032 = vrot.lane.b32.xlu0 %v3971, 27
  %v4033 = vpop.permute.xlu0 %4032
  %4034 = vrot.lane.b32.xlu0 %v3972, 27
  %v4035 = vpop.permute.xlu0 %4034
  %4038 = vrot.lane.b32.xlu0 %v4004, 26
  %v4039 = vpop.permute.xlu0 %4038
  %4040 = vrot.lane.b32.xlu0 %v4005, 26
  %v4041 = vpop.permute.xlu0 %4040
  %4044 = vrot.lane.b32.xlu0 %v4006, 24
  %v4045 = vpop.permute.xlu0 %4044
  %4046 = vrot.lane.b32.xlu0 %v4007, 24
  %v4047 = vpop.permute.xlu0 %4046
  %4050 = vrot.lane.b32.xlu0 %v4008, 23
  %v4051 = vpop.permute.xlu0 %4050
  %4052 = vrot.lane.b32.xlu0 %v4009, 23
  %v4053 = vpop.permute.xlu0 %4052
  %4056 = vrot.lane.b32.xlu0 %v4010, 22
  %v4057 = vpop.permute.xlu0 %4056
  %4058 = vrot.lane.b32.xlu0 %v4011, 22
  %v4059 = vpop.permute.xlu0 %4058
  %s4060 = scalar_lea.vmem %s45, 32
  %v4061 = vld [vmem:[%s4060] sm:$0xff]
  %v4062 = vld [vmem:[%s4060 + $0x8] sm:$0xff]
  %v4063 = vld [vmem:[%s4060 + $0x10] sm:$0xff]
  %v4064 = vld [vmem:[%s4060 + $0x18] sm:$0xff]
  %4066 = vset.pattern.permute.xlu0 0
  %4067 = vperm.xlu0 %4066, %v4061
  %v4068 = vpop.permute.xlu0 %4067
  %4071 = vset.pattern.permute.xlu0 0
  %4072 = vperm.xlu0 %4071, %v4062
  %v4073 = vpop.permute.xlu0 %4072
  %4076 = vset.pattern.permute.xlu0 0
  %4077 = vperm.xlu0 %4076, %v4063
  %v4078 = vpop.permute.xlu0 %4077
  %4081 = vset.pattern.permute.xlu0 0
  %4082 = vperm.xlu0 %4081, %v4064
  %v4083 = vpop.permute.xlu0 %4082
  %4087 = vrot.lane.b32.xlu0 %v3996, 101
  %v4088 = vpop.permute.xlu0 %4087
  %4089 = vrot.lane.b32.xlu0 %v3997, 101
  %v4090 = vpop.permute.xlu0 %4089
  %4091 = vrot.lane.b32.xlu0 %v4015, 101
  %v4092 = vpop.permute.xlu0 %4091
  %4093 = vrot.lane.b32.xlu0 %v4017, 101
  %v4094 = vpop.permute.xlu0 %4093
  %4095 = vrot.lane.b32.xlu0 %v4021, 101
  %v4096 = vpop.permute.xlu0 %4095
  %4097 = vrot.lane.b32.xlu0 %v4023, 101
  %v4098 = vpop.permute.xlu0 %4097
  %4099 = vrot.lane.b32.xlu0 %v4027, 101
  %v4100 = vpop.permute.xlu0 %4099
  %4101 = vrot.lane.b32.xlu0 %v4029, 101
  %v4102 = vpop.permute.xlu0 %4101
  %4103 = vrot.lane.b32.xlu0 %v4033, 101
  %v4104 = vpop.permute.xlu0 %4103
  %4105 = vrot.lane.b32.xlu0 %v4035, 101
  %v4106 = vpop.permute.xlu0 %4105
  %4107 = vrot.lane.b32.xlu0 %v4039, 101
  %v4108 = vpop.permute.xlu0 %4107
  %4109 = vrot.lane.b32.xlu0 %v4041, 101
  %v4110 = vpop.permute.xlu0 %4109
  %4111 = vrot.lane.b32.xlu0 %v4045, 101
  %v4112 = vpop.permute.xlu0 %4111
  %4113 = vrot.lane.b32.xlu0 %v4047, 101
  %v4114 = vpop.permute.xlu0 %4113
  %4115 = vrot.lane.b32.xlu0 %v4051, 101
  %v4116 = vpop.permute.xlu0 %4115
  %4117 = vrot.lane.b32.xlu0 %v4053, 101
  %v4118 = vpop.permute.xlu0 %4117
  %4119 = vrot.lane.b32.xlu0 %v4057, 101
  %v4120 = vpop.permute.xlu0 %4119
  %4121 = vrot.lane.b32.xlu0 %v4059, 101
  %v4122 = vpop.permute.xlu0 %4121
  %v4142 = vsel %vm2467, %v3977, 0
  %v4145 = vsel %vm2467, %v3979, 0
  %v4148 = vsel %vm2467, %v3981, 0
  %v4151 = vsel %vm2467, %v3983, 0
  %4153 = vmatprep.subr.mxu0 0.0
  %4154 = vmatpush1.msra.mxu0 %v4088
  %4155 = vmatprep.subr.mxu0 0.0
  %4156 = vmatpush1.msra.mxu0 %v4090
  %4157 = vmatprep.subr.mxu0 0.0
  %4158 = vmatpush1.msra.mxu0 %v4092
  %4159 = vmatprep.subr.mxu0 0.0
  %4160 = vmatpush1.msra.mxu0 %v4094
  %4161 = vmatprep.subr.mxu0 0.0
  %4162 = vmatpush1.msra.mxu0 %v4096
  %4163 = vmatprep.subr.mxu0 0.0
  %4164 = vmatpush1.msra.mxu0 %v4098
  %4165 = vmatprep.subr.mxu0 0.0
  %4166 = vmatpush1.msra.mxu0 %v4100
  %4167 = vmatprep.subr.mxu0 0.0
  %4168 = vmatpush1.msra.mxu0 %v4102
  %4169 = vmatprep.subr.mxu0 0.0
  %4170 = vmatpush1.msra.mxu0 %v4104
  %4171 = vmatprep.subr.mxu0 0.0
  %4172 = vmatpush1.msra.mxu0 %v4106
  %4173 = vmatprep.subr.mxu0 0.0
  %4174 = vmatpush1.msra.mxu0 %v4108
  %4175 = vmatprep.subr.mxu0 0.0
  %4176 = vmatpush1.msra.mxu0 %v4110
  %4177 = vmatprep.subr.mxu0 0.0
  %4178 = vmatpush1.msra.mxu0 %v4112
  %4179 = vmatprep.subr.mxu0 0.0
  %4180 = vmatpush1.msra.mxu0 %v4114
  %4181 = vmatprep.subr.mxu0 0.0
  %4182 = vmatpush1.msra.mxu0 %v4116
  %4183 = vmatprep.subr.mxu0 0.0
  %4184 = vmatpush1.msra.mxu0 %v4118
  %4185 = vmatprep.subr.mxu0 0.0
  %4186 = vmatpush1.msra.mxu0 %v4120
  %4187 = vmatprep.subr.mxu0 0.0
  %4188 = vmatpush1.msra.mxu0 %v4122
  %4189 = vmatprep.subr.mxu0 0.0
  %4190 = vmatpush1.msra.mxu0 0.0
  %4191 = vmatprep.subr.mxu0 0.0
  %4192 = vmatpush1.msra.mxu0 0.0
  %4193 = vmatprep.subr.mxu0 0.0
  %4194 = vmatpush1.msra.mxu0 0.0
  %4195 = vmatprep.subr.mxu0 0.0
  %4196 = vmatpush1.msra.mxu0 0.0
  %4197 = vmatprep.subr.mxu0 0.0
  %4198 = vmatpush1.msra.mxu0 0.0
  %4199 = vmatprep.subr.mxu0 0.0
  %4200 = vmatpush1.msra.mxu0 0.0
  %4201 = vmatprep.subr.mxu0 0.0
  %4202 = vmatpush1.msra.mxu0 0.0
  %4203 = vmatprep.subr.mxu0 0.0
  %4204 = vmatpush1.msra.mxu0 0.0
  %4205 = vmatprep.subr.mxu0 0.0
  %4206 = vmatpush1.msra.mxu0 0.0
  %4207 = vmatprep.subr.mxu0 0.0
  %4208 = vmatpush1.msra.mxu0 0.0
  %4209 = vmatprep.subr.mxu0 0.0
  %4210 = vmatpush1.msra.mxu0 0.0
  %4211 = vmatprep.subr.mxu0 0.0
  %4212 = vmatpush1.msra.mxu0 0.0
  %4213 = vmatprep.subr.mxu0 0.0
  %4214 = vmatpush1.msra.mxu0 0.0
  %4215 = vmatprep.subr.mxu0 0.0
  %4216 = vmatpush1.msra.mxu0 0.0
  %4217 = vmatprep.mubr.f32.mxu0 %v4142
  %4218 = vmatmul.mubr.f32.gmra.mrb[0].mxu0 %v3976
  %v4219 = vpop.f32.mrb[0].mxu0
  %v4220 = vadd.f32 %v4068, %v4219
  %v4221 = vpop.f32.mrb[0].mxu0
  %4222 = vmatprep.mubr.f32.mxu0 %v4145
  %4223 = vmatmul.mubr.f32.gmra.mrb[0].mxu0 %v3978
  %v4224 = vpop.f32.mrb[0].mxu0
  %v4225 = vadd.f32 %v4073, %v4224
  %v4226 = vpop.f32.mrb[0].mxu0
  %4227 = vmatprep.mubr.f32.mxu0 %v4148
  %4228 = vmatmul.mubr.f32.gmra.mrb[0].mxu0 %v3980
  %v4229 = vpop.f32.mrb[0].mxu0
  %v4230 = vadd.f32 %v4078, %v4229
  %v4231 = vpop.f32.mrb[0].mxu0
  %4232 = vmatprep.mubr.f32.mxu0 %v4151
  %4233 = vmatmul.mubr.f32.gmra.mrb[0].mxu0 %v3982
  %v4234 = vpop.f32.mrb[0].mxu0
  %v4235 = vadd.f32 %v4083, %v4234
  %v4236 = vpop.f32.mrb[0].mxu0
  %4237 = vdwg.mxu0
  %v4238 = vmax.f32 %v4220, 0.0
  %v4239 = vmax.f32 %v4225, 0.0
  %v4240 = vmax.f32 %v4230, 0.0
  %v4241 = vmax.f32 %v4235, 0.0
  %s4242 = scalar_lea.vmem %s47, 32
  %v4243 = vld [vmem:[%s4242] sm:$0xff]
  %v4244 = vld [vmem:[%s4242 + $0x8] sm:$0xff]
  %v4245 = vld [vmem:[%s4242 + $0x10] sm:$0xff]
  %v4246 = vld [vmem:[%s4242 + $0x18] sm:$0xff]
  %s4247 = scalar_lea.vmem %s49, 32
  %v4248 = vld [vmem:[%s4247] sm:$0xff]
  %v4249 = vld [vmem:[%s4247 + $0x8] sm:$0xff]
  %v4250 = vld [vmem:[%s4247 + $0x10] sm:$0xff]
  %v4251 = vld [vmem:[%s4247 + $0x18] sm:$0xff]
  %4253 = vset.pattern.permute.xlu0 0
  %4254 = vperm.xlu0 %4253, %v4248
  %v4255 = vpop.permute.xlu0 %4254
  %4258 = vset.pattern.permute.xlu0 0
  %4259 = vperm.xlu0 %4258, %v4249
  %v4260 = vpop.permute.xlu0 %4259
  %4263 = vset.pattern.permute.xlu0 0
  %4264 = vperm.xlu0 %4263, %v4250
  %v4265 = vpop.permute.xlu0 %4264
  %4268 = vset.pattern.permute.xlu0 0
  %4269 = vperm.xlu0 %4268, %v4251
  %v4270 = vpop.permute.xlu0 %4269
  %v4273 = vsel %vm534, %v4243, 0
  %v4276 = vsel %vm534, %v4244, 0
  %v4279 = vsel %vm534, %v4245, 0
  %v4282 = vsel %vm534, %v4246, 0
  %4284 = vmatprep.subr.mxu0 0.0
  %4285 = vmatpush1.msra.mxu0 %v4238
  %4286 = vmatprep.subr.mxu0 0.0
  %4287 = vmatpush1.msra.mxu0 %v4239
  %4288 = vmatprep.subr.mxu0 0.0
  %4289 = vmatpush1.msra.mxu0 %v4240
  %4290 = vmatprep.subr.mxu0 0.0
  %4291 = vmatpush1.msra.mxu0 %v4241
  %4292 = vmatprep.subr.mxu0 0.0
  %4293 = vmatpush1.msra.mxu0 0.0
  %4294 = vmatprep.subr.mxu0 0.0
  %4295 = vmatpush1.msra.mxu0 0.0
  %4296 = vmatprep.subr.mxu0 0.0
  %4297 = vmatpush1.msra.mxu0 0.0
  %4298 = vmatprep.subr.mxu0 0.0
  %4299 = vmatpush1.msra.mxu0 0.0
  %4300 = vmatprep.subr.mxu0 0.0
  %4301 = vmatpush1.msra.mxu0 0.0
  %4302 = vmatprep.subr.mxu0 0.0
  %4303 = vmatpush1.msra.mxu0 0.0
  %4304 = vmatprep.subr.mxu0 0.0
  %4305 = vmatpush1.msra.mxu0 0.0
  %4306 = vmatprep.subr.mxu0 0.0
  %4307 = vmatpush1.msra.mxu0 0.0
  %4308 = vmatprep.subr.mxu0 0.0
  %4309 = vmatpush1.msra.mxu0 0.0
  %4310 = vmatprep.subr.mxu0 0.0
  %4311 = vmatpush1.msra.mxu0 0.0
  %4312 = vmatprep.subr.mxu0 0.0
  %4313 = vmatpush1.msra.mxu0 0.0
  %4314 = vmatprep.subr.mxu0 0.0
  %4315 = vmatpush1.msra.mxu0 0.0
  %4316 = vmatprep.subr.mxu0 0.0
  %4317 = vmatpush1.msra.mxu0 0.0
  %4318 = vmatprep.subr.mxu0 0.0
  %4319 = vmatpush1.msra.mxu0 0.0
  %4320 = vmatprep.subr.mxu0 0.0
  %4321 = vmatpush1.msra.mxu0 0.0
  %4322 = vmatprep.subr.mxu0 0.0
  %4323 = vmatpush1.msra.mxu0 0.0
  %4324 = vmatprep.subr.mxu0 0.0
  %4325 = vmatpush1.msra.mxu0 0.0
  %4326 = vmatprep.subr.mxu0 0.0
  %4327 = vmatpush1.msra.mxu0 0.0
  %4328 = vmatprep.subr.mxu0 0.0
  %4329 = vmatpush1.msra.mxu0 0.0
  %4330 = vmatprep.subr.mxu0 0.0
  %4331 = vmatpush1.msra.mxu0 0.0
  %4332 = vmatprep.subr.mxu0 0.0
  %4333 = vmatpush1.msra.mxu0 0.0
  %4334 = vmatprep.subr.mxu0 0.0
  %4335 = vmatpush1.msra.mxu0 0.0
  %4336 = vmatprep.subr.mxu0 0.0
  %4337 = vmatpush1.msra.mxu0 0.0
  %4338 = vmatprep.subr.mxu0 0.0
  %4339 = vmatpush1.msra.mxu0 0.0
  %4340 = vmatprep.subr.mxu0 0.0
  %4341 = vmatpush1.msra.mxu0 0.0
  %4342 = vmatprep.subr.mxu0 0.0
  %4343 = vmatpush1.msra.mxu0 0.0
  %4344 = vmatprep.subr.mxu0 0.0
  %4345 = vmatpush1.msra.mxu0 0.0
  %4346 = vmatprep.subr.mxu0 0.0
  %4347 = vmatpush1.msra.mxu0 0.0
  %4348 = vmatprep.mubr.f32.mxu0 0.0
  %4349 = vmatmul.mubr.f32.gmra.mrb[0].mxu0 %v4273
  %v4350 = vpop.f32.mrb[0].mxu0
  %v4351 = vadd.f32 %v4255, %v4350
  %v4352 = vpop.f32.mrb[0].mxu0
  %4353 = vmatprep.mubr.f32.mxu0 0.0
  %4354 = vmatmul.mubr.f32.gmra.mrb[0].mxu0 %v4276
  %v4355 = vpop.f32.mrb[0].mxu0
  %v4356 = vadd.f32 %v4260, %v4355
  %v4357 = vpop.f32.mrb[0].mxu0
  %4358 = vmatprep.mubr.f32.mxu0 0.0
  %4359 = vmatmul.mubr.f32.gmra.mrb[0].mxu0 %v4279
  %v4360 = vpop.f32.mrb[0].mxu0
  %v4361 = vadd.f32 %v4265, %v4360
  %v4362 = vpop.f32.mrb[0].mxu0
  %4363 = vmatprep.mubr.f32.mxu0 0.0
  %4364 = vmatmul.mubr.f32.gmra.mrb[0].mxu0 %v4282
  %v4365 = vpop.f32.mrb[0].mxu0
  %v4366 = vadd.f32 %v4270, %v4365
  %v4367 = vpop.f32.mrb[0].mxu0
  %4368 = vdwg.mxu0
  %v4369 = vmax.f32 %v4351, 0.0
  %v4370 = vmax.f32 %v4356, 0.0
  %v4371 = vmax.f32 %v4361, 0.0
  %v4372 = vmax.f32 %v4366, 0.0
  %s4373 = scalar_lea.vmem %s51, 96
  %v4374 = vld [vmem:[%s4373] sm:$0xff]
  %v4375 = vld [vmem:[%s4373 + $0x8] sm:$0xff]
  %v4376 = vld [vmem:[%s4373 + $0x10] sm:$0xff]
  %v4377 = vld [vmem:[%s4373 + $0x18] sm:$0xff]
  %v4378 = vld [vmem:[%s4373 + $0x20] sm:$0xff]
  %v4379 = vld [vmem:[%s4373 + $0x28] sm:$0xff]
  %v4380 = vld [vmem:[%s4373 + $0x30] sm:$0xff]
  %v4381 = vld [vmem:[%s4373 + $0x38] sm:$0xff]
  %v4382 = vld [vmem:[%s4373 + $0x40] sm:$0xff]
  %v4383 = vld [vmem:[%s4373 + $0x48] sm:$0xff]
  %v4384 = vld [vmem:[%s4373 + $0x50] sm:$0xff]
  %v4385 = vld [vmem:[%s4373 + $0x58] sm:$0xff]
  %4386 = vrot.lane.b32.xlu0 %v4369, 32
  %v4387 = vpop.permute.xlu0 %4386
  %v4388 = vsel %vm2698, %v4387, %v4369
  %4389 = vrot.lane.b32.xlu0 %v4370, 32
  %v4390 = vpop.permute.xlu0 %4389
  %v4391 = vsel %vm2698, %v4390, %v4370
  %4392 = vrot.lane.b32.xlu0 %v4371, 32
  %v4393 = vpop.permute.xlu0 %4392
  %v4394 = vsel %vm2698, %v4393, %v4371
  %4395 = vrot.lane.b32.xlu0 %v4372, 32
  %v4396 = vpop.permute.xlu0 %4395
  %v4397 = vsel %vm2698, %v4396, %v4372
  %4398 = vrot.lane.b32.xlu0 %v4388, 32
  %v4399 = vpop.permute.xlu0 %4398
  %4400 = vrot.lane.b32.xlu0 %v4391, 32
  %v4401 = vpop.permute.xlu0 %4400
  %4402 = vrot.lane.b32.xlu0 %v4394, 32
  %v4403 = vpop.permute.xlu0 %4402
  %4404 = vrot.lane.b32.xlu0 %v4397, 32
  %v4405 = vpop.permute.xlu0 %4404
  %v4406 = vsel %vm2698, %v4399, %v4369
  %v4407 = vsel %vm2698, %v4401, %v4370
  %v4408 = vsel %vm2698, %v4403, %v4371
  %v4409 = vsel %vm2698, %v4405, %v4372
  %v4410 = vmul.f32 %v4406, %v2717
  %v4411 = vmul.f32 %v4407, %v2717
  %v4412 = vmul.f32 %v4408, %v2717
  %v4413 = vmul.f32 %v4409, %v2717
  %v4414 = vmul.f32 %v4406, %v2727
  %v4415 = vmul.f32 %v4407, %v2727
  %v4416 = vmul.f32 %v4408, %v2727
  %v4417 = vmul.f32 %v4409, %v2727
  %v4418 = vmul.f32 %v4406, %v2737
  %v4419 = vmul.f32 %v4407, %v2737
  %v4420 = vmul.f32 %v4408, %v2737
  %v4421 = vmul.f32 %v4409, %v2737
  %v4422 = vmul.f32 %v4406, %v2747
  %v4423 = vmul.f32 %v4407, %v2747
  %v4424 = vmul.f32 %v4408, %v2747
  %v4425 = vmul.f32 %v4409, %v2747
  %v4426 = vmul.f32 %v4406, %v2757
  %v4427 = vmul.f32 %v4407, %v2757
  %v4428 = vmul.f32 %v4408, %v2757
  %v4429 = vmul.f32 %v4409, %v2757
  %v4430 = vmul.f32 %v4406, %v2767
  %v4431 = vmul.f32 %v4407, %v2767
  %v4432 = vmul.f32 %v4408, %v2767
  %v4433 = vmul.f32 %v4409, %v2767
  %v4434 = vmul.f32 %v4406, %v2777
  %v4435 = vmul.f32 %v4407, %v2777
  %v4436 = vmul.f32 %v4408, %v2777
  %v4437 = vmul.f32 %v4409, %v2777
  %v4438 = vmul.f32 %v4406, %v2787
  %v4439 = vmul.f32 %v4407, %v2787
  %v4440 = vmul.f32 %v4408, %v2787
  %v4441 = vmul.f32 %v4409, %v2787
  %4446 = vrot.lane.b32.xlu0 %v4414, 127
  %v4447 = vpop.permute.xlu0 %4446
  %4448 = vrot.lane.b32.xlu0 %v4415, 127
  %v4449 = vpop.permute.xlu0 %4448
  %4450 = vrot.lane.b32.xlu0 %v4416, 127
  %v4451 = vpop.permute.xlu0 %4450
  %4452 = vrot.lane.b32.xlu0 %v4417, 127
  %v4453 = vpop.permute.xlu0 %4452
  %4458 = vrot.lane.b32.xlu0 %v4418, 126
  %v4459 = vpop.permute.xlu0 %4458
  %4460 = vrot.lane.b32.xlu0 %v4419, 126
  %v4461 = vpop.permute.xlu0 %4460
  %4462 = vrot.lane.b32.xlu0 %v4420, 126
  %v4463 = vpop.permute.xlu0 %4462
  %4464 = vrot.lane.b32.xlu0 %v4421, 126
  %v4465 = vpop.permute.xlu0 %4464
  %4470 = vrot.lane.b32.xlu0 %v4422, 124
  %v4471 = vpop.permute.xlu0 %4470
  %4472 = vrot.lane.b32.xlu0 %v4423, 124
  %v4473 = vpop.permute.xlu0 %4472
  %4474 = vrot.lane.b32.xlu0 %v4424, 124
  %v4475 = vpop.permute.xlu0 %4474
  %4476 = vrot.lane.b32.xlu0 %v4425, 124
  %v4477 = vpop.permute.xlu0 %4476
  %4482 = vrot.lane.b32.xlu0 %v4369, 27
  %v4483 = vpop.permute.xlu0 %4482
  %4484 = vrot.lane.b32.xlu0 %v4370, 27
  %v4485 = vpop.permute.xlu0 %4484
  %4486 = vrot.lane.b32.xlu0 %v4371, 27
  %v4487 = vpop.permute.xlu0 %4486
  %4488 = vrot.lane.b32.xlu0 %v4372, 27
  %v4489 = vpop.permute.xlu0 %4488
  %4494 = vrot.lane.b32.xlu0 %v4426, 26
  %v4495 = vpop.permute.xlu0 %4494
  %4496 = vrot.lane.b32.xlu0 %v4427, 26
  %v4497 = vpop.permute.xlu0 %4496
  %4498 = vrot.lane.b32.xlu0 %v4428, 26
  %v4499 = vpop.permute.xlu0 %4498
  %4500 = vrot.lane.b32.xlu0 %v4429, 26
  %v4501 = vpop.permute.xlu0 %4500
  %4506 = vrot.lane.b32.xlu0 %v4430, 24
  %v4507 = vpop.permute.xlu0 %4506
  %4508 = vrot.lane.b32.xlu0 %v4431, 24
  %v4509 = vpop.permute.xlu0 %4508
  %4510 = vrot.lane.b32.xlu0 %v4432, 24
  %v4511 = vpop.permute.xlu0 %4510
  %4512 = vrot.lane.b32.xlu0 %v4433, 24
  %v4513 = vpop.permute.xlu0 %4512
  %4518 = vrot.lane.b32.xlu0 %v4434, 23
  %v4519 = vpop.permute.xlu0 %4518
  %4520 = vrot.lane.b32.xlu0 %v4435, 23
  %v4521 = vpop.permute.xlu0 %4520
  %4522 = vrot.lane.b32.xlu0 %v4436, 23
  %v4523 = vpop.permute.xlu0 %4522
  %4524 = vrot.lane.b32.xlu0 %v4437, 23
  %v4525 = vpop.permute.xlu0 %4524
  %4530 = vrot.lane.b32.xlu0 %v4438, 22
  %v4531 = vpop.permute.xlu0 %4530
  %4532 = vrot.lane.b32.xlu0 %v4439, 22
  %v4533 = vpop.permute.xlu0 %4532
  %4534 = vrot.lane.b32.xlu0 %v4440, 22
  %v4535 = vpop.permute.xlu0 %4534
  %4536 = vrot.lane.b32.xlu0 %v4441, 22
  %v4537 = vpop.permute.xlu0 %4536
  %s4538 = scalar_lea.vmem %s53, 32
  %v4539 = vld [vmem:[%s4538] sm:$0xff]
  %v4540 = vld [vmem:[%s4538 + $0x8] sm:$0xff]
  %v4541 = vld [vmem:[%s4538 + $0x10] sm:$0xff]
  %v4542 = vld [vmem:[%s4538 + $0x18] sm:$0xff]
  %4544 = vset.pattern.permute.xlu0 0
  %4545 = vperm.xlu0 %4544, %v4539
  %v4546 = vpop.permute.xlu0 %4545
  %4549 = vset.pattern.permute.xlu0 0
  %4550 = vperm.xlu0 %4549, %v4540
  %v4551 = vpop.permute.xlu0 %4550
  %4554 = vset.pattern.permute.xlu0 0
  %4555 = vperm.xlu0 %4554, %v4541
  %v4556 = vpop.permute.xlu0 %4555
  %4559 = vset.pattern.permute.xlu0 0
  %4560 = vperm.xlu0 %4559, %v4542
  %v4561 = vpop.permute.xlu0 %4560
  %4567 = vrot.lane.b32.xlu0 %v4410, 101
  %v4568 = vpop.permute.xlu0 %4567
  %4569 = vrot.lane.b32.xlu0 %v4411, 101
  %v4570 = vpop.permute.xlu0 %4569
  %4571 = vrot.lane.b32.xlu0 %v4412, 101
  %v4572 = vpop.permute.xlu0 %4571
  %4573 = vrot.lane.b32.xlu0 %v4413, 101
  %v4574 = vpop.permute.xlu0 %4573
  %4575 = vrot.lane.b32.xlu0 %v4447, 101
  %v4576 = vpop.permute.xlu0 %4575
  %4577 = vrot.lane.b32.xlu0 %v4449, 101
  %v4578 = vpop.permute.xlu0 %4577
  %4579 = vrot.lane.b32.xlu0 %v4451, 101
  %v4580 = vpop.permute.xlu0 %4579
  %4581 = vrot.lane.b32.xlu0 %v4453, 101
  %v4582 = vpop.permute.xlu0 %4581
  %4583 = vrot.lane.b32.xlu0 %v4459, 101
  %v4584 = vpop.permute.xlu0 %4583
  %4585 = vrot.lane.b32.xlu0 %v4461, 101
  %v4586 = vpop.permute.xlu0 %4585
  %4587 = vrot.lane.b32.xlu0 %v4463, 101
  %v4588 = vpop.permute.xlu0 %4587
  %4589 = vrot.lane.b32.xlu0 %v4465, 101
  %v4590 = vpop.permute.xlu0 %4589
  %4591 = vrot.lane.b32.xlu0 %v4471, 101
  %v4592 = vpop.permute.xlu0 %4591
  %4593 = vrot.lane.b32.xlu0 %v4473, 101
  %v4594 = vpop.permute.xlu0 %4593
  %4595 = vrot.lane.b32.xlu0 %v4475, 101
  %v4596 = vpop.permute.xlu0 %4595
  %4597 = vrot.lane.b32.xlu0 %v4477, 101
  %v4598 = vpop.permute.xlu0 %4597
  %4599 = vrot.lane.b32.xlu0 %v4483, 101
  %v4600 = vpop.permute.xlu0 %4599
  %4601 = vrot.lane.b32.xlu0 %v4485, 101
  %v4602 = vpop.permute.xlu0 %4601
  %4603 = vrot.lane.b32.xlu0 %v4487, 101
  %v4604 = vpop.permute.xlu0 %4603
  %4605 = vrot.lane.b32.xlu0 %v4489, 101
  %v4606 = vpop.permute.xlu0 %4605
  %4607 = vrot.lane.b32.xlu0 %v4495, 101
  %v4608 = vpop.permute.xlu0 %4607
  %4609 = vrot.lane.b32.xlu0 %v4497, 101
  %v4610 = vpop.permute.xlu0 %4609
  %4611 = vrot.lane.b32.xlu0 %v4499, 101
  %v4612 = vpop.permute.xlu0 %4611
  %4613 = vrot.lane.b32.xlu0 %v4501, 101
  %v4614 = vpop.permute.xlu0 %4613
  %4615 = vrot.lane.b32.xlu0 %v4507, 101
  %v4616 = vpop.permute.xlu0 %4615
  %4617 = vrot.lane.b32.xlu0 %v4509, 101
  %v4618 = vpop.permute.xlu0 %4617
  %4619 = vrot.lane.b32.xlu0 %v4511, 101
  %v4620 = vpop.permute.xlu0 %4619
  %4621 = vrot.lane.b32.xlu0 %v4513, 101
  %v4622 = vpop.permute.xlu0 %4621
  %4623 = vrot.lane.b32.xlu0 %v4519, 101
  %v4624 = vpop.permute.xlu0 %4623
  %4625 = vrot.lane.b32.xlu0 %v4521, 101
  %v4626 = vpop.permute.xlu0 %4625
  %4627 = vrot.lane.b32.xlu0 %v4523, 101
  %v4628 = vpop.permute.xlu0 %4627
  %4629 = vrot.lane.b32.xlu0 %v4525, 101
  %v4630 = vpop.permute.xlu0 %4629
  %4631 = vrot.lane.b32.xlu0 %v4531, 101
  %v4632 = vpop.permute.xlu0 %4631
  %4633 = vrot.lane.b32.xlu0 %v4533, 101
  %v4634 = vpop.permute.xlu0 %4633
  %4635 = vrot.lane.b32.xlu0 %v4535, 101
  %v4636 = vpop.permute.xlu0 %4635
  %4637 = vrot.lane.b32.xlu0 %v4537, 101
  %v4638 = vpop.permute.xlu0 %4637
  %v4676 = vsel %vm534, %v4376, 0
  %v4679 = vsel %vm534, %v4379, 0
  %v4682 = vsel %vm534, %v4382, 0
  %v4685 = vsel %vm534, %v4385, 0
  %4687 = vmatprep.subr.mxu0 0.0
  %4688 = vmatpush1.msra.mxu0 %v4568
  %4689 = vmatprep.subr.mxu0 0.0
  %4690 = vmatpush1.msra.mxu0 %v4570
  %4691 = vmatprep.subr.mxu0 0.0
  %4692 = vmatpush1.msra.mxu0 %v4572
  %4693 = vmatprep.subr.mxu0 0.0
  %4694 = vmatpush1.msra.mxu0 %v4574
  %4695 = vmatprep.subr.mxu0 0.0
  %4696 = vmatpush1.msra.mxu0 %v4576
  %4697 = vmatprep.subr.mxu0 0.0
  %4698 = vmatpush1.msra.mxu0 %v4578
  %4699 = vmatprep.subr.mxu0 0.0
  %4700 = vmatpush1.msra.mxu0 %v4580
  %4701 = vmatprep.subr.mxu0 0.0
  %4702 = vmatpush1.msra.mxu0 %v4582
  %4703 = vmatprep.subr.mxu0 0.0
  %4704 = vmatpush1.msra.mxu0 %v4584
  %4705 = vmatprep.subr.mxu0 0.0
  %4706 = vmatpush1.msra.mxu0 %v4586
  %4707 = vmatprep.subr.mxu0 0.0
  %4708 = vmatpush1.msra.mxu0 %v4588
  %4709 = vmatprep.subr.mxu0 0.0
  %4710 = vmatpush1.msra.mxu0 %v4590
  %4711 = vmatprep.subr.mxu0 0.0
  %4712 = vmatpush1.msra.mxu0 %v4592
  %4713 = vmatprep.subr.mxu0 0.0
  %4714 = vmatpush1.msra.mxu0 %v4594
  %4715 = vmatprep.subr.mxu0 0.0
  %4716 = vmatpush1.msra.mxu0 %v4596
  %4717 = vmatprep.subr.mxu0 0.0
  %4718 = vmatpush1.msra.mxu0 %v4598
  %4719 = vmatprep.subr.mxu0 0.0
  %4720 = vmatpush1.msra.mxu0 %v4600
  %4721 = vmatprep.subr.mxu0 0.0
  %4722 = vmatpush1.msra.mxu0 %v4602
  %4723 = vmatprep.subr.mxu0 0.0
  %4724 = vmatpush1.msra.mxu0 %v4604
  %4725 = vmatprep.subr.mxu0 0.0
  %4726 = vmatpush1.msra.mxu0 %v4606
  %4727 = vmatprep.subr.mxu0 0.0
  %4728 = vmatpush1.msra.mxu0 %v4608
  %4729 = vmatprep.subr.mxu0 0.0
  %4730 = vmatpush1.msra.mxu0 %v4610
  %4731 = vmatprep.subr.mxu0 0.0
  %4732 = vmatpush1.msra.mxu0 %v4612
  %4733 = vmatprep.subr.mxu0 0.0
  %4734 = vmatpush1.msra.mxu0 %v4614
  %4735 = vmatprep.subr.mxu0 0.0
  %4736 = vmatpush1.msra.mxu0 %v4616
  %4737 = vmatprep.subr.mxu0 0.0
  %4738 = vmatpush1.msra.mxu0 %v4618
  %4739 = vmatprep.subr.mxu0 0.0
  %4740 = vmatpush1.msra.mxu0 %v4620
  %4741 = vmatprep.subr.mxu0 0.0
  %4742 = vmatpush1.msra.mxu0 %v4622
  %4743 = vmatprep.subr.mxu0 0.0
  %4744 = vmatpush1.msra.mxu0 %v4624
  %4745 = vmatprep.subr.mxu0 0.0
  %4746 = vmatpush1.msra.mxu0 %v4626
  %4747 = vmatprep.subr.mxu0 0.0
  %4748 = vmatpush1.msra.mxu0 %v4628
  %4749 = vmatprep.subr.mxu0 0.0
  %4750 = vmatpush1.msra.mxu0 %v4630
  %4751 = vmatprep.mubr.f32.mxu0 %v4375
  %4752 = vmatmul.mubr.f32.gmra.mrb[0].mxu0 %v4374
  %v4753 = vpop.f32.mrb[0].mxu0
  %v4754 = vadd.f32 %v4546, %v4753
  %v4755 = vpop.f32.mrb[0].mxu0
  %4756 = vmatprep.mubr.f32.mxu0 %v4378
  %4757 = vmatmul.mubr.f32.gmra.mrb[0].mxu0 %v4377
  %v4758 = vpop.f32.mrb[0].mxu0
  %v4759 = vadd.f32 %v4551, %v4758
  %v4760 = vpop.f32.mrb[0].mxu0
  %4761 = vmatprep.mubr.f32.mxu0 %v4381
  %4762 = vmatmul.mubr.f32.gmra.mrb[0].mxu0 %v4380
  %v4763 = vpop.f32.mrb[0].mxu0
  %v4764 = vadd.f32 %v4556, %v4763
  %v4765 = vpop.f32.mrb[0].mxu0
  %4766 = vmatprep.mubr.f32.mxu0 %v4384
  %4767 = vmatmul.mubr.f32.gmra.mrb[0].mxu0 %v4383
  %v4768 = vpop.f32.mrb[0].mxu0
  %v4769 = vadd.f32 %v4561, %v4768
  %v4770 = vpop.f32.mrb[0].mxu0
  %4771 = vdwg.mxu0
  %4772 = vmatprep.subr.mxu0 0.0
  %4773 = vmatpush1.msra.mxu0 %v4632
  %4774 = vmatprep.subr.mxu0 0.0
  %4775 = vmatpush1.msra.mxu0 %v4634
  %4776 = vmatprep.subr.mxu0 0.0
  %4777 = vmatpush1.msra.mxu0 %v4636
  %4778 = vmatprep.subr.mxu0 0.0
  %4779 = vmatpush1.msra.mxu0 %v4638
  %4780 = vmatprep.subr.mxu0 0.0
  %4781 = vmatpush1.msra.mxu0 0.0
  %4782 = vmatprep.subr.mxu0 0.0
  %4783 = vmatpush1.msra.mxu0 0.0
  %4784 = vmatprep.subr.mxu0 0.0
  %4785 = vmatpush1.msra.mxu0 0.0
  %4786 = vmatprep.subr.mxu0 0.0
  %4787 = vmatpush1.msra.mxu0 0.0
  %4788 = vmatprep.subr.mxu0 0.0
  %4789 = vmatpush1.msra.mxu0 0.0
  %4790 = vmatprep.subr.mxu0 0.0
  %4791 = vmatpush1.msra.mxu0 0.0
  %4792 = vmatprep.subr.mxu0 0.0
  %4793 = vmatpush1.msra.mxu0 0.0
  %4794 = vmatprep.subr.mxu0 0.0
  %4795 = vmatpush1.msra.mxu0 0.0
  %4796 = vmatprep.subr.mxu0 0.0
  %4797 = vmatpush1.msra.mxu0 0.0
  %4798 = vmatprep.subr.mxu0 0.0
  %4799 = vmatpush1.msra.mxu0 0.0
  %4800 = vmatprep.subr.mxu0 0.0
  %4801 = vmatpush1.msra.mxu0 0.0
  %4802 = vmatprep.subr.mxu0 0.0
  %4803 = vmatpush1.msra.mxu0 0.0
  %4804 = vmatprep.subr.mxu0 0.0
  %4805 = vmatpush1.msra.mxu0 0.0
  %4806 = vmatprep.subr.mxu0 0.0
  %4807 = vmatpush1.msra.mxu0 0.0
  %4808 = vmatprep.subr.mxu0 0.0
  %4809 = vmatpush1.msra.mxu0 0.0
  %4810 = vmatprep.subr.mxu0 0.0
  %4811 = vmatpush1.msra.mxu0 0.0
  %4812 = vmatprep.subr.mxu0 0.0
  %4813 = vmatpush1.msra.mxu0 0.0
  %4814 = vmatprep.subr.mxu0 0.0
  %4815 = vmatpush1.msra.mxu0 0.0
  %4816 = vmatprep.subr.mxu0 0.0
  %4817 = vmatpush1.msra.mxu0 0.0
  %4818 = vmatprep.subr.mxu0 0.0
  %4819 = vmatpush1.msra.mxu0 0.0
  %4820 = vmatprep.subr.mxu0 0.0
  %4821 = vmatpush1.msra.mxu0 0.0
  %4822 = vmatprep.subr.mxu0 0.0
  %4823 = vmatpush1.msra.mxu0 0.0
  %4824 = vmatprep.subr.mxu0 0.0
  %4825 = vmatpush1.msra.mxu0 0.0
  %4826 = vmatprep.subr.mxu0 0.0
  %4827 = vmatpush1.msra.mxu0 0.0
  %4828 = vmatprep.subr.mxu0 0.0
  %4829 = vmatpush1.msra.mxu0 0.0
  %4830 = vmatprep.subr.mxu0 0.0
  %4831 = vmatpush1.msra.mxu0 0.0
  %4832 = vmatprep.subr.mxu0 0.0
  %4833 = vmatpush1.msra.mxu0 0.0
  %4834 = vmatprep.subr.mxu0 0.0
  %4835 = vmatpush1.msra.mxu0 0.0
  %4836 = vmatprep.mubr.f32.mxu0 0.0
  %4837 = vmatmul.mubr.f32.gmra.mrb[0].mxu0 %v4676
  %v4838 = vpop.f32.mrb[0].mxu0
  %v4839 = vadd.f32 %v4754, %v4838
  %v4840 = vpop.f32.mrb[0].mxu0
  %4841 = vmatprep.mubr.f32.mxu0 0.0
  %4842 = vmatmul.mubr.f32.gmra.mrb[0].mxu0 %v4679
  %v4843 = vpop.f32.mrb[0].mxu0
  %v4844 = vadd.f32 %v4759, %v4843
  %v4845 = vpop.f32.mrb[0].mxu0
  %4846 = vmatprep.mubr.f32.mxu0 0.0
  %4847 = vmatmul.mubr.f32.gmra.mrb[0].mxu0 %v4682
  %v4848 = vpop.f32.mrb[0].mxu0
  %v4849 = vadd.f32 %v4764, %v4848
  %v4850 = vpop.f32.mrb[0].mxu0
  %4851 = vmatprep.mubr.f32.mxu0 0.0
  %4852 = vmatmul.mubr.f32.gmra.mrb[0].mxu0 %v4685
  %v4853 = vpop.f32.mrb[0].mxu0
  %v4854 = vadd.f32 %v4769, %v4853
  %v4855 = vpop.f32.mrb[0].mxu0
  %4856 = vdwg.mxu0
  %v4857 = vadd.f32 %v4849, 2.0
  %v4858 = vadd.f32 %v4854, 2.0
  %v4859 = vsub.f32 0.0, %v4857
  %v4860 = vsub.f32 0.0, %v4858
  %v4861 = vmul.f32 %v4859, 1.442695
  %v4862 = vpow.pop %v4861
  %v4863 = vmul.f32 %v4860, 1.442695
  %v4864 = vpow.pop %v4863
  %v4865 = vadd.f32 %v4862, 1.0
  %v4866 = vadd.f32 %v4864, 1.0
  %v4867 = vadd.f32 %v3973, %v4839
  %v4868 = vadd.f32 %v3974, %v4844
  %v4869 = vrcp.pop %v4865
  %v4870 = vrcp.pop %v4866
  %v4871 = vmul.f32 %v4867, %v4869
  %v4872 = vmul.f32 %v4868, %v4870
  %v4873 = vlog2.pop %v4865
  %v4874 = vmul.f32 %v4873, 0.6931472
  %v4875 = vlog2.pop %v4866
  %v4876 = vmul.f32 %v4875, 0.6931472
  %v4877 = vsub.f32 0.0, %v4874
  %v4878 = vsub.f32 0.0, %v4876
  %v4880 = vsel %vm534, %v4877, 0
  %v4883 = vsel %vm534, %v4878, 0
  %4885 = vmatprep.subr.mxu0 0.0
  %4886 = vmatpush1.msra.mxu0 %v2455
  %4887 = vmatprep.subr.mxu0 0.0
  %4888 = vmatpush1.msra.mxu0 %v2456
  %4889 = vmatprep.subr.mxu0 0.0
  %4890 = vmatpush1.msra.mxu0 %v2457
  %4891 = vmatprep.subr.mxu0 0.0
  %4892 = vmatpush1.msra.mxu0 %v2458
  %4893 = vmatprep.subr.mxu0 0.0
  %4894 = vmatpush1.msra.mxu0 0.0
  %4895 = vmatprep.subr.mxu0 0.0
  %4896 = vmatpush1.msra.mxu0 0.0
  %4897 = vmatprep.subr.mxu0 0.0
  %4898 = vmatpush1.msra.mxu0 0.0
  %4899 = vmatprep.subr.mxu0 0.0
  %4900 = vmatpush1.msra.mxu0 0.0
  %4901 = vmatprep.subr.mxu0 0.0
  %4902 = vmatpush1.msra.mxu0 0.0
  %4903 = vmatprep.subr.mxu0 0.0
  %4904 = vmatpush1.msra.mxu0 0.0
  %4905 = vmatprep.subr.mxu0 0.0
  %4906 = vmatpush1.msra.mxu0 0.0
  %4907 = vmatprep.subr.mxu0 0.0
  %4908 = vmatpush1.msra.mxu0 0.0
  %4909 = vmatprep.subr.mxu0 0.0
  %4910 = vmatpush1.msra.mxu0 0.0
  %4911 = vmatprep.subr.mxu0 0.0
  %4912 = vmatpush1.msra.mxu0 0.0
  %4913 = vmatprep.subr.mxu0 0.0
  %4914 = vmatpush1.msra.mxu0 0.0
  %4915 = vmatprep.subr.mxu0 0.0
  %4916 = vmatpush1.msra.mxu0 0.0
  %4917 = vmatprep.subr.mxu0 0.0
  %4918 = vmatpush1.msra.mxu0 0.0
  %4919 = vmatprep.subr.mxu0 0.0
  %4920 = vmatpush1.msra.mxu0 0.0
  %4921 = vmatprep.subr.mxu0 0.0
  %4922 = vmatpush1.msra.mxu0 0.0
  %4923 = vmatprep.subr.mxu0 0.0
  %4924 = vmatpush1.msra.mxu0 0.0
  %4925 = vmatprep.subr.mxu0 0.0
  %4926 = vmatpush1.msra.mxu0 0.0
  %4927 = vmatprep.subr.mxu0 0.0
  %4928 = vmatpush1.msra.mxu0 0.0
  %4929 = vmatprep.subr.mxu0 0.0
  %4930 = vmatpush1.msra.mxu0 0.0
  %4931 = vmatprep.subr.mxu0 0.0
  %4932 = vmatpush1.msra.mxu0 0.0
  %4933 = vmatprep.subr.mxu0 0.0
  %4934 = vmatpush1.msra.mxu0 0.0
  %4935 = vmatprep.subr.mxu0 0.0
  %4936 = vmatpush1.msra.mxu0 0.0
  %4937 = vmatprep.subr.mxu0 0.0
  %4938 = vmatpush1.msra.mxu0 0.0
  %4939 = vmatprep.subr.mxu0 0.0
  %4940 = vmatpush1.msra.mxu0 0.0
  %4941 = vmatprep.subr.mxu0 0.0
  %4942 = vmatpush1.msra.mxu0 0.0
  %4943 = vmatprep.subr.mxu0 0.0
  %4944 = vmatpush1.msra.mxu0 0.0
  %4945 = vmatprep.subr.mxu0 0.0
  %4946 = vmatpush1.msra.mxu0 0.0
  %4947 = vmatprep.subr.mxu0 0.0
  %4948 = vmatpush1.msra.mxu0 0.0
  %4949 = vmatprep.mubr.f32.mxu0 0.0
  %4950 = vmatmul.mubr.f32.gmra.mrb[0].mxu0 %v4880
  %v4951 = vpop.f32.mrb[0].mxu0
  %v4952 = vadd.f32 0.0, %v4951
  %v4953 = vpop.f32.mrb[0].mxu0
  %4954 = vmatprep.mubr.f32.mxu0 0.0
  %4955 = vmatmul.mubr.f32.gmra.mrb[0].mxu0 %v4883
  %v4956 = vpop.f32.mrb[0].mxu0
  %v4957 = vadd.f32 0.0, %v4956
  %v4958 = vpop.f32.mrb[0].mxu0
  %4959 = vdwg.mxu0
  %v4960 = vadd.f32 %v4952, %v4957
  %v4961 = vrot.slane %v4960, 4
  %v4962 = vadd.f32 %v4960, %v4961
  %v4963 = vrot.slane %v4962, 2
  %v4964 = vadd.f32 %v4962, %v4963
  %v4965 = vrot.slane %v4964, 1
  %v4966 = vadd.f32 %v4964, %v4965
  %v4967 = vadd.f32 %v3741, %v4966
  %v4968 = vmul.f32 %v3971, %v3971
  %v4969 = vmul.f32 %v3972, %v3972
  %v4970 = vadd.f32 %v4968, 1.837877
  %v4971 = vadd.f32 %v4969, 1.837877
  %v4972 = vmul.f32 %v4970, -0.5
  %v4973 = vmul.f32 %v4971, -0.5
  %v4975 = vsel %vm534, %v4972, 0
  %v4978 = vsel %vm534, %v4973, 0
  %4980 = vmatprep.subr.mxu0 0.0
  %4981 = vmatpush1.msra.mxu0 %v2455
  %4982 = vmatprep.subr.mxu0 0.0
  %4983 = vmatpush1.msra.mxu0 %v2456
  %4984 = vmatprep.subr.mxu0 0.0
  %4985 = vmatpush1.msra.mxu0 %v2457
  %4986 = vmatprep.subr.mxu0 0.0
  %4987 = vmatpush1.msra.mxu0 %v2458
  %4988 = vmatprep.subr.mxu0 0.0
  %4989 = vmatpush1.msra.mxu0 0.0
  %4990 = vmatprep.subr.mxu0 0.0
  %4991 = vmatpush1.msra.mxu0 0.0
  %4992 = vmatprep.subr.mxu0 0.0
  %4993 = vmatpush1.msra.mxu0 0.0
  %4994 = vmatprep.subr.mxu0 0.0
  %4995 = vmatpush1.msra.mxu0 0.0
  %4996 = vmatprep.subr.mxu0 0.0
  %4997 = vmatpush1.msra.mxu0 0.0
  %4998 = vmatprep.subr.mxu0 0.0
  %4999 = vmatpush1.msra.mxu0 0.0
  %5000 = vmatprep.subr.mxu0 0.0
  %5001 = vmatpush1.msra.mxu0 0.0
  %5002 = vmatprep.subr.mxu0 0.0
  %5003 = vmatpush1.msra.mxu0 0.0
  %5004 = vmatprep.subr.mxu0 0.0
  %5005 = vmatpush1.msra.mxu0 0.0
  %5006 = vmatprep.subr.mxu0 0.0
  %5007 = vmatpush1.msra.mxu0 0.0
  %5008 = vmatprep.subr.mxu0 0.0
  %5009 = vmatpush1.msra.mxu0 0.0
  %5010 = vmatprep.subr.mxu0 0.0
  %5011 = vmatpush1.msra.mxu0 0.0
  %5012 = vmatprep.subr.mxu0 0.0
  %5013 = vmatpush1.msra.mxu0 0.0
  %5014 = vmatprep.subr.mxu0 0.0
  %5015 = vmatpush1.msra.mxu0 0.0
  %5016 = vmatprep.subr.mxu0 0.0
  %5017 = vmatpush1.msra.mxu0 0.0
  %5018 = vmatprep.subr.mxu0 0.0
  %5019 = vmatpush1.msra.mxu0 0.0
  %5020 = vmatprep.subr.mxu0 0.0
  %5021 = vmatpush1.msra.mxu0 0.0
  %5022 = vmatprep.subr.mxu0 0.0
  %5023 = vmatpush1.msra.mxu0 0.0
  %5024 = vmatprep.subr.mxu0 0.0
  %5025 = vmatpush1.msra.mxu0 0.0
  %5026 = vmatprep.subr.mxu0 0.0
  %5027 = vmatpush1.msra.mxu0 0.0
  %5028 = vmatprep.subr.mxu0 0.0
  %5029 = vmatpush1.msra.mxu0 0.0
  %5030 = vmatprep.subr.mxu0 0.0
  %5031 = vmatpush1.msra.mxu0 0.0
  %5032 = vmatprep.subr.mxu0 0.0
  %5033 = vmatpush1.msra.mxu0 0.0
  %5034 = vmatprep.subr.mxu0 0.0
  %5035 = vmatpush1.msra.mxu0 0.0
  %5036 = vmatprep.subr.mxu0 0.0
  %5037 = vmatpush1.msra.mxu0 0.0
  %5038 = vmatprep.subr.mxu0 0.0
  %5039 = vmatpush1.msra.mxu0 0.0
  %5040 = vmatprep.subr.mxu0 0.0
  %5041 = vmatpush1.msra.mxu0 0.0
  %5042 = vmatprep.subr.mxu0 0.0
  %5043 = vmatpush1.msra.mxu0 0.0
  %5044 = vmatprep.mubr.f32.mxu0 0.0
  %5045 = vmatmul.mubr.f32.gmra.mrb[0].mxu0 %v4975
  %v5046 = vpop.f32.mrb[0].mxu0
  %v5047 = vadd.f32 0.0, %v5046
  %v5048 = vpop.f32.mrb[0].mxu0
  %5049 = vmatprep.mubr.f32.mxu0 0.0
  %5050 = vmatmul.mubr.f32.gmra.mrb[0].mxu0 %v4978
  %v5051 = vpop.f32.mrb[0].mxu0
  %v5052 = vadd.f32 0.0, %v5051
  %v5053 = vpop.f32.mrb[0].mxu0
  %5054 = vdwg.mxu0
  %v5055 = vadd.f32 %v5047, %v5052
  %v5056 = vrot.slane %v5055, 4
  %v5057 = vadd.f32 %v5055, %v5056
  %v5058 = vrot.slane %v5057, 2
  %v5059 = vadd.f32 %v5057, %v5058
  %v5060 = vrot.slane %v5059, 1
  %v5061 = vadd.f32 %v5059, %v5060
  %v5062 = vmul.f32 %v4871, %v4871
  %v5063 = vmul.f32 %v4872, %v4872
  %v5064 = vadd.f32 %v5062, 1.837877
  %v5065 = vadd.f32 %v5063, 1.837877
  %v5066 = vmul.f32 %v5064, -0.5
  %v5067 = vmul.f32 %v5065, -0.5
  %v5069 = vsel %vm534, %v5066, 0
  %v5072 = vsel %vm534, %v5067, 0
  %5074 = vmatprep.subr.mxu0 0.0
  %5075 = vmatpush1.msra.mxu0 %v2455
  %5076 = vmatprep.subr.mxu0 0.0
  %5077 = vmatpush1.msra.mxu0 %v2456
  %5078 = vmatprep.subr.mxu0 0.0
  %5079 = vmatpush1.msra.mxu0 %v2457
  %5080 = vmatprep.subr.mxu0 0.0
  %5081 = vmatpush1.msra.mxu0 %v2458
  %5082 = vmatprep.subr.mxu0 0.0
  %5083 = vmatpush1.msra.mxu0 0.0
  %5084 = vmatprep.subr.mxu0 0.0
  %5085 = vmatpush1.msra.mxu0 0.0
  %5086 = vmatprep.subr.mxu0 0.0
  %5087 = vmatpush1.msra.mxu0 0.0
  %5088 = vmatprep.subr.mxu0 0.0
  %5089 = vmatpush1.msra.mxu0 0.0
  %5090 = vmatprep.subr.mxu0 0.0
  %5091 = vmatpush1.msra.mxu0 0.0
  %5092 = vmatprep.subr.mxu0 0.0
  %5093 = vmatpush1.msra.mxu0 0.0
  %5094 = vmatprep.subr.mxu0 0.0
  %5095 = vmatpush1.msra.mxu0 0.0
  %5096 = vmatprep.subr.mxu0 0.0
  %5097 = vmatpush1.msra.mxu0 0.0
  %5098 = vmatprep.subr.mxu0 0.0
  %5099 = vmatpush1.msra.mxu0 0.0
  %5100 = vmatprep.subr.mxu0 0.0
  %5101 = vmatpush1.msra.mxu0 0.0
  %5102 = vmatprep.subr.mxu0 0.0
  %5103 = vmatpush1.msra.mxu0 0.0
  %5104 = vmatprep.subr.mxu0 0.0
  %5105 = vmatpush1.msra.mxu0 0.0
  %5106 = vmatprep.subr.mxu0 0.0
  %5107 = vmatpush1.msra.mxu0 0.0
  %5108 = vmatprep.subr.mxu0 0.0
  %5109 = vmatpush1.msra.mxu0 0.0
  %5110 = vmatprep.subr.mxu0 0.0
  %5111 = vmatpush1.msra.mxu0 0.0
  %5112 = vmatprep.subr.mxu0 0.0
  %5113 = vmatpush1.msra.mxu0 0.0
  %5114 = vmatprep.subr.mxu0 0.0
  %5115 = vmatpush1.msra.mxu0 0.0
  %5116 = vmatprep.subr.mxu0 0.0
  %5117 = vmatpush1.msra.mxu0 0.0
  %5118 = vmatprep.subr.mxu0 0.0
  %5119 = vmatpush1.msra.mxu0 0.0
  %5120 = vmatprep.subr.mxu0 0.0
  %5121 = vmatpush1.msra.mxu0 0.0
  %5122 = vmatprep.subr.mxu0 0.0
  %5123 = vmatpush1.msra.mxu0 0.0
  %5124 = vmatprep.subr.mxu0 0.0
  %5125 = vmatpush1.msra.mxu0 0.0
  %5126 = vmatprep.subr.mxu0 0.0
  %5127 = vmatpush1.msra.mxu0 0.0
  %5128 = vmatprep.subr.mxu0 0.0
  %5129 = vmatpush1.msra.mxu0 0.0
  %5130 = vmatprep.subr.mxu0 0.0
  %5131 = vmatpush1.msra.mxu0 0.0
  %5132 = vmatprep.subr.mxu0 0.0
  %5133 = vmatpush1.msra.mxu0 0.0
  %5134 = vmatprep.subr.mxu0 0.0
  %5135 = vmatpush1.msra.mxu0 0.0
  %5136 = vmatprep.subr.mxu0 0.0
  %5137 = vmatpush1.msra.mxu0 0.0
  %5138 = vmatprep.mubr.f32.mxu0 0.0
  %5139 = vmatmul.mubr.f32.gmra.mrb[0].mxu0 %v5069
  %v5140 = vpop.f32.mrb[0].mxu0
  %v5141 = vadd.f32 0.0, %v5140
  %v5142 = vpop.f32.mrb[0].mxu0
  %5143 = vmatprep.mubr.f32.mxu0 0.0
  %5144 = vmatmul.mubr.f32.gmra.mrb[0].mxu0 %v5072
  %v5145 = vpop.f32.mrb[0].mxu0
  %v5146 = vadd.f32 0.0, %v5145
  %v5147 = vpop.f32.mrb[0].mxu0
  %5148 = vdwg.mxu0
  %v5149 = vadd.f32 %v5141, %v5146
  %v5150 = vrot.slane %v5149, 4
  %v5151 = vadd.f32 %v5149, %v5150
  %v5152 = vrot.slane %v5151, 2
  %v5153 = vadd.f32 %v5151, %v5152
  %v5154 = vrot.slane %v5153, 1
  %v5155 = vadd.f32 %v5153, %v5154
  %v5156 = vadd.f32 %v5061, %v5155
  %5157 = vst.msk [vmem:[%s55] sm:$0xff] %vm534, %v3971
  %5158 = vst.msk [vmem:[%s55 + $0x8] sm:$0xff] %vm534, %v3972
  %5159 = vst.msk [vmem:[%s55 + $0x10] sm:$0xff] %vm534, %v4871
  %5160 = vst.msk [vmem:[%s55 + $0x18] sm:$0xff] %vm534, %v4872
  %5161 = vst [vmem:[%s57] sm:$0x1] %v4967
  %5162 = vst [vmem:[%s59] sm:$0x1] %v5156
  // Predicated region
  $region110: #{glow_normal_flow.1} parent=0 // pred_check
    _
  $region111: #{glow_normal_flow.1} parent=0 // pred_check_branch
    %5164 = sbr.rel (0) target = $region113
  $region112: #{glow_normal_flow.1} parent=0 // pred_region
    _
  $region113: #{glow_normal_flow.1} parent=0 // pred_fallthru
    _
  // Predicated region
  $region114: #{glow_normal_flow.1} parent=0 // pred_check
    _
  $region115: #{glow_normal_flow.1} parent=0 // pred_check_branch
    %5166 = sbr.rel (0) target = $region117
  $region116: #{glow_normal_flow.1} parent=0 // pred_region
    _
  $region117: #{glow_normal_flow.1} parent=0 // pred_fallthru
    _
  // Predicated region
  $region118: #{glow_normal_flow.1} parent=0 // pred_check
    _
  $region119: #{glow_normal_flow.1} parent=0 // pred_check_branch
    %5168 = sbr.rel (0) target = $region121
  $region120: #{glow_normal_flow.1} parent=0 // pred_region
    _
  $region121: #{glow_normal_flow.1} parent=0 // pred_fallthru
    _
  // Predicated region
  $region122: #{glow_normal_flow.1} parent=0 // pred_check
    _
  $region123: #{glow_normal_flow.1} parent=0 // pred_check_branch
    %5170 = sbr.rel (0) target = $region125
  $region124: #{glow_normal_flow.1} parent=0 // pred_region
    _
  $region125: #{glow_normal_flow.1} parent=0 // pred_fallthru
    _
  // Predicated region
  $region126: #{glow_normal_flow.1} parent=0 // pred_check
    _
  $region127: #{glow_normal_flow.1} parent=0 // pred_check_branch
    %5172 = sbr.rel (0) target = $region129
  $region128: #{glow_normal_flow.1} parent=0 // pred_region
    _
  $region129: #{glow_normal_flow.1} parent=0 // pred_fallthru
    _
  // Predicated region
  $region130: #{glow_normal_flow.1} parent=0 // pred_check
    _
  $region131: #{glow_normal_flow.1} parent=0 // pred_check_branch
    %5174 = sbr.rel (0) target = $region133
  $region132: #{glow_normal_flow.1} parent=0 // pred_region
    _
  $region133: #{glow_normal_flow.1} parent=0 // pred_fallthru
    _

</llo_original>
